<compile_context>
chip_gen: v7x
topology: tpu7x:2x2x1
jax: 0.10.0
libtpu: 0.0.40
codegen_flags: <defaults>
</compile_context>

<pallas_src>
import functools
import math

import numpy as np
import jax
import jax.numpy as jnp
from jax.experimental import pallas as pl
from jax.experimental.pallas import tpu as pltpu


# ----------------------------------------------------------------------------
# Block-size selection (VMEM aware).
# ----------------------------------------------------------------------------
_VMEM_BLOCK_BUDGET = 4 * 1024 * 1024  # bytes per operand block; with double
                                      # buffering this stays far below the
                                      # 32 MiB scoped-VMEM default (v7x-safe).


def _pick_row_block(n_rows, widest_row_elems, max_rows=1024):
    """Largest row-tile that (a) is a multiple of 8 or the full extent,
    (b) fits the per-operand VMEM budget, (c) preferably divides n_rows."""
    row_bytes = widest_row_elems * 4
    cap = max(8, min(max_rows, _VMEM_BLOCK_BUDGET // max(row_bytes, 1)))
    if n_rows <= cap:
        return n_rows
    cap8 = cap - (cap % 8)
    for tm in range(cap8, 7, -8):
        if n_rows % tm == 0:
            return tm
    return max(cap8, 8)


def _pick_group_block(n_groups, group_bytes, max_groups=512):
    cap = max(1, min(max_groups, _VMEM_BLOCK_BUDGET // max(group_bytes, 1)))
    if n_groups <= cap:
        return n_groups
    for tg in range(cap, 0, -1):
        if n_groups % tg == 0:
            return tg
    return 1


# ----------------------------------------------------------------------------
# Kernel 1: fused LayerNorm + Linear (+ optional tanh-GELU epilogue).
# ----------------------------------------------------------------------------
def _ln_linear_kernel(x_ref, gamma_ref, beta_ref, w_ref, bias_ref, o_ref, *,
                      eps, apply_gelu):
    x = x_ref[...]                                   # (TM, C) f32
    mean = jnp.mean(x, axis=-1, keepdims=True)
    xc = x - mean
    var = jnp.mean(xc * xc, axis=-1, keepdims=True)
    xn = xc * jax.lax.rsqrt(var + eps)
    xn = xn * gamma_ref[...] + beta_ref[...]         # (1, C) broadcast
    y = jnp.dot(xn, w_ref[...], preferred_element_type=jnp.float32)
    y = y + bias_ref[...]
    if apply_gelu:
        y = 0.5 * y * (1.0 + jnp.tanh(0.7978845608028654 *
                                      (y + 0.044715 * y * y * y)))
    o_ref[...] = y.astype(o_ref.dtype)


def ln_linear(x2d, gamma, beta, w, bias, *, eps=1e-5, apply_gelu=False):
    R, C = x2d.shape
    Nout = w.shape[1]
    TM = _pick_row_block(R, max(C, Nout))
    grid = (pl.cdiv(R, TM),)
    kern = functools.partial(_ln_linear_kernel, eps=eps, apply_gelu=apply_gelu)
    flops = int(2 * R * C * Nout + 10 * R * C)
    bytes_acc = int(4 * (R * C + C * Nout + Nout + 2 * C + R * Nout))
    return pl.pallas_call(
        kern,
        out_shape=jax.ShapeDtypeStruct((R, Nout), x2d.dtype),
        grid_spec=pltpu.PrefetchScalarGridSpec(
            num_scalar_prefetch=0,
            grid=grid,
            in_specs=[
                pl.BlockSpec((TM, C), lambda i: (i, 0)),     # activations, tiled
                pl.BlockSpec((1, C), lambda i: (0, 0)),      # gamma (resident)
                pl.BlockSpec((1, C), lambda i: (0, 0)),      # beta  (resident)
                pl.BlockSpec((C, Nout), lambda i: (0, 0)),   # weight (resident)
                pl.BlockSpec((1, Nout), lambda i: (0, 0)),   # bias   (resident)
            ],
            out_specs=pl.BlockSpec((TM, Nout), lambda i: (i, 0)),
        ),
        compiler_params=pltpu.CompilerParams(dimension_semantics=("parallel",)),
        cost_estimate=pl.CostEstimate(
            flops=flops,
            transcendentals=int(R * Nout) if apply_gelu else 0,
            bytes_accessed=bytes_acc),
    )(x2d, gamma.reshape(1, C), beta.reshape(1, C), w, bias.reshape(1, Nout))


# ----------------------------------------------------------------------------
# Kernel 2: window attention (scale + mask + softmax + P@V), batched over groups.
# Inputs are laid out (num_windows, batch*heads, S, E) so the per-window shift
# mask is indexed by the outer grid axis and stays resident across the inner one.
# ----------------------------------------------------------------------------
def _window_attn_kernel(mask_ref, q_ref, k_ref, v_ref, o_ref, *, scale):
    q = q_ref[...]                                   # (TG, S, E)
    k = k_ref[...]
    v = v_ref[...]
    s = jnp.einsum('gqe,gke->gqk', q, k,
                   preferred_element_type=jnp.float32) * scale
    s = s + mask_ref[...][None, :, :]                # (S, S) broadcast, may be -inf
    m = jnp.max(s, axis=-1, keepdims=True)
    p = jnp.exp(s - m)
    p = p / jnp.sum(p, axis=-1, keepdims=True)
    o = jnp.einsum('gqk,gke->gqe', p, v, preferred_element_type=jnp.float32)
    o_ref[...] = o.astype(o_ref.dtype)


def window_attention(q, k, v, win_mask, scale):
    NW, BH, S, E = q.shape
    TG = _pick_group_block(BH, S * E * 4)
    grid = (NW, pl.cdiv(BH, TG))
    qkv_spec = pl.BlockSpec((None, TG, S, E), lambda wi, gi: (wi, gi, 0, 0))
    mask_spec = pl.BlockSpec((None, S, S), lambda wi, gi: (wi, 0, 0))
    flops = int(4 * NW * BH * S * S * E + 6 * NW * BH * S * S)
    bytes_acc = int(4 * (4 * NW * BH * S * E + NW * S * S))
    return pl.pallas_call(
        functools.partial(_window_attn_kernel, scale=scale),
        out_shape=jax.ShapeDtypeStruct((NW, BH, S, E), q.dtype),
        grid_spec=pltpu.PrefetchScalarGridSpec(
            num_scalar_prefetch=0,
            grid=grid,
            in_specs=[mask_spec, qkv_spec, qkv_spec, qkv_spec],
            out_specs=pl.BlockSpec((None, TG, S, E), lambda wi, gi: (wi, gi, 0, 0)),
        ),
        compiler_params=pltpu.CompilerParams(
            dimension_semantics=("parallel", "parallel")),
        cost_estimate=pl.CostEstimate(
            flops=flops,
            transcendentals=int(NW * BH * S * S),
            bytes_accessed=bytes_acc),
    )(win_mask, q, k, v)


# ----------------------------------------------------------------------------
# Kernel 3: Linear + bias + residual add epilogue.
# ----------------------------------------------------------------------------
def _linear_res_kernel(x_ref, w_ref, bias_ref, res_ref, o_ref):
    y = jnp.dot(x_ref[...], w_ref[...], preferred_element_type=jnp.float32)
    o_ref[...] = (y + bias_ref[...] + res_ref[...]).astype(o_ref.dtype)


def linear_residual(x2d, w, bias, res2d):
    R, Kd = x2d.shape
    Nout = w.shape[1]
    TM = _pick_row_block(R, max(Kd, Nout))
    grid = (pl.cdiv(R, TM),)
    flops = int(2 * R * Kd * Nout)
    bytes_acc = int(4 * (R * Kd + Kd * Nout + Nout + 2 * R * Nout))
    return pl.pallas_call(
        _linear_res_kernel,
        out_shape=jax.ShapeDtypeStruct((R, Nout), x2d.dtype),
        grid_spec=pltpu.PrefetchScalarGridSpec(
            num_scalar_prefetch=0,
            grid=grid,
            in_specs=[
                pl.BlockSpec((TM, Kd), lambda i: (i, 0)),
                pl.BlockSpec((Kd, Nout), lambda i: (0, 0)),   # weight (resident)
                pl.BlockSpec((1, Nout), lambda i: (0, 0)),    # bias   (resident)
                pl.BlockSpec((TM, Nout), lambda i: (i, 0)),   # residual, tiled
            ],
            out_specs=pl.BlockSpec((TM, Nout), lambda i: (i, 0)),
        ),
        compiler_params=pltpu.CompilerParams(dimension_semantics=("parallel",)),
        cost_estimate=pl.CostEstimate(flops=flops, transcendentals=0,
                                      bytes_accessed=bytes_acc),
    )(x2d, w, bias.reshape(1, Nout), res2d)


# ----------------------------------------------------------------------------
# Shift-window masks (built host-side, matches the PyTorch row/column masks).
# ----------------------------------------------------------------------------
def _build_window_mask(ws, nh, nw, masked):
    S = ws * ws
    wm = np.zeros((nh, nw, S, S), dtype=np.float32)
    if masked:
        kk = ws * (ws // 2)
        row_mask = np.zeros((S, S), dtype=np.float32)
        row_mask[-kk:, 0:-kk] = -np.inf
        row_mask[0:-kk, -kk:] = -np.inf
        col_mask = row_mask.reshape(ws, ws, ws, ws).transpose(1, 0, 3, 2).reshape(S, S)
        wm[-1, :, :, :] += row_mask        # att_scores[:, :, -1, :] += row_mask
        wm[:, -1, :, :] += col_mask        # att_scores[:, :, :, -1] += column_mask
    return jnp.asarray(wm.reshape(nh * nw, S, S))


# ----------------------------------------------------------------------------
# Full SwinEncoderBlock forward (glue = reshapes / transposes / rolls only).
# ----------------------------------------------------------------------------
def swin_encoder_block_forward(x, params, *, num_heads, window_size, mask):
    b, N, C = x.shape
    H = num_heads
    E = C // H
    hh = ww = int(math.sqrt(N))
    ws = window_size
    nh, nw = hh // ws, ww // ws
    S = ws * ws
    scale = 1.0 / math.sqrt(C / H)

    x2 = x.reshape(b * N, C)

    # ---- LayerNorm + QKV projection (fused) -------------------------------
    qkv = ln_linear(x2, params['ln_g'], params['ln_b'],
                    params['w_qkv'], params['b_qkv'])
    # 'b (h w) (c K) -> b h w c K'   (interleaved QKV split, K fastest)
    qkv = qkv.reshape(b, hh, ww, C, 3)
    if mask:
        shift = (-window_size) // 2            # matches torch: -window_size // 2
        qkv = jnp.roll(qkv, (shift, shift), axis=(1, 2))
    # 'b (h m1) (w m2) (H E) K -> b H h w (m1 m2) E K'
    qkv = qkv.reshape(b, nh, ws, nw, ws, H, E, 3)
    qkv = qkv.transpose(0, 5, 1, 3, 2, 4, 6, 7).reshape(b, H, nh, nw, S, E, 3)
    q, k, v = qkv[..., 0], qkv[..., 1], qkv[..., 2]      # (b, H, nh, nw, S, E)

    # window index leading so the shift mask indexes the outer grid axis
    def to_groups(t):
        return t.transpose(2, 3, 0, 1, 4, 5).reshape(nh * nw, b * H, S, E)

    qg, kg, vg = to_groups(q), to_groups(k), to_groups(v)
    win_mask = _build_window_mask(ws, nh, nw, masked=mask)

    att = window_attention(qg, kg, vg, win_mask, scale)  # (nh*nw, b*H, S, E)

    # back to 'b (h m1) (w m2) (H E)'
    att = att.reshape(nh, nw, b, H, S, E).transpose(2, 3, 0, 1, 4, 5)
    att = att.reshape(b, H, nh, nw, ws, ws, E)
    att = att.transpose(0, 2, 4, 3, 5, 1, 6).reshape(b, hh, ww, C)
    if mask:
        unshift = window_size // 2
        att = jnp.roll(att, (unshift, unshift), axis=(1, 2))
    att2 = att.reshape(b * N, C)

    # ---- output projection + first residual (dropout = identity) ----------
    res1 = linear_residual(att2, params['w_o'], params['b_o'], x2)

    # ---- LayerNorm (same params reused, as in the PyTorch module) + MLP ----
    hdn = ln_linear(res1, params['ln_g'], params['ln_b'],
                    params['w_m1'], params['b_m1'], apply_gelu=True)
    out = linear_residual(hdn, params['w_m2'], params['b_m2'], res1)

    return out.reshape(b, N, C)


# ----------------------------------------------------------------------------
# Parameters and float64 numpy reference.
# ----------------------------------------------------------------------------
def init_params(key, embed_dim):
    C = embed_dim
    ks = jax.random.split(key, 10)

    def lin(kk, fin, fout):
        return jax.random.normal(kk, (fin, fout), jnp.float32) / np.sqrt(fin)

    return dict(
        ln_g=1.0 + 0.1 * jax.random.normal(ks[0], (C,), jnp.float32),
        ln_b=0.1 * jax.random.normal(ks[1], (C,), jnp.float32),
        w_qkv=lin(ks[2], C, 3 * C),
        b_qkv=0.1 * jax.random.normal(ks[3], (3 * C,), jnp.float32),
        w_o=lin(ks[4], C, C),
        b_o=0.1 * jax.random.normal(ks[5], (C,), jnp.float32),
        w_m1=lin(ks[6], C, 4 * C),
        b_m1=0.1 * jax.random.normal(ks[7], (4 * C,), jnp.float32),
        w_m2=lin(ks[8], 4 * C, C),
        b_m2=0.1 * jax.random.normal(ks[9], (C,), jnp.float32),
    )


def _reference_forward(x, params, *, num_heads, window_size, mask):
    x = np.asarray(x, dtype=np.float64)
    p = {kk: np.asarray(vv, dtype=np.float64) for kk, vv in params.items()}
    b, N, C = x.shape
    H, E = num_heads, C // num_heads
    hh = ww = int(math.sqrt(N))
    ws = window_size
    nh, nw = hh // ws, ww // ws
    S = ws * ws
    eps = 1e-5

    def ln(t):
        m = t.mean(-1, keepdims=True)
        v = ((t - m) ** 2).mean(-1, keepdims=True)
        return (t - m) / np.sqrt(v + eps) * p['ln_g'] + p['ln_b']

    def gelu(t):
        return 0.5 * t * (1.0 + np.tanh(0.7978845608028654 * (t + 0.044715 * t ** 3)))

    y = ln(x) @ p['w_qkv'] + p['b_qkv']
    y = y.reshape(b, hh, ww, C, 3)
    if mask:
        sh = (-window_size) // 2
        y = np.roll(y, (sh, sh), axis=(1, 2))
    y = y.reshape(b, nh, ws, nw, ws, H, E, 3).transpose(0, 5, 1, 3, 2, 4, 6, 7)
    y = y.reshape(b, H, nh, nw, S, E, 3)
    Q, K, V = y[..., 0], y[..., 1], y[..., 2]
    scores = np.einsum('bhijqe,bhijke->bhijqk', Q, K) / math.sqrt(C / H)
    if mask:
        kk = ws * (ws // 2)
        row_mask = np.zeros((S, S))
        row_mask[-kk:, 0:-kk] = -np.inf
        row_mask[0:-kk, -kk:] = -np.inf
        col_mask = row_mask.reshape(ws, ws, ws, ws).transpose(1, 0, 3, 2).reshape(S, S)
        scores[:, :, -1, :] += row_mask
        scores[:, :, :, -1] += col_mask
    scores = scores - scores.max(-1, keepdims=True)
    pr = np.exp(scores)
    pr = pr / pr.sum(-1, keepdims=True)
    att = np.einsum('bhijqk,bhijke->bhijqe', pr, V)
    att = att.reshape(b, H, nh, nw, ws, ws, E).transpose(0, 2, 4, 3, 5, 1, 6)
    att = att.reshape(b, hh, ww, C)
    if mask:
        us = window_size // 2
        att = np.roll(att, (us, us), axis=(1, 2))
    att = att.reshape(b, N, C)
    res1 = att @ p['w_o'] + p['b_o'] + x
    hdn = gelu(ln(res1) @ p['w_m1'] + p['b_m1'])
    return hdn @ p['w_m2'] + p['b_m2'] + res1


# ----------------------------------------------------------------------------
if __name__ == "__main__":
    key = jax.random.PRNGKey(0)
    k_p, k_x = jax.random.split(key)

    embed_dim, num_heads, window_size = 32, 4, 7
    batch = 2
    hh = ww = 2 * window_size                 # 14x14 tokens -> 2x2 windows of 7x7
    N = hh * ww

    params = init_params(k_p, embed_dim)
    x = jax.random.normal(k_x, (batch, N, embed_dim), dtype=jnp.float32)

    fwd = jax.jit(functools.partial(swin_encoder_block_forward,
                                    num_heads=num_heads,
                                    window_size=window_size, mask=False))
    fwd_shift = jax.jit(functools.partial(swin_encoder_block_forward,
                                          num_heads=num_heads,
                                          window_size=window_size, mask=True))

    y0 = jax.block_until_ready(fwd(x, params))
    y1 = jax.block_until_ready(fwd_shift(x, params))

    ref0 = _reference_forward(x, params, num_heads=num_heads,
                              window_size=window_size, mask=False)
    ref1 = _reference_forward(x, params, num_heads=num_heads,
                              window_size=window_size, mask=True)
    np.testing.assert_allclose(np.asarray(y0), ref0, rtol=2e-3, atol=2e-3)
    np.testing.assert_allclose(np.asarray(y1), ref1, rtol=2e-3, atol=2e-3)

    print("KERNEL_OK")
</pallas_src>

<mosaic_0001>
module attributes {stable_mosaic.version = 11 : i64} {
  func.func @_ln_linear_kernel(%arg0: i32, %arg1: memref<392x32xf32, #tpu.memory_space<vmem>>, %arg2: memref<1x32xf32, #tpu.memory_space<vmem>>, %arg3: memref<1x32xf32, #tpu.memory_space<vmem>>, %arg4: memref<32x96xf32, #tpu.memory_space<vmem>>, %arg5: memref<1x96xf32, #tpu.memory_space<vmem>>, %arg6: memref<392x96xf32, #tpu.memory_space<vmem>>) attributes {dimension_semantics = [#tpu.dimension_semantics<parallel>], iteration_bounds = array<i64: 1>, scalar_prefetch = 0 : i64, scratch_operands = 0 : i64, tpu.core_type = #tpu.core_type<tc>, window_params = [{transform_indices = @transform_0, window_bounds = array<i64: 392, 32>}, {pipeline_mode = #tpu.pipeline_mode<synchronous>, transform_indices = @transform_1, window_bounds = array<i64: 1, 32>}, {pipeline_mode = #tpu.pipeline_mode<synchronous>, transform_indices = @transform_2, window_bounds = array<i64: 1, 32>}, {pipeline_mode = #tpu.pipeline_mode<synchronous>, transform_indices = @transform_3, window_bounds = array<i64: 32, 96>}, {pipeline_mode = #tpu.pipeline_mode<synchronous>, transform_indices = @transform_4, window_bounds = array<i64: 1, 96>}, {transform_indices = @transform_5, window_bounds = array<i64: 392, 96>}]} {
    %c0 = arith.constant 0 : index
    %c0_0 = arith.constant 0 : index
    %0 = vector.load %arg1[%c0, %c0_0] : memref<392x32xf32, #tpu.memory_space<vmem>>, vector<392x32xf32>
    %cst = arith.constant dense<0.000000e+00> : vector<392xf32>
    %1 = vector.multi_reduction <add>, %0, %cst [1] : vector<392x32xf32> to vector<392xf32>
    %2 = vector.shape_cast %1 : vector<392xf32> to vector<392x1xf32>
    %cst_1 = arith.constant 3.200000e+01 : f32
    %3 = vector.broadcast %cst_1 : f32 to vector<392x1xf32>
    %4 = arith.divf %2, %3 : vector<392x1xf32>
    %5 = vector.broadcast %4 : vector<392x1xf32> to vector<392x32xf32>
    %6 = arith.subf %0, %5 : vector<392x32xf32>
    %7 = arith.mulf %6, %6 : vector<392x32xf32>
    %cst_2 = arith.constant dense<0.000000e+00> : vector<392xf32>
    %8 = vector.multi_reduction <add>, %7, %cst_2 [1] : vector<392x32xf32> to vector<392xf32>
    %9 = vector.shape_cast %8 : vector<392xf32> to vector<392x1xf32>
    %cst_3 = arith.constant 3.200000e+01 : f32
    %10 = vector.broadcast %cst_3 : f32 to vector<392x1xf32>
    %11 = arith.divf %9, %10 : vector<392x1xf32>
    %cst_4 = arith.constant 9.99999974E-6 : f32
    %12 = vector.broadcast %cst_4 : f32 to vector<392x1xf32>
    %13 = arith.addf %11, %12 : vector<392x1xf32>
    %14 = math.rsqrt %13 : vector<392x1xf32>
    %15 = vector.broadcast %14 : vector<392x1xf32> to vector<392x32xf32>
    %16 = arith.mulf %6, %15 : vector<392x32xf32>
    %c0_5 = arith.constant 0 : index
    %c0_6 = arith.constant 0 : index
    %17 = vector.load %arg2[%c0_5, %c0_6] : memref<1x32xf32, #tpu.memory_space<vmem>>, vector<1x32xf32>
    %18 = vector.broadcast %17 : vector<1x32xf32> to vector<392x32xf32>
    %19 = arith.mulf %16, %18 : vector<392x32xf32>
    %c0_7 = arith.constant 0 : index
    %c0_8 = arith.constant 0 : index
    %20 = vector.load %arg3[%c0_7, %c0_8] : memref<1x32xf32, #tpu.memory_space<vmem>>, vector<1x32xf32>
    %21 = vector.broadcast %20 : vector<1x32xf32> to vector<392x32xf32>
    %22 = arith.addf %19, %21 : vector<392x32xf32>
    %c0_9 = arith.constant 0 : index
    %c0_10 = arith.constant 0 : index
    %23 = vector.load %arg4[%c0_9, %c0_10] : memref<32x96xf32, #tpu.memory_space<vmem>>, vector<32x96xf32>
    %cst_11 = arith.constant dense<0.000000e+00> : vector<392x96xf32>
    %24 = tpu.matmul %22, %23, %cst_11 {dimension_numbers = #tpu.dot_dimension_numbers<[1], [0], [0], [1], [0, 0, 1, 1], [], []>} : vector<392x32xf32>, vector<32x96xf32>, vector<392x96xf32> -> vector<392x96xf32>
    %c0_12 = arith.constant 0 : index
    %c0_13 = arith.constant 0 : index
    %25 = vector.load %arg5[%c0_12, %c0_13] : memref<1x96xf32, #tpu.memory_space<vmem>>, vector<1x96xf32>
    %26 = vector.broadcast %25 : vector<1x96xf32> to vector<392x96xf32>
    %27 = arith.addf %24, %26 : vector<392x96xf32>
    %c0_14 = arith.constant 0 : index
    %c0_15 = arith.constant 0 : index
    %28 = vector.load %arg6[%c0_14, %c0_15] : memref<392x96xf32, #tpu.memory_space<vmem>>, vector<392x96xf32>
    tpu.vector_store %arg6[%c0_14, %c0_15], %27 {strides = array<i32>} : memref<392x96xf32, #tpu.memory_space<vmem>>, vector<392x96xf32>,
    return
  }
  func.func @transform_0(%arg0: i32) -> (i32, i32) {
    %c0_i32 = arith.constant 0 : i32
    %c0_i32_0 = arith.constant 0 : i32
    return %arg0, %c0_i32 : i32, i32
  }
  func.func @transform_1(%arg0: i32) -> (i32, i32) {
    %c0_i32 = arith.constant 0 : i32
    %c0_i32_0 = arith.constant 0 : i32
    %c0_i32_1 = arith.constant 0 : i32
    return %c0_i32, %c0_i32_0 : i32, i32
  }
  func.func @transform_2(%arg0: i32) -> (i32, i32) {
    %c0_i32 = arith.constant 0 : i32
    %c0_i32_0 = arith.constant 0 : i32
    %c0_i32_1 = arith.constant 0 : i32
    return %c0_i32, %c0_i32_0 : i32, i32
  }
  func.func @transform_3(%arg0: i32) -> (i32, i32) {
    %c0_i32 = arith.constant 0 : i32
    %c0_i32_0 = arith.constant 0 : i32
    %c0_i32_1 = arith.constant 0 : i32
    return %c0_i32, %c0_i32_0 : i32, i32
  }
  func.func @transform_4(%arg0: i32) -> (i32, i32) {
    %c0_i32 = arith.constant 0 : i32
    %c0_i32_0 = arith.constant 0 : i32
    %c0_i32_1 = arith.constant 0 : i32
    return %c0_i32, %c0_i32_0 : i32, i32
  }
  func.func @transform_5(%arg0: i32) -> (i32, i32) {
    %c0_i32 = arith.constant 0 : i32
    %c0_i32_0 = arith.constant 0 : i32
    return %arg0, %c0_i32 : i32, i32
  }
}

module attributes {stable_mosaic.version = 11 : i64} {
  func.func @_window_attn_kernel(%arg0: i32, %arg1: i32, %arg2: memref<1x49x49xf32, #tpu.memory_space<vmem>>, %arg3: memref<1x8x49x8xf32, #tpu.memory_space<vmem>>, %arg4: memref<1x8x49x8xf32, #tpu.memory_space<vmem>>, %arg5: memref<1x8x49x8xf32, #tpu.memory_space<vmem>>, %arg6: memref<1x8x49x8xf32, #tpu.memory_space<vmem>>) attributes {dimension_semantics = [#tpu.dimension_semantics<parallel>, #tpu.dimension_semantics<parallel>], iteration_bounds = array<i64: 4, 1>, scalar_prefetch = 0 : i64, scratch_operands = 0 : i64, tpu.core_type = #tpu.core_type<tc>, window_params = [{transform_indices = @transform_0, window_bounds = array<i64: 1, 49, 49>}, {transform_indices = @transform_1, window_bounds = array<i64: 1, 8, 49, 8>}, {transform_indices = @transform_2, window_bounds = array<i64: 1, 8, 49, 8>}, {transform_indices = @transform_3, window_bounds = array<i64: 1, 8, 49, 8>}, {transform_indices = @transform_4, window_bounds = array<i64: 1, 8, 49, 8>}]} {
    %c0 = arith.constant 0 : index
    %c0_0 = arith.constant 0 : index
    %c0_1 = arith.constant 0 : index
    %c0_2 = arith.constant 0 : index
    %0 = vector.load %arg3[%c0, %c0_0, %c0_1, %c0_2] : memref<1x8x49x8xf32, #tpu.memory_space<vmem>>, vector<1x8x49x8xf32>
    %1 = vector.shape_cast %0 : vector<1x8x49x8xf32> to vector<8x49x8xf32>
    %c0_3 = arith.constant 0 : index
    %c0_4 = arith.constant 0 : index
    %c0_5 = arith.constant 0 : index
    %c0_6 = arith.constant 0 : index
    %2 = vector.load %arg4[%c0_3, %c0_4, %c0_5, %c0_6] : memref<1x8x49x8xf32, #tpu.memory_space<vmem>>, vector<1x8x49x8xf32>
    %3 = vector.shape_cast %2 : vector<1x8x49x8xf32> to vector<8x49x8xf32>
    %c0_7 = arith.constant 0 : index
    %c0_8 = arith.constant 0 : index
    %c0_9 = arith.constant 0 : index
    %c0_10 = arith.constant 0 : index
    %4 = vector.load %arg5[%c0_7, %c0_8, %c0_9, %c0_10] : memref<1x8x49x8xf32, #tpu.memory_space<vmem>>, vector<1x8x49x8xf32>
    %5 = vector.shape_cast %4 : vector<1x8x49x8xf32> to vector<8x49x8xf32>
    "tpu.trace_start"() <{level = 10 : i32, message = "gqe,gke->gqk"}> : () -> ()
    %cst = arith.constant dense<0.000000e+00> : vector<8x49x49xf32>
    %6 = tpu.matmul %1, %3, %cst {dimension_numbers = #tpu.dot_dimension_numbers<[2], [2], [1], [1], [0, 0, 0, 1, 1, 1], [0], [0]>} : vector<8x49x8xf32>, vector<8x49x8xf32>, vector<8x49x49xf32> -> vector<8x49x49xf32>
    "tpu.trace_stop"() : () -> ()
    %cst_11 = arith.constant 0.353553385 : f32
    %7 = vector.broadcast %cst_11 : f32 to vector<8x49x49xf32>
    %8 = arith.mulf %6, %7 : vector<8x49x49xf32>
    %c0_12 = arith.constant 0 : index
    %c0_13 = arith.constant 0 : index
    %c0_14 = arith.constant 0 : index
    %9 = vector.load %arg2[%c0_12, %c0_13, %c0_14] : memref<1x49x49xf32, #tpu.memory_space<vmem>>, vector<1x49x49xf32>
    %10 = vector.shape_cast %9 : vector<1x49x49xf32> to vector<49x49xf32>
    %11 = vector.shape_cast %10 : vector<49x49xf32> to vector<1x49x49xf32>
    %12 = vector.broadcast %11 : vector<1x49x49xf32> to vector<8x49x49xf32>
    %13 = arith.addf %8, %12 : vector<8x49x49xf32>
    %cst_15 = arith.constant dense<0xFF800000> : vector<8x49xf32>
    %14 = vector.multi_reduction <maximumf>, %13, %cst_15 [2] : vector<8x49x49xf32> to vector<8x49xf32>
    %15 = vector.shape_cast %14 : vector<8x49xf32> to vector<8x49x1xf32>
    %16 = vector.broadcast %15 : vector<8x49x1xf32> to vector<8x49x49xf32>
    %17 = arith.subf %13, %16 : vector<8x49x49xf32>
    %18 = math.exp %17 : vector<8x49x49xf32>
    %cst_16 = arith.constant dense<0.000000e+00> : vector<8x49xf32>
    %19 = vector.multi_reduction <add>, %18, %cst_16 [2] : vector<8x49x49xf32> to vector<8x49xf32>
    %20 = vector.shape_cast %19 : vector<8x49xf32> to vector<8x49x1xf32>
    %21 = vector.broadcast %20 : vector<8x49x1xf32> to vector<8x49x49xf32>
    %22 = arith.divf %18, %21 : vector<8x49x49xf32>
    "tpu.trace_start"() <{level = 10 : i32, message = "gqk,gke->gqe"}> : () -> ()
    %cst_17 = arith.constant dense<0.000000e+00> : vector<8x49x8xf32>
    %23 = tpu.matmul %22, %5, %cst_17 {dimension_numbers = #tpu.dot_dimension_numbers<[2], [1], [1], [2], [0, 0, 0, 1, 1, 2], [0], [0]>} : vector<8x49x49xf32>, vector<8x49x8xf32>, vector<8x49x8xf32> -> vector<8x49x8xf32>
    "tpu.trace_stop"() : () -> ()
    %c0_18 = arith.constant 0 : index
    %c0_19 = arith.constant 0 : index
    %c0_20 = arith.constant 0 : index
    %c0_21 = arith.constant 0 : index
    %24 = vector.load %arg6[%c0_18, %c0_19, %c0_20, %c0_21] : memref<1x8x49x8xf32, #tpu.memory_space<vmem>>, vector<1x8x49x8xf32>
    %25 = vector.shape_cast %24 : vector<1x8x49x8xf32> to vector<8x49x8xf32>
    %26 = vector.shape_cast %23 : vector<8x49x8xf32> to vector<1x8x49x8xf32>
    tpu.vector_store %arg6[%c0_18, %c0_19, %c0_20, %c0_21], %26 {strides = array<i32>} : memref<1x8x49x8xf32, #tpu.memory_space<vmem>>, vector<1x8x49x8xf32>,
    return
  }
  func.func @transform_0(%arg0: i32, %arg1: i32) -> (i32, i32, i32) {
    %c0_i32 = arith.constant 0 : i32
    %c0_i32_0 = arith.constant 0 : i32
    %c0_i32_1 = arith.constant 0 : i32
    return %arg0, %c0_i32, %c0_i32_0 : i32, i32, i32
  }
  func.func @transform_1(%arg0: i32, %arg1: i32) -> (i32, i32, i32, i32) {
    %c0_i32 = arith.constant 0 : i32
    %c0_i32_0 = arith.constant 0 : i32
    %c0_i32_1 = arith.constant 0 : i32
    return %arg0, %arg1, %c0_i32, %c0_i32_0 : i32, i32, i32, i32
  }
  func.func @transform_2(%arg0: i32, %arg1: i32) -> (i32, i32, i32, i32) {
    %c0_i32 = arith.constant 0 : i32
    %c0_i32_0 = arith.constant 0 : i32
    %c0_i32_1 = arith.constant 0 : i32
    return %arg0, %arg1, %c0_i32, %c0_i32_0 : i32, i32, i32, i32
  }
  func.func @transform_3(%arg0: i32, %arg1: i32) -> (i32, i32, i32, i32) {
    %c0_i32 = arith.constant 0 : i32
    %c0_i32_0 = arith.constant 0 : i32
    %c0_i32_1 = arith.constant 0 : i32
    return %arg0, %arg1, %c0_i32, %c0_i32_0 : i32, i32, i32, i32
  }
  func.func @transform_4(%arg0: i32, %arg1: i32) -> (i32, i32, i32, i32) {
    %c0_i32 = arith.constant 0 : i32
    %c0_i32_0 = arith.constant 0 : i32
    %c0_i32_1 = arith.constant 0 : i32
    return %arg0, %arg1, %c0_i32, %c0_i32_0 : i32, i32, i32, i32
  }
}

module attributes {stable_mosaic.version = 11 : i64} {
  func.func @_linear_res_kernel(%arg0: i32, %arg1: memref<392x32xf32, #tpu.memory_space<vmem>>, %arg2: memref<32x32xf32, #tpu.memory_space<vmem>>, %arg3: memref<1x32xf32, #tpu.memory_space<vmem>>, %arg4: memref<392x32xf32, #tpu.memory_space<vmem>>, %arg5: memref<392x32xf32, #tpu.memory_space<vmem>>) attributes {dimension_semantics = [#tpu.dimension_semantics<parallel>], iteration_bounds = array<i64: 1>, scalar_prefetch = 0 : i64, scratch_operands = 0 : i64, tpu.core_type = #tpu.core_type<tc>, window_params = [{transform_indices = @transform_0, window_bounds = array<i64: 392, 32>}, {pipeline_mode = #tpu.pipeline_mode<synchronous>, transform_indices = @transform_1, window_bounds = array<i64: 32, 32>}, {pipeline_mode = #tpu.pipeline_mode<synchronous>, transform_indices = @transform_2, window_bounds = array<i64: 1, 32>}, {transform_indices = @transform_3, window_bounds = array<i64: 392, 32>}, {transform_indices = @transform_4, window_bounds = array<i64: 392, 32>}]} {
    %c0 = arith.constant 0 : index
    %c0_0 = arith.constant 0 : index
    %0 = vector.load %arg1[%c0, %c0_0] : memref<392x32xf32, #tpu.memory_space<vmem>>, vector<392x32xf32>
    %c0_1 = arith.constant 0 : index
    %c0_2 = arith.constant 0 : index
    %1 = vector.load %arg2[%c0_1, %c0_2] : memref<32x32xf32, #tpu.memory_space<vmem>>, vector<32x32xf32>
    %cst = arith.constant dense<0.000000e+00> : vector<392x32xf32>
    %2 = tpu.matmul %0, %1, %cst {dimension_numbers = #tpu.dot_dimension_numbers<[1], [0], [0], [1], [0, 0, 1, 1], [], []>} : vector<392x32xf32>, vector<32x32xf32>, vector<392x32xf32> -> vector<392x32xf32>
    %c0_3 = arith.constant 0 : index
    %c0_4 = arith.constant 0 : index
    %3 = vector.load %arg3[%c0_3, %c0_4] : memref<1x32xf32, #tpu.memory_space<vmem>>, vector<1x32xf32>
    %4 = vector.broadcast %3 : vector<1x32xf32> to vector<392x32xf32>
    %5 = arith.addf %2, %4 : vector<392x32xf32>
    %c0_5 = arith.constant 0 : index
    %c0_6 = arith.constant 0 : index
    %6 = vector.load %arg4[%c0_5, %c0_6] : memref<392x32xf32, #tpu.memory_space<vmem>>, vector<392x32xf32>
    %7 = arith.addf %5, %6 : vector<392x32xf32>
    %c0_7 = arith.constant 0 : index
    %c0_8 = arith.constant 0 : index
    %8 = vector.load %arg5[%c0_7, %c0_8] : memref<392x32xf32, #tpu.memory_space<vmem>>, vector<392x32xf32>
    tpu.vector_store %arg5[%c0_7, %c0_8], %7 {strides = array<i32>} : memref<392x32xf32, #tpu.memory_space<vmem>>, vector<392x32xf32>,
    return
  }
  func.func @transform_0(%arg0: i32) -> (i32, i32) {
    %c0_i32 = arith.constant 0 : i32
    %c0_i32_0 = arith.constant 0 : i32
    return %arg0, %c0_i32 : i32, i32
  }
  func.func @transform_1(%arg0: i32) -> (i32, i32) {
    %c0_i32 = arith.constant 0 : i32
    %c0_i32_0 = arith.constant 0 : i32
    %c0_i32_1 = arith.constant 0 : i32
    return %c0_i32, %c0_i32_0 : i32, i32
  }
  func.func @transform_2(%arg0: i32) -> (i32, i32) {
    %c0_i32 = arith.constant 0 : i32
    %c0_i32_0 = arith.constant 0 : i32
    %c0_i32_1 = arith.constant 0 : i32
    return %c0_i32, %c0_i32_0 : i32, i32
  }
  func.func @transform_3(%arg0: i32) -> (i32, i32) {
    %c0_i32 = arith.constant 0 : i32
    %c0_i32_0 = arith.constant 0 : i32
    return %arg0, %c0_i32 : i32, i32
  }
  func.func @transform_4(%arg0: i32) -> (i32, i32) {
    %c0_i32 = arith.constant 0 : i32
    %c0_i32_0 = arith.constant 0 : i32
    return %arg0, %c0_i32 : i32, i32
  }
}

module attributes {stable_mosaic.version = 11 : i64} {
  func.func @_ln_linear_kernel(%arg0: i32, %arg1: memref<392x32xf32, #tpu.memory_space<vmem>>, %arg2: memref<1x32xf32, #tpu.memory_space<vmem>>, %arg3: memref<1x32xf32, #tpu.memory_space<vmem>>, %arg4: memref<32x128xf32, #tpu.memory_space<vmem>>, %arg5: memref<1x128xf32, #tpu.memory_space<vmem>>, %arg6: memref<392x128xf32, #tpu.memory_space<vmem>>) attributes {dimension_semantics = [#tpu.dimension_semantics<parallel>], iteration_bounds = array<i64: 1>, scalar_prefetch = 0 : i64, scratch_operands = 0 : i64, tpu.core_type = #tpu.core_type<tc>, window_params = [{transform_indices = @transform_0, window_bounds = array<i64: 392, 32>}, {pipeline_mode = #tpu.pipeline_mode<synchronous>, transform_indices = @transform_1, window_bounds = array<i64: 1, 32>}, {pipeline_mode = #tpu.pipeline_mode<synchronous>, transform_indices = @transform_2, window_bounds = array<i64: 1, 32>}, {pipeline_mode = #tpu.pipeline_mode<synchronous>, transform_indices = @transform_3, window_bounds = array<i64: 32, 128>}, {pipeline_mode = #tpu.pipeline_mode<synchronous>, transform_indices = @transform_4, window_bounds = array<i64: 1, 128>}, {transform_indices = @transform_5, window_bounds = array<i64: 392, 128>}]} {
    %c0 = arith.constant 0 : index
    %c0_0 = arith.constant 0 : index
    %0 = vector.load %arg1[%c0, %c0_0] : memref<392x32xf32, #tpu.memory_space<vmem>>, vector<392x32xf32>
    %cst = arith.constant dense<0.000000e+00> : vector<392xf32>
    %1 = vector.multi_reduction <add>, %0, %cst [1] : vector<392x32xf32> to vector<392xf32>
    %2 = vector.shape_cast %1 : vector<392xf32> to vector<392x1xf32>
    %cst_1 = arith.constant 3.200000e+01 : f32
    %3 = vector.broadcast %cst_1 : f32 to vector<392x1xf32>
    %4 = arith.divf %2, %3 : vector<392x1xf32>
    %5 = vector.broadcast %4 : vector<392x1xf32> to vector<392x32xf32>
    %6 = arith.subf %0, %5 : vector<392x32xf32>
    %7 = arith.mulf %6, %6 : vector<392x32xf32>
    %cst_2 = arith.constant dense<0.000000e+00> : vector<392xf32>
    %8 = vector.multi_reduction <add>, %7, %cst_2 [1] : vector<392x32xf32> to vector<392xf32>
    %9 = vector.shape_cast %8 : vector<392xf32> to vector<392x1xf32>
    %cst_3 = arith.constant 3.200000e+01 : f32
    %10 = vector.broadcast %cst_3 : f32 to vector<392x1xf32>
    %11 = arith.divf %9, %10 : vector<392x1xf32>
    %cst_4 = arith.constant 9.99999974E-6 : f32
    %12 = vector.broadcast %cst_4 : f32 to vector<392x1xf32>
    %13 = arith.addf %11, %12 : vector<392x1xf32>
    %14 = math.rsqrt %13 : vector<392x1xf32>
    %15 = vector.broadcast %14 : vector<392x1xf32> to vector<392x32xf32>
    %16 = arith.mulf %6, %15 : vector<392x32xf32>
    %c0_5 = arith.constant 0 : index
    %c0_6 = arith.constant 0 : index
    %17 = vector.load %arg2[%c0_5, %c0_6] : memref<1x32xf32, #tpu.memory_space<vmem>>, vector<1x32xf32>
    %18 = vector.broadcast %17 : vector<1x32xf32> to vector<392x32xf32>
    %19 = arith.mulf %16, %18 : vector<392x32xf32>
    %c0_7 = arith.constant 0 : index
    %c0_8 = arith.constant 0 : index
    %20 = vector.load %arg3[%c0_7, %c0_8] : memref<1x32xf32, #tpu.memory_space<vmem>>, vector<1x32xf32>
    %21 = vector.broadcast %20 : vector<1x32xf32> to vector<392x32xf32>
    %22 = arith.addf %19, %21 : vector<392x32xf32>
    %c0_9 = arith.constant 0 : index
    %c0_10 = arith.constant 0 : index
    %23 = vector.load %arg4[%c0_9, %c0_10] : memref<32x128xf32, #tpu.memory_space<vmem>>, vector<32x128xf32>
    %cst_11 = arith.constant dense<0.000000e+00> : vector<392x128xf32>
    %24 = tpu.matmul %22, %23, %cst_11 {dimension_numbers = #tpu.dot_dimension_numbers<[1], [0], [0], [1], [0, 0, 1, 1], [], []>} : vector<392x32xf32>, vector<32x128xf32>, vector<392x128xf32> -> vector<392x128xf32>
    %c0_12 = arith.constant 0 : index
    %c0_13 = arith.constant 0 : index
    %25 = vector.load %arg5[%c0_12, %c0_13] : memref<1x128xf32, #tpu.memory_space<vmem>>, vector<1x128xf32>
    %26 = vector.broadcast %25 : vector<1x128xf32> to vector<392x128xf32>
    %27 = arith.addf %24, %26 : vector<392x128xf32>
    %cst_14 = arith.constant 5.000000e-01 : f32
    %28 = vector.broadcast %cst_14 : f32 to vector<392x128xf32>
    %29 = arith.mulf %28, %27 : vector<392x128xf32>
    %cst_15 = arith.constant 4.471500e-02 : f32
    %30 = vector.broadcast %cst_15 : f32 to vector<392x128xf32>
    %31 = arith.mulf %30, %27 : vector<392x128xf32>
    %32 = arith.mulf %31, %27 : vector<392x128xf32>
    %33 = arith.mulf %32, %27 : vector<392x128xf32>
    %34 = arith.addf %27, %33 : vector<392x128xf32>
    %cst_16 = arith.constant 0.797884583 : f32
    %35 = vector.broadcast %cst_16 : f32 to vector<392x128xf32>
    %36 = arith.mulf %35, %34 : vector<392x128xf32>
    %37 = math.tanh %36 : vector<392x128xf32>
    %cst_17 = arith.constant 1.000000e+00 : f32
    %38 = vector.broadcast %cst_17 : f32 to vector<392x128xf32>
    %39 = arith.addf %38, %37 : vector<392x128xf32>
    %40 = arith.mulf %29, %39 : vector<392x128xf32>
    %c0_18 = arith.constant 0 : index
    %c0_19 = arith.constant 0 : index
    %41 = vector.load %arg6[%c0_18, %c0_19] : memref<392x128xf32, #tpu.memory_space<vmem>>, vector<392x128xf32>
    tpu.vector_store %arg6[%c0_18, %c0_19], %40 {strides = array<i32>} : memref<392x128xf32, #tpu.memory_space<vmem>>, vector<392x128xf32>,
    return
  }
  func.func @transform_0(%arg0: i32) -> (i32, i32) {
    %c0_i32 = arith.constant 0 : i32
    %c0_i32_0 = arith.constant 0 : i32
    return %arg0, %c0_i32 : i32, i32
  }
  func.func @transform_1(%arg0: i32) -> (i32, i32) {
    %c0_i32 = arith.constant 0 : i32
    %c0_i32_0 = arith.constant 0 : i32
    %c0_i32_1 = arith.constant 0 : i32
    return %c0_i32, %c0_i32_0 : i32, i32
  }
  func.func @transform_2(%arg0: i32) -> (i32, i32) {
    %c0_i32 = arith.constant 0 : i32
    %c0_i32_0 = arith.constant 0 : i32
    %c0_i32_1 = arith.constant 0 : i32
    return %c0_i32, %c0_i32_0 : i32, i32
  }
  func.func @transform_3(%arg0: i32) -> (i32, i32) {
    %c0_i32 = arith.constant 0 : i32
    %c0_i32_0 = arith.constant 0 : i32
    %c0_i32_1 = arith.constant 0 : i32
    return %c0_i32, %c0_i32_0 : i32, i32
  }
  func.func @transform_4(%arg0: i32) -> (i32, i32) {
    %c0_i32 = arith.constant 0 : i32
    %c0_i32_0 = arith.constant 0 : i32
    %c0_i32_1 = arith.constant 0 : i32
    return %c0_i32, %c0_i32_0 : i32, i32
  }
  func.func @transform_5(%arg0: i32) -> (i32, i32) {
    %c0_i32 = arith.constant 0 : i32
    %c0_i32_0 = arith.constant 0 : i32
    return %arg0, %c0_i32 : i32, i32
  }
}

module attributes {stable_mosaic.version = 11 : i64} {
  func.func @_linear_res_kernel(%arg0: i32, %arg1: memref<392x128xf32, #tpu.memory_space<vmem>>, %arg2: memref<128x32xf32, #tpu.memory_space<vmem>>, %arg3: memref<1x32xf32, #tpu.memory_space<vmem>>, %arg4: memref<392x32xf32, #tpu.memory_space<vmem>>, %arg5: memref<392x32xf32, #tpu.memory_space<vmem>>) attributes {dimension_semantics = [#tpu.dimension_semantics<parallel>], iteration_bounds = array<i64: 1>, scalar_prefetch = 0 : i64, scratch_operands = 0 : i64, tpu.core_type = #tpu.core_type<tc>, window_params = [{transform_indices = @transform_0, window_bounds = array<i64: 392, 128>}, {pipeline_mode = #tpu.pipeline_mode<synchronous>, transform_indices = @transform_1, window_bounds = array<i64: 128, 32>}, {pipeline_mode = #tpu.pipeline_mode<synchronous>, transform_indices = @transform_2, window_bounds = array<i64: 1, 32>}, {transform_indices = @transform_3, window_bounds = array<i64: 392, 32>}, {transform_indices = @transform_4, window_bounds = array<i64: 392, 32>}]} {
    %c0 = arith.constant 0 : index
    %c0_0 = arith.constant 0 : index
    %0 = vector.load %arg1[%c0, %c0_0] : memref<392x128xf32, #tpu.memory_space<vmem>>, vector<392x128xf32>
    %c0_1 = arith.constant 0 : index
    %c0_2 = arith.constant 0 : index
    %1 = vector.load %arg2[%c0_1, %c0_2] : memref<128x32xf32, #tpu.memory_space<vmem>>, vector<128x32xf32>
    %cst = arith.constant dense<0.000000e+00> : vector<392x32xf32>
    %2 = tpu.matmul %0, %1, %cst {dimension_numbers = #tpu.dot_dimension_numbers<[1], [0], [0], [1], [0, 0, 1, 1], [], []>} : vector<392x128xf32>, vector<128x32xf32>, vector<392x32xf32> -> vector<392x32xf32>
    %c0_3 = arith.constant 0 : index
    %c0_4 = arith.constant 0 : index
    %3 = vector.load %arg3[%c0_3, %c0_4] : memref<1x32xf32, #tpu.memory_space<vmem>>, vector<1x32xf32>
    %4 = vector.broadcast %3 : vector<1x32xf32> to vector<392x32xf32>
    %5 = arith.addf %2, %4 : vector<392x32xf32>
    %c0_5 = arith.constant 0 : index
    %c0_6 = arith.constant 0 : index
    %6 = vector.load %arg4[%c0_5, %c0_6] : memref<392x32xf32, #tpu.memory_space<vmem>>, vector<392x32xf32>
    %7 = arith.addf %5, %6 : vector<392x32xf32>
    %c0_7 = arith.constant 0 : index
    %c0_8 = arith.constant 0 : index
    %8 = vector.load %arg5[%c0_7, %c0_8] : memref<392x32xf32, #tpu.memory_space<vmem>>, vector<392x32xf32>
    tpu.vector_store %arg5[%c0_7, %c0_8], %7 {strides = array<i32>} : memref<392x32xf32, #tpu.memory_space<vmem>>, vector<392x32xf32>,
    return
  }
  func.func @transform_0(%arg0: i32) -> (i32, i32) {
    %c0_i32 = arith.constant 0 : i32
    %c0_i32_0 = arith.constant 0 : i32
    return %arg0, %c0_i32 : i32, i32
  }
  func.func @transform_1(%arg0: i32) -> (i32, i32) {
    %c0_i32 = arith.constant 0 : i32
    %c0_i32_0 = arith.constant 0 : i32
    %c0_i32_1 = arith.constant 0 : i32
    return %c0_i32, %c0_i32_0 : i32, i32
  }
  func.func @transform_2(%arg0: i32) -> (i32, i32) {
    %c0_i32 = arith.constant 0 : i32
    %c0_i32_0 = arith.constant 0 : i32
    %c0_i32_1 = arith.constant 0 : i32
    return %c0_i32, %c0_i32_0 : i32, i32
  }
  func.func @transform_3(%arg0: i32) -> (i32, i32) {
    %c0_i32 = arith.constant 0 : i32
    %c0_i32_0 = arith.constant 0 : i32
    return %arg0, %c0_i32 : i32, i32
  }
  func.func @transform_4(%arg0: i32) -> (i32, i32) {
    %c0_i32 = arith.constant 0 : i32
    %c0_i32_0 = arith.constant 0 : i32
    return %arg0, %c0_i32 : i32, i32
  }
}

</mosaic_0001>

<llo_original>
// kernel: swin_encoder_block_forward.5
$region0: #{swin_encoder_block_forward.5}
  #allocation0 [shape = 'u32[]', space=smem, size = 0x4, offset = 0x4, fixed_abs, tag = 'smem constant byte address 0x4 - core index']
  #allocation1 [shape = 'u32[144,128]{1,0:T(1,128)}', space=vmem, size = 0x12000, scoped, tag = 'internal scratch']
  %s0 = inlined_call_operand.vmem [shape: f32[392,32], index: 0, kind: input, shape index: {}]
  %s1 = inlined_call_operand.hbm [shape: f32[1,32], index: 1, kind: input, shape index: {}]
  %s2 = inlined_call_operand.hbm [shape: f32[1,32], index: 2, kind: input, shape index: {}]
  %s3 = inlined_call_operand.hbm [shape: f32[32,96], index: 3, kind: input, shape index: {}]
  %s4 = inlined_call_operand.hbm [shape: f32[1,96], index: 4, kind: input, shape index: {}]
  %s5 = inlined_call_operand.vmem [shape: f32[392,96], index: 5, kind: output, shape index: {}]
  %s6 = sld [smem:[#allocation0]]
  $region46: #{swin_encoder_block_forward.5} parent=0
    _
  %s8 = ssub.s32 1, %s6
  %s9 = scalar_select 0, %s8, %s6
  $region1: #{swin_encoder_block_forward.5} parent=0
    #allocation2 [shape = 'u8[512]{0}', space=vmem, size = 0x400, scoped, tag = 'input window, operand 1, single buffered']
    #allocation3 [shape = 's32[1]{0}', space=sflag, size = 0x4, scoped, tag = 'scoped memory for swin_encoder_block_forward.5']
    #allocation4 [shape = 'u8[512]{0}', space=vmem, size = 0x400, scoped, tag = 'input window, operand 2, single buffered']
    #allocation5 [shape = 's32[1]{0}', space=sflag, size = 0x4, scoped, tag = 'scoped memory for swin_encoder_block_forward.5']
    #allocation6 [shape = 'u8[16384]{0}', space=vmem, size = 0x4000, scoped, tag = 'input window, operand 3, single buffered']
    #allocation7 [shape = 'u8[512]{0}', space=vmem, size = 0x400, scoped, tag = 'input window, operand 4, single buffered']
    #allocation8 [shape = 's32[1]{0}', space=sflag, size = 0x4, scoped, tag = 'scoped memory for swin_encoder_block_forward.5']
    %10 = vsyncpa [#allocation3], 0
    %11 = vsyncpa [#allocation5], 0
    %12 = vsyncpa [#allocation8], 0
    // Predicated region
    $region2: #{swin_encoder_block_forward.5} parent=1 // pred_check
      _
    $region3: #{swin_encoder_block_forward.5} parent=1 // pred_check_branch
      %14 = sbr.rel (0) target = $region5
    $region4: #{swin_encoder_block_forward.5} parent=1 // pred_region
      _
    $region5: #{swin_encoder_block_forward.5} parent=1 // pred_fallthru
      _
    // Predicated region
    $region6: #{swin_encoder_block_forward.5} parent=1 // pred_check
      _
    $region7: #{swin_encoder_block_forward.5} parent=1 // pred_check_branch
      %16 = sbr.rel (0) target = $region9
    $region8: #{swin_encoder_block_forward.5} parent=1 // pred_region
      %s18 = ssub.s32 16, 16
      %19 = vsyncadd [#allocation3], %s18
      %s21 = sshll.u32 [#allocation2], 4
      %s22 = int_to_ptr.vmem [resolvable:$true] %s21
      %24 = dma.hbm_to_vmem [thread:$0]  %s1, 16, %s22, [#allocation3]
    $region9: #{swin_encoder_block_forward.5} parent=1 // pred_fallthru
      _
    // Predicated region
    $region10: #{swin_encoder_block_forward.5} parent=1 // pred_check
      _
    $region11: #{swin_encoder_block_forward.5} parent=1 // pred_check_branch
      %26 = sbr.rel (0) target = $region13
    $region12: #{swin_encoder_block_forward.5} parent=1 // pred_region
      %s28 = ssub.s32 16, 16
      %29 = vsyncadd [#allocation5], %s28
      %s31 = sshll.u32 [#allocation4], 4
      %s32 = int_to_ptr.vmem [resolvable:$true] %s31
      %34 = dma.hbm_to_vmem [thread:$0]  %s2, 16, %s32, [#allocation5]
    $region13: #{swin_encoder_block_forward.5} parent=1 // pred_fallthru
      _
    // Predicated region
    $region14: #{swin_encoder_block_forward.5} parent=1 // pred_check
      _
    $region15: #{swin_encoder_block_forward.5} parent=1 // pred_check_branch
      %36 = sbr.rel (0) target = $region17
    $region16: #{swin_encoder_block_forward.5} parent=1 // pred_region
      %s38 = ssub.s32 512, 512
      %39 = vsyncadd [#allocation5], %s38
      %s40 = sshll.u32 [#allocation6], 4
      %s41 = int_to_ptr.vmem [resolvable:$true] %s40
      %46 = dma.hbm_to_vmem [thread:$0]  %s3, 512, %s41, [#allocation5], 128, 128, 8
    $region17: #{swin_encoder_block_forward.5} parent=1 // pred_fallthru
      _
    // Predicated region
    $region18: #{swin_encoder_block_forward.5} parent=1 // pred_check
      _
    $region19: #{swin_encoder_block_forward.5} parent=1 // pred_check_branch
      %48 = sbr.rel (0) target = $region21
    $region20: #{swin_encoder_block_forward.5} parent=1 // pred_region
      %s50 = ssub.s32 16, 16
      %51 = vsyncadd [#allocation8], %s50
      %s53 = sshll.u32 [#allocation7], 4
      %s54 = int_to_ptr.vmem [resolvable:$true] %s53
      %56 = dma.hbm_to_vmem [thread:$0]  %s4, 16, %s54, [#allocation8]
    $region21: #{swin_encoder_block_forward.5} parent=1 // pred_fallthru
      _
    // Predicated region
    $region22: #{swin_encoder_block_forward.5} parent=1 // pred_check
      _
    $region23: #{swin_encoder_block_forward.5} parent=1 // pred_check_branch
      %58 = sbr.rel (0) target = $region25
    $region24: #{swin_encoder_block_forward.5} parent=1 // pred_region
      %59 = dma.done [#allocation3], 16
    $region25: #{swin_encoder_block_forward.5} parent=1 // pred_fallthru
      _
    // Predicated region
    $region26: #{swin_encoder_block_forward.5} parent=1 // pred_check
      _
    $region27: #{swin_encoder_block_forward.5} parent=1 // pred_check_branch
      %61 = sbr.rel (0) target = $region29
    $region28: #{swin_encoder_block_forward.5} parent=1 // pred_region
      %62 = dma.done [#allocation5], 16
    $region29: #{swin_encoder_block_forward.5} parent=1 // pred_fallthru
      _
    // Predicated region
    $region30: #{swin_encoder_block_forward.5} parent=1 // pred_check
      _
    $region31: #{swin_encoder_block_forward.5} parent=1 // pred_check_branch
      %64 = sbr.rel (0) target = $region33
    $region32: #{swin_encoder_block_forward.5} parent=1 // pred_region
      %65 = dma.done [#allocation5], 512
    $region33: #{swin_encoder_block_forward.5} parent=1 // pred_fallthru
      _
    // Predicated region
    $region34: #{swin_encoder_block_forward.5} parent=1 // pred_check
      _
    $region35: #{swin_encoder_block_forward.5} parent=1 // pred_check_branch
      %67 = sbr.rel (0) target = $region37
    $region36: #{swin_encoder_block_forward.5} parent=1 // pred_region
      %68 = dma.done [#allocation8], 16
    $region37: #{swin_encoder_block_forward.5} parent=1 // pred_fallthru
      _
    %v69 = vld [vmem:[%s0] sm:$0xff]
    %v70 = vld [vmem:[%s0 + $0x8] sm:$0xff]
    %v71 = vld [vmem:[%s0 + $0x10] sm:$0xff]
    %v72 = vld [vmem:[%s0 + $0x18] sm:$0xff]
    %v73 = vld [vmem:[%s0 + $0x20] sm:$0xff]
    %v74 = vld [vmem:[%s0 + $0x28] sm:$0xff]
    %v75 = vld [vmem:[%s0 + $0x30] sm:$0xff]
    %v76 = vld [vmem:[%s0 + $0x38] sm:$0xff]
    %v77 = vld [vmem:[%s0 + $0x40] sm:$0xff]
    %v78 = vld [vmem:[%s0 + $0x48] sm:$0xff]
    %v79 = vld [vmem:[%s0 + $0x50] sm:$0xff]
    %v80 = vld [vmem:[%s0 + $0x58] sm:$0xff]
    %v81 = vld [vmem:[%s0 + $0x60] sm:$0xff]
    %v82 = vld [vmem:[%s0 + $0x68] sm:$0xff]
    %v83 = vld [vmem:[%s0 + $0x70] sm:$0xff]
    %v84 = vld [vmem:[%s0 + $0x78] sm:$0xff]
    %v85 = vld [vmem:[%s0 + $0x80] sm:$0xff]
    %v86 = vld [vmem:[%s0 + $0x88] sm:$0xff]
    %v87 = vld [vmem:[%s0 + $0x90] sm:$0xff]
    %v88 = vld [vmem:[%s0 + $0x98] sm:$0xff]
    %v89 = vld [vmem:[%s0 + $0xa0] sm:$0xff]
    %v90 = vld [vmem:[%s0 + $0xa8] sm:$0xff]
    %v91 = vld [vmem:[%s0 + $0xb0] sm:$0xff]
    %v92 = vld [vmem:[%s0 + $0xb8] sm:$0xff]
    %v93 = vld [vmem:[%s0 + $0xc0] sm:$0xff]
    %v94 = vld [vmem:[%s0 + $0xc8] sm:$0xff]
    %v95 = vld [vmem:[%s0 + $0xd0] sm:$0xff]
    %v96 = vld [vmem:[%s0 + $0xd8] sm:$0xff]
    %v97 = vld [vmem:[%s0 + $0xe0] sm:$0xff]
    %v98 = vld [vmem:[%s0 + $0xe8] sm:$0xff]
    %v99 = vld [vmem:[%s0 + $0xf0] sm:$0xff]
    %v100 = vld [vmem:[%s0 + $0xf8] sm:$0xff]
    %v101 = vld [vmem:[%s0 + $0x100] sm:$0xff]
    %v102 = vld [vmem:[%s0 + $0x108] sm:$0xff]
    %v103 = vld [vmem:[%s0 + $0x110] sm:$0xff]
    %v104 = vld [vmem:[%s0 + $0x118] sm:$0xff]
    %v105 = vld [vmem:[%s0 + $0x120] sm:$0xff]
    %v106 = vld [vmem:[%s0 + $0x128] sm:$0xff]
    %v107 = vld [vmem:[%s0 + $0x130] sm:$0xff]
    %v108 = vld [vmem:[%s0 + $0x138] sm:$0xff]
    %v109 = vld [vmem:[%s0 + $0x140] sm:$0xff]
    %v110 = vld [vmem:[%s0 + $0x148] sm:$0xff]
    %v111 = vld [vmem:[%s0 + $0x150] sm:$0xff]
    %v112 = vld [vmem:[%s0 + $0x158] sm:$0xff]
    %v113 = vld [vmem:[%s0 + $0x160] sm:$0xff]
    %v114 = vld [vmem:[%s0 + $0x168] sm:$0xff]
    %v115 = vld [vmem:[%s0 + $0x170] sm:$0xff]
    %v116 = vld [vmem:[%s0 + $0x178] sm:$0xff]
    %v117 = vld [vmem:[%s0 + $0x180] sm:$0xff]
    %vm118 = vcmask 261120
    %v119 = vsel %vm118, %v69, 0.0
    %120 = vadd.xlane.f32.xlu0 %v119
    %v121 = vpop.xlane.xlu0 %120
    %v122 = vsel %vm118, %v70, 0.0
    %123 = vadd.xlane.f32.xlu0 %v122
    %v124 = vpop.xlane.xlu0 %123
    %v125 = vsel %vm118, %v71, 0.0
    %126 = vadd.xlane.f32.xlu0 %v125
    %v127 = vpop.xlane.xlu0 %126
    %v128 = vsel %vm118, %v72, 0.0
    %129 = vadd.xlane.f32.xlu0 %v128
    %v130 = vpop.xlane.xlu0 %129
    %v131 = vsel %vm118, %v73, 0.0
    %132 = vadd.xlane.f32.xlu0 %v131
    %v133 = vpop.xlane.xlu0 %132
    %v134 = vsel %vm118, %v74, 0.0
    %135 = vadd.xlane.f32.xlu0 %v134
    %v136 = vpop.xlane.xlu0 %135
    %v137 = vsel %vm118, %v75, 0.0
    %138 = vadd.xlane.f32.xlu0 %v137
    %v139 = vpop.xlane.xlu0 %138
    %v140 = vsel %vm118, %v76, 0.0
    %141 = vadd.xlane.f32.xlu0 %v140
    %v142 = vpop.xlane.xlu0 %141
    %v143 = vsel %vm118, %v77, 0.0
    %144 = vadd.xlane.f32.xlu0 %v143
    %v145 = vpop.xlane.xlu0 %144
    %v146 = vsel %vm118, %v78, 0.0
    %147 = vadd.xlane.f32.xlu0 %v146
    %v148 = vpop.xlane.xlu0 %147
    %v149 = vsel %vm118, %v79, 0.0
    %150 = vadd.xlane.f32.xlu0 %v149
    %v151 = vpop.xlane.xlu0 %150
    %v152 = vsel %vm118, %v80, 0.0
    %153 = vadd.xlane.f32.xlu0 %v152
    %v154 = vpop.xlane.xlu0 %153
    %v155 = vsel %vm118, %v81, 0.0
    %156 = vadd.xlane.f32.xlu0 %v155
    %v157 = vpop.xlane.xlu0 %156
    %v158 = vsel %vm118, %v82, 0.0
    %159 = vadd.xlane.f32.xlu0 %v158
    %v160 = vpop.xlane.xlu0 %159
    %v161 = vsel %vm118, %v83, 0.0
    %162 = vadd.xlane.f32.xlu0 %v161
    %v163 = vpop.xlane.xlu0 %162
    %v164 = vsel %vm118, %v84, 0.0
    %165 = vadd.xlane.f32.xlu0 %v164
    %v166 = vpop.xlane.xlu0 %165
    %v167 = vsel %vm118, %v85, 0.0
    %168 = vadd.xlane.f32.xlu0 %v167
    %v169 = vpop.xlane.xlu0 %168
    %v170 = vsel %vm118, %v86, 0.0
    %171 = vadd.xlane.f32.xlu0 %v170
    %v172 = vpop.xlane.xlu0 %171
    %v173 = vsel %vm118, %v87, 0.0
    %174 = vadd.xlane.f32.xlu0 %v173
    %v175 = vpop.xlane.xlu0 %174
    %v176 = vsel %vm118, %v88, 0.0
    %177 = vadd.xlane.f32.xlu0 %v176
    %v178 = vpop.xlane.xlu0 %177
    %v179 = vsel %vm118, %v89, 0.0
    %180 = vadd.xlane.f32.xlu0 %v179
    %v181 = vpop.xlane.xlu0 %180
    %v182 = vsel %vm118, %v90, 0.0
    %183 = vadd.xlane.f32.xlu0 %v182
    %v184 = vpop.xlane.xlu0 %183
    %v185 = vsel %vm118, %v91, 0.0
    %186 = vadd.xlane.f32.xlu0 %v185
    %v187 = vpop.xlane.xlu0 %186
    %v188 = vsel %vm118, %v92, 0.0
    %189 = vadd.xlane.f32.xlu0 %v188
    %v190 = vpop.xlane.xlu0 %189
    %v191 = vsel %vm118, %v93, 0.0
    %192 = vadd.xlane.f32.xlu0 %v191
    %v193 = vpop.xlane.xlu0 %192
    %v194 = vsel %vm118, %v94, 0.0
    %195 = vadd.xlane.f32.xlu0 %v194
    %v196 = vpop.xlane.xlu0 %195
    %v197 = vsel %vm118, %v95, 0.0
    %198 = vadd.xlane.f32.xlu0 %v197
    %v199 = vpop.xlane.xlu0 %198
    %v200 = vsel %vm118, %v96, 0.0
    %201 = vadd.xlane.f32.xlu0 %v200
    %v202 = vpop.xlane.xlu0 %201
    %v203 = vsel %vm118, %v97, 0.0
    %204 = vadd.xlane.f32.xlu0 %v203
    %v205 = vpop.xlane.xlu0 %204
    %v206 = vsel %vm118, %v98, 0.0
    %207 = vadd.xlane.f32.xlu0 %v206
    %v208 = vpop.xlane.xlu0 %207
    %v209 = vsel %vm118, %v99, 0.0
    %210 = vadd.xlane.f32.xlu0 %v209
    %v211 = vpop.xlane.xlu0 %210
    %v212 = vsel %vm118, %v100, 0.0
    %213 = vadd.xlane.f32.xlu0 %v212
    %v214 = vpop.xlane.xlu0 %213
    %v215 = vsel %vm118, %v101, 0.0
    %216 = vadd.xlane.f32.xlu0 %v215
    %v217 = vpop.xlane.xlu0 %216
    %v218 = vsel %vm118, %v102, 0.0
    %219 = vadd.xlane.f32.xlu0 %v218
    %v220 = vpop.xlane.xlu0 %219
    %v221 = vsel %vm118, %v103, 0.0
    %222 = vadd.xlane.f32.xlu0 %v221
    %v223 = vpop.xlane.xlu0 %222
    %v224 = vsel %vm118, %v104, 0.0
    %225 = vadd.xlane.f32.xlu0 %v224
    %v226 = vpop.xlane.xlu0 %225
    %v227 = vsel %vm118, %v105, 0.0
    %228 = vadd.xlane.f32.xlu0 %v227
    %v229 = vpop.xlane.xlu0 %228
    %v230 = vsel %vm118, %v106, 0.0
    %231 = vadd.xlane.f32.xlu0 %v230
    %v232 = vpop.xlane.xlu0 %231
    %v233 = vsel %vm118, %v107, 0.0
    %234 = vadd.xlane.f32.xlu0 %v233
    %v235 = vpop.xlane.xlu0 %234
    %v236 = vsel %vm118, %v108, 0.0
    %237 = vadd.xlane.f32.xlu0 %v236
    %v238 = vpop.xlane.xlu0 %237
    %v239 = vsel %vm118, %v109, 0.0
    %240 = vadd.xlane.f32.xlu0 %v239
    %v241 = vpop.xlane.xlu0 %240
    %v242 = vsel %vm118, %v110, 0.0
    %243 = vadd.xlane.f32.xlu0 %v242
    %v244 = vpop.xlane.xlu0 %243
    %v245 = vsel %vm118, %v111, 0.0
    %246 = vadd.xlane.f32.xlu0 %v245
    %v247 = vpop.xlane.xlu0 %246
    %v248 = vsel %vm118, %v112, 0.0
    %249 = vadd.xlane.f32.xlu0 %v248
    %v250 = vpop.xlane.xlu0 %249
    %v251 = vsel %vm118, %v113, 0.0
    %252 = vadd.xlane.f32.xlu0 %v251
    %v253 = vpop.xlane.xlu0 %252
    %v254 = vsel %vm118, %v114, 0.0
    %255 = vadd.xlane.f32.xlu0 %v254
    %v256 = vpop.xlane.xlu0 %255
    %v257 = vsel %vm118, %v115, 0.0
    %258 = vadd.xlane.f32.xlu0 %v257
    %v259 = vpop.xlane.xlu0 %258
    %v260 = vsel %vm118, %v116, 0.0
    %261 = vadd.xlane.f32.xlu0 %v260
    %v262 = vpop.xlane.xlu0 %261
    %v263 = vsel %vm118, %v117, 0.0
    %264 = vadd.xlane.f32.xlu0 %v263
    %v265 = vpop.xlane.xlu0 %264
    %v266 = vrcp.pop 32.0
    %v267 = vmul.f32 %v121, %v266
    %v268 = vmul.f32 %v124, %v266
    %v269 = vmul.f32 %v127, %v266
    %v270 = vmul.f32 %v130, %v266
    %v271 = vmul.f32 %v133, %v266
    %v272 = vmul.f32 %v136, %v266
    %v273 = vmul.f32 %v139, %v266
    %v274 = vmul.f32 %v142, %v266
    %v275 = vmul.f32 %v145, %v266
    %v276 = vmul.f32 %v148, %v266
    %v277 = vmul.f32 %v151, %v266
    %v278 = vmul.f32 %v154, %v266
    %v279 = vmul.f32 %v157, %v266
    %v280 = vmul.f32 %v160, %v266
    %v281 = vmul.f32 %v163, %v266
    %v282 = vmul.f32 %v166, %v266
    %v283 = vmul.f32 %v169, %v266
    %v284 = vmul.f32 %v172, %v266
    %v285 = vmul.f32 %v175, %v266
    %v286 = vmul.f32 %v178, %v266
    %v287 = vmul.f32 %v181, %v266
    %v288 = vmul.f32 %v184, %v266
    %v289 = vmul.f32 %v187, %v266
    %v290 = vmul.f32 %v190, %v266
    %v291 = vmul.f32 %v193, %v266
    %v292 = vmul.f32 %v196, %v266
    %v293 = vmul.f32 %v199, %v266
    %v294 = vmul.f32 %v202, %v266
    %v295 = vmul.f32 %v205, %v266
    %v296 = vmul.f32 %v208, %v266
    %v297 = vmul.f32 %v211, %v266
    %v298 = vmul.f32 %v214, %v266
    %v299 = vmul.f32 %v217, %v266
    %v300 = vmul.f32 %v220, %v266
    %v301 = vmul.f32 %v223, %v266
    %v302 = vmul.f32 %v226, %v266
    %v303 = vmul.f32 %v229, %v266
    %v304 = vmul.f32 %v232, %v266
    %v305 = vmul.f32 %v235, %v266
    %v306 = vmul.f32 %v238, %v266
    %v307 = vmul.f32 %v241, %v266
    %v308 = vmul.f32 %v244, %v266
    %v309 = vmul.f32 %v247, %v266
    %v310 = vmul.f32 %v250, %v266
    %v311 = vmul.f32 %v253, %v266
    %v312 = vmul.f32 %v256, %v266
    %v313 = vmul.f32 %v259, %v266
    %v314 = vmul.f32 %v262, %v266
    %v315 = vmul.f32 %v265, %v266
    %v316 = vsub.f32 %v69, %v267
    %v317 = vsub.f32 %v70, %v268
    %v318 = vsub.f32 %v71, %v269
    %v319 = vsub.f32 %v72, %v270
    %v320 = vsub.f32 %v73, %v271
    %v321 = vsub.f32 %v74, %v272
    %v322 = vsub.f32 %v75, %v273
    %v323 = vsub.f32 %v76, %v274
    %v324 = vsub.f32 %v77, %v275
    %v325 = vsub.f32 %v78, %v276
    %v326 = vsub.f32 %v79, %v277
    %v327 = vsub.f32 %v80, %v278
    %v328 = vsub.f32 %v81, %v279
    %v329 = vsub.f32 %v82, %v280
    %v330 = vsub.f32 %v83, %v281
    %v331 = vsub.f32 %v84, %v282
    %v332 = vsub.f32 %v85, %v283
    %v333 = vsub.f32 %v86, %v284
    %v334 = vsub.f32 %v87, %v285
    %v335 = vsub.f32 %v88, %v286
    %v336 = vsub.f32 %v89, %v287
    %v337 = vsub.f32 %v90, %v288
    %v338 = vsub.f32 %v91, %v289
    %v339 = vsub.f32 %v92, %v290
    %v340 = vsub.f32 %v93, %v291
    %v341 = vsub.f32 %v94, %v292
    %v342 = vsub.f32 %v95, %v293
    %v343 = vsub.f32 %v96, %v294
    %v344 = vsub.f32 %v97, %v295
    %v345 = vsub.f32 %v98, %v296
    %v346 = vsub.f32 %v99, %v297
    %v347 = vsub.f32 %v100, %v298
    %v348 = vsub.f32 %v101, %v299
    %v349 = vsub.f32 %v102, %v300
    %v350 = vsub.f32 %v103, %v301
    %v351 = vsub.f32 %v104, %v302
    %v352 = vsub.f32 %v105, %v303
    %v353 = vsub.f32 %v106, %v304
    %v354 = vsub.f32 %v107, %v305
    %v355 = vsub.f32 %v108, %v306
    %v356 = vsub.f32 %v109, %v307
    %v357 = vsub.f32 %v110, %v308
    %v358 = vsub.f32 %v111, %v309
    %v359 = vsub.f32 %v112, %v310
    %v360 = vsub.f32 %v113, %v311
    %v361 = vsub.f32 %v114, %v312
    %v362 = vsub.f32 %v115, %v313
    %v363 = vsub.f32 %v116, %v314
    %v364 = vsub.f32 %v117, %v315
    %v365 = vmul.f32 %v316, %v316
    %v366 = vmul.f32 %v317, %v317
    %v367 = vmul.f32 %v318, %v318
    %v368 = vmul.f32 %v319, %v319
    %v369 = vmul.f32 %v320, %v320
    %v370 = vmul.f32 %v321, %v321
    %v371 = vmul.f32 %v322, %v322
    %v372 = vmul.f32 %v323, %v323
    %v373 = vmul.f32 %v324, %v324
    %v374 = vmul.f32 %v325, %v325
    %v375 = vmul.f32 %v326, %v326
    %v376 = vmul.f32 %v327, %v327
    %v377 = vmul.f32 %v328, %v328
    %v378 = vmul.f32 %v329, %v329
    %v379 = vmul.f32 %v330, %v330
    %v380 = vmul.f32 %v331, %v331
    %v381 = vmul.f32 %v332, %v332
    %v382 = vmul.f32 %v333, %v333
    %v383 = vmul.f32 %v334, %v334
    %v384 = vmul.f32 %v335, %v335
    %v385 = vmul.f32 %v336, %v336
    %v386 = vmul.f32 %v337, %v337
    %v387 = vmul.f32 %v338, %v338
    %v388 = vmul.f32 %v339, %v339
    %v389 = vmul.f32 %v340, %v340
    %v390 = vmul.f32 %v341, %v341
    %v391 = vmul.f32 %v342, %v342
    %v392 = vmul.f32 %v343, %v343
    %v393 = vmul.f32 %v344, %v344
    %v394 = vmul.f32 %v345, %v345
    %v395 = vmul.f32 %v346, %v346
    %v396 = vmul.f32 %v347, %v347
    %v397 = vmul.f32 %v348, %v348
    %v398 = vmul.f32 %v349, %v349
    %v399 = vmul.f32 %v350, %v350
    %v400 = vmul.f32 %v351, %v351
    %v401 = vmul.f32 %v352, %v352
    %v402 = vmul.f32 %v353, %v353
    %v403 = vmul.f32 %v354, %v354
    %v404 = vmul.f32 %v355, %v355
    %v405 = vmul.f32 %v356, %v356
    %v406 = vmul.f32 %v357, %v357
    %v407 = vmul.f32 %v358, %v358
    %v408 = vmul.f32 %v359, %v359
    %v409 = vmul.f32 %v360, %v360
    %v410 = vmul.f32 %v361, %v361
    %v411 = vmul.f32 %v362, %v362
    %v412 = vmul.f32 %v363, %v363
    %v413 = vmul.f32 %v364, %v364
    %v414 = vsel %vm118, %v365, 0.0
    %415 = vadd.xlane.f32.xlu0 %v414
    %v416 = vpop.xlane.xlu0 %415
    %v417 = vsel %vm118, %v366, 0.0
    %418 = vadd.xlane.f32.xlu0 %v417
    %v419 = vpop.xlane.xlu0 %418
    %v420 = vsel %vm118, %v367, 0.0
    %421 = vadd.xlane.f32.xlu0 %v420
    %v422 = vpop.xlane.xlu0 %421
    %v423 = vsel %vm118, %v368, 0.0
    %424 = vadd.xlane.f32.xlu0 %v423
    %v425 = vpop.xlane.xlu0 %424
    %v426 = vsel %vm118, %v369, 0.0
    %427 = vadd.xlane.f32.xlu0 %v426
    %v428 = vpop.xlane.xlu0 %427
    %v429 = vsel %vm118, %v370, 0.0
    %430 = vadd.xlane.f32.xlu0 %v429
    %v431 = vpop.xlane.xlu0 %430
    %v432 = vsel %vm118, %v371, 0.0
    %433 = vadd.xlane.f32.xlu0 %v432
    %v434 = vpop.xlane.xlu0 %433
    %v435 = vsel %vm118, %v372, 0.0
    %436 = vadd.xlane.f32.xlu0 %v435
    %v437 = vpop.xlane.xlu0 %436
    %v438 = vsel %vm118, %v373, 0.0
    %439 = vadd.xlane.f32.xlu0 %v438
    %v440 = vpop.xlane.xlu0 %439
    %v441 = vsel %vm118, %v374, 0.0
    %442 = vadd.xlane.f32.xlu0 %v441
    %v443 = vpop.xlane.xlu0 %442
    %v444 = vsel %vm118, %v375, 0.0
    %445 = vadd.xlane.f32.xlu0 %v444
    %v446 = vpop.xlane.xlu0 %445
    %v447 = vsel %vm118, %v376, 0.0
    %448 = vadd.xlane.f32.xlu0 %v447
    %v449 = vpop.xlane.xlu0 %448
    %v450 = vsel %vm118, %v377, 0.0
    %451 = vadd.xlane.f32.xlu0 %v450
    %v452 = vpop.xlane.xlu0 %451
    %v453 = vsel %vm118, %v378, 0.0
    %454 = vadd.xlane.f32.xlu0 %v453
    %v455 = vpop.xlane.xlu0 %454
    %v456 = vsel %vm118, %v379, 0.0
    %457 = vadd.xlane.f32.xlu0 %v456
    %v458 = vpop.xlane.xlu0 %457
    %v459 = vsel %vm118, %v380, 0.0
    %460 = vadd.xlane.f32.xlu0 %v459
    %v461 = vpop.xlane.xlu0 %460
    %v462 = vsel %vm118, %v381, 0.0
    %463 = vadd.xlane.f32.xlu0 %v462
    %v464 = vpop.xlane.xlu0 %463
    %v465 = vsel %vm118, %v382, 0.0
    %466 = vadd.xlane.f32.xlu0 %v465
    %v467 = vpop.xlane.xlu0 %466
    %v468 = vsel %vm118, %v383, 0.0
    %469 = vadd.xlane.f32.xlu0 %v468
    %v470 = vpop.xlane.xlu0 %469
    %v471 = vsel %vm118, %v384, 0.0
    %472 = vadd.xlane.f32.xlu0 %v471
    %v473 = vpop.xlane.xlu0 %472
    %v474 = vsel %vm118, %v385, 0.0
    %475 = vadd.xlane.f32.xlu0 %v474
    %v476 = vpop.xlane.xlu0 %475
    %v477 = vsel %vm118, %v386, 0.0
    %478 = vadd.xlane.f32.xlu0 %v477
    %v479 = vpop.xlane.xlu0 %478
    %v480 = vsel %vm118, %v387, 0.0
    %481 = vadd.xlane.f32.xlu0 %v480
    %v482 = vpop.xlane.xlu0 %481
    %v483 = vsel %vm118, %v388, 0.0
    %484 = vadd.xlane.f32.xlu0 %v483
    %v485 = vpop.xlane.xlu0 %484
    %v486 = vsel %vm118, %v389, 0.0
    %487 = vadd.xlane.f32.xlu0 %v486
    %v488 = vpop.xlane.xlu0 %487
    %v489 = vsel %vm118, %v390, 0.0
    %490 = vadd.xlane.f32.xlu0 %v489
    %v491 = vpop.xlane.xlu0 %490
    %v492 = vsel %vm118, %v391, 0.0
    %493 = vadd.xlane.f32.xlu0 %v492
    %v494 = vpop.xlane.xlu0 %493
    %v495 = vsel %vm118, %v392, 0.0
    %496 = vadd.xlane.f32.xlu0 %v495
    %v497 = vpop.xlane.xlu0 %496
    %v498 = vsel %vm118, %v393, 0.0
    %499 = vadd.xlane.f32.xlu0 %v498
    %v500 = vpop.xlane.xlu0 %499
    %v501 = vsel %vm118, %v394, 0.0
    %502 = vadd.xlane.f32.xlu0 %v501
    %v503 = vpop.xlane.xlu0 %502
    %v504 = vsel %vm118, %v395, 0.0
    %505 = vadd.xlane.f32.xlu0 %v504
    %v506 = vpop.xlane.xlu0 %505
    %v507 = vsel %vm118, %v396, 0.0
    %508 = vadd.xlane.f32.xlu0 %v507
    %v509 = vpop.xlane.xlu0 %508
    %v510 = vsel %vm118, %v397, 0.0
    %511 = vadd.xlane.f32.xlu0 %v510
    %v512 = vpop.xlane.xlu0 %511
    %v513 = vsel %vm118, %v398, 0.0
    %514 = vadd.xlane.f32.xlu0 %v513
    %v515 = vpop.xlane.xlu0 %514
    %v516 = vsel %vm118, %v399, 0.0
    %517 = vadd.xlane.f32.xlu0 %v516
    %v518 = vpop.xlane.xlu0 %517
    %v519 = vsel %vm118, %v400, 0.0
    %520 = vadd.xlane.f32.xlu0 %v519
    %v521 = vpop.xlane.xlu0 %520
    %v522 = vsel %vm118, %v401, 0.0
    %523 = vadd.xlane.f32.xlu0 %v522
    %v524 = vpop.xlane.xlu0 %523
    %v525 = vsel %vm118, %v402, 0.0
    %526 = vadd.xlane.f32.xlu0 %v525
    %v527 = vpop.xlane.xlu0 %526
    %v528 = vsel %vm118, %v403, 0.0
    %529 = vadd.xlane.f32.xlu0 %v528
    %v530 = vpop.xlane.xlu0 %529
    %v531 = vsel %vm118, %v404, 0.0
    %532 = vadd.xlane.f32.xlu0 %v531
    %v533 = vpop.xlane.xlu0 %532
    %v534 = vsel %vm118, %v405, 0.0
    %535 = vadd.xlane.f32.xlu0 %v534
    %v536 = vpop.xlane.xlu0 %535
    %v537 = vsel %vm118, %v406, 0.0
    %538 = vadd.xlane.f32.xlu0 %v537
    %v539 = vpop.xlane.xlu0 %538
    %v540 = vsel %vm118, %v407, 0.0
    %541 = vadd.xlane.f32.xlu0 %v540
    %v542 = vpop.xlane.xlu0 %541
    %v543 = vsel %vm118, %v408, 0.0
    %544 = vadd.xlane.f32.xlu0 %v543
    %v545 = vpop.xlane.xlu0 %544
    %v546 = vsel %vm118, %v409, 0.0
    %547 = vadd.xlane.f32.xlu0 %v546
    %v548 = vpop.xlane.xlu0 %547
    %v549 = vsel %vm118, %v410, 0.0
    %550 = vadd.xlane.f32.xlu0 %v549
    %v551 = vpop.xlane.xlu0 %550
    %v552 = vsel %vm118, %v411, 0.0
    %553 = vadd.xlane.f32.xlu0 %v552
    %v554 = vpop.xlane.xlu0 %553
    %v555 = vsel %vm118, %v412, 0.0
    %556 = vadd.xlane.f32.xlu0 %v555
    %v557 = vpop.xlane.xlu0 %556
    %v558 = vsel %vm118, %v413, 0.0
    %559 = vadd.xlane.f32.xlu0 %v558
    %v560 = vpop.xlane.xlu0 %559
    %v561 = vmul.f32 %v416, %v266
    %v562 = vmul.f32 %v419, %v266
    %v563 = vmul.f32 %v422, %v266
    %v564 = vmul.f32 %v425, %v266
    %v565 = vmul.f32 %v428, %v266
    %v566 = vmul.f32 %v431, %v266
    %v567 = vmul.f32 %v434, %v266
    %v568 = vmul.f32 %v437, %v266
    %v569 = vmul.f32 %v440, %v266
    %v570 = vmul.f32 %v443, %v266
    %v571 = vmul.f32 %v446, %v266
    %v572 = vmul.f32 %v449, %v266
    %v573 = vmul.f32 %v452, %v266
    %v574 = vmul.f32 %v455, %v266
    %v575 = vmul.f32 %v458, %v266
    %v576 = vmul.f32 %v461, %v266
    %v577 = vmul.f32 %v464, %v266
    %v578 = vmul.f32 %v467, %v266
    %v579 = vmul.f32 %v470, %v266
    %v580 = vmul.f32 %v473, %v266
    %v581 = vmul.f32 %v476, %v266
    %v582 = vmul.f32 %v479, %v266
    %v583 = vmul.f32 %v482, %v266
    %v584 = vmul.f32 %v485, %v266
    %v585 = vmul.f32 %v488, %v266
    %v586 = vmul.f32 %v491, %v266
    %v587 = vmul.f32 %v494, %v266
    %v588 = vmul.f32 %v497, %v266
    %v589 = vmul.f32 %v500, %v266
    %v590 = vmul.f32 %v503, %v266
    %v591 = vmul.f32 %v506, %v266
    %v592 = vmul.f32 %v509, %v266
    %v593 = vmul.f32 %v512, %v266
    %v594 = vmul.f32 %v515, %v266
    %v595 = vmul.f32 %v518, %v266
    %v596 = vmul.f32 %v521, %v266
    %v597 = vmul.f32 %v524, %v266
    %v598 = vmul.f32 %v527, %v266
    %v599 = vmul.f32 %v530, %v266
    %v600 = vmul.f32 %v533, %v266
    %v601 = vmul.f32 %v536, %v266
    %v602 = vmul.f32 %v539, %v266
    %v603 = vmul.f32 %v542, %v266
    %v604 = vmul.f32 %v545, %v266
    %v605 = vmul.f32 %v548, %v266
    %v606 = vmul.f32 %v551, %v266
    %v607 = vmul.f32 %v554, %v266
    %v608 = vmul.f32 %v557, %v266
    %v609 = vmul.f32 %v560, %v266
    %v610 = vadd.f32 %v561, 1e-05
    %v611 = vadd.f32 %v562, 1e-05
    %v612 = vadd.f32 %v563, 1e-05
    %v613 = vadd.f32 %v564, 1e-05
    %v614 = vadd.f32 %v565, 1e-05
    %v615 = vadd.f32 %v566, 1e-05
    %v616 = vadd.f32 %v567, 1e-05
    %v617 = vadd.f32 %v568, 1e-05
    %v618 = vadd.f32 %v569, 1e-05
    %v619 = vadd.f32 %v570, 1e-05
    %v620 = vadd.f32 %v571, 1e-05
    %v621 = vadd.f32 %v572, 1e-05
    %v622 = vadd.f32 %v573, 1e-05
    %v623 = vadd.f32 %v574, 1e-05
    %v624 = vadd.f32 %v575, 1e-05
    %v625 = vadd.f32 %v576, 1e-05
    %v626 = vadd.f32 %v577, 1e-05
    %v627 = vadd.f32 %v578, 1e-05
    %v628 = vadd.f32 %v579, 1e-05
    %v629 = vadd.f32 %v580, 1e-05
    %v630 = vadd.f32 %v581, 1e-05
    %v631 = vadd.f32 %v582, 1e-05
    %v632 = vadd.f32 %v583, 1e-05
    %v633 = vadd.f32 %v584, 1e-05
    %v634 = vadd.f32 %v585, 1e-05
    %v635 = vadd.f32 %v586, 1e-05
    %v636 = vadd.f32 %v587, 1e-05
    %v637 = vadd.f32 %v588, 1e-05
    %v638 = vadd.f32 %v589, 1e-05
    %v639 = vadd.f32 %v590, 1e-05
    %v640 = vadd.f32 %v591, 1e-05
    %v641 = vadd.f32 %v592, 1e-05
    %v642 = vadd.f32 %v593, 1e-05
    %v643 = vadd.f32 %v594, 1e-05
    %v644 = vadd.f32 %v595, 1e-05
    %v645 = vadd.f32 %v596, 1e-05
    %v646 = vadd.f32 %v597, 1e-05
    %v647 = vadd.f32 %v598, 1e-05
    %v648 = vadd.f32 %v599, 1e-05
    %v649 = vadd.f32 %v600, 1e-05
    %v650 = vadd.f32 %v601, 1e-05
    %v651 = vadd.f32 %v602, 1e-05
    %v652 = vadd.f32 %v603, 1e-05
    %v653 = vadd.f32 %v604, 1e-05
    %v654 = vadd.f32 %v605, 1e-05
    %v655 = vadd.f32 %v606, 1e-05
    %v656 = vadd.f32 %v607, 1e-05
    %v657 = vadd.f32 %v608, 1e-05
    %v658 = vadd.f32 %v609, 1e-05
    %v659 = vrsqrt.pop %v610
    %v660 = vrsqrt.pop %v611
    %v661 = vrsqrt.pop %v612
    %v662 = vrsqrt.pop %v613
    %v663 = vrsqrt.pop %v614
    %v664 = vrsqrt.pop %v615
    %v665 = vrsqrt.pop %v616
    %v666 = vrsqrt.pop %v617
    %v667 = vrsqrt.pop %v618
    %v668 = vrsqrt.pop %v619
    %v669 = vrsqrt.pop %v620
    %v670 = vrsqrt.pop %v621
    %v671 = vrsqrt.pop %v622
    %v672 = vrsqrt.pop %v623
    %v673 = vrsqrt.pop %v624
    %v674 = vrsqrt.pop %v625
    %v675 = vrsqrt.pop %v626
    %v676 = vrsqrt.pop %v627
    %v677 = vrsqrt.pop %v628
    %v678 = vrsqrt.pop %v629
    %v679 = vrsqrt.pop %v630
    %v680 = vrsqrt.pop %v631
    %v681 = vrsqrt.pop %v632
    %v682 = vrsqrt.pop %v633
    %v683 = vrsqrt.pop %v634
    %v684 = vrsqrt.pop %v635
    %v685 = vrsqrt.pop %v636
    %v686 = vrsqrt.pop %v637
    %v687 = vrsqrt.pop %v638
    %v688 = vrsqrt.pop %v639
    %v689 = vrsqrt.pop %v640
    %v690 = vrsqrt.pop %v641
    %v691 = vrsqrt.pop %v642
    %v692 = vrsqrt.pop %v643
    %v693 = vrsqrt.pop %v644
    %v694 = vrsqrt.pop %v645
    %v695 = vrsqrt.pop %v646
    %v696 = vrsqrt.pop %v647
    %v697 = vrsqrt.pop %v648
    %v698 = vrsqrt.pop %v649
    %v699 = vrsqrt.pop %v650
    %v700 = vrsqrt.pop %v651
    %v701 = vrsqrt.pop %v652
    %v702 = vrsqrt.pop %v653
    %v703 = vrsqrt.pop %v654
    %v704 = vrsqrt.pop %v655
    %v705 = vrsqrt.pop %v656
    %v706 = vrsqrt.pop %v657
    %v707 = vrsqrt.pop %v658
    %v708 = vmul.f32 %v316, %v659
    %v709 = vmul.f32 %v317, %v660
    %v710 = vmul.f32 %v318, %v661
    %v711 = vmul.f32 %v319, %v662
    %v712 = vmul.f32 %v320, %v663
    %v713 = vmul.f32 %v321, %v664
    %v714 = vmul.f32 %v322, %v665
    %v715 = vmul.f32 %v323, %v666
    %v716 = vmul.f32 %v324, %v667
    %v717 = vmul.f32 %v325, %v668
    %v718 = vmul.f32 %v326, %v669
    %v719 = vmul.f32 %v327, %v670
    %v720 = vmul.f32 %v328, %v671
    %v721 = vmul.f32 %v329, %v672
    %v722 = vmul.f32 %v330, %v673
    %v723 = vmul.f32 %v331, %v674
    %v724 = vmul.f32 %v332, %v675
    %v725 = vmul.f32 %v333, %v676
    %v726 = vmul.f32 %v334, %v677
    %v727 = vmul.f32 %v335, %v678
    %v728 = vmul.f32 %v336, %v679
    %v729 = vmul.f32 %v337, %v680
    %v730 = vmul.f32 %v338, %v681
    %v731 = vmul.f32 %v339, %v682
    %v732 = vmul.f32 %v340, %v683
    %v733 = vmul.f32 %v341, %v684
    %v734 = vmul.f32 %v342, %v685
    %v735 = vmul.f32 %v343, %v686
    %v736 = vmul.f32 %v344, %v687
    %v737 = vmul.f32 %v345, %v688
    %v738 = vmul.f32 %v346, %v689
    %v739 = vmul.f32 %v347, %v690
    %v740 = vmul.f32 %v348, %v691
    %v741 = vmul.f32 %v349, %v692
    %v742 = vmul.f32 %v350, %v693
    %v743 = vmul.f32 %v351, %v694
    %v744 = vmul.f32 %v352, %v695
    %v745 = vmul.f32 %v353, %v696
    %v746 = vmul.f32 %v354, %v697
    %v747 = vmul.f32 %v355, %v698
    %v748 = vmul.f32 %v356, %v699
    %v749 = vmul.f32 %v357, %v700
    %v750 = vmul.f32 %v358, %v701
    %v751 = vmul.f32 %v359, %v702
    %v752 = vmul.f32 %v360, %v703
    %v753 = vmul.f32 %v361, %v704
    %v754 = vmul.f32 %v362, %v705
    %v755 = vmul.f32 %v363, %v706
    %v756 = vmul.f32 %v364, %v707
    %v757 = vld [vmem:[#allocation2] sm:$0x1]
    %v759 = vlaneseq
    %v760 = vshrl.u32 %v759, 7
    %v761 = vsub.s32 0, %v760
    %v762 = vrot.slane %v757, %v761
    %v764 = vmul.f32 %v708, %v762
    %v765 = vmul.f32 %v709, %v762
    %v766 = vmul.f32 %v710, %v762
    %v767 = vmul.f32 %v711, %v762
    %v768 = vmul.f32 %v712, %v762
    %v769 = vmul.f32 %v713, %v762
    %v770 = vmul.f32 %v714, %v762
    %v771 = vmul.f32 %v715, %v762
    %v772 = vmul.f32 %v716, %v762
    %v773 = vmul.f32 %v717, %v762
    %v774 = vmul.f32 %v718, %v762
    %v775 = vmul.f32 %v719, %v762
    %v776 = vmul.f32 %v720, %v762
    %v777 = vmul.f32 %v721, %v762
    %v778 = vmul.f32 %v722, %v762
    %v779 = vmul.f32 %v723, %v762
    %v780 = vmul.f32 %v724, %v762
    %v781 = vmul.f32 %v725, %v762
    %v782 = vmul.f32 %v726, %v762
    %v783 = vmul.f32 %v727, %v762
    %v784 = vmul.f32 %v728, %v762
    %v785 = vmul.f32 %v729, %v762
    %v786 = vmul.f32 %v730, %v762
    %v787 = vmul.f32 %v731, %v762
    %v788 = vmul.f32 %v732, %v762
    %v789 = vmul.f32 %v733, %v762
    %v790 = vmul.f32 %v734, %v762
    %v791 = vmul.f32 %v735, %v762
    %v792 = vmul.f32 %v736, %v762
    %v793 = vmul.f32 %v737, %v762
    %v794 = vmul.f32 %v738, %v762
    %v795 = vmul.f32 %v739, %v762
    %v796 = vmul.f32 %v740, %v762
    %v797 = vmul.f32 %v741, %v762
    %v798 = vmul.f32 %v742, %v762
    %v799 = vmul.f32 %v743, %v762
    %v800 = vmul.f32 %v744, %v762
    %v801 = vmul.f32 %v745, %v762
    %v802 = vmul.f32 %v746, %v762
    %v803 = vmul.f32 %v747, %v762
    %v804 = vmul.f32 %v748, %v762
    %v805 = vmul.f32 %v749, %v762
    %v806 = vmul.f32 %v750, %v762
    %v807 = vmul.f32 %v751, %v762
    %v808 = vmul.f32 %v752, %v762
    %v809 = vmul.f32 %v753, %v762
    %v810 = vmul.f32 %v754, %v762
    %v811 = vmul.f32 %v755, %v762
    %v812 = vmul.f32 %v756, %v762
    %v813 = vld [vmem:[#allocation4] sm:$0x1]
    %v815 = vlaneseq
    %v816 = vshrl.u32 %v815, 7
    %v817 = vsub.s32 0, %v816
    %v818 = vrot.slane %v813, %v817
    %v820 = vadd.f32 %v764, %v818
    %v821 = vadd.f32 %v765, %v818
    %v822 = vadd.f32 %v766, %v818
    %v823 = vadd.f32 %v767, %v818
    %v824 = vadd.f32 %v768, %v818
    %v825 = vadd.f32 %v769, %v818
    %v826 = vadd.f32 %v770, %v818
    %v827 = vadd.f32 %v771, %v818
    %v828 = vadd.f32 %v772, %v818
    %v829 = vadd.f32 %v773, %v818
    %v830 = vadd.f32 %v774, %v818
    %v831 = vadd.f32 %v775, %v818
    %v832 = vadd.f32 %v776, %v818
    %v833 = vadd.f32 %v777, %v818
    %v834 = vadd.f32 %v778, %v818
    %v835 = vadd.f32 %v779, %v818
    %v836 = vadd.f32 %v780, %v818
    %v837 = vadd.f32 %v781, %v818
    %v838 = vadd.f32 %v782, %v818
    %v839 = vadd.f32 %v783, %v818
    %v840 = vadd.f32 %v784, %v818
    %v841 = vadd.f32 %v785, %v818
    %v842 = vadd.f32 %v786, %v818
    %v843 = vadd.f32 %v787, %v818
    %v844 = vadd.f32 %v788, %v818
    %v845 = vadd.f32 %v789, %v818
    %v846 = vadd.f32 %v790, %v818
    %v847 = vadd.f32 %v791, %v818
    %v848 = vadd.f32 %v792, %v818
    %v849 = vadd.f32 %v793, %v818
    %v850 = vadd.f32 %v794, %v818
    %v851 = vadd.f32 %v795, %v818
    %v852 = vadd.f32 %v796, %v818
    %v853 = vadd.f32 %v797, %v818
    %v854 = vadd.f32 %v798, %v818
    %v855 = vadd.f32 %v799, %v818
    %v856 = vadd.f32 %v800, %v818
    %v857 = vadd.f32 %v801, %v818
    %v858 = vadd.f32 %v802, %v818
    %v859 = vadd.f32 %v803, %v818
    %v860 = vadd.f32 %v804, %v818
    %v861 = vadd.f32 %v805, %v818
    %v862 = vadd.f32 %v806, %v818
    %v863 = vadd.f32 %v807, %v818
    %v864 = vadd.f32 %v808, %v818
    %v865 = vadd.f32 %v809, %v818
    %v866 = vadd.f32 %v810, %v818
    %v867 = vadd.f32 %v811, %v818
    %v868 = vadd.f32 %v812, %v818
    %v869 = vld [vmem:[#allocation6] sm:$0xff]
    %v870 = vld [vmem:[#allocation6 + $0x8] sm:$0xff]
    %v871 = vld [vmem:[#allocation6 + $0x10] sm:$0xff]
    %v872 = vld [vmem:[#allocation6 + $0x18] sm:$0xff]
    %v873 = vld [vmem:[#allocation7] sm:$0x1]
    %v875 = vlaneseq
    %v876 = vshrl.u32 %v875, 7
    %v877 = vsub.s32 0, %v876
    %v878 = vrot.slane %v873, %v877
    %v881 = vsel %vm118, %v820, 0
    %v884 = vsel %vm118, %v821, 0
    %v887 = vsel %vm118, %v822, 0
    %v890 = vsel %vm118, %v823, 0
    %v893 = vsel %vm118, %v824, 0
    %v896 = vsel %vm118, %v825, 0
    %v899 = vsel %vm118, %v826, 0
    %v902 = vsel %vm118, %v827, 0
    %v905 = vsel %vm118, %v828, 0
    %v908 = vsel %vm118, %v829, 0
    %v911 = vsel %vm118, %v830, 0
    %v914 = vsel %vm118, %v831, 0
    %v917 = vsel %vm118, %v832, 0
    %v920 = vsel %vm118, %v833, 0
    %v923 = vsel %vm118, %v834, 0
    %v926 = vsel %vm118, %v835, 0
    %v929 = vsel %vm118, %v836, 0
    %v932 = vsel %vm118, %v837, 0
    %v935 = vsel %vm118, %v838, 0
    %v938 = vsel %vm118, %v839, 0
    %v941 = vsel %vm118, %v840, 0
    %v944 = vsel %vm118, %v841, 0
    %v947 = vsel %vm118, %v842, 0
    %v950 = vsel %vm118, %v843, 0
    %v953 = vsel %vm118, %v844, 0
    %v956 = vsel %vm118, %v845, 0
    %v959 = vsel %vm118, %v846, 0
    %v962 = vsel %vm118, %v847, 0
    %v965 = vsel %vm118, %v848, 0
    %v968 = vsel %vm118, %v849, 0
    %v971 = vsel %vm118, %v850, 0
    %v974 = vsel %vm118, %v851, 0
    %v977 = vsel %vm118, %v852, 0
    %v980 = vsel %vm118, %v853, 0
    %v983 = vsel %vm118, %v854, 0
    %v986 = vsel %vm118, %v855, 0
    %v989 = vsel %vm118, %v856, 0
    %v992 = vsel %vm118, %v857, 0
    %v995 = vsel %vm118, %v858, 0
    %v998 = vsel %vm118, %v859, 0
    %v1001 = vsel %vm118, %v860, 0
    %v1004 = vsel %vm118, %v861, 0
    %v1007 = vsel %vm118, %v862, 0
    %v1010 = vsel %vm118, %v863, 0
    %v1013 = vsel %vm118, %v864, 0
    %v1016 = vsel %vm118, %v865, 0
    %v1019 = vsel %vm118, %v866, 0
    %v1022 = vsel %vm118, %v867, 0
    %v1025 = vsel %vm118, %v868, 0
    %1027 = vmatprep.subr.mxu0 0.0
    %1028 = vmatpush1.msra.mxu0 %v869
    %1029 = vmatprep.subr.mxu0 0.0
    %1030 = vmatpush1.msra.mxu0 %v870
    %1031 = vmatprep.subr.mxu0 0.0
    %1032 = vmatpush1.msra.mxu0 %v871
    %1033 = vmatprep.subr.mxu0 0.0
    %1034 = vmatpush1.msra.mxu0 %v872
    %1035 = vmatprep.subr.mxu0 0.0
    %1036 = vmatpush1.msra.mxu0 0.0
    %1037 = vmatprep.subr.mxu0 0.0
    %1038 = vmatpush1.msra.mxu0 0.0
    %1039 = vmatprep.subr.mxu0 0.0
    %1040 = vmatpush1.msra.mxu0 0.0
    %1041 = vmatprep.subr.mxu0 0.0
    %1042 = vmatpush1.msra.mxu0 0.0
    %1043 = vmatprep.subr.mxu0 0.0
    %1044 = vmatpush1.msra.mxu0 0.0
    %1045 = vmatprep.subr.mxu0 0.0
    %1046 = vmatpush1.msra.mxu0 0.0
    %1047 = vmatprep.subr.mxu0 0.0
    %1048 = vmatpush1.msra.mxu0 0.0
    %1049 = vmatprep.subr.mxu0 0.0
    %1050 = vmatpush1.msra.mxu0 0.0
    %1051 = vmatprep.subr.mxu0 0.0
    %1052 = vmatpush1.msra.mxu0 0.0
    %1053 = vmatprep.subr.mxu0 0.0
    %1054 = vmatpush1.msra.mxu0 0.0
    %1055 = vmatprep.subr.mxu0 0.0
    %1056 = vmatpush1.msra.mxu0 0.0
    %1057 = vmatprep.subr.mxu0 0.0
    %1058 = vmatpush1.msra.mxu0 0.0
    %1059 = vmatprep.subr.mxu0 0.0
    %1060 = vmatpush1.msra.mxu0 0.0
    %1061 = vmatprep.subr.mxu0 0.0
    %1062 = vmatpush1.msra.mxu0 0.0
    %1063 = vmatprep.subr.mxu0 0.0
    %1064 = vmatpush1.msra.mxu0 0.0
    %1065 = vmatprep.subr.mxu0 0.0
    %1066 = vmatpush1.msra.mxu0 0.0
    %1067 = vmatprep.subr.mxu0 0.0
    %1068 = vmatpush1.msra.mxu0 0.0
    %1069 = vmatprep.subr.mxu0 0.0
    %1070 = vmatpush1.msra.mxu0 0.0
    %1071 = vmatprep.subr.mxu0 0.0
    %1072 = vmatpush1.msra.mxu0 0.0
    %1073 = vmatprep.subr.mxu0 0.0
    %1074 = vmatpush1.msra.mxu0 0.0
    %1075 = vmatprep.subr.mxu0 0.0
    %1076 = vmatpush1.msra.mxu0 0.0
    %1077 = vmatprep.subr.mxu0 0.0
    %1078 = vmatpush1.msra.mxu0 0.0
    %1079 = vmatprep.subr.mxu0 0.0
    %1080 = vmatpush1.msra.mxu0 0.0
    %1081 = vmatprep.subr.mxu0 0.0
    %1082 = vmatpush1.msra.mxu0 0.0
    %1083 = vmatprep.subr.mxu0 0.0
    %1084 = vmatpush1.msra.mxu0 0.0
    %1085 = vmatprep.subr.mxu0 0.0
    %1086 = vmatpush1.msra.mxu0 0.0
    %1087 = vmatprep.subr.mxu0 0.0
    %1088 = vmatpush1.msra.mxu0 0.0
    %1089 = vmatprep.subr.mxu0 0.0
    %1090 = vmatpush1.msra.mxu0 0.0
    %1091 = vmatprep.mubr.f32.mxu0 0.0
    %1092 = vmatmul.mubr.f32.gmra.mrb[0].mxu0 %v881
    %v1093 = vpop.f32.mrb[0].mxu0
    %v1094 = vadd.f32 %v878, %v1093
    %v1095 = vpop.f32.mrb[0].mxu0
    %1096 = vmatprep.mubr.f32.mxu0 0.0
    %1097 = vmatmul.mubr.f32.gmra.mrb[0].mxu0 %v884
    %v1098 = vpop.f32.mrb[0].mxu0
    %v1099 = vadd.f32 %v878, %v1098
    %v1100 = vpop.f32.mrb[0].mxu0
    %1101 = vmatprep.mubr.f32.mxu0 0.0
    %1102 = vmatmul.mubr.f32.gmra.mrb[0].mxu0 %v887
    %v1103 = vpop.f32.mrb[0].mxu0
    %v1104 = vadd.f32 %v878, %v1103
    %v1105 = vpop.f32.mrb[0].mxu0
    %1106 = vmatprep.mubr.f32.mxu0 0.0
    %1107 = vmatmul.mubr.f32.gmra.mrb[0].mxu0 %v890
    %v1108 = vpop.f32.mrb[0].mxu0
    %v1109 = vadd.f32 %v878, %v1108
    %v1110 = vpop.f32.mrb[0].mxu0
    %1111 = vmatprep.mubr.f32.mxu0 0.0
    %1112 = vmatmul.mubr.f32.gmra.mrb[0].mxu0 %v893
    %v1113 = vpop.f32.mrb[0].mxu0
    %v1114 = vadd.f32 %v878, %v1113
    %v1115 = vpop.f32.mrb[0].mxu0
    %1116 = vmatprep.mubr.f32.mxu0 0.0
    %1117 = vmatmul.mubr.f32.gmra.mrb[0].mxu0 %v896
    %v1118 = vpop.f32.mrb[0].mxu0
    %v1119 = vadd.f32 %v878, %v1118
    %v1120 = vpop.f32.mrb[0].mxu0
    %1121 = vmatprep.mubr.f32.mxu0 0.0
    %1122 = vmatmul.mubr.f32.gmra.mrb[0].mxu0 %v899
    %v1123 = vpop.f32.mrb[0].mxu0
    %v1124 = vadd.f32 %v878, %v1123
    %v1125 = vpop.f32.mrb[0].mxu0
    %1126 = vmatprep.mubr.f32.mxu0 0.0
    %1127 = vmatmul.mubr.f32.gmra.mrb[0].mxu0 %v902
    %v1128 = vpop.f32.mrb[0].mxu0
    %v1129 = vadd.f32 %v878, %v1128
    %v1130 = vpop.f32.mrb[0].mxu0
    %1131 = vmatprep.mubr.f32.mxu0 0.0
    %1132 = vmatmul.mubr.f32.gmra.mrb[0].mxu0 %v905
    %v1133 = vpop.f32.mrb[0].mxu0
    %v1134 = vadd.f32 %v878, %v1133
    %v1135 = vpop.f32.mrb[0].mxu0
    %1136 = vmatprep.mubr.f32.mxu0 0.0
    %1137 = vmatmul.mubr.f32.gmra.mrb[0].mxu0 %v908
    %v1138 = vpop.f32.mrb[0].mxu0
    %v1139 = vadd.f32 %v878, %v1138
    %v1140 = vpop.f32.mrb[0].mxu0
    %1141 = vmatprep.mubr.f32.mxu0 0.0
    %1142 = vmatmul.mubr.f32.gmra.mrb[0].mxu0 %v911
    %v1143 = vpop.f32.mrb[0].mxu0
    %v1144 = vadd.f32 %v878, %v1143
    %v1145 = vpop.f32.mrb[0].mxu0
    %1146 = vmatprep.mubr.f32.mxu0 0.0
    %1147 = vmatmul.mubr.f32.gmra.mrb[0].mxu0 %v914
    %v1148 = vpop.f32.mrb[0].mxu0
    %v1149 = vadd.f32 %v878, %v1148
    %v1150 = vpop.f32.mrb[0].mxu0
    %1151 = vmatprep.mubr.f32.mxu0 0.0
    %1152 = vmatmul.mubr.f32.gmra.mrb[0].mxu0 %v917
    %v1153 = vpop.f32.mrb[0].mxu0
    %v1154 = vadd.f32 %v878, %v1153
    %v1155 = vpop.f32.mrb[0].mxu0
    %1156 = vmatprep.mubr.f32.mxu0 0.0
    %1157 = vmatmul.mubr.f32.gmra.mrb[0].mxu0 %v920
    %v1158 = vpop.f32.mrb[0].mxu0
    %v1159 = vadd.f32 %v878, %v1158
    %v1160 = vpop.f32.mrb[0].mxu0
    %1161 = vmatprep.mubr.f32.mxu0 0.0
    %1162 = vmatmul.mubr.f32.gmra.mrb[0].mxu0 %v923
    %v1163 = vpop.f32.mrb[0].mxu0
    %v1164 = vadd.f32 %v878, %v1163
    %v1165 = vpop.f32.mrb[0].mxu0
    %1166 = vmatprep.mubr.f32.mxu0 0.0
    %1167 = vmatmul.mubr.f32.gmra.mrb[0].mxu0 %v926
    %v1168 = vpop.f32.mrb[0].mxu0
    %v1169 = vadd.f32 %v878, %v1168
    %v1170 = vpop.f32.mrb[0].mxu0
    %1171 = vmatprep.mubr.f32.mxu0 0.0
    %1172 = vmatmul.mubr.f32.gmra.mrb[0].mxu0 %v929
    %v1173 = vpop.f32.mrb[0].mxu0
    %v1174 = vadd.f32 %v878, %v1173
    %v1175 = vpop.f32.mrb[0].mxu0
    %1176 = vmatprep.mubr.f32.mxu0 0.0
    %1177 = vmatmul.mubr.f32.gmra.mrb[0].mxu0 %v932
    %v1178 = vpop.f32.mrb[0].mxu0
    %v1179 = vadd.f32 %v878, %v1178
    %v1180 = vpop.f32.mrb[0].mxu0
    %1181 = vmatprep.mubr.f32.mxu0 0.0
    %1182 = vmatmul.mubr.f32.gmra.mrb[0].mxu0 %v935
    %v1183 = vpop.f32.mrb[0].mxu0
    %v1184 = vadd.f32 %v878, %v1183
    %v1185 = vpop.f32.mrb[0].mxu0
    %1186 = vmatprep.mubr.f32.mxu0 0.0
    %1187 = vmatmul.mubr.f32.gmra.mrb[0].mxu0 %v938
    %v1188 = vpop.f32.mrb[0].mxu0
    %v1189 = vadd.f32 %v878, %v1188
    %v1190 = vpop.f32.mrb[0].mxu0
    %1191 = vmatprep.mubr.f32.mxu0 0.0
    %1192 = vmatmul.mubr.f32.gmra.mrb[0].mxu0 %v941
    %v1193 = vpop.f32.mrb[0].mxu0
    %v1194 = vadd.f32 %v878, %v1193
    %v1195 = vpop.f32.mrb[0].mxu0
    %1196 = vmatprep.mubr.f32.mxu0 0.0
    %1197 = vmatmul.mubr.f32.gmra.mrb[0].mxu0 %v944
    %v1198 = vpop.f32.mrb[0].mxu0
    %v1199 = vadd.f32 %v878, %v1198
    %v1200 = vpop.f32.mrb[0].mxu0
    %1201 = vmatprep.mubr.f32.mxu0 0.0
    %1202 = vmatmul.mubr.f32.gmra.mrb[0].mxu0 %v947
    %v1203 = vpop.f32.mrb[0].mxu0
    %v1204 = vadd.f32 %v878, %v1203
    %v1205 = vpop.f32.mrb[0].mxu0
    %1206 = vmatprep.mubr.f32.mxu0 0.0
    %1207 = vmatmul.mubr.f32.gmra.mrb[0].mxu0 %v950
    %v1208 = vpop.f32.mrb[0].mxu0
    %v1209 = vadd.f32 %v878, %v1208
    %v1210 = vpop.f32.mrb[0].mxu0
    %1211 = vmatprep.mubr.f32.mxu0 0.0
    %1212 = vmatmul.mubr.f32.gmra.mrb[0].mxu0 %v953
    %v1213 = vpop.f32.mrb[0].mxu0
    %v1214 = vadd.f32 %v878, %v1213
    %v1215 = vpop.f32.mrb[0].mxu0
    %1216 = vmatprep.mubr.f32.mxu0 0.0
    %1217 = vmatmul.mubr.f32.gmra.mrb[0].mxu0 %v956
    %v1218 = vpop.f32.mrb[0].mxu0
    %v1219 = vadd.f32 %v878, %v1218
    %v1220 = vpop.f32.mrb[0].mxu0
    %1221 = vmatprep.mubr.f32.mxu0 0.0
    %1222 = vmatmul.mubr.f32.gmra.mrb[0].mxu0 %v959
    %v1223 = vpop.f32.mrb[0].mxu0
    %v1224 = vadd.f32 %v878, %v1223
    %v1225 = vpop.f32.mrb[0].mxu0
    %1226 = vmatprep.mubr.f32.mxu0 0.0
    %1227 = vmatmul.mubr.f32.gmra.mrb[0].mxu0 %v962
    %v1228 = vpop.f32.mrb[0].mxu0
    %v1229 = vadd.f32 %v878, %v1228
    %v1230 = vpop.f32.mrb[0].mxu0
    %1231 = vmatprep.mubr.f32.mxu0 0.0
    %1232 = vmatmul.mubr.f32.gmra.mrb[0].mxu0 %v965
    %v1233 = vpop.f32.mrb[0].mxu0
    %v1234 = vadd.f32 %v878, %v1233
    %v1235 = vpop.f32.mrb[0].mxu0
    %1236 = vmatprep.mubr.f32.mxu0 0.0
    %1237 = vmatmul.mubr.f32.gmra.mrb[0].mxu0 %v968
    %v1238 = vpop.f32.mrb[0].mxu0
    %v1239 = vadd.f32 %v878, %v1238
    %v1240 = vpop.f32.mrb[0].mxu0
    %1241 = vmatprep.mubr.f32.mxu0 0.0
    %1242 = vmatmul.mubr.f32.gmra.mrb[0].mxu0 %v971
    %v1243 = vpop.f32.mrb[0].mxu0
    %v1244 = vadd.f32 %v878, %v1243
    %v1245 = vpop.f32.mrb[0].mxu0
    %1246 = vmatprep.mubr.f32.mxu0 0.0
    %1247 = vmatmul.mubr.f32.gmra.mrb[0].mxu0 %v974
    %v1248 = vpop.f32.mrb[0].mxu0
    %v1249 = vadd.f32 %v878, %v1248
    %v1250 = vpop.f32.mrb[0].mxu0
    %1251 = vmatprep.mubr.f32.mxu0 0.0
    %1252 = vmatmul.mubr.f32.gmra.mrb[0].mxu0 %v977
    %v1253 = vpop.f32.mrb[0].mxu0
    %v1254 = vadd.f32 %v878, %v1253
    %v1255 = vpop.f32.mrb[0].mxu0
    %1256 = vmatprep.mubr.f32.mxu0 0.0
    %1257 = vmatmul.mubr.f32.gmra.mrb[0].mxu0 %v980
    %v1258 = vpop.f32.mrb[0].mxu0
    %v1259 = vadd.f32 %v878, %v1258
    %v1260 = vpop.f32.mrb[0].mxu0
    %1261 = vmatprep.mubr.f32.mxu0 0.0
    %1262 = vmatmul.mubr.f32.gmra.mrb[0].mxu0 %v983
    %v1263 = vpop.f32.mrb[0].mxu0
    %v1264 = vadd.f32 %v878, %v1263
    %v1265 = vpop.f32.mrb[0].mxu0
    %1266 = vmatprep.mubr.f32.mxu0 0.0
    %1267 = vmatmul.mubr.f32.gmra.mrb[0].mxu0 %v986
    %v1268 = vpop.f32.mrb[0].mxu0
    %v1269 = vadd.f32 %v878, %v1268
    %v1270 = vpop.f32.mrb[0].mxu0
    %1271 = vmatprep.mubr.f32.mxu0 0.0
    %1272 = vmatmul.mubr.f32.gmra.mrb[0].mxu0 %v989
    %v1273 = vpop.f32.mrb[0].mxu0
    %v1274 = vadd.f32 %v878, %v1273
    %v1275 = vpop.f32.mrb[0].mxu0
    %1276 = vmatprep.mubr.f32.mxu0 0.0
    %1277 = vmatmul.mubr.f32.gmra.mrb[0].mxu0 %v992
    %v1278 = vpop.f32.mrb[0].mxu0
    %v1279 = vadd.f32 %v878, %v1278
    %v1280 = vpop.f32.mrb[0].mxu0
    %1281 = vmatprep.mubr.f32.mxu0 0.0
    %1282 = vmatmul.mubr.f32.gmra.mrb[0].mxu0 %v995
    %v1283 = vpop.f32.mrb[0].mxu0
    %v1284 = vadd.f32 %v878, %v1283
    %v1285 = vpop.f32.mrb[0].mxu0
    %1286 = vmatprep.mubr.f32.mxu0 0.0
    %1287 = vmatmul.mubr.f32.gmra.mrb[0].mxu0 %v998
    %v1288 = vpop.f32.mrb[0].mxu0
    %v1289 = vadd.f32 %v878, %v1288
    %v1290 = vpop.f32.mrb[0].mxu0
    %1291 = vmatprep.mubr.f32.mxu0 0.0
    %1292 = vmatmul.mubr.f32.gmra.mrb[0].mxu0 %v1001
    %v1293 = vpop.f32.mrb[0].mxu0
    %v1294 = vadd.f32 %v878, %v1293
    %v1295 = vpop.f32.mrb[0].mxu0
    %1296 = vmatprep.mubr.f32.mxu0 0.0
    %1297 = vmatmul.mubr.f32.gmra.mrb[0].mxu0 %v1004
    %v1298 = vpop.f32.mrb[0].mxu0
    %v1299 = vadd.f32 %v878, %v1298
    %v1300 = vpop.f32.mrb[0].mxu0
    %1301 = vmatprep.mubr.f32.mxu0 0.0
    %1302 = vmatmul.mubr.f32.gmra.mrb[0].mxu0 %v1007
    %v1303 = vpop.f32.mrb[0].mxu0
    %v1304 = vadd.f32 %v878, %v1303
    %v1305 = vpop.f32.mrb[0].mxu0
    %1306 = vmatprep.mubr.f32.mxu0 0.0
    %1307 = vmatmul.mubr.f32.gmra.mrb[0].mxu0 %v1010
    %v1308 = vpop.f32.mrb[0].mxu0
    %v1309 = vadd.f32 %v878, %v1308
    %v1310 = vpop.f32.mrb[0].mxu0
    %1311 = vmatprep.mubr.f32.mxu0 0.0
    %1312 = vmatmul.mubr.f32.gmra.mrb[0].mxu0 %v1013
    %v1313 = vpop.f32.mrb[0].mxu0
    %v1314 = vadd.f32 %v878, %v1313
    %v1315 = vpop.f32.mrb[0].mxu0
    %1316 = vmatprep.mubr.f32.mxu0 0.0
    %1317 = vmatmul.mubr.f32.gmra.mrb[0].mxu0 %v1016
    %v1318 = vpop.f32.mrb[0].mxu0
    %v1319 = vadd.f32 %v878, %v1318
    %v1320 = vpop.f32.mrb[0].mxu0
    %1321 = vmatprep.mubr.f32.mxu0 0.0
    %1322 = vmatmul.mubr.f32.gmra.mrb[0].mxu0 %v1019
    %v1323 = vpop.f32.mrb[0].mxu0
    %v1324 = vadd.f32 %v878, %v1323
    %v1325 = vpop.f32.mrb[0].mxu0
    %1326 = vmatprep.mubr.f32.mxu0 0.0
    %1327 = vmatmul.mubr.f32.gmra.mrb[0].mxu0 %v1022
    %v1328 = vpop.f32.mrb[0].mxu0
    %v1329 = vadd.f32 %v878, %v1328
    %v1330 = vpop.f32.mrb[0].mxu0
    %1331 = vmatprep.mubr.f32.mxu0 0.0
    %1332 = vmatmul.mubr.f32.gmra.mrb[0].mxu0 %v1025
    %v1333 = vpop.f32.mrb[0].mxu0
    %v1334 = vadd.f32 %v878, %v1333
    %v1335 = vpop.f32.mrb[0].mxu0
    %1336 = vdwg.mxu0
    %vm1337 = vcmask 785408
    %1338 = vst.msk [vmem:[%s5] sm:$0xff] %vm1337, %v1094
    %1339 = vst.msk [vmem:[%s5 + $0x8] sm:$0xff] %vm1337, %v1099
    %1340 = vst.msk [vmem:[%s5 + $0x10] sm:$0xff] %vm1337, %v1104
    %1341 = vst.msk [vmem:[%s5 + $0x18] sm:$0xff] %vm1337, %v1109
    %1342 = vst.msk [vmem:[%s5 + $0x20] sm:$0xff] %vm1337, %v1114
    %1343 = vst.msk [vmem:[%s5 + $0x28] sm:$0xff] %vm1337, %v1119
    %1344 = vst.msk [vmem:[%s5 + $0x30] sm:$0xff] %vm1337, %v1124
    %1345 = vst.msk [vmem:[%s5 + $0x38] sm:$0xff] %vm1337, %v1129
    %1346 = vst.msk [vmem:[%s5 + $0x40] sm:$0xff] %vm1337, %v1134
    %1347 = vst.msk [vmem:[%s5 + $0x48] sm:$0xff] %vm1337, %v1139
    %1348 = vst.msk [vmem:[%s5 + $0x50] sm:$0xff] %vm1337, %v1144
    %1349 = vst.msk [vmem:[%s5 + $0x58] sm:$0xff] %vm1337, %v1149
    %1350 = vst.msk [vmem:[%s5 + $0x60] sm:$0xff] %vm1337, %v1154
    %1351 = vst.msk [vmem:[%s5 + $0x68] sm:$0xff] %vm1337, %v1159
    %1352 = vst.msk [vmem:[%s5 + $0x70] sm:$0xff] %vm1337, %v1164
    %1353 = vst.msk [vmem:[%s5 + $0x78] sm:$0xff] %vm1337, %v1169
    %1354 = vst.msk [vmem:[%s5 + $0x80] sm:$0xff] %vm1337, %v1174
    %1355 = vst.msk [vmem:[%s5 + $0x88] sm:$0xff] %vm1337, %v1179
    %1356 = vst.msk [vmem:[%s5 + $0x90] sm:$0xff] %vm1337, %v1184
    %1357 = vst.msk [vmem:[%s5 + $0x98] sm:$0xff] %vm1337, %v1189
    %1358 = vst.msk [vmem:[%s5 + $0xa0] sm:$0xff] %vm1337, %v1194
    %1359 = vst.msk [vmem:[%s5 + $0xa8] sm:$0xff] %vm1337, %v1199
    %1360 = vst.msk [vmem:[%s5 + $0xb0] sm:$0xff] %vm1337, %v1204
    %1361 = vst.msk [vmem:[%s5 + $0xb8] sm:$0xff] %vm1337, %v1209
    %1362 = vst.msk [vmem:[%s5 + $0xc0] sm:$0xff] %vm1337, %v1214
    %1363 = vst.msk [vmem:[%s5 + $0xc8] sm:$0xff] %vm1337, %v1219
    %1364 = vst.msk [vmem:[%s5 + $0xd0] sm:$0xff] %vm1337, %v1224
    %1365 = vst.msk [vmem:[%s5 + $0xd8] sm:$0xff] %vm1337, %v1229
    %1366 = vst.msk [vmem:[%s5 + $0xe0] sm:$0xff] %vm1337, %v1234
    %1367 = vst.msk [vmem:[%s5 + $0xe8] sm:$0xff] %vm1337, %v1239
    %1368 = vst.msk [vmem:[%s5 + $0xf0] sm:$0xff] %vm1337, %v1244
    %1369 = vst.msk [vmem:[%s5 + $0xf8] sm:$0xff] %vm1337, %v1249
    %1370 = vst.msk [vmem:[%s5 + $0x100] sm:$0xff] %vm1337, %v1254
    %1371 = vst.msk [vmem:[%s5 + $0x108] sm:$0xff] %vm1337, %v1259
    %1372 = vst.msk [vmem:[%s5 + $0x110] sm:$0xff] %vm1337, %v1264
    %1373 = vst.msk [vmem:[%s5 + $0x118] sm:$0xff] %vm1337, %v1269
    %1374 = vst.msk [vmem:[%s5 + $0x120] sm:$0xff] %vm1337, %v1274
    %1375 = vst.msk [vmem:[%s5 + $0x128] sm:$0xff] %vm1337, %v1279
    %1376 = vst.msk [vmem:[%s5 + $0x130] sm:$0xff] %vm1337, %v1284
    %1377 = vst.msk [vmem:[%s5 + $0x138] sm:$0xff] %vm1337, %v1289
    %1378 = vst.msk [vmem:[%s5 + $0x140] sm:$0xff] %vm1337, %v1294
    %1379 = vst.msk [vmem:[%s5 + $0x148] sm:$0xff] %vm1337, %v1299
    %1380 = vst.msk [vmem:[%s5 + $0x150] sm:$0xff] %vm1337, %v1304
    %1381 = vst.msk [vmem:[%s5 + $0x158] sm:$0xff] %vm1337, %v1309
    %1382 = vst.msk [vmem:[%s5 + $0x160] sm:$0xff] %vm1337, %v1314
    %1383 = vst.msk [vmem:[%s5 + $0x168] sm:$0xff] %vm1337, %v1319
    %1384 = vst.msk [vmem:[%s5 + $0x170] sm:$0xff] %vm1337, %v1324
    %1385 = vst.msk [vmem:[%s5 + $0x178] sm:$0xff] %vm1337, %v1329
    %1386 = vst.msk [vmem:[%s5 + $0x180] sm:$0xff] %vm1337, %v1334
    // Predicated region
    $region38: #{swin_encoder_block_forward.5} parent=1 // pred_check
      _
    $region39: #{swin_encoder_block_forward.5} parent=1 // pred_check_branch
      %1388 = sbr.rel (0) target = $region41
    $region40: #{swin_encoder_block_forward.5} parent=1 // pred_region
      _
    $region41: #{swin_encoder_block_forward.5} parent=1 // pred_fallthru
      _
    // Predicated region
    $region42: #{swin_encoder_block_forward.5} parent=1 // pred_check
      _
    $region43: #{swin_encoder_block_forward.5} parent=1 // pred_check_branch
      %1390 = sbr.rel (0) target = $region45
    $region44: #{swin_encoder_block_forward.5} parent=1 // pred_region
      _
    $region45: #{swin_encoder_block_forward.5} parent=1 // pred_fallthru
      _
    %1391 = vsyncpa [#allocation3], 1
    %1392 = vsyncpa [#allocation5], 1
    %1393 = vsyncpa [#allocation8], 1

// kernel: swin_encoder_block_forward.6
$region0: #{swin_encoder_block_forward.6}
  #allocation0 [shape = 'u32[]', space=smem, size = 0x4, offset = 0x4, fixed_abs, tag = 'smem constant byte address 0x4 - core index']
  #allocation1 [shape = 'u32[144,128]{1,0:T(1,128)}', space=vmem, size = 0x12000, scoped, tag = 'internal scratch']
  %s0 = inlined_call_operand.vmem [shape: f32[4,49,49], index: 0, kind: input, shape index: {}]
  %s1 = inlined_call_operand.vmem [shape: f32[4,8,49,8], index: 1, kind: input, shape index: {}]
  %s2 = inlined_call_operand.vmem [shape: f32[4,8,49,8], index: 2, kind: input, shape index: {}]
  %s3 = inlined_call_operand.vmem [shape: f32[4,8,49,8], index: 3, kind: input, shape index: {}]
  %s4 = inlined_call_operand.vmem [shape: f32[4,8,49,8], index: 4, kind: output, shape index: {}]
  %s5 = sld [smem:[#allocation0]]
  $region49: #{swin_encoder_block_forward.6} parent=0
    _
  %s7 = ssub.s32 1, %s5
  %s8 = scalar_select 0, %s7, %s5
  loop: start=0, step=1, limit=6
  $region2: #{swin_encoder_block_forward.6} parent=0 // loop_pre_header
    _
  $region3: #{swin_encoder_block_forward.6} parent=0 // loop_header
    %s10 = sphi 0, %s14
    %p11 = scmp.ge.s32.totalorder %s10, 6
    %s17 = sphi 0, %s29
    %s18 = sphi 0, %s25
    %s19 = sphi 0, %s17
    %s20 = sphi 0, %s18
    %s21 = sphi 0, %s19
    %s22 = sphi 0, %s20
    %s32 = sphi 0, %s34
    %s35 = sphi 0, %s32
    %s36 = sphi 0, %s35
    %s52 = sphi 0, %s36
    %s60 = sphi 0, %s62
    %s63 = sphi 0, %s60
    %s64 = sphi 0, %s63
    %s80 = sphi 0, %s64
    %s88 = sphi 0, %s90
    %s91 = sphi 0, %s88
    %s92 = sphi 0, %s91
    %s108 = sphi 0, %s92
    %s116 = sphi 0, %s118
    %s119 = sphi 0, %s116
    %s120 = sphi 0, %s119
    %s136 = sphi 0, %s120
    %s144 = sphi 0, %s146
    %s147 = sphi 0, %s144
    %s148 = sphi 0, %s147
    %s164 = sphi 0, %s148
  $region4: #{swin_encoder_block_forward.6} parent=0 // loop_header_branch
    %13 = sbr.rel (%p11) target = $region8
  $region5: #{swin_encoder_block_forward.6} parent=0 // loop_body
    %s15 = ssub.s32 %s10, 1
    %s16 = ssub.s32 %s10, 2
    %s23 = sadd.s32 1, %s18
    %p24 = scmp.ge.s32.totalorder %s23, 1
    %s25 = scalar_select %p24, 0, %s23
    %s26 = sadd.s32 1, %s17
    %s27 = scalar_select %p24, %s26, %s17
    %p28 = scmp.ge.s32.totalorder %s27, 4
    %s29 = scalar_select %p28, 0, %s27
    %s30 = ssub.s32 %s17, %s29
    %p31 = scmp.eq.s32.totalorder %s30, 0
    %s33 = sadd.s32 %s32, 1
    %s34 = scalar_select %p31, %s32, %s33
    %p37 = pneg %p31
    %p38 = scmp.eq.s32.totalorder %s10, 3
    %p39 = por %p37, %p38
    %p40 = scmp.ne.s32.totalorder %s32, %s35
    %p41 = scmp.eq.s32.totalorder %s10, 0
    %p42 = por %p40, %p41
    %p43 = scmp.ne.s32.totalorder %s32, %s35
    %p44 = scmp.eq.s32.totalorder %s15, 3
    %p45 = por %p43, %p44
    %p46 = scmp.ne.s32.totalorder %s35, %s36
    %p47 = scmp.eq.s32.totalorder %s15, 0
    %p48 = por %p46, %p47
    %p49 = scmp.ne.s32.totalorder %s35, %s36
    %p50 = scmp.eq.s32.totalorder %s16, 3
    %p51 = por %p49, %p50
    %p53 = scmp.ne.s32.totalorder %s36, %s52
    %p54 = scmp.eq.s32.totalorder %s16, 0
    %p55 = por %p53, %p54
    %s56 = ssub.s32 %s17, %s29
    %s57 = ssub.s32 %s18, %s25
    %s58 = sor.u32 %s56, %s57
    %p59 = scmp.eq.s32.totalorder %s58, 0
    %s61 = sadd.s32 %s60, 1
    %s62 = scalar_select %p59, %s60, %s61
    %p65 = pneg %p59
    %p66 = scmp.eq.s32.totalorder %s10, 3
    %p67 = por %p65, %p66
    %p68 = scmp.ne.s32.totalorder %s60, %s63
    %p69 = scmp.eq.s32.totalorder %s10, 0
    %p70 = por %p68, %p69
    %p71 = scmp.ne.s32.totalorder %s60, %s63
    %p72 = scmp.eq.s32.totalorder %s15, 3
    %p73 = por %p71, %p72
    %p74 = scmp.ne.s32.totalorder %s63, %s64
    %p75 = scmp.eq.s32.totalorder %s15, 0
    %p76 = por %p74, %p75
    %p77 = scmp.ne.s32.totalorder %s63, %s64
    %p78 = scmp.eq.s32.totalorder %s16, 3
    %p79 = por %p77, %p78
    %p81 = scmp.ne.s32.totalorder %s64, %s80
    %p82 = scmp.eq.s32.totalorder %s16, 0
    %p83 = por %p81, %p82
    %s84 = ssub.s32 %s17, %s29
    %s85 = ssub.s32 %s18, %s25
    %s86 = sor.u32 %s84, %s85
    %p87 = scmp.eq.s32.totalorder %s86, 0
    %s89 = sadd.s32 %s88, 1
    %s90 = scalar_select %p87, %s88, %s89
    %p93 = pneg %p87
    %p94 = scmp.eq.s32.totalorder %s10, 3
    %p95 = por %p93, %p94
    %p96 = scmp.ne.s32.totalorder %s88, %s91
    %p97 = scmp.eq.s32.totalorder %s10, 0
    %p98 = por %p96, %p97
    %p99 = scmp.ne.s32.totalorder %s88, %s91
    %p100 = scmp.eq.s32.totalorder %s15, 3
    %p101 = por %p99, %p100
    %p102 = scmp.ne.s32.totalorder %s91, %s92
    %p103 = scmp.eq.s32.totalorder %s15, 0
    %p104 = por %p102, %p103
    %p105 = scmp.ne.s32.totalorder %s91, %s92
    %p106 = scmp.eq.s32.totalorder %s16, 3
    %p107 = por %p105, %p106
    %p109 = scmp.ne.s32.totalorder %s92, %s108
    %p110 = scmp.eq.s32.totalorder %s16, 0
    %p111 = por %p109, %p110
    %s112 = ssub.s32 %s17, %s29
    %s113 = ssub.s32 %s18, %s25
    %s114 = sor.u32 %s112, %s113
    %p115 = scmp.eq.s32.totalorder %s114, 0
    %s117 = sadd.s32 %s116, 1
    %s118 = scalar_select %p115, %s116, %s117
    %p121 = pneg %p115
    %p122 = scmp.eq.s32.totalorder %s10, 3
    %p123 = por %p121, %p122
    %p124 = scmp.ne.s32.totalorder %s116, %s119
    %p125 = scmp.eq.s32.totalorder %s10, 0
    %p126 = por %p124, %p125
    %p127 = scmp.ne.s32.totalorder %s116, %s119
    %p128 = scmp.eq.s32.totalorder %s15, 3
    %p129 = por %p127, %p128
    %p130 = scmp.ne.s32.totalorder %s119, %s120
    %p131 = scmp.eq.s32.totalorder %s15, 0
    %p132 = por %p130, %p131
    %p133 = scmp.ne.s32.totalorder %s119, %s120
    %p134 = scmp.eq.s32.totalorder %s16, 3
    %p135 = por %p133, %p134
    %p137 = scmp.ne.s32.totalorder %s120, %s136
    %p138 = scmp.eq.s32.totalorder %s16, 0
    %p139 = por %p137, %p138
    %s140 = ssub.s32 %s17, %s29
    %s141 = ssub.s32 %s18, %s25
    %s142 = sor.u32 %s140, %s141
    %p143 = scmp.eq.s32.totalorder %s142, 0
    %s145 = sadd.s32 %s144, 1
    %s146 = scalar_select %p143, %s144, %s145
    %p149 = pneg %p143
    %p150 = scmp.eq.s32.totalorder %s10, 3
    %p151 = por %p149, %p150
    %p152 = scmp.ne.s32.totalorder %s144, %s147
    %p153 = scmp.eq.s32.totalorder %s10, 0
    %p154 = por %p152, %p153
    %p155 = scmp.ne.s32.totalorder %s144, %s147
    %p156 = scmp.eq.s32.totalorder %s15, 3
    %p157 = por %p155, %p156
    %p158 = scmp.ne.s32.totalorder %s147, %s148
    %p159 = scmp.eq.s32.totalorder %s15, 0
    %p160 = por %p158, %p159
    %p161 = scmp.ne.s32.totalorder %s147, %s148
    %p162 = scmp.eq.s32.totalorder %s16, 3
    %p163 = por %p161, %p162
    %p165 = scmp.ne.s32.totalorder %s148, %s164
    %p166 = scmp.eq.s32.totalorder %s16, 0
    %p167 = por %p165, %p166
    %p168 = scmp.le.s32.totalorder 1, %s10
    %p169 = scmp.lt.s32.totalorder %s10, 5
    %p170 = pnand %p168, %p169
    %p171 = pneg %p170
    // Predicated region
    $region9: #{swin_encoder_block_forward.6} parent=5 // pred_check
      _
    $region10: #{swin_encoder_block_forward.6} parent=5 // pred_check_branch
      %173 = sbr.rel (%p170) target = $region12
    $region11: #{swin_encoder_block_forward.6} parent=5 // pred_region
      %s174 = ssub.s32 %s10, 1
    $region12: #{swin_encoder_block_forward.6} parent=5 // pred_fallthru
      _
    %p175 = scmp.lt.s32.totalorder %s10, 4
    // Predicated region
    $region13: #{swin_encoder_block_forward.6} parent=5 // pred_check
      %p176 = pneg %p175
    $region14: #{swin_encoder_block_forward.6} parent=5 // pred_check_branch
      %178 = sbr.rel (%p176) target = $region16
    $region15: #{swin_encoder_block_forward.6} parent=5 // pred_region
      // Predicated region
      $region17: #{swin_encoder_block_forward.6} parent=15 // pred_check
        %p179 = pneg %p42
      $region18: #{swin_encoder_block_forward.6} parent=15 // pred_check_branch
        %181 = sbr.rel (%p179) target = $region20
      $region19: #{swin_encoder_block_forward.6} parent=15 // pred_region
        %p182 = scmp.lt.s32.totalorder %s17, 3
        %s183 = scalar_select %p182, %s17, 3
        %s184 = smul.addr %s183, 7
        %s185 = smul.addr %s184, 8
        %s186 = scalar_lea.vmem %s0, %s185
      $region20: #{swin_encoder_block_forward.6} parent=15 // pred_fallthru
        _
      // Predicated region
      $region21: #{swin_encoder_block_forward.6} parent=15 // pred_check
        %p187 = pneg %p70
      $region22: #{swin_encoder_block_forward.6} parent=15 // pred_check_branch
        %189 = sbr.rel (%p187) target = $region24
      $region23: #{swin_encoder_block_forward.6} parent=15 // pred_region
        %s190 = smul.u32 8, %s18
        %p191 = scmp.lt.s32.totalorder %s17, 3
        %s192 = scalar_select %p191, %s17, 3
        %p193 = scmp.lt.s32.totalorder %s190, 7
        %s194 = scalar_select %p193, %s190, 7
        %s195 = smul.addr %s194, 7
        %s196 = smul.addr %s192, 56
        %s197 = sadd.s32 %s195, %s196
        %s198 = smul.addr %s197, 8
        %s199 = scalar_lea.vmem %s1, %s198
        %s200 = smul.u32 8, %s18
      $region24: #{swin_encoder_block_forward.6} parent=15 // pred_fallthru
        _
      // Predicated region
      $region25: #{swin_encoder_block_forward.6} parent=15 // pred_check
        %p201 = pneg %p98
      $region26: #{swin_encoder_block_forward.6} parent=15 // pred_check_branch
        %203 = sbr.rel (%p201) target = $region28
      $region27: #{swin_encoder_block_forward.6} parent=15 // pred_region
        %s204 = smul.u32 8, %s18
        %p205 = scmp.lt.s32.totalorder %s17, 3
        %s206 = scalar_select %p205, %s17, 3
        %p207 = scmp.lt.s32.totalorder %s204, 7
        %s208 = scalar_select %p207, %s204, 7
        %s209 = smul.addr %s208, 7
        %s210 = smul.addr %s206, 56
        %s211 = sadd.s32 %s209, %s210
        %s212 = smul.addr %s211, 8
        %s213 = scalar_lea.vmem %s2, %s212
        %s214 = smul.u32 8, %s18
      $region28: #{swin_encoder_block_forward.6} parent=15 // pred_fallthru
        _
      // Predicated region
      $region29: #{swin_encoder_block_forward.6} parent=15 // pred_check
        %p215 = pneg %p126
      $region30: #{swin_encoder_block_forward.6} parent=15 // pred_check_branch
        %217 = sbr.rel (%p215) target = $region32
      $region31: #{swin_encoder_block_forward.6} parent=15 // pred_region
        %s218 = smul.u32 8, %s18
        %p219 = scmp.lt.s32.totalorder %s17, 3
        %s220 = scalar_select %p219, %s17, 3
        %p221 = scmp.lt.s32.totalorder %s218, 7
        %s222 = scalar_select %p221, %s218, 7
        %s223 = smul.addr %s222, 7
        %s224 = smul.addr %s220, 56
        %s225 = sadd.s32 %s223, %s224
        %s226 = smul.addr %s225, 8
        %s227 = scalar_lea.vmem %s3, %s226
        %s228 = smul.u32 8, %s18
      $region32: #{swin_encoder_block_forward.6} parent=15 // pred_fallthru
        _
    $region16: #{swin_encoder_block_forward.6} parent=5 // pred_fallthru
      _
    %p229 = scmp.le.s32.totalorder 1, %s10
    %p230 = scmp.lt.s32.totalorder %s10, 5
    %p231 = pnand %p229, %p230
    %p232 = pneg %p231
    // Predicated region
    $region33: #{swin_encoder_block_forward.6} parent=5 // pred_check
      _
    $region34: #{swin_encoder_block_forward.6} parent=5 // pred_check_branch
      %234 = sbr.rel (%p231) target = $region36
    $region35: #{swin_encoder_block_forward.6} parent=5 // pred_region
      %s235 = ssub.s32 %s10, 1
      %p236 = scmp.lt.s32.totalorder %s19, 3
      %s237 = scalar_select %p236, %s19, 3
      %s238 = smul.addr %s237, 7
      %s239 = smul.addr %s238, 8
      %s240 = scalar_lea.vmem %s0, %s239
      %p241 = pneg %p48
      %p242 = pneg %p45
      %s243 = smul.u32 8, %s20
      %p244 = scmp.lt.s32.totalorder %s19, 3
      %s245 = scalar_select %p244, %s19, 3
      %p246 = scmp.lt.s32.totalorder %s243, 7
      %s247 = scalar_select %p246, %s243, 7
      %s248 = smul.addr %s247, 7
      %s249 = smul.addr %s245, 56
      %s250 = sadd.s32 %s248, %s249
      %s251 = smul.addr %s250, 8
      %s252 = scalar_lea.vmem %s1, %s251
      %p253 = pneg %p76
      %p254 = pneg %p73
      %s255 = smul.u32 8, %s20
      %p256 = scmp.lt.s32.totalorder %s19, 3
      %s257 = scalar_select %p256, %s19, 3
      %p258 = scmp.lt.s32.totalorder %s255, 7
      %s259 = scalar_select %p258, %s255, 7
      %s260 = smul.addr %s259, 7
      %s261 = smul.addr %s257, 56
      %s262 = sadd.s32 %s260, %s261
      %s263 = smul.addr %s262, 8
      %s264 = scalar_lea.vmem %s2, %s263
      %p265 = pneg %p104
      %p266 = pneg %p101
      %s267 = smul.u32 8, %s20
      %p268 = scmp.lt.s32.totalorder %s19, 3
      %s269 = scalar_select %p268, %s19, 3
      %p270 = scmp.lt.s32.totalorder %s267, 7
      %s271 = scalar_select %p270, %s267, 7
      %s272 = smul.addr %s271, 7
      %s273 = smul.addr %s269, 56
      %s274 = sadd.s32 %s272, %s273
      %s275 = smul.addr %s274, 8
      %s276 = scalar_lea.vmem %s3, %s275
      %p277 = pneg %p132
      %p278 = pneg %p129
      %p279 = pneg %p160
      %p280 = pneg %p157
      %s281 = smul.u32 8, %s20
      %p282 = scmp.lt.s32.totalorder %s19, 3
      %s283 = scalar_select %p282, %s19, 3
      %p284 = scmp.lt.s32.totalorder %s281, 7
      %s285 = scalar_select %p284, %s281, 7
      %s286 = smul.addr %s285, 7
      %s287 = smul.addr %s283, 56
      %s288 = sadd.s32 %s286, %s287
      %s289 = smul.addr %s288, 8
      %s290 = scalar_lea.vmem %s4, %s289
      %p291 = scmp.lt.s32.totalorder %s19, 3
      %s292 = scalar_select %p291, %s19, 3
      %s293 = smul.addr %s292, 7
      %s294 = smul.addr %s293, 8
      %s295 = scalar_lea.vmem %s0, %s294
      %s296 = smul.u32 8, %s20
      %p297 = scmp.lt.s32.totalorder %s19, 3
      %s298 = scalar_select %p297, %s19, 3
      %p299 = scmp.lt.s32.totalorder %s296, 7
      %s300 = scalar_select %p299, %s296, 7
      %s301 = smul.addr %s300, 7
      %s302 = smul.addr %s298, 56
      %s303 = sadd.s32 %s301, %s302
      %s304 = smul.addr %s303, 8
      %s305 = scalar_lea.vmem %s1, %s304
      %s306 = smul.u32 8, %s20
      %s307 = smul.u32 8, %s20
      %p308 = scmp.lt.s32.totalorder %s19, 3
      %s309 = scalar_select %p308, %s19, 3
      %p310 = scmp.lt.s32.totalorder %s307, 7
      %s311 = scalar_select %p310, %s307, 7
      %s312 = smul.addr %s311, 7
      %s313 = smul.addr %s309, 56
      %s314 = sadd.s32 %s312, %s313
      %s315 = smul.addr %s314, 8
      %s316 = scalar_lea.vmem %s2, %s315
      %s317 = smul.u32 8, %s20
      %s318 = smul.u32 8, %s20
      %p319 = scmp.lt.s32.totalorder %s19, 3
      %s320 = scalar_select %p319, %s19, 3
      %p321 = scmp.lt.s32.totalorder %s318, 7
      %s322 = scalar_select %p321, %s318, 7
      %s323 = smul.addr %s322, 7
      %s324 = smul.addr %s320, 56
      %s325 = sadd.s32 %s323, %s324
      %s326 = smul.addr %s325, 8
      %s327 = scalar_lea.vmem %s3, %s326
      %s328 = smul.u32 8, %s20
      %s329 = smul.u32 8, %s20
      %p330 = scmp.lt.s32.totalorder %s19, 3
      %s331 = scalar_select %p330, %s19, 3
      %p332 = scmp.lt.s32.totalorder %s329, 7
      %s333 = scalar_select %p332, %s329, 7
      %s334 = smul.addr %s333, 7
      %s335 = smul.addr %s331, 56
      %s336 = sadd.s32 %s334, %s335
      %s337 = smul.addr %s336, 8
      %s338 = scalar_lea.vmem %s4, %s337
      %s339 = smul.u32 8, %s20
      %v340 = vld [vmem:[%s305] sm:$0xff]
      %v341 = vld [vmem:[%s305 + $0x8] sm:$0xff]
      %v342 = vld [vmem:[%s305 + $0x10] sm:$0xff]
      %v343 = vld [vmem:[%s305 + $0x18] sm:$0xff]
      %v344 = vld [vmem:[%s305 + $0x20] sm:$0xff]
      %v345 = vld [vmem:[%s305 + $0x28] sm:$0xff]
      %v346 = vld [vmem:[%s305 + $0x30] sm:$0x1]
      %v347 = vld [vmem:[%s305 + $0x38] sm:$0xff]
      %v348 = vld [vmem:[%s305 + $0x40] sm:$0xff]
      %v349 = vld [vmem:[%s305 + $0x48] sm:$0xff]
      %v350 = vld [vmem:[%s305 + $0x50] sm:$0xff]
      %v351 = vld [vmem:[%s305 + $0x58] sm:$0xff]
      %v352 = vld [vmem:[%s305 + $0x60] sm:$0xff]
      %v353 = vld [vmem:[%s305 + $0x68] sm:$0x1]
      %v354 = vld [vmem:[%s305 + $0x70] sm:$0xff]
      %v355 = vld [vmem:[%s305 + $0x78] sm:$0xff]
      %v356 = vld [vmem:[%s305 + $0x80] sm:$0xff]
      %v357 = vld [vmem:[%s305 + $0x88] sm:$0xff]
      %v358 = vld [vmem:[%s305 + $0x90] sm:$0xff]
      %v359 = vld [vmem:[%s305 + $0x98] sm:$0xff]
      %v360 = vld [vmem:[%s305 + $0xa0] sm:$0x1]
      %v361 = vld [vmem:[%s305 + $0xa8] sm:$0xff]
      %v362 = vld [vmem:[%s305 + $0xb0] sm:$0xff]
      %v363 = vld [vmem:[%s305 + $0xb8] sm:$0xff]
      %v364 = vld [vmem:[%s305 + $0xc0] sm:$0xff]
      %v365 = vld [vmem:[%s305 + $0xc8] sm:$0xff]
      %v366 = vld [vmem:[%s305 + $0xd0] sm:$0xff]
      %v367 = vld [vmem:[%s305 + $0xd8] sm:$0x1]
      %v368 = vld [vmem:[%s305 + $0xe0] sm:$0xff]
      %v369 = vld [vmem:[%s305 + $0xe8] sm:$0xff]
      %v370 = vld [vmem:[%s305 + $0xf0] sm:$0xff]
      %v371 = vld [vmem:[%s305 + $0xf8] sm:$0xff]
      %v372 = vld [vmem:[%s305 + $0x100] sm:$0xff]
      %v373 = vld [vmem:[%s305 + $0x108] sm:$0xff]
      %v374 = vld [vmem:[%s305 + $0x110] sm:$0x1]
      %v375 = vld [vmem:[%s305 + $0x118] sm:$0xff]
      %v376 = vld [vmem:[%s305 + $0x120] sm:$0xff]
      %v377 = vld [vmem:[%s305 + $0x128] sm:$0xff]
      %v378 = vld [vmem:[%s305 + $0x130] sm:$0xff]
      %v379 = vld [vmem:[%s305 + $0x138] sm:$0xff]
      %v380 = vld [vmem:[%s305 + $0x140] sm:$0xff]
      %v381 = vld [vmem:[%s305 + $0x148] sm:$0x1]
      %v382 = vld [vmem:[%s305 + $0x150] sm:$0xff]
      %v383 = vld [vmem:[%s305 + $0x158] sm:$0xff]
      %v384 = vld [vmem:[%s305 + $0x160] sm:$0xff]
      %v385 = vld [vmem:[%s305 + $0x168] sm:$0xff]
      %v386 = vld [vmem:[%s305 + $0x170] sm:$0xff]
      %v387 = vld [vmem:[%s305 + $0x178] sm:$0xff]
      %v388 = vld [vmem:[%s305 + $0x180] sm:$0x1]
      %v389 = vld [vmem:[%s305 + $0x188] sm:$0xff]
      %v390 = vld [vmem:[%s305 + $0x190] sm:$0xff]
      %v391 = vld [vmem:[%s305 + $0x198] sm:$0xff]
      %v392 = vld [vmem:[%s305 + $0x1a0] sm:$0xff]
      %v393 = vld [vmem:[%s305 + $0x1a8] sm:$0xff]
      %v394 = vld [vmem:[%s305 + $0x1b0] sm:$0xff]
      %v395 = vld [vmem:[%s305 + $0x1b8] sm:$0x1]
      %v396 = vld [vmem:[%s316] sm:$0xff]
      %v397 = vld [vmem:[%s316 + $0x8] sm:$0xff]
      %v398 = vld [vmem:[%s316 + $0x10] sm:$0xff]
      %v399 = vld [vmem:[%s316 + $0x18] sm:$0xff]
      %v400 = vld [vmem:[%s316 + $0x20] sm:$0xff]
      %v401 = vld [vmem:[%s316 + $0x28] sm:$0xff]
      %v402 = vld [vmem:[%s316 + $0x30] sm:$0x1]
      %v403 = vld [vmem:[%s316 + $0x38] sm:$0xff]
      %v404 = vld [vmem:[%s316 + $0x40] sm:$0xff]
      %v405 = vld [vmem:[%s316 + $0x48] sm:$0xff]
      %v406 = vld [vmem:[%s316 + $0x50] sm:$0xff]
      %v407 = vld [vmem:[%s316 + $0x58] sm:$0xff]
      %v408 = vld [vmem:[%s316 + $0x60] sm:$0xff]
      %v409 = vld [vmem:[%s316 + $0x68] sm:$0x1]
      %v410 = vld [vmem:[%s316 + $0x70] sm:$0xff]
      %v411 = vld [vmem:[%s316 + $0x78] sm:$0xff]
      %v412 = vld [vmem:[%s316 + $0x80] sm:$0xff]
      %v413 = vld [vmem:[%s316 + $0x88] sm:$0xff]
      %v414 = vld [vmem:[%s316 + $0x90] sm:$0xff]
      %v415 = vld [vmem:[%s316 + $0x98] sm:$0xff]
      %v416 = vld [vmem:[%s316 + $0xa0] sm:$0x1]
      %v417 = vld [vmem:[%s316 + $0xa8] sm:$0xff]
      %v418 = vld [vmem:[%s316 + $0xb0] sm:$0xff]
      %v419 = vld [vmem:[%s316 + $0xb8] sm:$0xff]
      %v420 = vld [vmem:[%s316 + $0xc0] sm:$0xff]
      %v421 = vld [vmem:[%s316 + $0xc8] sm:$0xff]
      %v422 = vld [vmem:[%s316 + $0xd0] sm:$0xff]
      %v423 = vld [vmem:[%s316 + $0xd8] sm:$0x1]
      %v424 = vld [vmem:[%s316 + $0xe0] sm:$0xff]
      %v425 = vld [vmem:[%s316 + $0xe8] sm:$0xff]
      %v426 = vld [vmem:[%s316 + $0xf0] sm:$0xff]
      %v427 = vld [vmem:[%s316 + $0xf8] sm:$0xff]
      %v428 = vld [vmem:[%s316 + $0x100] sm:$0xff]
      %v429 = vld [vmem:[%s316 + $0x108] sm:$0xff]
      %v430 = vld [vmem:[%s316 + $0x110] sm:$0x1]
      %v431 = vld [vmem:[%s316 + $0x118] sm:$0xff]
      %v432 = vld [vmem:[%s316 + $0x120] sm:$0xff]
      %v433 = vld [vmem:[%s316 + $0x128] sm:$0xff]
      %v434 = vld [vmem:[%s316 + $0x130] sm:$0xff]
      %v435 = vld [vmem:[%s316 + $0x138] sm:$0xff]
      %v436 = vld [vmem:[%s316 + $0x140] sm:$0xff]
      %v437 = vld [vmem:[%s316 + $0x148] sm:$0x1]
      %v438 = vld [vmem:[%s316 + $0x150] sm:$0xff]
      %v439 = vld [vmem:[%s316 + $0x158] sm:$0xff]
      %v440 = vld [vmem:[%s316 + $0x160] sm:$0xff]
      %v441 = vld [vmem:[%s316 + $0x168] sm:$0xff]
      %v442 = vld [vmem:[%s316 + $0x170] sm:$0xff]
      %v443 = vld [vmem:[%s316 + $0x178] sm:$0xff]
      %v444 = vld [vmem:[%s316 + $0x180] sm:$0x1]
      %v445 = vld [vmem:[%s316 + $0x188] sm:$0xff]
      %v446 = vld [vmem:[%s316 + $0x190] sm:$0xff]
      %v447 = vld [vmem:[%s316 + $0x198] sm:$0xff]
      %v448 = vld [vmem:[%s316 + $0x1a0] sm:$0xff]
      %v449 = vld [vmem:[%s316 + $0x1a8] sm:$0xff]
      %v450 = vld [vmem:[%s316 + $0x1b0] sm:$0xff]
      %v451 = vld [vmem:[%s316 + $0x1b8] sm:$0x1]
      %v452 = vld [vmem:[%s327] sm:$0xff]
      %v453 = vld [vmem:[%s327 + $0x8] sm:$0xff]
      %v454 = vld [vmem:[%s327 + $0x10] sm:$0xff]
      %v455 = vld [vmem:[%s327 + $0x18] sm:$0xff]
      %v456 = vld [vmem:[%s327 + $0x20] sm:$0xff]
      %v457 = vld [vmem:[%s327 + $0x28] sm:$0xff]
      %v458 = vld [vmem:[%s327 + $0x30] sm:$0x1]
      %v459 = vld [vmem:[%s327 + $0x38] sm:$0xff]
      %v460 = vld [vmem:[%s327 + $0x40] sm:$0xff]
      %v461 = vld [vmem:[%s327 + $0x48] sm:$0xff]
      %v462 = vld [vmem:[%s327 + $0x50] sm:$0xff]
      %v463 = vld [vmem:[%s327 + $0x58] sm:$0xff]
      %v464 = vld [vmem:[%s327 + $0x60] sm:$0xff]
      %v465 = vld [vmem:[%s327 + $0x68] sm:$0x1]
      %v466 = vld [vmem:[%s327 + $0x70] sm:$0xff]
      %v467 = vld [vmem:[%s327 + $0x78] sm:$0xff]
      %v468 = vld [vmem:[%s327 + $0x80] sm:$0xff]
      %v469 = vld [vmem:[%s327 + $0x88] sm:$0xff]
      %v470 = vld [vmem:[%s327 + $0x90] sm:$0xff]
      %v471 = vld [vmem:[%s327 + $0x98] sm:$0xff]
      %v472 = vld [vmem:[%s327 + $0xa0] sm:$0x1]
      %v473 = vld [vmem:[%s327 + $0xa8] sm:$0xff]
      %v474 = vld [vmem:[%s327 + $0xb0] sm:$0xff]
      %v475 = vld [vmem:[%s327 + $0xb8] sm:$0xff]
      %v476 = vld [vmem:[%s327 + $0xc0] sm:$0xff]
      %v477 = vld [vmem:[%s327 + $0xc8] sm:$0xff]
      %v478 = vld [vmem:[%s327 + $0xd0] sm:$0xff]
      %v479 = vld [vmem:[%s327 + $0xd8] sm:$0x1]
      %v480 = vld [vmem:[%s327 + $0xe0] sm:$0xff]
      %v481 = vld [vmem:[%s327 + $0xe8] sm:$0xff]
      %v482 = vld [vmem:[%s327 + $0xf0] sm:$0xff]
      %v483 = vld [vmem:[%s327 + $0xf8] sm:$0xff]
      %v484 = vld [vmem:[%s327 + $0x100] sm:$0xff]
      %v485 = vld [vmem:[%s327 + $0x108] sm:$0xff]
      %v486 = vld [vmem:[%s327 + $0x110] sm:$0x1]
      %v487 = vld [vmem:[%s327 + $0x118] sm:$0xff]
      %v488 = vld [vmem:[%s327 + $0x120] sm:$0xff]
      %v489 = vld [vmem:[%s327 + $0x128] sm:$0xff]
      %v490 = vld [vmem:[%s327 + $0x130] sm:$0xff]
      %v491 = vld [vmem:[%s327 + $0x138] sm:$0xff]
      %v492 = vld [vmem:[%s327 + $0x140] sm:$0xff]
      %v493 = vld [vmem:[%s327 + $0x148] sm:$0x1]
      %v494 = vld [vmem:[%s327 + $0x150] sm:$0xff]
      %v495 = vld [vmem:[%s327 + $0x158] sm:$0xff]
      %v496 = vld [vmem:[%s327 + $0x160] sm:$0xff]
      %v497 = vld [vmem:[%s327 + $0x168] sm:$0xff]
      %v498 = vld [vmem:[%s327 + $0x170] sm:$0xff]
      %v499 = vld [vmem:[%s327 + $0x178] sm:$0xff]
      %v500 = vld [vmem:[%s327 + $0x180] sm:$0x1]
      %v501 = vld [vmem:[%s327 + $0x188] sm:$0xff]
      %v502 = vld [vmem:[%s327 + $0x190] sm:$0xff]
      %v503 = vld [vmem:[%s327 + $0x198] sm:$0xff]
      %v504 = vld [vmem:[%s327 + $0x1a0] sm:$0xff]
      %v505 = vld [vmem:[%s327 + $0x1a8] sm:$0xff]
      %v506 = vld [vmem:[%s327 + $0x1b0] sm:$0xff]
      %v507 = vld [vmem:[%s327 + $0x1b8] sm:$0x1]
      %vm508 = vcmask 64512
      %v510 = vsel %vm508, %v340, 0
      %v513 = vsel %vm508, %v341, 0
      %v516 = vsel %vm508, %v342, 0
      %v519 = vsel %vm508, %v343, 0
      %v522 = vsel %vm508, %v344, 0
      %v525 = vsel %vm508, %v345, 0
      %v528 = vsel %vm508, %v346, 0
      %v531 = vsel %vm508, %v396, 0
      %v534 = vsel %vm508, %v397, 0
      %v537 = vsel %vm508, %v398, 0
      %v540 = vsel %vm508, %v399, 0
      %v543 = vsel %vm508, %v400, 0
      %v546 = vsel %vm508, %v401, 0
      %v549 = vsel %vm508, %v402, 0
      %551 = vmatprep.subr.mxu0 0.0
      %552 = vmatpush1.xpose.msra.mxu0 %v531
      %553 = vmatprep.subr.mxu0 0.0
      %554 = vmatpush1.xpose.msra.mxu0 %v534
      %555 = vmatprep.subr.mxu0 0.0
      %556 = vmatpush1.xpose.msra.mxu0 %v537
      %557 = vmatprep.subr.mxu0 0.0
      %558 = vmatpush1.xpose.msra.mxu0 %v540
      %559 = vmatprep.subr.mxu0 0.0
      %560 = vmatpush1.xpose.msra.mxu0 %v543
      %561 = vmatprep.subr.mxu0 0.0
      %562 = vmatpush1.xpose.msra.mxu0 %v546
      %563 = vmatprep.subr.mxu0 0.0
      %564 = vmatpush1.xpose.msra.mxu0 %v549
      %565 = vmatprep.subr.mxu0 0.0
      %566 = vmatpush1.xpose.msra.mxu0 0.0
      %567 = vmatprep.subr.mxu0 0.0
      %568 = vmatpush1.xpose.msra.mxu0 0.0
      %569 = vmatprep.subr.mxu0 0.0
      %570 = vmatpush1.xpose.msra.mxu0 0.0
      %571 = vmatprep.subr.mxu0 0.0
      %572 = vmatpush1.xpose.msra.mxu0 0.0
      %573 = vmatprep.subr.mxu0 0.0
      %574 = vmatpush1.xpose.msra.mxu0 0.0
      %575 = vmatprep.subr.mxu0 0.0
      %576 = vmatpush1.xpose.msra.mxu0 0.0
      %577 = vmatprep.subr.mxu0 0.0
      %578 = vmatpush1.xpose.msra.mxu0 0.0
      %579 = vmatprep.subr.mxu0 0.0
      %580 = vmatpush1.xpose.msra.mxu0 0.0
      %581 = vmatprep.subr.mxu0 0.0
      %582 = vmatpush1.xpose.msra.mxu0 0.0
      %583 = vmatprep.subr.mxu0 0.0
      %584 = vmatpush1.xpose.msra.mxu0 0.0
      %585 = vmatprep.subr.mxu0 0.0
      %586 = vmatpush1.xpose.msra.mxu0 0.0
      %587 = vmatprep.subr.mxu0 0.0
      %588 = vmatpush1.xpose.msra.mxu0 0.0
      %589 = vmatprep.subr.mxu0 0.0
      %590 = vmatpush1.xpose.msra.mxu0 0.0
      %591 = vmatprep.subr.mxu0 0.0
      %592 = vmatpush1.xpose.msra.mxu0 0.0
      %593 = vmatprep.subr.mxu0 0.0
      %594 = vmatpush1.xpose.msra.mxu0 0.0
      %595 = vmatprep.subr.mxu0 0.0
      %596 = vmatpush1.xpose.msra.mxu0 0.0
      %597 = vmatprep.subr.mxu0 0.0
      %598 = vmatpush1.xpose.msra.mxu0 0.0
      %599 = vmatprep.subr.mxu0 0.0
      %600 = vmatpush1.xpose.msra.mxu0 0.0
      %601 = vmatprep.subr.mxu0 0.0
      %602 = vmatpush1.xpose.msra.mxu0 0.0
      %603 = vmatprep.subr.mxu0 0.0
      %604 = vmatpush1.xpose.msra.mxu0 0.0
      %605 = vmatprep.subr.mxu0 0.0
      %606 = vmatpush1.xpose.msra.mxu0 0.0
      %607 = vmatprep.subr.mxu0 0.0
      %608 = vmatpush1.xpose.msra.mxu0 0.0
      %609 = vmatprep.subr.mxu0 0.0
      %610 = vmatpush1.xpose.msra.mxu0 0.0
      %611 = vmatprep.subr.mxu0 0.0
      %612 = vmatpush1.xpose.msra.mxu0 0.0
      %613 = vmatprep.subr.mxu0 0.0
      %614 = vmatpush1.xpose.msra.mxu0 0.0
      %615 = vmatprep.mubr.f32.mxu0 0.0
      %616 = vmatmul.mubr.f32.gmra.mrb[0].mxu0 %v510
      %v617 = vpop.f32.mrb[0].mxu0
      %v618 = vadd.f32 0.0, %v617
      %v619 = vpop.f32.mrb[0].mxu0
      %620 = vmatprep.mubr.f32.mxu0 0.0
      %621 = vmatmul.mubr.f32.gmra.mrb[0].mxu0 %v513
      %v622 = vpop.f32.mrb[0].mxu0
      %v623 = vadd.f32 0.0, %v622
      %v624 = vpop.f32.mrb[0].mxu0
      %625 = vmatprep.mubr.f32.mxu0 0.0
      %626 = vmatmul.mubr.f32.gmra.mrb[0].mxu0 %v516
      %v627 = vpop.f32.mrb[0].mxu0
      %v628 = vadd.f32 0.0, %v627
      %v629 = vpop.f32.mrb[0].mxu0
      %630 = vmatprep.mubr.f32.mxu0 0.0
      %631 = vmatmul.mubr.f32.gmra.mrb[0].mxu0 %v519
      %v632 = vpop.f32.mrb[0].mxu0
      %v633 = vadd.f32 0.0, %v632
      %v634 = vpop.f32.mrb[0].mxu0
      %635 = vmatprep.mubr.f32.mxu0 0.0
      %636 = vmatmul.mubr.f32.gmra.mrb[0].mxu0 %v522
      %v637 = vpop.f32.mrb[0].mxu0
      %v638 = vadd.f32 0.0, %v637
      %v639 = vpop.f32.mrb[0].mxu0
      %640 = vmatprep.mubr.f32.mxu0 0.0
      %641 = vmatmul.mubr.f32.gmra.mrb[0].mxu0 %v525
      %v642 = vpop.f32.mrb[0].mxu0
      %v643 = vadd.f32 0.0, %v642
      %v644 = vpop.f32.mrb[0].mxu0
      %645 = vmatprep.mubr.f32.mxu0 0.0
      %646 = vmatmul.mubr.f32.gmra.mrb[0].mxu0 %v528
      %v647 = vpop.f32.mrb[0].mxu0
      %v648 = vadd.f32 0.0, %v647
      %v649 = vpop.f32.mrb[0].mxu0
      %650 = vdwg.mxu0
      %v652 = vsel %vm508, %v347, 0
      %v655 = vsel %vm508, %v348, 0
      %v658 = vsel %vm508, %v349, 0
      %v661 = vsel %vm508, %v350, 0
      %v664 = vsel %vm508, %v351, 0
      %v667 = vsel %vm508, %v352, 0
      %v670 = vsel %vm508, %v353, 0
      %v673 = vsel %vm508, %v403, 0
      %v676 = vsel %vm508, %v404, 0
      %v679 = vsel %vm508, %v405, 0
      %v682 = vsel %vm508, %v406, 0
      %v685 = vsel %vm508, %v407, 0
      %v688 = vsel %vm508, %v408, 0
      %v691 = vsel %vm508, %v409, 0
      %693 = vmatprep.subr.mxu0 0.0
      %694 = vmatpush1.xpose.msra.mxu0 %v673
      %695 = vmatprep.subr.mxu0 0.0
      %696 = vmatpush1.xpose.msra.mxu0 %v676
      %697 = vmatprep.subr.mxu0 0.0
      %698 = vmatpush1.xpose.msra.mxu0 %v679
      %699 = vmatprep.subr.mxu0 0.0
      %700 = vmatpush1.xpose.msra.mxu0 %v682
      %701 = vmatprep.subr.mxu0 0.0
      %702 = vmatpush1.xpose.msra.mxu0 %v685
      %703 = vmatprep.subr.mxu0 0.0
      %704 = vmatpush1.xpose.msra.mxu0 %v688
      %705 = vmatprep.subr.mxu0 0.0
      %706 = vmatpush1.xpose.msra.mxu0 %v691
      %707 = vmatprep.subr.mxu0 0.0
      %708 = vmatpush1.xpose.msra.mxu0 0.0
      %709 = vmatprep.subr.mxu0 0.0
      %710 = vmatpush1.xpose.msra.mxu0 0.0
      %711 = vmatprep.subr.mxu0 0.0
      %712 = vmatpush1.xpose.msra.mxu0 0.0
      %713 = vmatprep.subr.mxu0 0.0
      %714 = vmatpush1.xpose.msra.mxu0 0.0
      %715 = vmatprep.subr.mxu0 0.0
      %716 = vmatpush1.xpose.msra.mxu0 0.0
      %717 = vmatprep.subr.mxu0 0.0
      %718 = vmatpush1.xpose.msra.mxu0 0.0
      %719 = vmatprep.subr.mxu0 0.0
      %720 = vmatpush1.xpose.msra.mxu0 0.0
      %721 = vmatprep.subr.mxu0 0.0
      %722 = vmatpush1.xpose.msra.mxu0 0.0
      %723 = vmatprep.subr.mxu0 0.0
      %724 = vmatpush1.xpose.msra.mxu0 0.0
      %725 = vmatprep.subr.mxu0 0.0
      %726 = vmatpush1.xpose.msra.mxu0 0.0
      %727 = vmatprep.subr.mxu0 0.0
      %728 = vmatpush1.xpose.msra.mxu0 0.0
      %729 = vmatprep.subr.mxu0 0.0
      %730 = vmatpush1.xpose.msra.mxu0 0.0
      %731 = vmatprep.subr.mxu0 0.0
      %732 = vmatpush1.xpose.msra.mxu0 0.0
      %733 = vmatprep.subr.mxu0 0.0
      %734 = vmatpush1.xpose.msra.mxu0 0.0
      %735 = vmatprep.subr.mxu0 0.0
      %736 = vmatpush1.xpose.msra.mxu0 0.0
      %737 = vmatprep.subr.mxu0 0.0
      %738 = vmatpush1.xpose.msra.mxu0 0.0
      %739 = vmatprep.subr.mxu0 0.0
      %740 = vmatpush1.xpose.msra.mxu0 0.0
      %741 = vmatprep.subr.mxu0 0.0
      %742 = vmatpush1.xpose.msra.mxu0 0.0
      %743 = vmatprep.subr.mxu0 0.0
      %744 = vmatpush1.xpose.msra.mxu0 0.0
      %745 = vmatprep.subr.mxu0 0.0
      %746 = vmatpush1.xpose.msra.mxu0 0.0
      %747 = vmatprep.subr.mxu0 0.0
      %748 = vmatpush1.xpose.msra.mxu0 0.0
      %749 = vmatprep.subr.mxu0 0.0
      %750 = vmatpush1.xpose.msra.mxu0 0.0
      %751 = vmatprep.subr.mxu0 0.0
      %752 = vmatpush1.xpose.msra.mxu0 0.0
      %753 = vmatprep.subr.mxu0 0.0
      %754 = vmatpush1.xpose.msra.mxu0 0.0
      %755 = vmatprep.subr.mxu0 0.0
      %756 = vmatpush1.xpose.msra.mxu0 0.0
      %757 = vmatprep.mubr.f32.mxu0 0.0
      %758 = vmatmul.mubr.f32.gmra.mrb[0].mxu0 %v652
      %v759 = vpop.f32.mrb[0].mxu0
      %v760 = vadd.f32 0.0, %v759
      %v761 = vpop.f32.mrb[0].mxu0
      %762 = vmatprep.mubr.f32.mxu0 0.0
      %763 = vmatmul.mubr.f32.gmra.mrb[0].mxu0 %v655
      %v764 = vpop.f32.mrb[0].mxu0
      %v765 = vadd.f32 0.0, %v764
      %v766 = vpop.f32.mrb[0].mxu0
      %767 = vmatprep.mubr.f32.mxu0 0.0
      %768 = vmatmul.mubr.f32.gmra.mrb[0].mxu0 %v658
      %v769 = vpop.f32.mrb[0].mxu0
      %v770 = vadd.f32 0.0, %v769
      %v771 = vpop.f32.mrb[0].mxu0
      %772 = vmatprep.mubr.f32.mxu0 0.0
      %773 = vmatmul.mubr.f32.gmra.mrb[0].mxu0 %v661
      %v774 = vpop.f32.mrb[0].mxu0
      %v775 = vadd.f32 0.0, %v774
      %v776 = vpop.f32.mrb[0].mxu0
      %777 = vmatprep.mubr.f32.mxu0 0.0
      %778 = vmatmul.mubr.f32.gmra.mrb[0].mxu0 %v664
      %v779 = vpop.f32.mrb[0].mxu0
      %v780 = vadd.f32 0.0, %v779
      %v781 = vpop.f32.mrb[0].mxu0
      %782 = vmatprep.mubr.f32.mxu0 0.0
      %783 = vmatmul.mubr.f32.gmra.mrb[0].mxu0 %v667
      %v784 = vpop.f32.mrb[0].mxu0
      %v785 = vadd.f32 0.0, %v784
      %v786 = vpop.f32.mrb[0].mxu0
      %787 = vmatprep.mubr.f32.mxu0 0.0
      %788 = vmatmul.mubr.f32.gmra.mrb[0].mxu0 %v670
      %v789 = vpop.f32.mrb[0].mxu0
      %v790 = vadd.f32 0.0, %v789
      %v791 = vpop.f32.mrb[0].mxu0
      %792 = vdwg.mxu0
      %v794 = vsel %vm508, %v354, 0
      %v797 = vsel %vm508, %v355, 0
      %v800 = vsel %vm508, %v356, 0
      %v803 = vsel %vm508, %v357, 0
      %v806 = vsel %vm508, %v358, 0
      %v809 = vsel %vm508, %v359, 0
      %v812 = vsel %vm508, %v360, 0
      %v815 = vsel %vm508, %v410, 0
      %v818 = vsel %vm508, %v411, 0
      %v821 = vsel %vm508, %v412, 0
      %v824 = vsel %vm508, %v413, 0
      %v827 = vsel %vm508, %v414, 0
      %v830 = vsel %vm508, %v415, 0
      %v833 = vsel %vm508, %v416, 0
      %835 = vmatprep.subr.mxu0 0.0
      %836 = vmatpush1.xpose.msra.mxu0 %v815
      %837 = vmatprep.subr.mxu0 0.0
      %838 = vmatpush1.xpose.msra.mxu0 %v818
      %839 = vmatprep.subr.mxu0 0.0
      %840 = vmatpush1.xpose.msra.mxu0 %v821
      %841 = vmatprep.subr.mxu0 0.0
      %842 = vmatpush1.xpose.msra.mxu0 %v824
      %843 = vmatprep.subr.mxu0 0.0
      %844 = vmatpush1.xpose.msra.mxu0 %v827
      %845 = vmatprep.subr.mxu0 0.0
      %846 = vmatpush1.xpose.msra.mxu0 %v830
      %847 = vmatprep.subr.mxu0 0.0
      %848 = vmatpush1.xpose.msra.mxu0 %v833
      %849 = vmatprep.subr.mxu0 0.0
      %850 = vmatpush1.xpose.msra.mxu0 0.0
      %851 = vmatprep.subr.mxu0 0.0
      %852 = vmatpush1.xpose.msra.mxu0 0.0
      %853 = vmatprep.subr.mxu0 0.0
      %854 = vmatpush1.xpose.msra.mxu0 0.0
      %855 = vmatprep.subr.mxu0 0.0
      %856 = vmatpush1.xpose.msra.mxu0 0.0
      %857 = vmatprep.subr.mxu0 0.0
      %858 = vmatpush1.xpose.msra.mxu0 0.0
      %859 = vmatprep.subr.mxu0 0.0
      %860 = vmatpush1.xpose.msra.mxu0 0.0
      %861 = vmatprep.subr.mxu0 0.0
      %862 = vmatpush1.xpose.msra.mxu0 0.0
      %863 = vmatprep.subr.mxu0 0.0
      %864 = vmatpush1.xpose.msra.mxu0 0.0
      %865 = vmatprep.subr.mxu0 0.0
      %866 = vmatpush1.xpose.msra.mxu0 0.0
      %867 = vmatprep.subr.mxu0 0.0
      %868 = vmatpush1.xpose.msra.mxu0 0.0
      %869 = vmatprep.subr.mxu0 0.0
      %870 = vmatpush1.xpose.msra.mxu0 0.0
      %871 = vmatprep.subr.mxu0 0.0
      %872 = vmatpush1.xpose.msra.mxu0 0.0
      %873 = vmatprep.subr.mxu0 0.0
      %874 = vmatpush1.xpose.msra.mxu0 0.0
      %875 = vmatprep.subr.mxu0 0.0
      %876 = vmatpush1.xpose.msra.mxu0 0.0
      %877 = vmatprep.subr.mxu0 0.0
      %878 = vmatpush1.xpose.msra.mxu0 0.0
      %879 = vmatprep.subr.mxu0 0.0
      %880 = vmatpush1.xpose.msra.mxu0 0.0
      %881 = vmatprep.subr.mxu0 0.0
      %882 = vmatpush1.xpose.msra.mxu0 0.0
      %883 = vmatprep.subr.mxu0 0.0
      %884 = vmatpush1.xpose.msra.mxu0 0.0
      %885 = vmatprep.subr.mxu0 0.0
      %886 = vmatpush1.xpose.msra.mxu0 0.0
      %887 = vmatprep.subr.mxu0 0.0
      %888 = vmatpush1.xpose.msra.mxu0 0.0
      %889 = vmatprep.subr.mxu0 0.0
      %890 = vmatpush1.xpose.msra.mxu0 0.0
      %891 = vmatprep.subr.mxu0 0.0
      %892 = vmatpush1.xpose.msra.mxu0 0.0
      %893 = vmatprep.subr.mxu0 0.0
      %894 = vmatpush1.xpose.msra.mxu0 0.0
      %895 = vmatprep.subr.mxu0 0.0
      %896 = vmatpush1.xpose.msra.mxu0 0.0
      %897 = vmatprep.subr.mxu0 0.0
      %898 = vmatpush1.xpose.msra.mxu0 0.0
      %899 = vmatprep.mubr.f32.mxu0 0.0
      %900 = vmatmul.mubr.f32.gmra.mrb[0].mxu0 %v794
      %v901 = vpop.f32.mrb[0].mxu0
      %v902 = vadd.f32 0.0, %v901
      %v903 = vpop.f32.mrb[0].mxu0
      %904 = vmatprep.mubr.f32.mxu0 0.0
      %905 = vmatmul.mubr.f32.gmra.mrb[0].mxu0 %v797
      %v906 = vpop.f32.mrb[0].mxu0
      %v907 = vadd.f32 0.0, %v906
      %v908 = vpop.f32.mrb[0].mxu0
      %909 = vmatprep.mubr.f32.mxu0 0.0
      %910 = vmatmul.mubr.f32.gmra.mrb[0].mxu0 %v800
      %v911 = vpop.f32.mrb[0].mxu0
      %v912 = vadd.f32 0.0, %v911
      %v913 = vpop.f32.mrb[0].mxu0
      %914 = vmatprep.mubr.f32.mxu0 0.0
      %915 = vmatmul.mubr.f32.gmra.mrb[0].mxu0 %v803
      %v916 = vpop.f32.mrb[0].mxu0
      %v917 = vadd.f32 0.0, %v916
      %v918 = vpop.f32.mrb[0].mxu0
      %919 = vmatprep.mubr.f32.mxu0 0.0
      %920 = vmatmul.mubr.f32.gmra.mrb[0].mxu0 %v806
      %v921 = vpop.f32.mrb[0].mxu0
      %v922 = vadd.f32 0.0, %v921
      %v923 = vpop.f32.mrb[0].mxu0
      %924 = vmatprep.mubr.f32.mxu0 0.0
      %925 = vmatmul.mubr.f32.gmra.mrb[0].mxu0 %v809
      %v926 = vpop.f32.mrb[0].mxu0
      %v927 = vadd.f32 0.0, %v926
      %v928 = vpop.f32.mrb[0].mxu0
      %929 = vmatprep.mubr.f32.mxu0 0.0
      %930 = vmatmul.mubr.f32.gmra.mrb[0].mxu0 %v812
      %v931 = vpop.f32.mrb[0].mxu0
      %v932 = vadd.f32 0.0, %v931
      %v933 = vpop.f32.mrb[0].mxu0
      %934 = vdwg.mxu0
      %v936 = vsel %vm508, %v361, 0
      %v939 = vsel %vm508, %v362, 0
      %v942 = vsel %vm508, %v363, 0
      %v945 = vsel %vm508, %v364, 0
      %v948 = vsel %vm508, %v365, 0
      %v951 = vsel %vm508, %v366, 0
      %v954 = vsel %vm508, %v367, 0
      %v957 = vsel %vm508, %v417, 0
      %v960 = vsel %vm508, %v418, 0
      %v963 = vsel %vm508, %v419, 0
      %v966 = vsel %vm508, %v420, 0
      %v969 = vsel %vm508, %v421, 0
      %v972 = vsel %vm508, %v422, 0
      %v975 = vsel %vm508, %v423, 0
      %977 = vmatprep.subr.mxu0 0.0
      %978 = vmatpush1.xpose.msra.mxu0 %v957
      %979 = vmatprep.subr.mxu0 0.0
      %980 = vmatpush1.xpose.msra.mxu0 %v960
      %981 = vmatprep.subr.mxu0 0.0
      %982 = vmatpush1.xpose.msra.mxu0 %v963
      %983 = vmatprep.subr.mxu0 0.0
      %984 = vmatpush1.xpose.msra.mxu0 %v966
      %985 = vmatprep.subr.mxu0 0.0
      %986 = vmatpush1.xpose.msra.mxu0 %v969
      %987 = vmatprep.subr.mxu0 0.0
      %988 = vmatpush1.xpose.msra.mxu0 %v972
      %989 = vmatprep.subr.mxu0 0.0
      %990 = vmatpush1.xpose.msra.mxu0 %v975
      %991 = vmatprep.subr.mxu0 0.0
      %992 = vmatpush1.xpose.msra.mxu0 0.0
      %993 = vmatprep.subr.mxu0 0.0
      %994 = vmatpush1.xpose.msra.mxu0 0.0
      %995 = vmatprep.subr.mxu0 0.0
      %996 = vmatpush1.xpose.msra.mxu0 0.0
      %997 = vmatprep.subr.mxu0 0.0
      %998 = vmatpush1.xpose.msra.mxu0 0.0
      %999 = vmatprep.subr.mxu0 0.0
      %1000 = vmatpush1.xpose.msra.mxu0 0.0
      %1001 = vmatprep.subr.mxu0 0.0
      %1002 = vmatpush1.xpose.msra.mxu0 0.0
      %1003 = vmatprep.subr.mxu0 0.0
      %1004 = vmatpush1.xpose.msra.mxu0 0.0
      %1005 = vmatprep.subr.mxu0 0.0
      %1006 = vmatpush1.xpose.msra.mxu0 0.0
      %1007 = vmatprep.subr.mxu0 0.0
      %1008 = vmatpush1.xpose.msra.mxu0 0.0
      %1009 = vmatprep.subr.mxu0 0.0
      %1010 = vmatpush1.xpose.msra.mxu0 0.0
      %1011 = vmatprep.subr.mxu0 0.0
      %1012 = vmatpush1.xpose.msra.mxu0 0.0
      %1013 = vmatprep.subr.mxu0 0.0
      %1014 = vmatpush1.xpose.msra.mxu0 0.0
      %1015 = vmatprep.subr.mxu0 0.0
      %1016 = vmatpush1.xpose.msra.mxu0 0.0
      %1017 = vmatprep.subr.mxu0 0.0
      %1018 = vmatpush1.xpose.msra.mxu0 0.0
      %1019 = vmatprep.subr.mxu0 0.0
      %1020 = vmatpush1.xpose.msra.mxu0 0.0
      %1021 = vmatprep.subr.mxu0 0.0
      %1022 = vmatpush1.xpose.msra.mxu0 0.0
      %1023 = vmatprep.subr.mxu0 0.0
      %1024 = vmatpush1.xpose.msra.mxu0 0.0
      %1025 = vmatprep.subr.mxu0 0.0
      %1026 = vmatpush1.xpose.msra.mxu0 0.0
      %1027 = vmatprep.subr.mxu0 0.0
      %1028 = vmatpush1.xpose.msra.mxu0 0.0
      %1029 = vmatprep.subr.mxu0 0.0
      %1030 = vmatpush1.xpose.msra.mxu0 0.0
      %1031 = vmatprep.subr.mxu0 0.0
      %1032 = vmatpush1.xpose.msra.mxu0 0.0
      %1033 = vmatprep.subr.mxu0 0.0
      %1034 = vmatpush1.xpose.msra.mxu0 0.0
      %1035 = vmatprep.subr.mxu0 0.0
      %1036 = vmatpush1.xpose.msra.mxu0 0.0
      %1037 = vmatprep.subr.mxu0 0.0
      %1038 = vmatpush1.xpose.msra.mxu0 0.0
      %1039 = vmatprep.subr.mxu0 0.0
      %1040 = vmatpush1.xpose.msra.mxu0 0.0
      %1041 = vmatprep.mubr.f32.mxu0 0.0
      %1042 = vmatmul.mubr.f32.gmra.mrb[0].mxu0 %v936
      %v1043 = vpop.f32.mrb[0].mxu0
      %v1044 = vadd.f32 0.0, %v1043
      %v1045 = vpop.f32.mrb[0].mxu0
      %1046 = vmatprep.mubr.f32.mxu0 0.0
      %1047 = vmatmul.mubr.f32.gmra.mrb[0].mxu0 %v939
      %v1048 = vpop.f32.mrb[0].mxu0
      %v1049 = vadd.f32 0.0, %v1048
      %v1050 = vpop.f32.mrb[0].mxu0
      %1051 = vmatprep.mubr.f32.mxu0 0.0
      %1052 = vmatmul.mubr.f32.gmra.mrb[0].mxu0 %v942
      %v1053 = vpop.f32.mrb[0].mxu0
      %v1054 = vadd.f32 0.0, %v1053
      %v1055 = vpop.f32.mrb[0].mxu0
      %1056 = vmatprep.mubr.f32.mxu0 0.0
      %1057 = vmatmul.mubr.f32.gmra.mrb[0].mxu0 %v945
      %v1058 = vpop.f32.mrb[0].mxu0
      %v1059 = vadd.f32 0.0, %v1058
      %v1060 = vpop.f32.mrb[0].mxu0
      %1061 = vmatprep.mubr.f32.mxu0 0.0
      %1062 = vmatmul.mubr.f32.gmra.mrb[0].mxu0 %v948
      %v1063 = vpop.f32.mrb[0].mxu0
      %v1064 = vadd.f32 0.0, %v1063
      %v1065 = vpop.f32.mrb[0].mxu0
      %1066 = vmatprep.mubr.f32.mxu0 0.0
      %1067 = vmatmul.mubr.f32.gmra.mrb[0].mxu0 %v951
      %v1068 = vpop.f32.mrb[0].mxu0
      %v1069 = vadd.f32 0.0, %v1068
      %v1070 = vpop.f32.mrb[0].mxu0
      %1071 = vmatprep.mubr.f32.mxu0 0.0
      %1072 = vmatmul.mubr.f32.gmra.mrb[0].mxu0 %v954
      %v1073 = vpop.f32.mrb[0].mxu0
      %v1074 = vadd.f32 0.0, %v1073
      %v1075 = vpop.f32.mrb[0].mxu0
      %1076 = vdwg.mxu0
      %v1078 = vsel %vm508, %v368, 0
      %v1081 = vsel %vm508, %v369, 0
      %v1084 = vsel %vm508, %v370, 0
      %v1087 = vsel %vm508, %v371, 0
      %v1090 = vsel %vm508, %v372, 0
      %v1093 = vsel %vm508, %v373, 0
      %v1096 = vsel %vm508, %v374, 0
      %v1099 = vsel %vm508, %v424, 0
      %v1102 = vsel %vm508, %v425, 0
      %v1105 = vsel %vm508, %v426, 0
      %v1108 = vsel %vm508, %v427, 0
      %v1111 = vsel %vm508, %v428, 0
      %v1114 = vsel %vm508, %v429, 0
      %v1117 = vsel %vm508, %v430, 0
      %1119 = vmatprep.subr.mxu0 0.0
      %1120 = vmatpush1.xpose.msra.mxu0 %v1099
      %1121 = vmatprep.subr.mxu0 0.0
      %1122 = vmatpush1.xpose.msra.mxu0 %v1102
      %1123 = vmatprep.subr.mxu0 0.0
      %1124 = vmatpush1.xpose.msra.mxu0 %v1105
      %1125 = vmatprep.subr.mxu0 0.0
      %1126 = vmatpush1.xpose.msra.mxu0 %v1108
      %1127 = vmatprep.subr.mxu0 0.0
      %1128 = vmatpush1.xpose.msra.mxu0 %v1111
      %1129 = vmatprep.subr.mxu0 0.0
      %1130 = vmatpush1.xpose.msra.mxu0 %v1114
      %1131 = vmatprep.subr.mxu0 0.0
      %1132 = vmatpush1.xpose.msra.mxu0 %v1117
      %1133 = vmatprep.subr.mxu0 0.0
      %1134 = vmatpush1.xpose.msra.mxu0 0.0
      %1135 = vmatprep.subr.mxu0 0.0
      %1136 = vmatpush1.xpose.msra.mxu0 0.0
      %1137 = vmatprep.subr.mxu0 0.0
      %1138 = vmatpush1.xpose.msra.mxu0 0.0
      %1139 = vmatprep.subr.mxu0 0.0
      %1140 = vmatpush1.xpose.msra.mxu0 0.0
      %1141 = vmatprep.subr.mxu0 0.0
      %1142 = vmatpush1.xpose.msra.mxu0 0.0
      %1143 = vmatprep.subr.mxu0 0.0
      %1144 = vmatpush1.xpose.msra.mxu0 0.0
      %1145 = vmatprep.subr.mxu0 0.0
      %1146 = vmatpush1.xpose.msra.mxu0 0.0
      %1147 = vmatprep.subr.mxu0 0.0
      %1148 = vmatpush1.xpose.msra.mxu0 0.0
      %1149 = vmatprep.subr.mxu0 0.0
      %1150 = vmatpush1.xpose.msra.mxu0 0.0
      %1151 = vmatprep.subr.mxu0 0.0
      %1152 = vmatpush1.xpose.msra.mxu0 0.0
      %1153 = vmatprep.subr.mxu0 0.0
      %1154 = vmatpush1.xpose.msra.mxu0 0.0
      %1155 = vmatprep.subr.mxu0 0.0
      %1156 = vmatpush1.xpose.msra.mxu0 0.0
      %1157 = vmatprep.subr.mxu0 0.0
      %1158 = vmatpush1.xpose.msra.mxu0 0.0
      %1159 = vmatprep.subr.mxu0 0.0
      %1160 = vmatpush1.xpose.msra.mxu0 0.0
      %1161 = vmatprep.subr.mxu0 0.0
      %1162 = vmatpush1.xpose.msra.mxu0 0.0
      %1163 = vmatprep.subr.mxu0 0.0
      %1164 = vmatpush1.xpose.msra.mxu0 0.0
      %1165 = vmatprep.subr.mxu0 0.0
      %1166 = vmatpush1.xpose.msra.mxu0 0.0
      %1167 = vmatprep.subr.mxu0 0.0
      %1168 = vmatpush1.xpose.msra.mxu0 0.0
      %1169 = vmatprep.subr.mxu0 0.0
      %1170 = vmatpush1.xpose.msra.mxu0 0.0
      %1171 = vmatprep.subr.mxu0 0.0
      %1172 = vmatpush1.xpose.msra.mxu0 0.0
      %1173 = vmatprep.subr.mxu0 0.0
      %1174 = vmatpush1.xpose.msra.mxu0 0.0
      %1175 = vmatprep.subr.mxu0 0.0
      %1176 = vmatpush1.xpose.msra.mxu0 0.0
      %1177 = vmatprep.subr.mxu0 0.0
      %1178 = vmatpush1.xpose.msra.mxu0 0.0
      %1179 = vmatprep.subr.mxu0 0.0
      %1180 = vmatpush1.xpose.msra.mxu0 0.0
      %1181 = vmatprep.subr.mxu0 0.0
      %1182 = vmatpush1.xpose.msra.mxu0 0.0
      %1183 = vmatprep.mubr.f32.mxu0 0.0
      %1184 = vmatmul.mubr.f32.gmra.mrb[0].mxu0 %v1078
      %v1185 = vpop.f32.mrb[0].mxu0
      %v1186 = vadd.f32 0.0, %v1185
      %v1187 = vpop.f32.mrb[0].mxu0
      %1188 = vmatprep.mubr.f32.mxu0 0.0
      %1189 = vmatmul.mubr.f32.gmra.mrb[0].mxu0 %v1081
      %v1190 = vpop.f32.mrb[0].mxu0
      %v1191 = vadd.f32 0.0, %v1190
      %v1192 = vpop.f32.mrb[0].mxu0
      %1193 = vmatprep.mubr.f32.mxu0 0.0
      %1194 = vmatmul.mubr.f32.gmra.mrb[0].mxu0 %v1084
      %v1195 = vpop.f32.mrb[0].mxu0
      %v1196 = vadd.f32 0.0, %v1195
      %v1197 = vpop.f32.mrb[0].mxu0
      %1198 = vmatprep.mubr.f32.mxu0 0.0
      %1199 = vmatmul.mubr.f32.gmra.mrb[0].mxu0 %v1087
      %v1200 = vpop.f32.mrb[0].mxu0
      %v1201 = vadd.f32 0.0, %v1200
      %v1202 = vpop.f32.mrb[0].mxu0
      %1203 = vmatprep.mubr.f32.mxu0 0.0
      %1204 = vmatmul.mubr.f32.gmra.mrb[0].mxu0 %v1090
      %v1205 = vpop.f32.mrb[0].mxu0
      %v1206 = vadd.f32 0.0, %v1205
      %v1207 = vpop.f32.mrb[0].mxu0
      %1208 = vmatprep.mubr.f32.mxu0 0.0
      %1209 = vmatmul.mubr.f32.gmra.mrb[0].mxu0 %v1093
      %v1210 = vpop.f32.mrb[0].mxu0
      %v1211 = vadd.f32 0.0, %v1210
      %v1212 = vpop.f32.mrb[0].mxu0
      %1213 = vmatprep.mubr.f32.mxu0 0.0
      %1214 = vmatmul.mubr.f32.gmra.mrb[0].mxu0 %v1096
      %v1215 = vpop.f32.mrb[0].mxu0
      %v1216 = vadd.f32 0.0, %v1215
      %v1217 = vpop.f32.mrb[0].mxu0
      %1218 = vdwg.mxu0
      %v1220 = vsel %vm508, %v375, 0
      %v1223 = vsel %vm508, %v376, 0
      %v1226 = vsel %vm508, %v377, 0
      %v1229 = vsel %vm508, %v378, 0
      %v1232 = vsel %vm508, %v379, 0
      %v1235 = vsel %vm508, %v380, 0
      %v1238 = vsel %vm508, %v381, 0
      %v1241 = vsel %vm508, %v431, 0
      %v1244 = vsel %vm508, %v432, 0
      %v1247 = vsel %vm508, %v433, 0
      %v1250 = vsel %vm508, %v434, 0
      %v1253 = vsel %vm508, %v435, 0
      %v1256 = vsel %vm508, %v436, 0
      %v1259 = vsel %vm508, %v437, 0
      %1261 = vmatprep.subr.mxu0 0.0
      %1262 = vmatpush1.xpose.msra.mxu0 %v1241
      %1263 = vmatprep.subr.mxu0 0.0
      %1264 = vmatpush1.xpose.msra.mxu0 %v1244
      %1265 = vmatprep.subr.mxu0 0.0
      %1266 = vmatpush1.xpose.msra.mxu0 %v1247
      %1267 = vmatprep.subr.mxu0 0.0
      %1268 = vmatpush1.xpose.msra.mxu0 %v1250
      %1269 = vmatprep.subr.mxu0 0.0
      %1270 = vmatpush1.xpose.msra.mxu0 %v1253
      %1271 = vmatprep.subr.mxu0 0.0
      %1272 = vmatpush1.xpose.msra.mxu0 %v1256
      %1273 = vmatprep.subr.mxu0 0.0
      %1274 = vmatpush1.xpose.msra.mxu0 %v1259
      %1275 = vmatprep.subr.mxu0 0.0
      %1276 = vmatpush1.xpose.msra.mxu0 0.0
      %1277 = vmatprep.subr.mxu0 0.0
      %1278 = vmatpush1.xpose.msra.mxu0 0.0
      %1279 = vmatprep.subr.mxu0 0.0
      %1280 = vmatpush1.xpose.msra.mxu0 0.0
      %1281 = vmatprep.subr.mxu0 0.0
      %1282 = vmatpush1.xpose.msra.mxu0 0.0
      %1283 = vmatprep.subr.mxu0 0.0
      %1284 = vmatpush1.xpose.msra.mxu0 0.0
      %1285 = vmatprep.subr.mxu0 0.0
      %1286 = vmatpush1.xpose.msra.mxu0 0.0
      %1287 = vmatprep.subr.mxu0 0.0
      %1288 = vmatpush1.xpose.msra.mxu0 0.0
      %1289 = vmatprep.subr.mxu0 0.0
      %1290 = vmatpush1.xpose.msra.mxu0 0.0
      %1291 = vmatprep.subr.mxu0 0.0
      %1292 = vmatpush1.xpose.msra.mxu0 0.0
      %1293 = vmatprep.subr.mxu0 0.0
      %1294 = vmatpush1.xpose.msra.mxu0 0.0
      %1295 = vmatprep.subr.mxu0 0.0
      %1296 = vmatpush1.xpose.msra.mxu0 0.0
      %1297 = vmatprep.subr.mxu0 0.0
      %1298 = vmatpush1.xpose.msra.mxu0 0.0
      %1299 = vmatprep.subr.mxu0 0.0
      %1300 = vmatpush1.xpose.msra.mxu0 0.0
      %1301 = vmatprep.subr.mxu0 0.0
      %1302 = vmatpush1.xpose.msra.mxu0 0.0
      %1303 = vmatprep.subr.mxu0 0.0
      %1304 = vmatpush1.xpose.msra.mxu0 0.0
      %1305 = vmatprep.subr.mxu0 0.0
      %1306 = vmatpush1.xpose.msra.mxu0 0.0
      %1307 = vmatprep.subr.mxu0 0.0
      %1308 = vmatpush1.xpose.msra.mxu0 0.0
      %1309 = vmatprep.subr.mxu0 0.0
      %1310 = vmatpush1.xpose.msra.mxu0 0.0
      %1311 = vmatprep.subr.mxu0 0.0
      %1312 = vmatpush1.xpose.msra.mxu0 0.0
      %1313 = vmatprep.subr.mxu0 0.0
      %1314 = vmatpush1.xpose.msra.mxu0 0.0
      %1315 = vmatprep.subr.mxu0 0.0
      %1316 = vmatpush1.xpose.msra.mxu0 0.0
      %1317 = vmatprep.subr.mxu0 0.0
      %1318 = vmatpush1.xpose.msra.mxu0 0.0
      %1319 = vmatprep.subr.mxu0 0.0
      %1320 = vmatpush1.xpose.msra.mxu0 0.0
      %1321 = vmatprep.subr.mxu0 0.0
      %1322 = vmatpush1.xpose.msra.mxu0 0.0
      %1323 = vmatprep.subr.mxu0 0.0
      %1324 = vmatpush1.xpose.msra.mxu0 0.0
      %1325 = vmatprep.mubr.f32.mxu0 0.0
      %1326 = vmatmul.mubr.f32.gmra.mrb[0].mxu0 %v1220
      %v1327 = vpop.f32.mrb[0].mxu0
      %v1328 = vadd.f32 0.0, %v1327
      %v1329 = vpop.f32.mrb[0].mxu0
      %1330 = vmatprep.mubr.f32.mxu0 0.0
      %1331 = vmatmul.mubr.f32.gmra.mrb[0].mxu0 %v1223
      %v1332 = vpop.f32.mrb[0].mxu0
      %v1333 = vadd.f32 0.0, %v1332
      %v1334 = vpop.f32.mrb[0].mxu0
      %1335 = vmatprep.mubr.f32.mxu0 0.0
      %1336 = vmatmul.mubr.f32.gmra.mrb[0].mxu0 %v1226
      %v1337 = vpop.f32.mrb[0].mxu0
      %v1338 = vadd.f32 0.0, %v1337
      %v1339 = vpop.f32.mrb[0].mxu0
      %1340 = vmatprep.mubr.f32.mxu0 0.0
      %1341 = vmatmul.mubr.f32.gmra.mrb[0].mxu0 %v1229
      %v1342 = vpop.f32.mrb[0].mxu0
      %v1343 = vadd.f32 0.0, %v1342
      %v1344 = vpop.f32.mrb[0].mxu0
      %1345 = vmatprep.mubr.f32.mxu0 0.0
      %1346 = vmatmul.mubr.f32.gmra.mrb[0].mxu0 %v1232
      %v1347 = vpop.f32.mrb[0].mxu0
      %v1348 = vadd.f32 0.0, %v1347
      %v1349 = vpop.f32.mrb[0].mxu0
      %1350 = vmatprep.mubr.f32.mxu0 0.0
      %1351 = vmatmul.mubr.f32.gmra.mrb[0].mxu0 %v1235
      %v1352 = vpop.f32.mrb[0].mxu0
      %v1353 = vadd.f32 0.0, %v1352
      %v1354 = vpop.f32.mrb[0].mxu0
      %1355 = vmatprep.mubr.f32.mxu0 0.0
      %1356 = vmatmul.mubr.f32.gmra.mrb[0].mxu0 %v1238
      %v1357 = vpop.f32.mrb[0].mxu0
      %v1358 = vadd.f32 0.0, %v1357
      %v1359 = vpop.f32.mrb[0].mxu0
      %1360 = vdwg.mxu0
      %v1362 = vsel %vm508, %v382, 0
      %v1365 = vsel %vm508, %v383, 0
      %v1368 = vsel %vm508, %v384, 0
      %v1371 = vsel %vm508, %v385, 0
      %v1374 = vsel %vm508, %v386, 0
      %v1377 = vsel %vm508, %v387, 0
      %v1380 = vsel %vm508, %v388, 0
      %v1383 = vsel %vm508, %v438, 0
      %v1386 = vsel %vm508, %v439, 0
      %v1389 = vsel %vm508, %v440, 0
      %v1392 = vsel %vm508, %v441, 0
      %v1395 = vsel %vm508, %v442, 0
      %v1398 = vsel %vm508, %v443, 0
      %v1401 = vsel %vm508, %v444, 0
      %1403 = vmatprep.subr.mxu0 0.0
      %1404 = vmatpush1.xpose.msra.mxu0 %v1383
      %1405 = vmatprep.subr.mxu0 0.0
      %1406 = vmatpush1.xpose.msra.mxu0 %v1386
      %1407 = vmatprep.subr.mxu0 0.0
      %1408 = vmatpush1.xpose.msra.mxu0 %v1389
      %1409 = vmatprep.subr.mxu0 0.0
      %1410 = vmatpush1.xpose.msra.mxu0 %v1392
      %1411 = vmatprep.subr.mxu0 0.0
      %1412 = vmatpush1.xpose.msra.mxu0 %v1395
      %1413 = vmatprep.subr.mxu0 0.0
      %1414 = vmatpush1.xpose.msra.mxu0 %v1398
      %1415 = vmatprep.subr.mxu0 0.0
      %1416 = vmatpush1.xpose.msra.mxu0 %v1401
      %1417 = vmatprep.subr.mxu0 0.0
      %1418 = vmatpush1.xpose.msra.mxu0 0.0
      %1419 = vmatprep.subr.mxu0 0.0
      %1420 = vmatpush1.xpose.msra.mxu0 0.0
      %1421 = vmatprep.subr.mxu0 0.0
      %1422 = vmatpush1.xpose.msra.mxu0 0.0
      %1423 = vmatprep.subr.mxu0 0.0
      %1424 = vmatpush1.xpose.msra.mxu0 0.0
      %1425 = vmatprep.subr.mxu0 0.0
      %1426 = vmatpush1.xpose.msra.mxu0 0.0
      %1427 = vmatprep.subr.mxu0 0.0
      %1428 = vmatpush1.xpose.msra.mxu0 0.0
      %1429 = vmatprep.subr.mxu0 0.0
      %1430 = vmatpush1.xpose.msra.mxu0 0.0
      %1431 = vmatprep.subr.mxu0 0.0
      %1432 = vmatpush1.xpose.msra.mxu0 0.0
      %1433 = vmatprep.subr.mxu0 0.0
      %1434 = vmatpush1.xpose.msra.mxu0 0.0
      %1435 = vmatprep.subr.mxu0 0.0
      %1436 = vmatpush1.xpose.msra.mxu0 0.0
      %1437 = vmatprep.subr.mxu0 0.0
      %1438 = vmatpush1.xpose.msra.mxu0 0.0
      %1439 = vmatprep.subr.mxu0 0.0
      %1440 = vmatpush1.xpose.msra.mxu0 0.0
      %1441 = vmatprep.subr.mxu0 0.0
      %1442 = vmatpush1.xpose.msra.mxu0 0.0
      %1443 = vmatprep.subr.mxu0 0.0
      %1444 = vmatpush1.xpose.msra.mxu0 0.0
      %1445 = vmatprep.subr.mxu0 0.0
      %1446 = vmatpush1.xpose.msra.mxu0 0.0
      %1447 = vmatprep.subr.mxu0 0.0
      %1448 = vmatpush1.xpose.msra.mxu0 0.0
      %1449 = vmatprep.subr.mxu0 0.0
      %1450 = vmatpush1.xpose.msra.mxu0 0.0
      %1451 = vmatprep.subr.mxu0 0.0
      %1452 = vmatpush1.xpose.msra.mxu0 0.0
      %1453 = vmatprep.subr.mxu0 0.0
      %1454 = vmatpush1.xpose.msra.mxu0 0.0
      %1455 = vmatprep.subr.mxu0 0.0
      %1456 = vmatpush1.xpose.msra.mxu0 0.0
      %1457 = vmatprep.subr.mxu0 0.0
      %1458 = vmatpush1.xpose.msra.mxu0 0.0
      %1459 = vmatprep.subr.mxu0 0.0
      %1460 = vmatpush1.xpose.msra.mxu0 0.0
      %1461 = vmatprep.subr.mxu0 0.0
      %1462 = vmatpush1.xpose.msra.mxu0 0.0
      %1463 = vmatprep.subr.mxu0 0.0
      %1464 = vmatpush1.xpose.msra.mxu0 0.0
      %1465 = vmatprep.subr.mxu0 0.0
      %1466 = vmatpush1.xpose.msra.mxu0 0.0
      %1467 = vmatprep.mubr.f32.mxu0 0.0
      %1468 = vmatmul.mubr.f32.gmra.mrb[0].mxu0 %v1362
      %v1469 = vpop.f32.mrb[0].mxu0
      %v1470 = vadd.f32 0.0, %v1469
      %v1471 = vpop.f32.mrb[0].mxu0
      %1472 = vmatprep.mubr.f32.mxu0 0.0
      %1473 = vmatmul.mubr.f32.gmra.mrb[0].mxu0 %v1365
      %v1474 = vpop.f32.mrb[0].mxu0
      %v1475 = vadd.f32 0.0, %v1474
      %v1476 = vpop.f32.mrb[0].mxu0
      %1477 = vmatprep.mubr.f32.mxu0 0.0
      %1478 = vmatmul.mubr.f32.gmra.mrb[0].mxu0 %v1368
      %v1479 = vpop.f32.mrb[0].mxu0
      %v1480 = vadd.f32 0.0, %v1479
      %v1481 = vpop.f32.mrb[0].mxu0
      %1482 = vmatprep.mubr.f32.mxu0 0.0
      %1483 = vmatmul.mubr.f32.gmra.mrb[0].mxu0 %v1371
      %v1484 = vpop.f32.mrb[0].mxu0
      %v1485 = vadd.f32 0.0, %v1484
      %v1486 = vpop.f32.mrb[0].mxu0
      %1487 = vmatprep.mubr.f32.mxu0 0.0
      %1488 = vmatmul.mubr.f32.gmra.mrb[0].mxu0 %v1374
      %v1489 = vpop.f32.mrb[0].mxu0
      %v1490 = vadd.f32 0.0, %v1489
      %v1491 = vpop.f32.mrb[0].mxu0
      %1492 = vmatprep.mubr.f32.mxu0 0.0
      %1493 = vmatmul.mubr.f32.gmra.mrb[0].mxu0 %v1377
      %v1494 = vpop.f32.mrb[0].mxu0
      %v1495 = vadd.f32 0.0, %v1494
      %v1496 = vpop.f32.mrb[0].mxu0
      %1497 = vmatprep.mubr.f32.mxu0 0.0
      %1498 = vmatmul.mubr.f32.gmra.mrb[0].mxu0 %v1380
      %v1499 = vpop.f32.mrb[0].mxu0
      %v1500 = vadd.f32 0.0, %v1499
      %v1501 = vpop.f32.mrb[0].mxu0
      %1502 = vdwg.mxu0
      %v1504 = vsel %vm508, %v389, 0
      %v1507 = vsel %vm508, %v390, 0
      %v1510 = vsel %vm508, %v391, 0
      %v1513 = vsel %vm508, %v392, 0
      %v1516 = vsel %vm508, %v393, 0
      %v1519 = vsel %vm508, %v394, 0
      %v1522 = vsel %vm508, %v395, 0
      %v1525 = vsel %vm508, %v445, 0
      %v1528 = vsel %vm508, %v446, 0
      %v1531 = vsel %vm508, %v447, 0
      %v1534 = vsel %vm508, %v448, 0
      %v1537 = vsel %vm508, %v449, 0
      %v1540 = vsel %vm508, %v450, 0
      %v1543 = vsel %vm508, %v451, 0
      %1545 = vmatprep.subr.mxu0 0.0
      %1546 = vmatpush1.xpose.msra.mxu0 %v1525
      %1547 = vmatprep.subr.mxu0 0.0
      %1548 = vmatpush1.xpose.msra.mxu0 %v1528
      %1549 = vmatprep.subr.mxu0 0.0
      %1550 = vmatpush1.xpose.msra.mxu0 %v1531
      %1551 = vmatprep.subr.mxu0 0.0
      %1552 = vmatpush1.xpose.msra.mxu0 %v1534
      %1553 = vmatprep.subr.mxu0 0.0
      %1554 = vmatpush1.xpose.msra.mxu0 %v1537
      %1555 = vmatprep.subr.mxu0 0.0
      %1556 = vmatpush1.xpose.msra.mxu0 %v1540
      %1557 = vmatprep.subr.mxu0 0.0
      %1558 = vmatpush1.xpose.msra.mxu0 %v1543
      %1559 = vmatprep.subr.mxu0 0.0
      %1560 = vmatpush1.xpose.msra.mxu0 0.0
      %1561 = vmatprep.subr.mxu0 0.0
      %1562 = vmatpush1.xpose.msra.mxu0 0.0
      %1563 = vmatprep.subr.mxu0 0.0
      %1564 = vmatpush1.xpose.msra.mxu0 0.0
      %1565 = vmatprep.subr.mxu0 0.0
      %1566 = vmatpush1.xpose.msra.mxu0 0.0
      %1567 = vmatprep.subr.mxu0 0.0
      %1568 = vmatpush1.xpose.msra.mxu0 0.0
      %1569 = vmatprep.subr.mxu0 0.0
      %1570 = vmatpush1.xpose.msra.mxu0 0.0
      %1571 = vmatprep.subr.mxu0 0.0
      %1572 = vmatpush1.xpose.msra.mxu0 0.0
      %1573 = vmatprep.subr.mxu0 0.0
      %1574 = vmatpush1.xpose.msra.mxu0 0.0
      %1575 = vmatprep.subr.mxu0 0.0
      %1576 = vmatpush1.xpose.msra.mxu0 0.0
      %1577 = vmatprep.subr.mxu0 0.0
      %1578 = vmatpush1.xpose.msra.mxu0 0.0
      %1579 = vmatprep.subr.mxu0 0.0
      %1580 = vmatpush1.xpose.msra.mxu0 0.0
      %1581 = vmatprep.subr.mxu0 0.0
      %1582 = vmatpush1.xpose.msra.mxu0 0.0
      %1583 = vmatprep.subr.mxu0 0.0
      %1584 = vmatpush1.xpose.msra.mxu0 0.0
      %1585 = vmatprep.subr.mxu0 0.0
      %1586 = vmatpush1.xpose.msra.mxu0 0.0
      %1587 = vmatprep.subr.mxu0 0.0
      %1588 = vmatpush1.xpose.msra.mxu0 0.0
      %1589 = vmatprep.subr.mxu0 0.0
      %1590 = vmatpush1.xpose.msra.mxu0 0.0
      %1591 = vmatprep.subr.mxu0 0.0
      %1592 = vmatpush1.xpose.msra.mxu0 0.0
      %1593 = vmatprep.subr.mxu0 0.0
      %1594 = vmatpush1.xpose.msra.mxu0 0.0
      %1595 = vmatprep.subr.mxu0 0.0
      %1596 = vmatpush1.xpose.msra.mxu0 0.0
      %1597 = vmatprep.subr.mxu0 0.0
      %1598 = vmatpush1.xpose.msra.mxu0 0.0
      %1599 = vmatprep.subr.mxu0 0.0
      %1600 = vmatpush1.xpose.msra.mxu0 0.0
      %1601 = vmatprep.subr.mxu0 0.0
      %1602 = vmatpush1.xpose.msra.mxu0 0.0
      %1603 = vmatprep.subr.mxu0 0.0
      %1604 = vmatpush1.xpose.msra.mxu0 0.0
      %1605 = vmatprep.subr.mxu0 0.0
      %1606 = vmatpush1.xpose.msra.mxu0 0.0
      %1607 = vmatprep.subr.mxu0 0.0
      %1608 = vmatpush1.xpose.msra.mxu0 0.0
      %1609 = vmatprep.mubr.f32.mxu0 0.0
      %1610 = vmatmul.mubr.f32.gmra.mrb[0].mxu0 %v1504
      %v1611 = vpop.f32.mrb[0].mxu0
      %v1612 = vadd.f32 0.0, %v1611
      %v1613 = vpop.f32.mrb[0].mxu0
      %1614 = vmatprep.mubr.f32.mxu0 0.0
      %1615 = vmatmul.mubr.f32.gmra.mrb[0].mxu0 %v1507
      %v1616 = vpop.f32.mrb[0].mxu0
      %v1617 = vadd.f32 0.0, %v1616
      %v1618 = vpop.f32.mrb[0].mxu0
      %1619 = vmatprep.mubr.f32.mxu0 0.0
      %1620 = vmatmul.mubr.f32.gmra.mrb[0].mxu0 %v1510
      %v1621 = vpop.f32.mrb[0].mxu0
      %v1622 = vadd.f32 0.0, %v1621
      %v1623 = vpop.f32.mrb[0].mxu0
      %1624 = vmatprep.mubr.f32.mxu0 0.0
      %1625 = vmatmul.mubr.f32.gmra.mrb[0].mxu0 %v1513
      %v1626 = vpop.f32.mrb[0].mxu0
      %v1627 = vadd.f32 0.0, %v1626
      %v1628 = vpop.f32.mrb[0].mxu0
      %1629 = vmatprep.mubr.f32.mxu0 0.0
      %1630 = vmatmul.mubr.f32.gmra.mrb[0].mxu0 %v1516
      %v1631 = vpop.f32.mrb[0].mxu0
      %v1632 = vadd.f32 0.0, %v1631
      %v1633 = vpop.f32.mrb[0].mxu0
      %1634 = vmatprep.mubr.f32.mxu0 0.0
      %1635 = vmatmul.mubr.f32.gmra.mrb[0].mxu0 %v1519
      %v1636 = vpop.f32.mrb[0].mxu0
      %v1637 = vadd.f32 0.0, %v1636
      %v1638 = vpop.f32.mrb[0].mxu0
      %1639 = vmatprep.mubr.f32.mxu0 0.0
      %1640 = vmatmul.mubr.f32.gmra.mrb[0].mxu0 %v1522
      %v1641 = vpop.f32.mrb[0].mxu0
      %v1642 = vadd.f32 0.0, %v1641
      %v1643 = vpop.f32.mrb[0].mxu0
      %1644 = vdwg.mxu0
      %v1645 = vmul.f32 %v618, 0.35355338
      %v1646 = vmul.f32 %v623, 0.35355338
      %v1647 = vmul.f32 %v628, 0.35355338
      %v1648 = vmul.f32 %v633, 0.35355338
      %v1649 = vmul.f32 %v638, 0.35355338
      %v1650 = vmul.f32 %v643, 0.35355338
      %v1651 = vmul.f32 %v648, 0.35355338
      %v1652 = vmul.f32 %v760, 0.35355338
      %v1653 = vmul.f32 %v765, 0.35355338
      %v1654 = vmul.f32 %v770, 0.35355338
      %v1655 = vmul.f32 %v775, 0.35355338
      %v1656 = vmul.f32 %v780, 0.35355338
      %v1657 = vmul.f32 %v785, 0.35355338
      %v1658 = vmul.f32 %v790, 0.35355338
      %v1659 = vmul.f32 %v902, 0.35355338
      %v1660 = vmul.f32 %v907, 0.35355338
      %v1661 = vmul.f32 %v912, 0.35355338
      %v1662 = vmul.f32 %v917, 0.35355338
      %v1663 = vmul.f32 %v922, 0.35355338
      %v1664 = vmul.f32 %v927, 0.35355338
      %v1665 = vmul.f32 %v932, 0.35355338
      %v1666 = vmul.f32 %v1044, 0.35355338
      %v1667 = vmul.f32 %v1049, 0.35355338
      %v1668 = vmul.f32 %v1054, 0.35355338
      %v1669 = vmul.f32 %v1059, 0.35355338
      %v1670 = vmul.f32 %v1064, 0.35355338
      %v1671 = vmul.f32 %v1069, 0.35355338
      %v1672 = vmul.f32 %v1074, 0.35355338
      %v1673 = vmul.f32 %v1186, 0.35355338
      %v1674 = vmul.f32 %v1191, 0.35355338
      %v1675 = vmul.f32 %v1196, 0.35355338
      %v1676 = vmul.f32 %v1201, 0.35355338
      %v1677 = vmul.f32 %v1206, 0.35355338
      %v1678 = vmul.f32 %v1211, 0.35355338
      %v1679 = vmul.f32 %v1216, 0.35355338
      %v1680 = vmul.f32 %v1328, 0.35355338
      %v1681 = vmul.f32 %v1333, 0.35355338
      %v1682 = vmul.f32 %v1338, 0.35355338
      %v1683 = vmul.f32 %v1343, 0.35355338
      %v1684 = vmul.f32 %v1348, 0.35355338
      %v1685 = vmul.f32 %v1353, 0.35355338
      %v1686 = vmul.f32 %v1358, 0.35355338
      %v1687 = vmul.f32 %v1470, 0.35355338
      %v1688 = vmul.f32 %v1475, 0.35355338
      %v1689 = vmul.f32 %v1480, 0.35355338
      %v1690 = vmul.f32 %v1485, 0.35355338
      %v1691 = vmul.f32 %v1490, 0.35355338
      %v1692 = vmul.f32 %v1495, 0.35355338
      %v1693 = vmul.f32 %v1500, 0.35355338
      %v1694 = vmul.f32 %v1612, 0.35355338
      %v1695 = vmul.f32 %v1617, 0.35355338
      %v1696 = vmul.f32 %v1622, 0.35355338
      %v1697 = vmul.f32 %v1627, 0.35355338
      %v1698 = vmul.f32 %v1632, 0.35355338
      %v1699 = vmul.f32 %v1637, 0.35355338
      %v1700 = vmul.f32 %v1642, 0.35355338
      %v1701 = vld [vmem:[%s295] sm:$0xff]
      %v1702 = vld [vmem:[%s295 + $0x8] sm:$0xff]
      %v1703 = vld [vmem:[%s295 + $0x10] sm:$0xff]
      %v1704 = vld [vmem:[%s295 + $0x18] sm:$0xff]
      %v1705 = vld [vmem:[%s295 + $0x20] sm:$0xff]
      %v1706 = vld [vmem:[%s295 + $0x28] sm:$0xff]
      %v1707 = vld [vmem:[%s295 + $0x30] sm:$0x1]
      %v1708 = vadd.f32 %v1645, %v1701
      %v1709 = vadd.f32 %v1646, %v1702
      %v1710 = vadd.f32 %v1647, %v1703
      %v1711 = vadd.f32 %v1648, %v1704
      %v1712 = vadd.f32 %v1649, %v1705
      %v1713 = vadd.f32 %v1650, %v1706
      %v1714 = vadd.f32 %v1651, %v1707
      %v1715 = vadd.f32 %v1652, %v1701
      %v1716 = vadd.f32 %v1653, %v1702
      %v1717 = vadd.f32 %v1654, %v1703
      %v1718 = vadd.f32 %v1655, %v1704
      %v1719 = vadd.f32 %v1656, %v1705
      %v1720 = vadd.f32 %v1657, %v1706
      %v1721 = vadd.f32 %v1658, %v1707
      %v1722 = vadd.f32 %v1659, %v1701
      %v1723 = vadd.f32 %v1660, %v1702
      %v1724 = vadd.f32 %v1661, %v1703
      %v1725 = vadd.f32 %v1662, %v1704
      %v1726 = vadd.f32 %v1663, %v1705
      %v1727 = vadd.f32 %v1664, %v1706
      %v1728 = vadd.f32 %v1665, %v1707
      %v1729 = vadd.f32 %v1666, %v1701
      %v1730 = vadd.f32 %v1667, %v1702
      %v1731 = vadd.f32 %v1668, %v1703
      %v1732 = vadd.f32 %v1669, %v1704
      %v1733 = vadd.f32 %v1670, %v1705
      %v1734 = vadd.f32 %v1671, %v1706
      %v1735 = vadd.f32 %v1672, %v1707
      %v1736 = vadd.f32 %v1673, %v1701
      %v1737 = vadd.f32 %v1674, %v1702
      %v1738 = vadd.f32 %v1675, %v1703
      %v1739 = vadd.f32 %v1676, %v1704
      %v1740 = vadd.f32 %v1677, %v1705
      %v1741 = vadd.f32 %v1678, %v1706
      %v1742 = vadd.f32 %v1679, %v1707
      %v1743 = vadd.f32 %v1680, %v1701
      %v1744 = vadd.f32 %v1681, %v1702
      %v1745 = vadd.f32 %v1682, %v1703
      %v1746 = vadd.f32 %v1683, %v1704
      %v1747 = vadd.f32 %v1684, %v1705
      %v1748 = vadd.f32 %v1685, %v1706
      %v1749 = vadd.f32 %v1686, %v1707
      %v1750 = vadd.f32 %v1687, %v1701
      %v1751 = vadd.f32 %v1688, %v1702
      %v1752 = vadd.f32 %v1689, %v1703
      %v1753 = vadd.f32 %v1690, %v1704
      %v1754 = vadd.f32 %v1691, %v1705
      %v1755 = vadd.f32 %v1692, %v1706
      %v1756 = vadd.f32 %v1693, %v1707
      %v1757 = vadd.f32 %v1694, %v1701
      %v1758 = vadd.f32 %v1695, %v1702
      %v1759 = vadd.f32 %v1696, %v1703
      %v1760 = vadd.f32 %v1697, %v1704
      %v1761 = vadd.f32 %v1698, %v1705
      %v1762 = vadd.f32 %v1699, %v1706
      %v1763 = vadd.f32 %v1700, %v1707
      %vm1764 = vcmask 400384
      %v1765 = vsel %vm1764, %v1708, -inf
      %1766 = vmax.xlane.f32.xlu0 %v1765
      %v1767 = vpop.xlane.xlu0 %1766
      %v1768 = vsel %vm1764, %v1709, -inf
      %1769 = vmax.xlane.f32.xlu0 %v1768
      %v1770 = vpop.xlane.xlu0 %1769
      %v1771 = vsel %vm1764, %v1710, -inf
      %1772 = vmax.xlane.f32.xlu0 %v1771
      %v1773 = vpop.xlane.xlu0 %1772
      %v1774 = vsel %vm1764, %v1711, -inf
      %1775 = vmax.xlane.f32.xlu0 %v1774
      %v1776 = vpop.xlane.xlu0 %1775
      %v1777 = vsel %vm1764, %v1712, -inf
      %1778 = vmax.xlane.f32.xlu0 %v1777
      %v1779 = vpop.xlane.xlu0 %1778
      %v1780 = vsel %vm1764, %v1713, -inf
      %1781 = vmax.xlane.f32.xlu0 %v1780
      %v1782 = vpop.xlane.xlu0 %1781
      %vm1783 = vcmask 393216
      %v1784 = vsel %vm1783, %v1714, -inf
      %1785 = vmax.xlane.f32.xlu0 %v1784
      %v1786 = vpop.xlane.xlu0 %1785
      %v1787 = vsel %vm1764, %v1715, -inf
      %1788 = vmax.xlane.f32.xlu0 %v1787
      %v1789 = vpop.xlane.xlu0 %1788
      %v1790 = vsel %vm1764, %v1716, -inf
      %1791 = vmax.xlane.f32.xlu0 %v1790
      %v1792 = vpop.xlane.xlu0 %1791
      %v1793 = vsel %vm1764, %v1717, -inf
      %1794 = vmax.xlane.f32.xlu0 %v1793
      %v1795 = vpop.xlane.xlu0 %1794
      %v1796 = vsel %vm1764, %v1718, -inf
      %1797 = vmax.xlane.f32.xlu0 %v1796
      %v1798 = vpop.xlane.xlu0 %1797
      %v1799 = vsel %vm1764, %v1719, -inf
      %1800 = vmax.xlane.f32.xlu0 %v1799
      %v1801 = vpop.xlane.xlu0 %1800
      %v1802 = vsel %vm1764, %v1720, -inf
      %1803 = vmax.xlane.f32.xlu0 %v1802
      %v1804 = vpop.xlane.xlu0 %1803
      %v1805 = vsel %vm1783, %v1721, -inf
      %1806 = vmax.xlane.f32.xlu0 %v1805
      %v1807 = vpop.xlane.xlu0 %1806
      %v1808 = vsel %vm1764, %v1722, -inf
      %1809 = vmax.xlane.f32.xlu0 %v1808
      %v1810 = vpop.xlane.xlu0 %1809
      %v1811 = vsel %vm1764, %v1723, -inf
      %1812 = vmax.xlane.f32.xlu0 %v1811
      %v1813 = vpop.xlane.xlu0 %1812
      %v1814 = vsel %vm1764, %v1724, -inf
      %1815 = vmax.xlane.f32.xlu0 %v1814
      %v1816 = vpop.xlane.xlu0 %1815
      %v1817 = vsel %vm1764, %v1725, -inf
      %1818 = vmax.xlane.f32.xlu0 %v1817
      %v1819 = vpop.xlane.xlu0 %1818
      %v1820 = vsel %vm1764, %v1726, -inf
      %1821 = vmax.xlane.f32.xlu0 %v1820
      %v1822 = vpop.xlane.xlu0 %1821
      %v1823 = vsel %vm1764, %v1727, -inf
      %1824 = vmax.xlane.f32.xlu0 %v1823
      %v1825 = vpop.xlane.xlu0 %1824
      %v1826 = vsel %vm1783, %v1728, -inf
      %1827 = vmax.xlane.f32.xlu0 %v1826
      %v1828 = vpop.xlane.xlu0 %1827
      %v1829 = vsel %vm1764, %v1729, -inf
      %1830 = vmax.xlane.f32.xlu0 %v1829
      %v1831 = vpop.xlane.xlu0 %1830
      %v1832 = vsel %vm1764, %v1730, -inf
      %1833 = vmax.xlane.f32.xlu0 %v1832
      %v1834 = vpop.xlane.xlu0 %1833
      %v1835 = vsel %vm1764, %v1731, -inf
      %1836 = vmax.xlane.f32.xlu0 %v1835
      %v1837 = vpop.xlane.xlu0 %1836
      %v1838 = vsel %vm1764, %v1732, -inf
      %1839 = vmax.xlane.f32.xlu0 %v1838
      %v1840 = vpop.xlane.xlu0 %1839
      %v1841 = vsel %vm1764, %v1733, -inf
      %1842 = vmax.xlane.f32.xlu0 %v1841
      %v1843 = vpop.xlane.xlu0 %1842
      %v1844 = vsel %vm1764, %v1734, -inf
      %1845 = vmax.xlane.f32.xlu0 %v1844
      %v1846 = vpop.xlane.xlu0 %1845
      %v1847 = vsel %vm1783, %v1735, -inf
      %1848 = vmax.xlane.f32.xlu0 %v1847
      %v1849 = vpop.xlane.xlu0 %1848
      %v1850 = vsel %vm1764, %v1736, -inf
      %1851 = vmax.xlane.f32.xlu0 %v1850
      %v1852 = vpop.xlane.xlu0 %1851
      %v1853 = vsel %vm1764, %v1737, -inf
      %1854 = vmax.xlane.f32.xlu0 %v1853
      %v1855 = vpop.xlane.xlu0 %1854
      %v1856 = vsel %vm1764, %v1738, -inf
      %1857 = vmax.xlane.f32.xlu0 %v1856
      %v1858 = vpop.xlane.xlu0 %1857
      %v1859 = vsel %vm1764, %v1739, -inf
      %1860 = vmax.xlane.f32.xlu0 %v1859
      %v1861 = vpop.xlane.xlu0 %1860
      %v1862 = vsel %vm1764, %v1740, -inf
      %1863 = vmax.xlane.f32.xlu0 %v1862
      %v1864 = vpop.xlane.xlu0 %1863
      %v1865 = vsel %vm1764, %v1741, -inf
      %1866 = vmax.xlane.f32.xlu0 %v1865
      %v1867 = vpop.xlane.xlu0 %1866
      %v1868 = vsel %vm1783, %v1742, -inf
      %1869 = vmax.xlane.f32.xlu0 %v1868
      %v1870 = vpop.xlane.xlu0 %1869
      %v1871 = vsel %vm1764, %v1743, -inf
      %1872 = vmax.xlane.f32.xlu0 %v1871
      %v1873 = vpop.xlane.xlu0 %1872
      %v1874 = vsel %vm1764, %v1744, -inf
      %1875 = vmax.xlane.f32.xlu0 %v1874
      %v1876 = vpop.xlane.xlu0 %1875
      %v1877 = vsel %vm1764, %v1745, -inf
      %1878 = vmax.xlane.f32.xlu0 %v1877
      %v1879 = vpop.xlane.xlu0 %1878
      %v1880 = vsel %vm1764, %v1746, -inf
      %1881 = vmax.xlane.f32.xlu0 %v1880
      %v1882 = vpop.xlane.xlu0 %1881
      %v1883 = vsel %vm1764, %v1747, -inf
      %1884 = vmax.xlane.f32.xlu0 %v1883
      %v1885 = vpop.xlane.xlu0 %1884
      %v1886 = vsel %vm1764, %v1748, -inf
      %1887 = vmax.xlane.f32.xlu0 %v1886
      %v1888 = vpop.xlane.xlu0 %1887
      %v1889 = vsel %vm1783, %v1749, -inf
      %1890 = vmax.xlane.f32.xlu0 %v1889
      %v1891 = vpop.xlane.xlu0 %1890
      %v1892 = vsel %vm1764, %v1750, -inf
      %1893 = vmax.xlane.f32.xlu0 %v1892
      %v1894 = vpop.xlane.xlu0 %1893
      %v1895 = vsel %vm1764, %v1751, -inf
      %1896 = vmax.xlane.f32.xlu0 %v1895
      %v1897 = vpop.xlane.xlu0 %1896
      %v1898 = vsel %vm1764, %v1752, -inf
      %1899 = vmax.xlane.f32.xlu0 %v1898
      %v1900 = vpop.xlane.xlu0 %1899
      %v1901 = vsel %vm1764, %v1753, -inf
      %1902 = vmax.xlane.f32.xlu0 %v1901
      %v1903 = vpop.xlane.xlu0 %1902
      %v1904 = vsel %vm1764, %v1754, -inf
      %1905 = vmax.xlane.f32.xlu0 %v1904
      %v1906 = vpop.xlane.xlu0 %1905
      %v1907 = vsel %vm1764, %v1755, -inf
      %1908 = vmax.xlane.f32.xlu0 %v1907
      %v1909 = vpop.xlane.xlu0 %1908
      %v1910 = vsel %vm1783, %v1756, -inf
      %1911 = vmax.xlane.f32.xlu0 %v1910
      %v1912 = vpop.xlane.xlu0 %1911
      %v1913 = vsel %vm1764, %v1757, -inf
      %1914 = vmax.xlane.f32.xlu0 %v1913
      %v1915 = vpop.xlane.xlu0 %1914
      %v1916 = vsel %vm1764, %v1758, -inf
      %1917 = vmax.xlane.f32.xlu0 %v1916
      %v1918 = vpop.xlane.xlu0 %1917
      %v1919 = vsel %vm1764, %v1759, -inf
      %1920 = vmax.xlane.f32.xlu0 %v1919
      %v1921 = vpop.xlane.xlu0 %1920
      %v1922 = vsel %vm1764, %v1760, -inf
      %1923 = vmax.xlane.f32.xlu0 %v1922
      %v1924 = vpop.xlane.xlu0 %1923
      %v1925 = vsel %vm1764, %v1761, -inf
      %1926 = vmax.xlane.f32.xlu0 %v1925
      %v1927 = vpop.xlane.xlu0 %1926
      %v1928 = vsel %vm1764, %v1762, -inf
      %1929 = vmax.xlane.f32.xlu0 %v1928
      %v1930 = vpop.xlane.xlu0 %1929
      %v1931 = vsel %vm1783, %v1763, -inf
      %1932 = vmax.xlane.f32.xlu0 %v1931
      %v1933 = vpop.xlane.xlu0 %1932
      %v1934 = vsub.f32 %v1708, %v1767
      %v1935 = vsub.f32 %v1709, %v1770
      %v1936 = vsub.f32 %v1710, %v1773
      %v1937 = vsub.f32 %v1711, %v1776
      %v1938 = vsub.f32 %v1712, %v1779
      %v1939 = vsub.f32 %v1713, %v1782
      %v1940 = vsub.f32 %v1714, %v1786
      %v1941 = vsub.f32 %v1715, %v1789
      %v1942 = vsub.f32 %v1716, %v1792
      %v1943 = vsub.f32 %v1717, %v1795
      %v1944 = vsub.f32 %v1718, %v1798
      %v1945 = vsub.f32 %v1719, %v1801
      %v1946 = vsub.f32 %v1720, %v1804
      %v1947 = vsub.f32 %v1721, %v1807
      %v1948 = vsub.f32 %v1722, %v1810
      %v1949 = vsub.f32 %v1723, %v1813
      %v1950 = vsub.f32 %v1724, %v1816
      %v1951 = vsub.f32 %v1725, %v1819
      %v1952 = vsub.f32 %v1726, %v1822
      %v1953 = vsub.f32 %v1727, %v1825
      %v1954 = vsub.f32 %v1728, %v1828
      %v1955 = vsub.f32 %v1729, %v1831
      %v1956 = vsub.f32 %v1730, %v1834
      %v1957 = vsub.f32 %v1731, %v1837
      %v1958 = vsub.f32 %v1732, %v1840
      %v1959 = vsub.f32 %v1733, %v1843
      %v1960 = vsub.f32 %v1734, %v1846
      %v1961 = vsub.f32 %v1735, %v1849
      %v1962 = vsub.f32 %v1736, %v1852
      %v1963 = vsub.f32 %v1737, %v1855
      %v1964 = vsub.f32 %v1738, %v1858
      %v1965 = vsub.f32 %v1739, %v1861
      %v1966 = vsub.f32 %v1740, %v1864
      %v1967 = vsub.f32 %v1741, %v1867
      %v1968 = vsub.f32 %v1742, %v1870
      %v1969 = vsub.f32 %v1743, %v1873
      %v1970 = vsub.f32 %v1744, %v1876
      %v1971 = vsub.f32 %v1745, %v1879
      %v1972 = vsub.f32 %v1746, %v1882
      %v1973 = vsub.f32 %v1747, %v1885
      %v1974 = vsub.f32 %v1748, %v1888
      %v1975 = vsub.f32 %v1749, %v1891
      %v1976 = vsub.f32 %v1750, %v1894
      %v1977 = vsub.f32 %v1751, %v1897
      %v1978 = vsub.f32 %v1752, %v1900
      %v1979 = vsub.f32 %v1753, %v1903
      %v1980 = vsub.f32 %v1754, %v1906
      %v1981 = vsub.f32 %v1755, %v1909
      %v1982 = vsub.f32 %v1756, %v1912
      %v1983 = vsub.f32 %v1757, %v1915
      %v1984 = vsub.f32 %v1758, %v1918
      %v1985 = vsub.f32 %v1759, %v1921
      %v1986 = vsub.f32 %v1760, %v1924
      %v1987 = vsub.f32 %v1761, %v1927
      %v1988 = vsub.f32 %v1762, %v1930
      %v1989 = vsub.f32 %v1763, %v1933
      %v1990 = vmul.f32 %v1934, 1.442695
      %v1991 = vpow.pop %v1990
      %v1992 = vmul.f32 %v1935, 1.442695
      %v1993 = vpow.pop %v1992
      %v1994 = vmul.f32 %v1936, 1.442695
      %v1995 = vpow.pop %v1994
      %v1996 = vmul.f32 %v1937, 1.442695
      %v1997 = vpow.pop %v1996
      %v1998 = vmul.f32 %v1938, 1.442695
      %v1999 = vpow.pop %v1998
      %v2000 = vmul.f32 %v1939, 1.442695
      %v2001 = vpow.pop %v2000
      %v2002 = vmul.f32 %v1940, 1.442695
      %v2003 = vpow.pop %v2002
      %v2004 = vmul.f32 %v1941, 1.442695
      %v2005 = vpow.pop %v2004
      %v2006 = vmul.f32 %v1942, 1.442695
      %v2007 = vpow.pop %v2006
      %v2008 = vmul.f32 %v1943, 1.442695
      %v2009 = vpow.pop %v2008
      %v2010 = vmul.f32 %v1944, 1.442695
      %v2011 = vpow.pop %v2010
      %v2012 = vmul.f32 %v1945, 1.442695
      %v2013 = vpow.pop %v2012
      %v2014 = vmul.f32 %v1946, 1.442695
      %v2015 = vpow.pop %v2014
      %v2016 = vmul.f32 %v1947, 1.442695
      %v2017 = vpow.pop %v2016
      %v2018 = vmul.f32 %v1948, 1.442695
      %v2019 = vpow.pop %v2018
      %v2020 = vmul.f32 %v1949, 1.442695
      %v2021 = vpow.pop %v2020
      %v2022 = vmul.f32 %v1950, 1.442695
      %v2023 = vpow.pop %v2022
      %v2024 = vmul.f32 %v1951, 1.442695
      %v2025 = vpow.pop %v2024
      %v2026 = vmul.f32 %v1952, 1.442695
      %v2027 = vpow.pop %v2026
      %v2028 = vmul.f32 %v1953, 1.442695
      %v2029 = vpow.pop %v2028
      %v2030 = vmul.f32 %v1954, 1.442695
      %v2031 = vpow.pop %v2030
      %v2032 = vmul.f32 %v1955, 1.442695
      %v2033 = vpow.pop %v2032
      %v2034 = vmul.f32 %v1956, 1.442695
      %v2035 = vpow.pop %v2034
      %v2036 = vmul.f32 %v1957, 1.442695
      %v2037 = vpow.pop %v2036
      %v2038 = vmul.f32 %v1958, 1.442695
      %v2039 = vpow.pop %v2038
      %v2040 = vmul.f32 %v1959, 1.442695
      %v2041 = vpow.pop %v2040
      %v2042 = vmul.f32 %v1960, 1.442695
      %v2043 = vpow.pop %v2042
      %v2044 = vmul.f32 %v1961, 1.442695
      %v2045 = vpow.pop %v2044
      %v2046 = vmul.f32 %v1962, 1.442695
      %v2047 = vpow.pop %v2046
      %v2048 = vmul.f32 %v1963, 1.442695
      %v2049 = vpow.pop %v2048
      %v2050 = vmul.f32 %v1964, 1.442695
      %v2051 = vpow.pop %v2050
      %v2052 = vmul.f32 %v1965, 1.442695
      %v2053 = vpow.pop %v2052
      %v2054 = vmul.f32 %v1966, 1.442695
      %v2055 = vpow.pop %v2054
      %v2056 = vmul.f32 %v1967, 1.442695
      %v2057 = vpow.pop %v2056
      %v2058 = vmul.f32 %v1968, 1.442695
      %v2059 = vpow.pop %v2058
      %v2060 = vmul.f32 %v1969, 1.442695
      %v2061 = vpow.pop %v2060
      %v2062 = vmul.f32 %v1970, 1.442695
      %v2063 = vpow.pop %v2062
      %v2064 = vmul.f32 %v1971, 1.442695
      %v2065 = vpow.pop %v2064
      %v2066 = vmul.f32 %v1972, 1.442695
      %v2067 = vpow.pop %v2066
      %v2068 = vmul.f32 %v1973, 1.442695
      %v2069 = vpow.pop %v2068
      %v2070 = vmul.f32 %v1974, 1.442695
      %v2071 = vpow.pop %v2070
      %v2072 = vmul.f32 %v1975, 1.442695
      %v2073 = vpow.pop %v2072
      %v2074 = vmul.f32 %v1976, 1.442695
      %v2075 = vpow.pop %v2074
      %v2076 = vmul.f32 %v1977, 1.442695
      %v2077 = vpow.pop %v2076
      %v2078 = vmul.f32 %v1978, 1.442695
      %v2079 = vpow.pop %v2078
      %v2080 = vmul.f32 %v1979, 1.442695
      %v2081 = vpow.pop %v2080
      %v2082 = vmul.f32 %v1980, 1.442695
      %v2083 = vpow.pop %v2082
      %v2084 = vmul.f32 %v1981, 1.442695
      %v2085 = vpow.pop %v2084
      %v2086 = vmul.f32 %v1982, 1.442695
      %v2087 = vpow.pop %v2086
      %v2088 = vmul.f32 %v1983, 1.442695
      %v2089 = vpow.pop %v2088
      %v2090 = vmul.f32 %v1984, 1.442695
      %v2091 = vpow.pop %v2090
      %v2092 = vmul.f32 %v1985, 1.442695
      %v2093 = vpow.pop %v2092
      %v2094 = vmul.f32 %v1986, 1.442695
      %v2095 = vpow.pop %v2094
      %v2096 = vmul.f32 %v1987, 1.442695
      %v2097 = vpow.pop %v2096
      %v2098 = vmul.f32 %v1988, 1.442695
      %v2099 = vpow.pop %v2098
      %v2100 = vmul.f32 %v1989, 1.442695
      %v2101 = vpow.pop %v2100
      %v2102 = vsel %vm1764, %v1991, 0.0
      %2103 = vadd.xlane.f32.xlu0 %v2102
      %v2104 = vpop.xlane.xlu0 %2103
      %v2105 = vsel %vm1764, %v1993, 0.0
      %2106 = vadd.xlane.f32.xlu0 %v2105
      %v2107 = vpop.xlane.xlu0 %2106
      %v2108 = vsel %vm1764, %v1995, 0.0
      %2109 = vadd.xlane.f32.xlu0 %v2108
      %v2110 = vpop.xlane.xlu0 %2109
      %v2111 = vsel %vm1764, %v1997, 0.0
      %2112 = vadd.xlane.f32.xlu0 %v2111
      %v2113 = vpop.xlane.xlu0 %2112
      %v2114 = vsel %vm1764, %v1999, 0.0
      %2115 = vadd.xlane.f32.xlu0 %v2114
      %v2116 = vpop.xlane.xlu0 %2115
      %v2117 = vsel %vm1764, %v2001, 0.0
      %2118 = vadd.xlane.f32.xlu0 %v2117
      %v2119 = vpop.xlane.xlu0 %2118
      %v2120 = vsel %vm1783, %v2003, 0.0
      %2121 = vadd.xlane.f32.xlu0 %v2120
      %v2122 = vpop.xlane.xlu0 %2121
      %v2123 = vsel %vm1764, %v2005, 0.0
      %2124 = vadd.xlane.f32.xlu0 %v2123
      %v2125 = vpop.xlane.xlu0 %2124
      %v2126 = vsel %vm1764, %v2007, 0.0
      %2127 = vadd.xlane.f32.xlu0 %v2126
      %v2128 = vpop.xlane.xlu0 %2127
      %v2129 = vsel %vm1764, %v2009, 0.0
      %2130 = vadd.xlane.f32.xlu0 %v2129
      %v2131 = vpop.xlane.xlu0 %2130
      %v2132 = vsel %vm1764, %v2011, 0.0
      %2133 = vadd.xlane.f32.xlu0 %v2132
      %v2134 = vpop.xlane.xlu0 %2133
      %v2135 = vsel %vm1764, %v2013, 0.0
      %2136 = vadd.xlane.f32.xlu0 %v2135
      %v2137 = vpop.xlane.xlu0 %2136
      %v2138 = vsel %vm1764, %v2015, 0.0
      %2139 = vadd.xlane.f32.xlu0 %v2138
      %v2140 = vpop.xlane.xlu0 %2139
      %v2141 = vsel %vm1783, %v2017, 0.0
      %2142 = vadd.xlane.f32.xlu0 %v2141
      %v2143 = vpop.xlane.xlu0 %2142
      %v2144 = vsel %vm1764, %v2019, 0.0
      %2145 = vadd.xlane.f32.xlu0 %v2144
      %v2146 = vpop.xlane.xlu0 %2145
      %v2147 = vsel %vm1764, %v2021, 0.0
      %2148 = vadd.xlane.f32.xlu0 %v2147
      %v2149 = vpop.xlane.xlu0 %2148
      %v2150 = vsel %vm1764, %v2023, 0.0
      %2151 = vadd.xlane.f32.xlu0 %v2150
      %v2152 = vpop.xlane.xlu0 %2151
      %v2153 = vsel %vm1764, %v2025, 0.0
      %2154 = vadd.xlane.f32.xlu0 %v2153
      %v2155 = vpop.xlane.xlu0 %2154
      %v2156 = vsel %vm1764, %v2027, 0.0
      %2157 = vadd.xlane.f32.xlu0 %v2156
      %v2158 = vpop.xlane.xlu0 %2157
      %v2159 = vsel %vm1764, %v2029, 0.0
      %2160 = vadd.xlane.f32.xlu0 %v2159
      %v2161 = vpop.xlane.xlu0 %2160
      %v2162 = vsel %vm1783, %v2031, 0.0
      %2163 = vadd.xlane.f32.xlu0 %v2162
      %v2164 = vpop.xlane.xlu0 %2163
      %v2165 = vsel %vm1764, %v2033, 0.0
      %2166 = vadd.xlane.f32.xlu0 %v2165
      %v2167 = vpop.xlane.xlu0 %2166
      %v2168 = vsel %vm1764, %v2035, 0.0
      %2169 = vadd.xlane.f32.xlu0 %v2168
      %v2170 = vpop.xlane.xlu0 %2169
      %v2171 = vsel %vm1764, %v2037, 0.0
      %2172 = vadd.xlane.f32.xlu0 %v2171
      %v2173 = vpop.xlane.xlu0 %2172
      %v2174 = vsel %vm1764, %v2039, 0.0
      %2175 = vadd.xlane.f32.xlu0 %v2174
      %v2176 = vpop.xlane.xlu0 %2175
      %v2177 = vsel %vm1764, %v2041, 0.0
      %2178 = vadd.xlane.f32.xlu0 %v2177
      %v2179 = vpop.xlane.xlu0 %2178
      %v2180 = vsel %vm1764, %v2043, 0.0
      %2181 = vadd.xlane.f32.xlu0 %v2180
      %v2182 = vpop.xlane.xlu0 %2181
      %v2183 = vsel %vm1783, %v2045, 0.0
      %2184 = vadd.xlane.f32.xlu0 %v2183
      %v2185 = vpop.xlane.xlu0 %2184
      %v2186 = vsel %vm1764, %v2047, 0.0
      %2187 = vadd.xlane.f32.xlu0 %v2186
      %v2188 = vpop.xlane.xlu0 %2187
      %v2189 = vsel %vm1764, %v2049, 0.0
      %2190 = vadd.xlane.f32.xlu0 %v2189
      %v2191 = vpop.xlane.xlu0 %2190
      %v2192 = vsel %vm1764, %v2051, 0.0
      %2193 = vadd.xlane.f32.xlu0 %v2192
      %v2194 = vpop.xlane.xlu0 %2193
      %v2195 = vsel %vm1764, %v2053, 0.0
      %2196 = vadd.xlane.f32.xlu0 %v2195
      %v2197 = vpop.xlane.xlu0 %2196
      %v2198 = vsel %vm1764, %v2055, 0.0
      %2199 = vadd.xlane.f32.xlu0 %v2198
      %v2200 = vpop.xlane.xlu0 %2199
      %v2201 = vsel %vm1764, %v2057, 0.0
      %2202 = vadd.xlane.f32.xlu0 %v2201
      %v2203 = vpop.xlane.xlu0 %2202
      %v2204 = vsel %vm1783, %v2059, 0.0
      %2205 = vadd.xlane.f32.xlu0 %v2204
      %v2206 = vpop.xlane.xlu0 %2205
      %v2207 = vsel %vm1764, %v2061, 0.0
      %2208 = vadd.xlane.f32.xlu0 %v2207
      %v2209 = vpop.xlane.xlu0 %2208
      %v2210 = vsel %vm1764, %v2063, 0.0
      %2211 = vadd.xlane.f32.xlu0 %v2210
      %v2212 = vpop.xlane.xlu0 %2211
      %v2213 = vsel %vm1764, %v2065, 0.0
      %2214 = vadd.xlane.f32.xlu0 %v2213
      %v2215 = vpop.xlane.xlu0 %2214
      %v2216 = vsel %vm1764, %v2067, 0.0
      %2217 = vadd.xlane.f32.xlu0 %v2216
      %v2218 = vpop.xlane.xlu0 %2217
      %v2219 = vsel %vm1764, %v2069, 0.0
      %2220 = vadd.xlane.f32.xlu0 %v2219
      %v2221 = vpop.xlane.xlu0 %2220
      %v2222 = vsel %vm1764, %v2071, 0.0
      %2223 = vadd.xlane.f32.xlu0 %v2222
      %v2224 = vpop.xlane.xlu0 %2223
      %v2225 = vsel %vm1783, %v2073, 0.0
      %2226 = vadd.xlane.f32.xlu0 %v2225
      %v2227 = vpop.xlane.xlu0 %2226
      %v2228 = vsel %vm1764, %v2075, 0.0
      %2229 = vadd.xlane.f32.xlu0 %v2228
      %v2230 = vpop.xlane.xlu0 %2229
      %v2231 = vsel %vm1764, %v2077, 0.0
      %2232 = vadd.xlane.f32.xlu0 %v2231
      %v2233 = vpop.xlane.xlu0 %2232
      %v2234 = vsel %vm1764, %v2079, 0.0
      %2235 = vadd.xlane.f32.xlu0 %v2234
      %v2236 = vpop.xlane.xlu0 %2235
      %v2237 = vsel %vm1764, %v2081, 0.0
      %2238 = vadd.xlane.f32.xlu0 %v2237
      %v2239 = vpop.xlane.xlu0 %2238
      %v2240 = vsel %vm1764, %v2083, 0.0
      %2241 = vadd.xlane.f32.xlu0 %v2240
      %v2242 = vpop.xlane.xlu0 %2241
      %v2243 = vsel %vm1764, %v2085, 0.0
      %2244 = vadd.xlane.f32.xlu0 %v2243
      %v2245 = vpop.xlane.xlu0 %2244
      %v2246 = vsel %vm1783, %v2087, 0.0
      %2247 = vadd.xlane.f32.xlu0 %v2246
      %v2248 = vpop.xlane.xlu0 %2247
      %v2249 = vsel %vm1764, %v2089, 0.0
      %2250 = vadd.xlane.f32.xlu0 %v2249
      %v2251 = vpop.xlane.xlu0 %2250
      %v2252 = vsel %vm1764, %v2091, 0.0
      %2253 = vadd.xlane.f32.xlu0 %v2252
      %v2254 = vpop.xlane.xlu0 %2253
      %v2255 = vsel %vm1764, %v2093, 0.0
      %2256 = vadd.xlane.f32.xlu0 %v2255
      %v2257 = vpop.xlane.xlu0 %2256
      %v2258 = vsel %vm1764, %v2095, 0.0
      %2259 = vadd.xlane.f32.xlu0 %v2258
      %v2260 = vpop.xlane.xlu0 %2259
      %v2261 = vsel %vm1764, %v2097, 0.0
      %2262 = vadd.xlane.f32.xlu0 %v2261
      %v2263 = vpop.xlane.xlu0 %2262
      %v2264 = vsel %vm1764, %v2099, 0.0
      %2265 = vadd.xlane.f32.xlu0 %v2264
      %v2266 = vpop.xlane.xlu0 %2265
      %v2267 = vsel %vm1783, %v2101, 0.0
      %2268 = vadd.xlane.f32.xlu0 %v2267
      %v2269 = vpop.xlane.xlu0 %2268
      %v2270 = vrcp.pop %v2104
      %v2271 = vmul.f32 %v1991, %v2270
      %v2272 = vrcp.pop %v2107
      %v2273 = vmul.f32 %v1993, %v2272
      %v2274 = vrcp.pop %v2110
      %v2275 = vmul.f32 %v1995, %v2274
      %v2276 = vrcp.pop %v2113
      %v2277 = vmul.f32 %v1997, %v2276
      %v2278 = vrcp.pop %v2116
      %v2279 = vmul.f32 %v1999, %v2278
      %v2280 = vrcp.pop %v2119
      %v2281 = vmul.f32 %v2001, %v2280
      %v2282 = vrcp.pop %v2122
      %v2283 = vmul.f32 %v2003, %v2282
      %v2284 = vrcp.pop %v2125
      %v2285 = vmul.f32 %v2005, %v2284
      %v2286 = vrcp.pop %v2128
      %v2287 = vmul.f32 %v2007, %v2286
      %v2288 = vrcp.pop %v2131
      %v2289 = vmul.f32 %v2009, %v2288
      %v2290 = vrcp.pop %v2134
      %v2291 = vmul.f32 %v2011, %v2290
      %v2292 = vrcp.pop %v2137
      %v2293 = vmul.f32 %v2013, %v2292
      %v2294 = vrcp.pop %v2140
      %v2295 = vmul.f32 %v2015, %v2294
      %v2296 = vrcp.pop %v2143
      %v2297 = vmul.f32 %v2017, %v2296
      %v2298 = vrcp.pop %v2146
      %v2299 = vmul.f32 %v2019, %v2298
      %v2300 = vrcp.pop %v2149
      %v2301 = vmul.f32 %v2021, %v2300
      %v2302 = vrcp.pop %v2152
      %v2303 = vmul.f32 %v2023, %v2302
      %v2304 = vrcp.pop %v2155
      %v2305 = vmul.f32 %v2025, %v2304
      %v2306 = vrcp.pop %v2158
      %v2307 = vmul.f32 %v2027, %v2306
      %v2308 = vrcp.pop %v2161
      %v2309 = vmul.f32 %v2029, %v2308
      %v2310 = vrcp.pop %v2164
      %v2311 = vmul.f32 %v2031, %v2310
      %v2312 = vrcp.pop %v2167
      %v2313 = vmul.f32 %v2033, %v2312
      %v2314 = vrcp.pop %v2170
      %v2315 = vmul.f32 %v2035, %v2314
      %v2316 = vrcp.pop %v2173
      %v2317 = vmul.f32 %v2037, %v2316
      %v2318 = vrcp.pop %v2176
      %v2319 = vmul.f32 %v2039, %v2318
      %v2320 = vrcp.pop %v2179
      %v2321 = vmul.f32 %v2041, %v2320
      %v2322 = vrcp.pop %v2182
      %v2323 = vmul.f32 %v2043, %v2322
      %v2324 = vrcp.pop %v2185
      %v2325 = vmul.f32 %v2045, %v2324
      %v2326 = vrcp.pop %v2188
      %v2327 = vmul.f32 %v2047, %v2326
      %v2328 = vrcp.pop %v2191
      %v2329 = vmul.f32 %v2049, %v2328
      %v2330 = vrcp.pop %v2194
      %v2331 = vmul.f32 %v2051, %v2330
      %v2332 = vrcp.pop %v2197
      %v2333 = vmul.f32 %v2053, %v2332
      %v2334 = vrcp.pop %v2200
      %v2335 = vmul.f32 %v2055, %v2334
      %v2336 = vrcp.pop %v2203
      %v2337 = vmul.f32 %v2057, %v2336
      %v2338 = vrcp.pop %v2206
      %v2339 = vmul.f32 %v2059, %v2338
      %v2340 = vrcp.pop %v2209
      %v2341 = vmul.f32 %v2061, %v2340
      %v2342 = vrcp.pop %v2212
      %v2343 = vmul.f32 %v2063, %v2342
      %v2344 = vrcp.pop %v2215
      %v2345 = vmul.f32 %v2065, %v2344
      %v2346 = vrcp.pop %v2218
      %v2347 = vmul.f32 %v2067, %v2346
      %v2348 = vrcp.pop %v2221
      %v2349 = vmul.f32 %v2069, %v2348
      %v2350 = vrcp.pop %v2224
      %v2351 = vmul.f32 %v2071, %v2350
      %v2352 = vrcp.pop %v2227
      %v2353 = vmul.f32 %v2073, %v2352
      %v2354 = vrcp.pop %v2230
      %v2355 = vmul.f32 %v2075, %v2354
      %v2356 = vrcp.pop %v2233
      %v2357 = vmul.f32 %v2077, %v2356
      %v2358 = vrcp.pop %v2236
      %v2359 = vmul.f32 %v2079, %v2358
      %v2360 = vrcp.pop %v2239
      %v2361 = vmul.f32 %v2081, %v2360
      %v2362 = vrcp.pop %v2242
      %v2363 = vmul.f32 %v2083, %v2362
      %v2364 = vrcp.pop %v2245
      %v2365 = vmul.f32 %v2085, %v2364
      %v2366 = vrcp.pop %v2248
      %v2367 = vmul.f32 %v2087, %v2366
      %v2368 = vrcp.pop %v2251
      %v2369 = vmul.f32 %v2089, %v2368
      %v2370 = vrcp.pop %v2254
      %v2371 = vmul.f32 %v2091, %v2370
      %v2372 = vrcp.pop %v2257
      %v2373 = vmul.f32 %v2093, %v2372
      %v2374 = vrcp.pop %v2260
      %v2375 = vmul.f32 %v2095, %v2374
      %v2376 = vrcp.pop %v2263
      %v2377 = vmul.f32 %v2097, %v2376
      %v2378 = vrcp.pop %v2266
      %v2379 = vmul.f32 %v2099, %v2378
      %v2380 = vrcp.pop %v2269
      %v2381 = vmul.f32 %v2101, %v2380
      %v2383 = vsel %vm1764, %v2271, 0
      %v2386 = vsel %vm1764, %v2273, 0
      %v2389 = vsel %vm1764, %v2275, 0
      %v2392 = vsel %vm1764, %v2277, 0
      %v2395 = vsel %vm1764, %v2279, 0
      %v2398 = vsel %vm1764, %v2281, 0
      %v2401 = vsel %vm1764, %v2283, 0
      %vm2403 = vcmask 1040384
      %v2405 = vsel %vm2403, %v458, 0
      %2407 = vmatprep.subr.mxu0 0.0
      %2408 = vmatpush1.msra.mxu0 %v452
      %2409 = vmatprep.subr.mxu0 0.0
      %2410 = vmatpush1.msra.mxu0 %v453
      %2411 = vmatprep.subr.mxu0 0.0
      %2412 = vmatpush1.msra.mxu0 %v454
      %2413 = vmatprep.subr.mxu0 0.0
      %2414 = vmatpush1.msra.mxu0 %v455
      %2415 = vmatprep.subr.mxu0 0.0
      %2416 = vmatpush1.msra.mxu0 %v456
      %2417 = vmatprep.subr.mxu0 0.0
      %2418 = vmatpush1.msra.mxu0 %v457
      %2419 = vmatprep.subr.mxu0 0.0
      %2420 = vmatpush1.msra.mxu0 %v2405
      %2421 = vmatprep.subr.mxu0 0.0
      %2422 = vmatpush1.msra.mxu0 0.0
      %2423 = vmatprep.subr.mxu0 0.0
      %2424 = vmatpush1.msra.mxu0 0.0
      %2425 = vmatprep.subr.mxu0 0.0
      %2426 = vmatpush1.msra.mxu0 0.0
      %2427 = vmatprep.subr.mxu0 0.0
      %2428 = vmatpush1.msra.mxu0 0.0
      %2429 = vmatprep.subr.mxu0 0.0
      %2430 = vmatpush1.msra.mxu0 0.0
      %2431 = vmatprep.subr.mxu0 0.0
      %2432 = vmatpush1.msra.mxu0 0.0
      %2433 = vmatprep.subr.mxu0 0.0
      %2434 = vmatpush1.msra.mxu0 0.0
      %2435 = vmatprep.subr.mxu0 0.0
      %2436 = vmatpush1.msra.mxu0 0.0
      %2437 = vmatprep.subr.mxu0 0.0
      %2438 = vmatpush1.msra.mxu0 0.0
      %2439 = vmatprep.subr.mxu0 0.0
      %2440 = vmatpush1.msra.mxu0 0.0
      %2441 = vmatprep.subr.mxu0 0.0
      %2442 = vmatpush1.msra.mxu0 0.0
      %2443 = vmatprep.subr.mxu0 0.0
      %2444 = vmatpush1.msra.mxu0 0.0
      %2445 = vmatprep.subr.mxu0 0.0
      %2446 = vmatpush1.msra.mxu0 0.0
      %2447 = vmatprep.subr.mxu0 0.0
      %2448 = vmatpush1.msra.mxu0 0.0
      %2449 = vmatprep.subr.mxu0 0.0
      %2450 = vmatpush1.msra.mxu0 0.0
      %2451 = vmatprep.subr.mxu0 0.0
      %2452 = vmatpush1.msra.mxu0 0.0
      %2453 = vmatprep.subr.mxu0 0.0
      %2454 = vmatpush1.msra.mxu0 0.0
      %2455 = vmatprep.subr.mxu0 0.0
      %2456 = vmatpush1.msra.mxu0 0.0
      %2457 = vmatprep.subr.mxu0 0.0
      %2458 = vmatpush1.msra.mxu0 0.0
      %2459 = vmatprep.subr.mxu0 0.0
      %2460 = vmatpush1.msra.mxu0 0.0
      %2461 = vmatprep.subr.mxu0 0.0
      %2462 = vmatpush1.msra.mxu0 0.0
      %2463 = vmatprep.subr.mxu0 0.0
      %2464 = vmatpush1.msra.mxu0 0.0
      %2465 = vmatprep.subr.mxu0 0.0
      %2466 = vmatpush1.msra.mxu0 0.0
      %2467 = vmatprep.subr.mxu0 0.0
      %2468 = vmatpush1.msra.mxu0 0.0
      %2469 = vmatprep.subr.mxu0 0.0
      %2470 = vmatpush1.msra.mxu0 0.0
      %2471 = vmatprep.mubr.f32.mxu0 0.0
      %2472 = vmatmul.mubr.f32.gmra.mrb[0].mxu0 %v2383
      %v2473 = vpop.f32.mrb[0].mxu0
      %v2474 = vadd.f32 0.0, %v2473
      %v2475 = vpop.f32.mrb[0].mxu0
      %2476 = vmatprep.mubr.f32.mxu0 0.0
      %2477 = vmatmul.mubr.f32.gmra.mrb[0].mxu0 %v2386
      %v2478 = vpop.f32.mrb[0].mxu0
      %v2479 = vadd.f32 0.0, %v2478
      %v2480 = vpop.f32.mrb[0].mxu0
      %2481 = vmatprep.mubr.f32.mxu0 0.0
      %2482 = vmatmul.mubr.f32.gmra.mrb[0].mxu0 %v2389
      %v2483 = vpop.f32.mrb[0].mxu0
      %v2484 = vadd.f32 0.0, %v2483
      %v2485 = vpop.f32.mrb[0].mxu0
      %2486 = vmatprep.mubr.f32.mxu0 0.0
      %2487 = vmatmul.mubr.f32.gmra.mrb[0].mxu0 %v2392
      %v2488 = vpop.f32.mrb[0].mxu0
      %v2489 = vadd.f32 0.0, %v2488
      %v2490 = vpop.f32.mrb[0].mxu0
      %2491 = vmatprep.mubr.f32.mxu0 0.0
      %2492 = vmatmul.mubr.f32.gmra.mrb[0].mxu0 %v2395
      %v2493 = vpop.f32.mrb[0].mxu0
      %v2494 = vadd.f32 0.0, %v2493
      %v2495 = vpop.f32.mrb[0].mxu0
      %2496 = vmatprep.mubr.f32.mxu0 0.0
      %2497 = vmatmul.mubr.f32.gmra.mrb[0].mxu0 %v2398
      %v2498 = vpop.f32.mrb[0].mxu0
      %v2499 = vadd.f32 0.0, %v2498
      %v2500 = vpop.f32.mrb[0].mxu0
      %2501 = vmatprep.mubr.f32.mxu0 0.0
      %2502 = vmatmul.mubr.f32.gmra.mrb[0].mxu0 %v2401
      %v2503 = vpop.f32.mrb[0].mxu0
      %v2504 = vadd.f32 0.0, %v2503
      %v2505 = vpop.f32.mrb[0].mxu0
      %2506 = vdwg.mxu0
      %v2508 = vsel %vm1764, %v2285, 0
      %v2511 = vsel %vm1764, %v2287, 0
      %v2514 = vsel %vm1764, %v2289, 0
      %v2517 = vsel %vm1764, %v2291, 0
      %v2520 = vsel %vm1764, %v2293, 0
      %v2523 = vsel %vm1764, %v2295, 0
      %v2526 = vsel %vm1764, %v2297, 0
      %v2529 = vsel %vm2403, %v465, 0
      %2531 = vmatprep.subr.mxu0 0.0
      %2532 = vmatpush1.msra.mxu0 %v459
      %2533 = vmatprep.subr.mxu0 0.0
      %2534 = vmatpush1.msra.mxu0 %v460
      %2535 = vmatprep.subr.mxu0 0.0
      %2536 = vmatpush1.msra.mxu0 %v461
      %2537 = vmatprep.subr.mxu0 0.0
      %2538 = vmatpush1.msra.mxu0 %v462
      %2539 = vmatprep.subr.mxu0 0.0
      %2540 = vmatpush1.msra.mxu0 %v463
      %2541 = vmatprep.subr.mxu0 0.0
      %2542 = vmatpush1.msra.mxu0 %v464
      %2543 = vmatprep.subr.mxu0 0.0
      %2544 = vmatpush1.msra.mxu0 %v2529
      %2545 = vmatprep.subr.mxu0 0.0
      %2546 = vmatpush1.msra.mxu0 0.0
      %2547 = vmatprep.subr.mxu0 0.0
      %2548 = vmatpush1.msra.mxu0 0.0
      %2549 = vmatprep.subr.mxu0 0.0
      %2550 = vmatpush1.msra.mxu0 0.0
      %2551 = vmatprep.subr.mxu0 0.0
      %2552 = vmatpush1.msra.mxu0 0.0
      %2553 = vmatprep.subr.mxu0 0.0
      %2554 = vmatpush1.msra.mxu0 0.0
      %2555 = vmatprep.subr.mxu0 0.0
      %2556 = vmatpush1.msra.mxu0 0.0
      %2557 = vmatprep.subr.mxu0 0.0
      %2558 = vmatpush1.msra.mxu0 0.0
      %2559 = vmatprep.subr.mxu0 0.0
      %2560 = vmatpush1.msra.mxu0 0.0
      %2561 = vmatprep.subr.mxu0 0.0
      %2562 = vmatpush1.msra.mxu0 0.0
      %2563 = vmatprep.subr.mxu0 0.0
      %2564 = vmatpush1.msra.mxu0 0.0
      %2565 = vmatprep.subr.mxu0 0.0
      %2566 = vmatpush1.msra.mxu0 0.0
      %2567 = vmatprep.subr.mxu0 0.0
      %2568 = vmatpush1.msra.mxu0 0.0
      %2569 = vmatprep.subr.mxu0 0.0
      %2570 = vmatpush1.msra.mxu0 0.0
      %2571 = vmatprep.subr.mxu0 0.0
      %2572 = vmatpush1.msra.mxu0 0.0
      %2573 = vmatprep.subr.mxu0 0.0
      %2574 = vmatpush1.msra.mxu0 0.0
      %2575 = vmatprep.subr.mxu0 0.0
      %2576 = vmatpush1.msra.mxu0 0.0
      %2577 = vmatprep.subr.mxu0 0.0
      %2578 = vmatpush1.msra.mxu0 0.0
      %2579 = vmatprep.subr.mxu0 0.0
      %2580 = vmatpush1.msra.mxu0 0.0
      %2581 = vmatprep.subr.mxu0 0.0
      %2582 = vmatpush1.msra.mxu0 0.0
      %2583 = vmatprep.subr.mxu0 0.0
      %2584 = vmatpush1.msra.mxu0 0.0
      %2585 = vmatprep.subr.mxu0 0.0
      %2586 = vmatpush1.msra.mxu0 0.0
      %2587 = vmatprep.subr.mxu0 0.0
      %2588 = vmatpush1.msra.mxu0 0.0
      %2589 = vmatprep.subr.mxu0 0.0
      %2590 = vmatpush1.msra.mxu0 0.0
      %2591 = vmatprep.subr.mxu0 0.0
      %2592 = vmatpush1.msra.mxu0 0.0
      %2593 = vmatprep.subr.mxu0 0.0
      %2594 = vmatpush1.msra.mxu0 0.0
      %2595 = vmatprep.mubr.f32.mxu0 0.0
      %2596 = vmatmul.mubr.f32.gmra.mrb[0].mxu0 %v2508
      %v2597 = vpop.f32.mrb[0].mxu0
      %v2598 = vadd.f32 0.0, %v2597
      %v2599 = vpop.f32.mrb[0].mxu0
      %2600 = vmatprep.mubr.f32.mxu0 0.0
      %2601 = vmatmul.mubr.f32.gmra.mrb[0].mxu0 %v2511
      %v2602 = vpop.f32.mrb[0].mxu0
      %v2603 = vadd.f32 0.0, %v2602
      %v2604 = vpop.f32.mrb[0].mxu0
      %2605 = vmatprep.mubr.f32.mxu0 0.0
      %2606 = vmatmul.mubr.f32.gmra.mrb[0].mxu0 %v2514
      %v2607 = vpop.f32.mrb[0].mxu0
      %v2608 = vadd.f32 0.0, %v2607
      %v2609 = vpop.f32.mrb[0].mxu0
      %2610 = vmatprep.mubr.f32.mxu0 0.0
      %2611 = vmatmul.mubr.f32.gmra.mrb[0].mxu0 %v2517
      %v2612 = vpop.f32.mrb[0].mxu0
      %v2613 = vadd.f32 0.0, %v2612
      %v2614 = vpop.f32.mrb[0].mxu0
      %2615 = vmatprep.mubr.f32.mxu0 0.0
      %2616 = vmatmul.mubr.f32.gmra.mrb[0].mxu0 %v2520
      %v2617 = vpop.f32.mrb[0].mxu0
      %v2618 = vadd.f32 0.0, %v2617
      %v2619 = vpop.f32.mrb[0].mxu0
      %2620 = vmatprep.mubr.f32.mxu0 0.0
      %2621 = vmatmul.mubr.f32.gmra.mrb[0].mxu0 %v2523
      %v2622 = vpop.f32.mrb[0].mxu0
      %v2623 = vadd.f32 0.0, %v2622
      %v2624 = vpop.f32.mrb[0].mxu0
      %2625 = vmatprep.mubr.f32.mxu0 0.0
      %2626 = vmatmul.mubr.f32.gmra.mrb[0].mxu0 %v2526
      %v2627 = vpop.f32.mrb[0].mxu0
      %v2628 = vadd.f32 0.0, %v2627
      %v2629 = vpop.f32.mrb[0].mxu0
      %2630 = vdwg.mxu0
      %v2632 = vsel %vm1764, %v2299, 0
      %v2635 = vsel %vm1764, %v2301, 0
      %v2638 = vsel %vm1764, %v2303, 0
      %v2641 = vsel %vm1764, %v2305, 0
      %v2644 = vsel %vm1764, %v2307, 0
      %v2647 = vsel %vm1764, %v2309, 0
      %v2650 = vsel %vm1764, %v2311, 0
      %v2653 = vsel %vm2403, %v472, 0
      %2655 = vmatprep.subr.mxu0 0.0
      %2656 = vmatpush1.msra.mxu0 %v466
      %2657 = vmatprep.subr.mxu0 0.0
      %2658 = vmatpush1.msra.mxu0 %v467
      %2659 = vmatprep.subr.mxu0 0.0
      %2660 = vmatpush1.msra.mxu0 %v468
      %2661 = vmatprep.subr.mxu0 0.0
      %2662 = vmatpush1.msra.mxu0 %v469
      %2663 = vmatprep.subr.mxu0 0.0
      %2664 = vmatpush1.msra.mxu0 %v470
      %2665 = vmatprep.subr.mxu0 0.0
      %2666 = vmatpush1.msra.mxu0 %v471
      %2667 = vmatprep.subr.mxu0 0.0
      %2668 = vmatpush1.msra.mxu0 %v2653
      %2669 = vmatprep.subr.mxu0 0.0
      %2670 = vmatpush1.msra.mxu0 0.0
      %2671 = vmatprep.subr.mxu0 0.0
      %2672 = vmatpush1.msra.mxu0 0.0
      %2673 = vmatprep.subr.mxu0 0.0
      %2674 = vmatpush1.msra.mxu0 0.0
      %2675 = vmatprep.subr.mxu0 0.0
      %2676 = vmatpush1.msra.mxu0 0.0
      %2677 = vmatprep.subr.mxu0 0.0
      %2678 = vmatpush1.msra.mxu0 0.0
      %2679 = vmatprep.subr.mxu0 0.0
      %2680 = vmatpush1.msra.mxu0 0.0
      %2681 = vmatprep.subr.mxu0 0.0
      %2682 = vmatpush1.msra.mxu0 0.0
      %2683 = vmatprep.subr.mxu0 0.0
      %2684 = vmatpush1.msra.mxu0 0.0
      %2685 = vmatprep.subr.mxu0 0.0
      %2686 = vmatpush1.msra.mxu0 0.0
      %2687 = vmatprep.subr.mxu0 0.0
      %2688 = vmatpush1.msra.mxu0 0.0
      %2689 = vmatprep.subr.mxu0 0.0
      %2690 = vmatpush1.msra.mxu0 0.0
      %2691 = vmatprep.subr.mxu0 0.0
      %2692 = vmatpush1.msra.mxu0 0.0
      %2693 = vmatprep.subr.mxu0 0.0
      %2694 = vmatpush1.msra.mxu0 0.0
      %2695 = vmatprep.subr.mxu0 0.0
      %2696 = vmatpush1.msra.mxu0 0.0
      %2697 = vmatprep.subr.mxu0 0.0
      %2698 = vmatpush1.msra.mxu0 0.0
      %2699 = vmatprep.subr.mxu0 0.0
      %2700 = vmatpush1.msra.mxu0 0.0
      %2701 = vmatprep.subr.mxu0 0.0
      %2702 = vmatpush1.msra.mxu0 0.0
      %2703 = vmatprep.subr.mxu0 0.0
      %2704 = vmatpush1.msra.mxu0 0.0
      %2705 = vmatprep.subr.mxu0 0.0
      %2706 = vmatpush1.msra.mxu0 0.0
      %2707 = vmatprep.subr.mxu0 0.0
      %2708 = vmatpush1.msra.mxu0 0.0
      %2709 = vmatprep.subr.mxu0 0.0
      %2710 = vmatpush1.msra.mxu0 0.0
      %2711 = vmatprep.subr.mxu0 0.0
      %2712 = vmatpush1.msra.mxu0 0.0
      %2713 = vmatprep.subr.mxu0 0.0
      %2714 = vmatpush1.msra.mxu0 0.0
      %2715 = vmatprep.subr.mxu0 0.0
      %2716 = vmatpush1.msra.mxu0 0.0
      %2717 = vmatprep.subr.mxu0 0.0
      %2718 = vmatpush1.msra.mxu0 0.0
      %2719 = vmatprep.mubr.f32.mxu0 0.0
      %2720 = vmatmul.mubr.f32.gmra.mrb[0].mxu0 %v2632
      %v2721 = vpop.f32.mrb[0].mxu0
      %v2722 = vadd.f32 0.0, %v2721
      %v2723 = vpop.f32.mrb[0].mxu0
      %2724 = vmatprep.mubr.f32.mxu0 0.0
      %2725 = vmatmul.mubr.f32.gmra.mrb[0].mxu0 %v2635
      %v2726 = vpop.f32.mrb[0].mxu0
      %v2727 = vadd.f32 0.0, %v2726
      %v2728 = vpop.f32.mrb[0].mxu0
      %2729 = vmatprep.mubr.f32.mxu0 0.0
      %2730 = vmatmul.mubr.f32.gmra.mrb[0].mxu0 %v2638
      %v2731 = vpop.f32.mrb[0].mxu0
      %v2732 = vadd.f32 0.0, %v2731
      %v2733 = vpop.f32.mrb[0].mxu0
      %2734 = vmatprep.mubr.f32.mxu0 0.0
      %2735 = vmatmul.mubr.f32.gmra.mrb[0].mxu0 %v2641
      %v2736 = vpop.f32.mrb[0].mxu0
      %v2737 = vadd.f32 0.0, %v2736
      %v2738 = vpop.f32.mrb[0].mxu0
      %2739 = vmatprep.mubr.f32.mxu0 0.0
      %2740 = vmatmul.mubr.f32.gmra.mrb[0].mxu0 %v2644
      %v2741 = vpop.f32.mrb[0].mxu0
      %v2742 = vadd.f32 0.0, %v2741
      %v2743 = vpop.f32.mrb[0].mxu0
      %2744 = vmatprep.mubr.f32.mxu0 0.0
      %2745 = vmatmul.mubr.f32.gmra.mrb[0].mxu0 %v2647
      %v2746 = vpop.f32.mrb[0].mxu0
      %v2747 = vadd.f32 0.0, %v2746
      %v2748 = vpop.f32.mrb[0].mxu0
      %2749 = vmatprep.mubr.f32.mxu0 0.0
      %2750 = vmatmul.mubr.f32.gmra.mrb[0].mxu0 %v2650
      %v2751 = vpop.f32.mrb[0].mxu0
      %v2752 = vadd.f32 0.0, %v2751
      %v2753 = vpop.f32.mrb[0].mxu0
      %2754 = vdwg.mxu0
      %v2756 = vsel %vm1764, %v2313, 0
      %v2759 = vsel %vm1764, %v2315, 0
      %v2762 = vsel %vm1764, %v2317, 0
      %v2765 = vsel %vm1764, %v2319, 0
      %v2768 = vsel %vm1764, %v2321, 0
      %v2771 = vsel %vm1764, %v2323, 0
      %v2774 = vsel %vm1764, %v2325, 0
      %v2777 = vsel %vm2403, %v479, 0
      %2779 = vmatprep.subr.mxu0 0.0
      %2780 = vmatpush1.msra.mxu0 %v473
      %2781 = vmatprep.subr.mxu0 0.0
      %2782 = vmatpush1.msra.mxu0 %v474
      %2783 = vmatprep.subr.mxu0 0.0
      %2784 = vmatpush1.msra.mxu0 %v475
      %2785 = vmatprep.subr.mxu0 0.0
      %2786 = vmatpush1.msra.mxu0 %v476
      %2787 = vmatprep.subr.mxu0 0.0
      %2788 = vmatpush1.msra.mxu0 %v477
      %2789 = vmatprep.subr.mxu0 0.0
      %2790 = vmatpush1.msra.mxu0 %v478
      %2791 = vmatprep.subr.mxu0 0.0
      %2792 = vmatpush1.msra.mxu0 %v2777
      %2793 = vmatprep.subr.mxu0 0.0
      %2794 = vmatpush1.msra.mxu0 0.0
      %2795 = vmatprep.subr.mxu0 0.0
      %2796 = vmatpush1.msra.mxu0 0.0
      %2797 = vmatprep.subr.mxu0 0.0
      %2798 = vmatpush1.msra.mxu0 0.0
      %2799 = vmatprep.subr.mxu0 0.0
      %2800 = vmatpush1.msra.mxu0 0.0
      %2801 = vmatprep.subr.mxu0 0.0
      %2802 = vmatpush1.msra.mxu0 0.0
      %2803 = vmatprep.subr.mxu0 0.0
      %2804 = vmatpush1.msra.mxu0 0.0
      %2805 = vmatprep.subr.mxu0 0.0
      %2806 = vmatpush1.msra.mxu0 0.0
      %2807 = vmatprep.subr.mxu0 0.0
      %2808 = vmatpush1.msra.mxu0 0.0
      %2809 = vmatprep.subr.mxu0 0.0
      %2810 = vmatpush1.msra.mxu0 0.0
      %2811 = vmatprep.subr.mxu0 0.0
      %2812 = vmatpush1.msra.mxu0 0.0
      %2813 = vmatprep.subr.mxu0 0.0
      %2814 = vmatpush1.msra.mxu0 0.0
      %2815 = vmatprep.subr.mxu0 0.0
      %2816 = vmatpush1.msra.mxu0 0.0
      %2817 = vmatprep.subr.mxu0 0.0
      %2818 = vmatpush1.msra.mxu0 0.0
      %2819 = vmatprep.subr.mxu0 0.0
      %2820 = vmatpush1.msra.mxu0 0.0
      %2821 = vmatprep.subr.mxu0 0.0
      %2822 = vmatpush1.msra.mxu0 0.0
      %2823 = vmatprep.subr.mxu0 0.0
      %2824 = vmatpush1.msra.mxu0 0.0
      %2825 = vmatprep.subr.mxu0 0.0
      %2826 = vmatpush1.msra.mxu0 0.0
      %2827 = vmatprep.subr.mxu0 0.0
      %2828 = vmatpush1.msra.mxu0 0.0
      %2829 = vmatprep.subr.mxu0 0.0
      %2830 = vmatpush1.msra.mxu0 0.0
      %2831 = vmatprep.subr.mxu0 0.0
      %2832 = vmatpush1.msra.mxu0 0.0
      %2833 = vmatprep.subr.mxu0 0.0
      %2834 = vmatpush1.msra.mxu0 0.0
      %2835 = vmatprep.subr.mxu0 0.0
      %2836 = vmatpush1.msra.mxu0 0.0
      %2837 = vmatprep.subr.mxu0 0.0
      %2838 = vmatpush1.msra.mxu0 0.0
      %2839 = vmatprep.subr.mxu0 0.0
      %2840 = vmatpush1.msra.mxu0 0.0
      %2841 = vmatprep.subr.mxu0 0.0
      %2842 = vmatpush1.msra.mxu0 0.0
      %2843 = vmatprep.mubr.f32.mxu0 0.0
      %2844 = vmatmul.mubr.f32.gmra.mrb[0].mxu0 %v2756
      %v2845 = vpop.f32.mrb[0].mxu0
      %v2846 = vadd.f32 0.0, %v2845
      %v2847 = vpop.f32.mrb[0].mxu0
      %2848 = vmatprep.mubr.f32.mxu0 0.0
      %2849 = vmatmul.mubr.f32.gmra.mrb[0].mxu0 %v2759
      %v2850 = vpop.f32.mrb[0].mxu0
      %v2851 = vadd.f32 0.0, %v2850
      %v2852 = vpop.f32.mrb[0].mxu0
      %2853 = vmatprep.mubr.f32.mxu0 0.0
      %2854 = vmatmul.mubr.f32.gmra.mrb[0].mxu0 %v2762
      %v2855 = vpop.f32.mrb[0].mxu0
      %v2856 = vadd.f32 0.0, %v2855
      %v2857 = vpop.f32.mrb[0].mxu0
      %2858 = vmatprep.mubr.f32.mxu0 0.0
      %2859 = vmatmul.mubr.f32.gmra.mrb[0].mxu0 %v2765
      %v2860 = vpop.f32.mrb[0].mxu0
      %v2861 = vadd.f32 0.0, %v2860
      %v2862 = vpop.f32.mrb[0].mxu0
      %2863 = vmatprep.mubr.f32.mxu0 0.0
      %2864 = vmatmul.mubr.f32.gmra.mrb[0].mxu0 %v2768
      %v2865 = vpop.f32.mrb[0].mxu0
      %v2866 = vadd.f32 0.0, %v2865
      %v2867 = vpop.f32.mrb[0].mxu0
      %2868 = vmatprep.mubr.f32.mxu0 0.0
      %2869 = vmatmul.mubr.f32.gmra.mrb[0].mxu0 %v2771
      %v2870 = vpop.f32.mrb[0].mxu0
      %v2871 = vadd.f32 0.0, %v2870
      %v2872 = vpop.f32.mrb[0].mxu0
      %2873 = vmatprep.mubr.f32.mxu0 0.0
      %2874 = vmatmul.mubr.f32.gmra.mrb[0].mxu0 %v2774
      %v2875 = vpop.f32.mrb[0].mxu0
      %v2876 = vadd.f32 0.0, %v2875
      %v2877 = vpop.f32.mrb[0].mxu0
      %2878 = vdwg.mxu0
      %v2880 = vsel %vm1764, %v2327, 0
      %v2883 = vsel %vm1764, %v2329, 0
      %v2886 = vsel %vm1764, %v2331, 0
      %v2889 = vsel %vm1764, %v2333, 0
      %v2892 = vsel %vm1764, %v2335, 0
      %v2895 = vsel %vm1764, %v2337, 0
      %v2898 = vsel %vm1764, %v2339, 0
      %v2901 = vsel %vm2403, %v486, 0
      %2903 = vmatprep.subr.mxu0 0.0
      %2904 = vmatpush1.msra.mxu0 %v480
      %2905 = vmatprep.subr.mxu0 0.0
      %2906 = vmatpush1.msra.mxu0 %v481
      %2907 = vmatprep.subr.mxu0 0.0
      %2908 = vmatpush1.msra.mxu0 %v482
      %2909 = vmatprep.subr.mxu0 0.0
      %2910 = vmatpush1.msra.mxu0 %v483
      %2911 = vmatprep.subr.mxu0 0.0
      %2912 = vmatpush1.msra.mxu0 %v484
      %2913 = vmatprep.subr.mxu0 0.0
      %2914 = vmatpush1.msra.mxu0 %v485
      %2915 = vmatprep.subr.mxu0 0.0
      %2916 = vmatpush1.msra.mxu0 %v2901
      %2917 = vmatprep.subr.mxu0 0.0
      %2918 = vmatpush1.msra.mxu0 0.0
      %2919 = vmatprep.subr.mxu0 0.0
      %2920 = vmatpush1.msra.mxu0 0.0
      %2921 = vmatprep.subr.mxu0 0.0
      %2922 = vmatpush1.msra.mxu0 0.0
      %2923 = vmatprep.subr.mxu0 0.0
      %2924 = vmatpush1.msra.mxu0 0.0
      %2925 = vmatprep.subr.mxu0 0.0
      %2926 = vmatpush1.msra.mxu0 0.0
      %2927 = vmatprep.subr.mxu0 0.0
      %2928 = vmatpush1.msra.mxu0 0.0
      %2929 = vmatprep.subr.mxu0 0.0
      %2930 = vmatpush1.msra.mxu0 0.0
      %2931 = vmatprep.subr.mxu0 0.0
      %2932 = vmatpush1.msra.mxu0 0.0
      %2933 = vmatprep.subr.mxu0 0.0
      %2934 = vmatpush1.msra.mxu0 0.0
      %2935 = vmatprep.subr.mxu0 0.0
      %2936 = vmatpush1.msra.mxu0 0.0
      %2937 = vmatprep.subr.mxu0 0.0
      %2938 = vmatpush1.msra.mxu0 0.0
      %2939 = vmatprep.subr.mxu0 0.0
      %2940 = vmatpush1.msra.mxu0 0.0
      %2941 = vmatprep.subr.mxu0 0.0
      %2942 = vmatpush1.msra.mxu0 0.0
      %2943 = vmatprep.subr.mxu0 0.0
      %2944 = vmatpush1.msra.mxu0 0.0
      %2945 = vmatprep.subr.mxu0 0.0
      %2946 = vmatpush1.msra.mxu0 0.0
      %2947 = vmatprep.subr.mxu0 0.0
      %2948 = vmatpush1.msra.mxu0 0.0
      %2949 = vmatprep.subr.mxu0 0.0
      %2950 = vmatpush1.msra.mxu0 0.0
      %2951 = vmatprep.subr.mxu0 0.0
      %2952 = vmatpush1.msra.mxu0 0.0
      %2953 = vmatprep.subr.mxu0 0.0
      %2954 = vmatpush1.msra.mxu0 0.0
      %2955 = vmatprep.subr.mxu0 0.0
      %2956 = vmatpush1.msra.mxu0 0.0
      %2957 = vmatprep.subr.mxu0 0.0
      %2958 = vmatpush1.msra.mxu0 0.0
      %2959 = vmatprep.subr.mxu0 0.0
      %2960 = vmatpush1.msra.mxu0 0.0
      %2961 = vmatprep.subr.mxu0 0.0
      %2962 = vmatpush1.msra.mxu0 0.0
      %2963 = vmatprep.subr.mxu0 0.0
      %2964 = vmatpush1.msra.mxu0 0.0
      %2965 = vmatprep.subr.mxu0 0.0
      %2966 = vmatpush1.msra.mxu0 0.0
      %2967 = vmatprep.mubr.f32.mxu0 0.0
      %2968 = vmatmul.mubr.f32.gmra.mrb[0].mxu0 %v2880
      %v2969 = vpop.f32.mrb[0].mxu0
      %v2970 = vadd.f32 0.0, %v2969
      %v2971 = vpop.f32.mrb[0].mxu0
      %2972 = vmatprep.mubr.f32.mxu0 0.0
      %2973 = vmatmul.mubr.f32.gmra.mrb[0].mxu0 %v2883
      %v2974 = vpop.f32.mrb[0].mxu0
      %v2975 = vadd.f32 0.0, %v2974
      %v2976 = vpop.f32.mrb[0].mxu0
      %2977 = vmatprep.mubr.f32.mxu0 0.0
      %2978 = vmatmul.mubr.f32.gmra.mrb[0].mxu0 %v2886
      %v2979 = vpop.f32.mrb[0].mxu0
      %v2980 = vadd.f32 0.0, %v2979
      %v2981 = vpop.f32.mrb[0].mxu0
      %2982 = vmatprep.mubr.f32.mxu0 0.0
      %2983 = vmatmul.mubr.f32.gmra.mrb[0].mxu0 %v2889
      %v2984 = vpop.f32.mrb[0].mxu0
      %v2985 = vadd.f32 0.0, %v2984
      %v2986 = vpop.f32.mrb[0].mxu0
      %2987 = vmatprep.mubr.f32.mxu0 0.0
      %2988 = vmatmul.mubr.f32.gmra.mrb[0].mxu0 %v2892
      %v2989 = vpop.f32.mrb[0].mxu0
      %v2990 = vadd.f32 0.0, %v2989
      %v2991 = vpop.f32.mrb[0].mxu0
      %2992 = vmatprep.mubr.f32.mxu0 0.0
      %2993 = vmatmul.mubr.f32.gmra.mrb[0].mxu0 %v2895
      %v2994 = vpop.f32.mrb[0].mxu0
      %v2995 = vadd.f32 0.0, %v2994
      %v2996 = vpop.f32.mrb[0].mxu0
      %2997 = vmatprep.mubr.f32.mxu0 0.0
      %2998 = vmatmul.mubr.f32.gmra.mrb[0].mxu0 %v2898
      %v2999 = vpop.f32.mrb[0].mxu0
      %v3000 = vadd.f32 0.0, %v2999
      %v3001 = vpop.f32.mrb[0].mxu0
      %3002 = vdwg.mxu0
      %v3004 = vsel %vm1764, %v2341, 0
      %v3007 = vsel %vm1764, %v2343, 0
      %v3010 = vsel %vm1764, %v2345, 0
      %v3013 = vsel %vm1764, %v2347, 0
      %v3016 = vsel %vm1764, %v2349, 0
      %v3019 = vsel %vm1764, %v2351, 0
      %v3022 = vsel %vm1764, %v2353, 0
      %v3025 = vsel %vm2403, %v493, 0
      %3027 = vmatprep.subr.mxu0 0.0
      %3028 = vmatpush1.msra.mxu0 %v487
      %3029 = vmatprep.subr.mxu0 0.0
      %3030 = vmatpush1.msra.mxu0 %v488
      %3031 = vmatprep.subr.mxu0 0.0
      %3032 = vmatpush1.msra.mxu0 %v489
      %3033 = vmatprep.subr.mxu0 0.0
      %3034 = vmatpush1.msra.mxu0 %v490
      %3035 = vmatprep.subr.mxu0 0.0
      %3036 = vmatpush1.msra.mxu0 %v491
      %3037 = vmatprep.subr.mxu0 0.0
      %3038 = vmatpush1.msra.mxu0 %v492
      %3039 = vmatprep.subr.mxu0 0.0
      %3040 = vmatpush1.msra.mxu0 %v3025
      %3041 = vmatprep.subr.mxu0 0.0
      %3042 = vmatpush1.msra.mxu0 0.0
      %3043 = vmatprep.subr.mxu0 0.0
      %3044 = vmatpush1.msra.mxu0 0.0
      %3045 = vmatprep.subr.mxu0 0.0
      %3046 = vmatpush1.msra.mxu0 0.0
      %3047 = vmatprep.subr.mxu0 0.0
      %3048 = vmatpush1.msra.mxu0 0.0
      %3049 = vmatprep.subr.mxu0 0.0
      %3050 = vmatpush1.msra.mxu0 0.0
      %3051 = vmatprep.subr.mxu0 0.0
      %3052 = vmatpush1.msra.mxu0 0.0
      %3053 = vmatprep.subr.mxu0 0.0
      %3054 = vmatpush1.msra.mxu0 0.0
      %3055 = vmatprep.subr.mxu0 0.0
      %3056 = vmatpush1.msra.mxu0 0.0
      %3057 = vmatprep.subr.mxu0 0.0
      %3058 = vmatpush1.msra.mxu0 0.0
      %3059 = vmatprep.subr.mxu0 0.0
      %3060 = vmatpush1.msra.mxu0 0.0
      %3061 = vmatprep.subr.mxu0 0.0
      %3062 = vmatpush1.msra.mxu0 0.0
      %3063 = vmatprep.subr.mxu0 0.0
      %3064 = vmatpush1.msra.mxu0 0.0
      %3065 = vmatprep.subr.mxu0 0.0
      %3066 = vmatpush1.msra.mxu0 0.0
      %3067 = vmatprep.subr.mxu0 0.0
      %3068 = vmatpush1.msra.mxu0 0.0
      %3069 = vmatprep.subr.mxu0 0.0
      %3070 = vmatpush1.msra.mxu0 0.0
      %3071 = vmatprep.subr.mxu0 0.0
      %3072 = vmatpush1.msra.mxu0 0.0
      %3073 = vmatprep.subr.mxu0 0.0
      %3074 = vmatpush1.msra.mxu0 0.0
      %3075 = vmatprep.subr.mxu0 0.0
      %3076 = vmatpush1.msra.mxu0 0.0
      %3077 = vmatprep.subr.mxu0 0.0
      %3078 = vmatpush1.msra.mxu0 0.0
      %3079 = vmatprep.subr.mxu0 0.0
      %3080 = vmatpush1.msra.mxu0 0.0
      %3081 = vmatprep.subr.mxu0 0.0
      %3082 = vmatpush1.msra.mxu0 0.0
      %3083 = vmatprep.subr.mxu0 0.0
      %3084 = vmatpush1.msra.mxu0 0.0
      %3085 = vmatprep.subr.mxu0 0.0
      %3086 = vmatpush1.msra.mxu0 0.0
      %3087 = vmatprep.subr.mxu0 0.0
      %3088 = vmatpush1.msra.mxu0 0.0
      %3089 = vmatprep.subr.mxu0 0.0
      %3090 = vmatpush1.msra.mxu0 0.0
      %3091 = vmatprep.mubr.f32.mxu0 0.0
      %3092 = vmatmul.mubr.f32.gmra.mrb[0].mxu0 %v3004
      %v3093 = vpop.f32.mrb[0].mxu0
      %v3094 = vadd.f32 0.0, %v3093
      %v3095 = vpop.f32.mrb[0].mxu0
      %3096 = vmatprep.mubr.f32.mxu0 0.0
      %3097 = vmatmul.mubr.f32.gmra.mrb[0].mxu0 %v3007
      %v3098 = vpop.f32.mrb[0].mxu0
      %v3099 = vadd.f32 0.0, %v3098
      %v3100 = vpop.f32.mrb[0].mxu0
      %3101 = vmatprep.mubr.f32.mxu0 0.0
      %3102 = vmatmul.mubr.f32.gmra.mrb[0].mxu0 %v3010
      %v3103 = vpop.f32.mrb[0].mxu0
      %v3104 = vadd.f32 0.0, %v3103
      %v3105 = vpop.f32.mrb[0].mxu0
      %3106 = vmatprep.mubr.f32.mxu0 0.0
      %3107 = vmatmul.mubr.f32.gmra.mrb[0].mxu0 %v3013
      %v3108 = vpop.f32.mrb[0].mxu0
      %v3109 = vadd.f32 0.0, %v3108
      %v3110 = vpop.f32.mrb[0].mxu0
      %3111 = vmatprep.mubr.f32.mxu0 0.0
      %3112 = vmatmul.mubr.f32.gmra.mrb[0].mxu0 %v3016
      %v3113 = vpop.f32.mrb[0].mxu0
      %v3114 = vadd.f32 0.0, %v3113
      %v3115 = vpop.f32.mrb[0].mxu0
      %3116 = vmatprep.mubr.f32.mxu0 0.0
      %3117 = vmatmul.mubr.f32.gmra.mrb[0].mxu0 %v3019
      %v3118 = vpop.f32.mrb[0].mxu0
      %v3119 = vadd.f32 0.0, %v3118
      %v3120 = vpop.f32.mrb[0].mxu0
      %3121 = vmatprep.mubr.f32.mxu0 0.0
      %3122 = vmatmul.mubr.f32.gmra.mrb[0].mxu0 %v3022
      %v3123 = vpop.f32.mrb[0].mxu0
      %v3124 = vadd.f32 0.0, %v3123
      %v3125 = vpop.f32.mrb[0].mxu0
      %3126 = vdwg.mxu0
      %v3128 = vsel %vm1764, %v2355, 0
      %v3131 = vsel %vm1764, %v2357, 0
      %v3134 = vsel %vm1764, %v2359, 0
      %v3137 = vsel %vm1764, %v2361, 0
      %v3140 = vsel %vm1764, %v2363, 0
      %v3143 = vsel %vm1764, %v2365, 0
      %v3146 = vsel %vm1764, %v2367, 0
      %v3149 = vsel %vm2403, %v500, 0
      %3151 = vmatprep.subr.mxu0 0.0
      %3152 = vmatpush1.msra.mxu0 %v494
      %3153 = vmatprep.subr.mxu0 0.0
      %3154 = vmatpush1.msra.mxu0 %v495
      %3155 = vmatprep.subr.mxu0 0.0
      %3156 = vmatpush1.msra.mxu0 %v496
      %3157 = vmatprep.subr.mxu0 0.0
      %3158 = vmatpush1.msra.mxu0 %v497
      %3159 = vmatprep.subr.mxu0 0.0
      %3160 = vmatpush1.msra.mxu0 %v498
      %3161 = vmatprep.subr.mxu0 0.0
      %3162 = vmatpush1.msra.mxu0 %v499
      %3163 = vmatprep.subr.mxu0 0.0
      %3164 = vmatpush1.msra.mxu0 %v3149
      %3165 = vmatprep.subr.mxu0 0.0
      %3166 = vmatpush1.msra.mxu0 0.0
      %3167 = vmatprep.subr.mxu0 0.0
      %3168 = vmatpush1.msra.mxu0 0.0
      %3169 = vmatprep.subr.mxu0 0.0
      %3170 = vmatpush1.msra.mxu0 0.0
      %3171 = vmatprep.subr.mxu0 0.0
      %3172 = vmatpush1.msra.mxu0 0.0
      %3173 = vmatprep.subr.mxu0 0.0
      %3174 = vmatpush1.msra.mxu0 0.0
      %3175 = vmatprep.subr.mxu0 0.0
      %3176 = vmatpush1.msra.mxu0 0.0
      %3177 = vmatprep.subr.mxu0 0.0
      %3178 = vmatpush1.msra.mxu0 0.0
      %3179 = vmatprep.subr.mxu0 0.0
      %3180 = vmatpush1.msra.mxu0 0.0
      %3181 = vmatprep.subr.mxu0 0.0
      %3182 = vmatpush1.msra.mxu0 0.0
      %3183 = vmatprep.subr.mxu0 0.0
      %3184 = vmatpush1.msra.mxu0 0.0
      %3185 = vmatprep.subr.mxu0 0.0
      %3186 = vmatpush1.msra.mxu0 0.0
      %3187 = vmatprep.subr.mxu0 0.0
      %3188 = vmatpush1.msra.mxu0 0.0
      %3189 = vmatprep.subr.mxu0 0.0
      %3190 = vmatpush1.msra.mxu0 0.0
      %3191 = vmatprep.subr.mxu0 0.0
      %3192 = vmatpush1.msra.mxu0 0.0
      %3193 = vmatprep.subr.mxu0 0.0
      %3194 = vmatpush1.msra.mxu0 0.0
      %3195 = vmatprep.subr.mxu0 0.0
      %3196 = vmatpush1.msra.mxu0 0.0
      %3197 = vmatprep.subr.mxu0 0.0
      %3198 = vmatpush1.msra.mxu0 0.0
      %3199 = vmatprep.subr.mxu0 0.0
      %3200 = vmatpush1.msra.mxu0 0.0
      %3201 = vmatprep.subr.mxu0 0.0
      %3202 = vmatpush1.msra.mxu0 0.0
      %3203 = vmatprep.subr.mxu0 0.0
      %3204 = vmatpush1.msra.mxu0 0.0
      %3205 = vmatprep.subr.mxu0 0.0
      %3206 = vmatpush1.msra.mxu0 0.0
      %3207 = vmatprep.subr.mxu0 0.0
      %3208 = vmatpush1.msra.mxu0 0.0
      %3209 = vmatprep.subr.mxu0 0.0
      %3210 = vmatpush1.msra.mxu0 0.0
      %3211 = vmatprep.subr.mxu0 0.0
      %3212 = vmatpush1.msra.mxu0 0.0
      %3213 = vmatprep.subr.mxu0 0.0
      %3214 = vmatpush1.msra.mxu0 0.0
      %3215 = vmatprep.mubr.f32.mxu0 0.0
      %3216 = vmatmul.mubr.f32.gmra.mrb[0].mxu0 %v3128
      %v3217 = vpop.f32.mrb[0].mxu0
      %v3218 = vadd.f32 0.0, %v3217
      %v3219 = vpop.f32.mrb[0].mxu0
      %3220 = vmatprep.mubr.f32.mxu0 0.0
      %3221 = vmatmul.mubr.f32.gmra.mrb[0].mxu0 %v3131
      %v3222 = vpop.f32.mrb[0].mxu0
      %v3223 = vadd.f32 0.0, %v3222
      %v3224 = vpop.f32.mrb[0].mxu0
      %3225 = vmatprep.mubr.f32.mxu0 0.0
      %3226 = vmatmul.mubr.f32.gmra.mrb[0].mxu0 %v3134
      %v3227 = vpop.f32.mrb[0].mxu0
      %v3228 = vadd.f32 0.0, %v3227
      %v3229 = vpop.f32.mrb[0].mxu0
      %3230 = vmatprep.mubr.f32.mxu0 0.0
      %3231 = vmatmul.mubr.f32.gmra.mrb[0].mxu0 %v3137
      %v3232 = vpop.f32.mrb[0].mxu0
      %v3233 = vadd.f32 0.0, %v3232
      %v3234 = vpop.f32.mrb[0].mxu0
      %3235 = vmatprep.mubr.f32.mxu0 0.0
      %3236 = vmatmul.mubr.f32.gmra.mrb[0].mxu0 %v3140
      %v3237 = vpop.f32.mrb[0].mxu0
      %v3238 = vadd.f32 0.0, %v3237
      %v3239 = vpop.f32.mrb[0].mxu0
      %3240 = vmatprep.mubr.f32.mxu0 0.0
      %3241 = vmatmul.mubr.f32.gmra.mrb[0].mxu0 %v3143
      %v3242 = vpop.f32.mrb[0].mxu0
      %v3243 = vadd.f32 0.0, %v3242
      %v3244 = vpop.f32.mrb[0].mxu0
      %3245 = vmatprep.mubr.f32.mxu0 0.0
      %3246 = vmatmul.mubr.f32.gmra.mrb[0].mxu0 %v3146
      %v3247 = vpop.f32.mrb[0].mxu0
      %v3248 = vadd.f32 0.0, %v3247
      %v3249 = vpop.f32.mrb[0].mxu0
      %3250 = vdwg.mxu0
      %v3252 = vsel %vm1764, %v2369, 0
      %v3255 = vsel %vm1764, %v2371, 0
      %v3258 = vsel %vm1764, %v2373, 0
      %v3261 = vsel %vm1764, %v2375, 0
      %v3264 = vsel %vm1764, %v2377, 0
      %v3267 = vsel %vm1764, %v2379, 0
      %v3270 = vsel %vm1764, %v2381, 0
      %v3273 = vsel %vm2403, %v507, 0
      %3275 = vmatprep.subr.mxu0 0.0
      %3276 = vmatpush1.msra.mxu0 %v501
      %3277 = vmatprep.subr.mxu0 0.0
      %3278 = vmatpush1.msra.mxu0 %v502
      %3279 = vmatprep.subr.mxu0 0.0
      %3280 = vmatpush1.msra.mxu0 %v503
      %3281 = vmatprep.subr.mxu0 0.0
      %3282 = vmatpush1.msra.mxu0 %v504
      %3283 = vmatprep.subr.mxu0 0.0
      %3284 = vmatpush1.msra.mxu0 %v505
      %3285 = vmatprep.subr.mxu0 0.0
      %3286 = vmatpush1.msra.mxu0 %v506
      %3287 = vmatprep.subr.mxu0 0.0
      %3288 = vmatpush1.msra.mxu0 %v3273
      %3289 = vmatprep.subr.mxu0 0.0
      %3290 = vmatpush1.msra.mxu0 0.0
      %3291 = vmatprep.subr.mxu0 0.0
      %3292 = vmatpush1.msra.mxu0 0.0
      %3293 = vmatprep.subr.mxu0 0.0
      %3294 = vmatpush1.msra.mxu0 0.0
      %3295 = vmatprep.subr.mxu0 0.0
      %3296 = vmatpush1.msra.mxu0 0.0
      %3297 = vmatprep.subr.mxu0 0.0
      %3298 = vmatpush1.msra.mxu0 0.0
      %3299 = vmatprep.subr.mxu0 0.0
      %3300 = vmatpush1.msra.mxu0 0.0
      %3301 = vmatprep.subr.mxu0 0.0
      %3302 = vmatpush1.msra.mxu0 0.0
      %3303 = vmatprep.subr.mxu0 0.0
      %3304 = vmatpush1.msra.mxu0 0.0
      %3305 = vmatprep.subr.mxu0 0.0
      %3306 = vmatpush1.msra.mxu0 0.0
      %3307 = vmatprep.subr.mxu0 0.0
      %3308 = vmatpush1.msra.mxu0 0.0
      %3309 = vmatprep.subr.mxu0 0.0
      %3310 = vmatpush1.msra.mxu0 0.0
      %3311 = vmatprep.subr.mxu0 0.0
      %3312 = vmatpush1.msra.mxu0 0.0
      %3313 = vmatprep.subr.mxu0 0.0
      %3314 = vmatpush1.msra.mxu0 0.0
      %3315 = vmatprep.subr.mxu0 0.0
      %3316 = vmatpush1.msra.mxu0 0.0
      %3317 = vmatprep.subr.mxu0 0.0
      %3318 = vmatpush1.msra.mxu0 0.0
      %3319 = vmatprep.subr.mxu0 0.0
      %3320 = vmatpush1.msra.mxu0 0.0
      %3321 = vmatprep.subr.mxu0 0.0
      %3322 = vmatpush1.msra.mxu0 0.0
      %3323 = vmatprep.subr.mxu0 0.0
      %3324 = vmatpush1.msra.mxu0 0.0
      %3325 = vmatprep.subr.mxu0 0.0
      %3326 = vmatpush1.msra.mxu0 0.0
      %3327 = vmatprep.subr.mxu0 0.0
      %3328 = vmatpush1.msra.mxu0 0.0
      %3329 = vmatprep.subr.mxu0 0.0
      %3330 = vmatpush1.msra.mxu0 0.0
      %3331 = vmatprep.subr.mxu0 0.0
      %3332 = vmatpush1.msra.mxu0 0.0
      %3333 = vmatprep.subr.mxu0 0.0
      %3334 = vmatpush1.msra.mxu0 0.0
      %3335 = vmatprep.subr.mxu0 0.0
      %3336 = vmatpush1.msra.mxu0 0.0
      %3337 = vmatprep.subr.mxu0 0.0
      %3338 = vmatpush1.msra.mxu0 0.0
      %3339 = vmatprep.mubr.f32.mxu0 0.0
      %3340 = vmatmul.mubr.f32.gmra.mrb[0].mxu0 %v3252
      %v3341 = vpop.f32.mrb[0].mxu0
      %v3342 = vadd.f32 0.0, %v3341
      %v3343 = vpop.f32.mrb[0].mxu0
      %3344 = vmatprep.mubr.f32.mxu0 0.0
      %3345 = vmatmul.mubr.f32.gmra.mrb[0].mxu0 %v3255
      %v3346 = vpop.f32.mrb[0].mxu0
      %v3347 = vadd.f32 0.0, %v3346
      %v3348 = vpop.f32.mrb[0].mxu0
      %3349 = vmatprep.mubr.f32.mxu0 0.0
      %3350 = vmatmul.mubr.f32.gmra.mrb[0].mxu0 %v3258
      %v3351 = vpop.f32.mrb[0].mxu0
      %v3352 = vadd.f32 0.0, %v3351
      %v3353 = vpop.f32.mrb[0].mxu0
      %3354 = vmatprep.mubr.f32.mxu0 0.0
      %3355 = vmatmul.mubr.f32.gmra.mrb[0].mxu0 %v3261
      %v3356 = vpop.f32.mrb[0].mxu0
      %v3357 = vadd.f32 0.0, %v3356
      %v3358 = vpop.f32.mrb[0].mxu0
      %3359 = vmatprep.mubr.f32.mxu0 0.0
      %3360 = vmatmul.mubr.f32.gmra.mrb[0].mxu0 %v3264
      %v3361 = vpop.f32.mrb[0].mxu0
      %v3362 = vadd.f32 0.0, %v3361
      %v3363 = vpop.f32.mrb[0].mxu0
      %3364 = vmatprep.mubr.f32.mxu0 0.0
      %3365 = vmatmul.mubr.f32.gmra.mrb[0].mxu0 %v3267
      %v3366 = vpop.f32.mrb[0].mxu0
      %v3367 = vadd.f32 0.0, %v3366
      %v3368 = vpop.f32.mrb[0].mxu0
      %3369 = vmatprep.mubr.f32.mxu0 0.0
      %3370 = vmatmul.mubr.f32.gmra.mrb[0].mxu0 %v3270
      %v3371 = vpop.f32.mrb[0].mxu0
      %v3372 = vadd.f32 0.0, %v3371
      %v3373 = vpop.f32.mrb[0].mxu0
      %3374 = vdwg.mxu0
      %3375 = vst.msk [vmem:[%s338] sm:$0xff] %vm508, %v2474
      %3376 = vst.msk [vmem:[%s338 + $0x8] sm:$0xff] %vm508, %v2479
      %3377 = vst.msk [vmem:[%s338 + $0x10] sm:$0xff] %vm508, %v2484
      %3378 = vst.msk [vmem:[%s338 + $0x18] sm:$0xff] %vm508, %v2489
      %3379 = vst.msk [vmem:[%s338 + $0x20] sm:$0xff] %vm508, %v2494
      %3380 = vst.msk [vmem:[%s338 + $0x28] sm:$0xff] %vm508, %v2499
      %vm3381 = vcmask 57344
      %3382 = vst.msk [vmem:[%s338 + $0x30] sm:$0x1] %vm3381, %v2504
      %3383 = vst.msk [vmem:[%s338 + $0x38] sm:$0xff] %vm508, %v2598
      %3384 = vst.msk [vmem:[%s338 + $0x40] sm:$0xff] %vm508, %v2603
      %3385 = vst.msk [vmem:[%s338 + $0x48] sm:$0xff] %vm508, %v2608
      %3386 = vst.msk [vmem:[%s338 + $0x50] sm:$0xff] %vm508, %v2613
      %3387 = vst.msk [vmem:[%s338 + $0x58] sm:$0xff] %vm508, %v2618
      %3388 = vst.msk [vmem:[%s338 + $0x60] sm:$0xff] %vm508, %v2623
      %3389 = vst.msk [vmem:[%s338 + $0x68] sm:$0x1] %vm3381, %v2628
      %3390 = vst.msk [vmem:[%s338 + $0x70] sm:$0xff] %vm508, %v2722
      %3391 = vst.msk [vmem:[%s338 + $0x78] sm:$0xff] %vm508, %v2727
      %3392 = vst.msk [vmem:[%s338 + $0x80] sm:$0xff] %vm508, %v2732
      %3393 = vst.msk [vmem:[%s338 + $0x88] sm:$0xff] %vm508, %v2737
      %3394 = vst.msk [vmem:[%s338 + $0x90] sm:$0xff] %vm508, %v2742
      %3395 = vst.msk [vmem:[%s338 + $0x98] sm:$0xff] %vm508, %v2747
      %3396 = vst.msk [vmem:[%s338 + $0xa0] sm:$0x1] %vm3381, %v2752
      %3397 = vst.msk [vmem:[%s338 + $0xa8] sm:$0xff] %vm508, %v2846
      %3398 = vst.msk [vmem:[%s338 + $0xb0] sm:$0xff] %vm508, %v2851
      %3399 = vst.msk [vmem:[%s338 + $0xb8] sm:$0xff] %vm508, %v2856
      %3400 = vst.msk [vmem:[%s338 + $0xc0] sm:$0xff] %vm508, %v2861
      %3401 = vst.msk [vmem:[%s338 + $0xc8] sm:$0xff] %vm508, %v2866
      %3402 = vst.msk [vmem:[%s338 + $0xd0] sm:$0xff] %vm508, %v2871
      %3403 = vst.msk [vmem:[%s338 + $0xd8] sm:$0x1] %vm3381, %v2876
      %3404 = vst.msk [vmem:[%s338 + $0xe0] sm:$0xff] %vm508, %v2970
      %3405 = vst.msk [vmem:[%s338 + $0xe8] sm:$0xff] %vm508, %v2975
      %3406 = vst.msk [vmem:[%s338 + $0xf0] sm:$0xff] %vm508, %v2980
      %3407 = vst.msk [vmem:[%s338 + $0xf8] sm:$0xff] %vm508, %v2985
      %3408 = vst.msk [vmem:[%s338 + $0x100] sm:$0xff] %vm508, %v2990
      %3409 = vst.msk [vmem:[%s338 + $0x108] sm:$0xff] %vm508, %v2995
      %3410 = vst.msk [vmem:[%s338 + $0x110] sm:$0x1] %vm3381, %v3000
      %3411 = vst.msk [vmem:[%s338 + $0x118] sm:$0xff] %vm508, %v3094
      %3412 = vst.msk [vmem:[%s338 + $0x120] sm:$0xff] %vm508, %v3099
      %3413 = vst.msk [vmem:[%s338 + $0x128] sm:$0xff] %vm508, %v3104
      %3414 = vst.msk [vmem:[%s338 + $0x130] sm:$0xff] %vm508, %v3109
      %3415 = vst.msk [vmem:[%s338 + $0x138] sm:$0xff] %vm508, %v3114
      %3416 = vst.msk [vmem:[%s338 + $0x140] sm:$0xff] %vm508, %v3119
      %3417 = vst.msk [vmem:[%s338 + $0x148] sm:$0x1] %vm3381, %v3124
      %3418 = vst.msk [vmem:[%s338 + $0x150] sm:$0xff] %vm508, %v3218
      %3419 = vst.msk [vmem:[%s338 + $0x158] sm:$0xff] %vm508, %v3223
      %3420 = vst.msk [vmem:[%s338 + $0x160] sm:$0xff] %vm508, %v3228
      %3421 = vst.msk [vmem:[%s338 + $0x168] sm:$0xff] %vm508, %v3233
      %3422 = vst.msk [vmem:[%s338 + $0x170] sm:$0xff] %vm508, %v3238
      %3423 = vst.msk [vmem:[%s338 + $0x178] sm:$0xff] %vm508, %v3243
      %3424 = vst.msk [vmem:[%s338 + $0x180] sm:$0x1] %vm3381, %v3248
      %3425 = vst.msk [vmem:[%s338 + $0x188] sm:$0xff] %vm508, %v3342
      %3426 = vst.msk [vmem:[%s338 + $0x190] sm:$0xff] %vm508, %v3347
      %3427 = vst.msk [vmem:[%s338 + $0x198] sm:$0xff] %vm508, %v3352
      %3428 = vst.msk [vmem:[%s338 + $0x1a0] sm:$0xff] %vm508, %v3357
      %3429 = vst.msk [vmem:[%s338 + $0x1a8] sm:$0xff] %vm508, %v3362
      %3430 = vst.msk [vmem:[%s338 + $0x1b0] sm:$0xff] %vm508, %v3367
      %3431 = vst.msk [vmem:[%s338 + $0x1b8] sm:$0x1] %vm3381, %v3372
      %s3432 = smul.u32 8, %s20
      %p3433 = scmp.lt.s32.totalorder %s19, 3
      %s3434 = scalar_select %p3433, %s19, 3
      %p3435 = scmp.lt.s32.totalorder %s3432, 7
      %s3436 = scalar_select %p3435, %s3432, 7
      %s3437 = smul.addr %s3436, 7
      %s3438 = smul.addr %s3434, 56
      %s3439 = sadd.s32 %s3437, %s3438
      %s3440 = smul.addr %s3439, 8
      %s3441 = scalar_lea.vmem %s4, %s3440
      // Predicated region
      $region37: #{swin_encoder_block_forward.6} parent=35 // pred_check
        %p3442 = pneg %p157
      $region38: #{swin_encoder_block_forward.6} parent=35 // pred_check_branch
        %3444 = sbr.rel (%p3442) target = $region40
      $region39: #{swin_encoder_block_forward.6} parent=35 // pred_region
        %s3445 = smul.u32 8, %s20
      $region40: #{swin_encoder_block_forward.6} parent=35 // pred_fallthru
        _
    $region36: #{swin_encoder_block_forward.6} parent=5 // pred_fallthru
      _
    %p3446 = scmp.le.s32.totalorder 2, %s10
    // Predicated region
    $region41: #{swin_encoder_block_forward.6} parent=5 // pred_check
      %p3447 = pneg %p3446
    $region42: #{swin_encoder_block_forward.6} parent=5 // pred_check_branch
      %3449 = sbr.rel (%p3447) target = $region44
    $region43: #{swin_encoder_block_forward.6} parent=5 // pred_region
      %s3450 = ssub.s32 %s10, 2
      // Predicated region
      $region45: #{swin_encoder_block_forward.6} parent=43 // pred_check
        %p3451 = pneg %p163
      $region46: #{swin_encoder_block_forward.6} parent=43 // pred_check_branch
        %3453 = sbr.rel (%p3451) target = $region48
      $region47: #{swin_encoder_block_forward.6} parent=43 // pred_region
        %s3454 = smul.u32 8, %s22
        %p3455 = scmp.lt.s32.totalorder %s21, 3
        %s3456 = scalar_select %p3455, %s21, 3
        %p3457 = scmp.lt.s32.totalorder %s3454, 7
        %s3458 = scalar_select %p3457, %s3454, 7
        %s3459 = smul.addr %s3458, 7
        %s3460 = smul.addr %s3456, 56
        %s3461 = sadd.s32 %s3459, %s3460
        %s3462 = smul.addr %s3461, 8
        %s3463 = scalar_lea.vmem %s4, %s3462
      $region48: #{swin_encoder_block_forward.6} parent=43 // pred_fallthru
        _
    $region44: #{swin_encoder_block_forward.6} parent=5 // pred_fallthru
      _
  $region6: #{swin_encoder_block_forward.6} parent=0 // loop_footer
    %s14 = sadd.s32 1, %s10
  $region7: #{swin_encoder_block_forward.6} parent=0 // loop_footer_branch
    %9 = sbr.rel target = $region3
  $region8: #{swin_encoder_block_forward.6} parent=0 // loop_exit
    _

// kernel: swin_encoder_block_forward.7
$region0: #{swin_encoder_block_forward.7}
  #allocation0 [shape = 'u32[]', space=smem, size = 0x4, offset = 0x4, fixed_abs, tag = 'smem constant byte address 0x4 - core index']
  #allocation1 [shape = 'u32[144,128]{1,0:T(1,128)}', space=vmem, size = 0x12000, scoped, tag = 'internal scratch']
  %s0 = inlined_call_operand.vmem [shape: f32[392,32], index: 0, kind: input, shape index: {}]
  %s1 = inlined_call_operand.vmem [shape: f32[32,32], index: 1, kind: input, shape index: {}]
  %s2 = inlined_call_operand.vmem [shape: f32[1,32], index: 2, kind: input, shape index: {}]
  %s3 = inlined_call_operand.vmem [shape: f32[392,32], index: 3, kind: input, shape index: {}]
  %s4 = inlined_call_operand.vmem [shape: f32[392,32], index: 4, kind: output, shape index: {}]
  %s5 = sld [smem:[#allocation0]]
  $region26: #{swin_encoder_block_forward.7} parent=0
    _
  %s7 = ssub.s32 1, %s5
  %s8 = scalar_select 0, %s7, %s5
  // Predicated region
  $region2: #{swin_encoder_block_forward.7} parent=0 // pred_check
    _
  $region3: #{swin_encoder_block_forward.7} parent=0 // pred_check_branch
    %10 = sbr.rel (0) target = $region5
  $region4: #{swin_encoder_block_forward.7} parent=0 // pred_region
    _
  $region5: #{swin_encoder_block_forward.7} parent=0 // pred_fallthru
    _
  // Predicated region
  $region6: #{swin_encoder_block_forward.7} parent=0 // pred_check
    _
  $region7: #{swin_encoder_block_forward.7} parent=0 // pred_check_branch
    %12 = sbr.rel (0) target = $region9
  $region8: #{swin_encoder_block_forward.7} parent=0 // pred_region
    _
  $region9: #{swin_encoder_block_forward.7} parent=0 // pred_fallthru
    _
  // Predicated region
  $region10: #{swin_encoder_block_forward.7} parent=0 // pred_check
    _
  $region11: #{swin_encoder_block_forward.7} parent=0 // pred_check_branch
    %14 = sbr.rel (0) target = $region13
  $region12: #{swin_encoder_block_forward.7} parent=0 // pred_region
    _
  $region13: #{swin_encoder_block_forward.7} parent=0 // pred_fallthru
    _
  // Predicated region
  $region14: #{swin_encoder_block_forward.7} parent=0 // pred_check
    _
  $region15: #{swin_encoder_block_forward.7} parent=0 // pred_check_branch
    %16 = sbr.rel (0) target = $region17
  $region16: #{swin_encoder_block_forward.7} parent=0 // pred_region
    _
  $region17: #{swin_encoder_block_forward.7} parent=0 // pred_fallthru
    _
  %v17 = vld [vmem:[%s0] sm:$0xff]
  %v18 = vld [vmem:[%s0 + $0x8] sm:$0xff]
  %v19 = vld [vmem:[%s0 + $0x10] sm:$0xff]
  %v20 = vld [vmem:[%s0 + $0x18] sm:$0xff]
  %v21 = vld [vmem:[%s0 + $0x20] sm:$0xff]
  %v22 = vld [vmem:[%s0 + $0x28] sm:$0xff]
  %v23 = vld [vmem:[%s0 + $0x30] sm:$0xff]
  %v24 = vld [vmem:[%s0 + $0x38] sm:$0xff]
  %v25 = vld [vmem:[%s0 + $0x40] sm:$0xff]
  %v26 = vld [vmem:[%s0 + $0x48] sm:$0xff]
  %v27 = vld [vmem:[%s0 + $0x50] sm:$0xff]
  %v28 = vld [vmem:[%s0 + $0x58] sm:$0xff]
  %v29 = vld [vmem:[%s0 + $0x60] sm:$0xff]
  %v30 = vld [vmem:[%s0 + $0x68] sm:$0xff]
  %v31 = vld [vmem:[%s0 + $0x70] sm:$0xff]
  %v32 = vld [vmem:[%s0 + $0x78] sm:$0xff]
  %v33 = vld [vmem:[%s0 + $0x80] sm:$0xff]
  %v34 = vld [vmem:[%s0 + $0x88] sm:$0xff]
  %v35 = vld [vmem:[%s0 + $0x90] sm:$0xff]
  %v36 = vld [vmem:[%s0 + $0x98] sm:$0xff]
  %v37 = vld [vmem:[%s0 + $0xa0] sm:$0xff]
  %v38 = vld [vmem:[%s0 + $0xa8] sm:$0xff]
  %v39 = vld [vmem:[%s0 + $0xb0] sm:$0xff]
  %v40 = vld [vmem:[%s0 + $0xb8] sm:$0xff]
  %v41 = vld [vmem:[%s0 + $0xc0] sm:$0xff]
  %v42 = vld [vmem:[%s0 + $0xc8] sm:$0xff]
  %v43 = vld [vmem:[%s0 + $0xd0] sm:$0xff]
  %v44 = vld [vmem:[%s0 + $0xd8] sm:$0xff]
  %v45 = vld [vmem:[%s0 + $0xe0] sm:$0xff]
  %v46 = vld [vmem:[%s0 + $0xe8] sm:$0xff]
  %v47 = vld [vmem:[%s0 + $0xf0] sm:$0xff]
  %v48 = vld [vmem:[%s0 + $0xf8] sm:$0xff]
  %v49 = vld [vmem:[%s0 + $0x100] sm:$0xff]
  %v50 = vld [vmem:[%s0 + $0x108] sm:$0xff]
  %v51 = vld [vmem:[%s0 + $0x110] sm:$0xff]
  %v52 = vld [vmem:[%s0 + $0x118] sm:$0xff]
  %v53 = vld [vmem:[%s0 + $0x120] sm:$0xff]
  %v54 = vld [vmem:[%s0 + $0x128] sm:$0xff]
  %v55 = vld [vmem:[%s0 + $0x130] sm:$0xff]
  %v56 = vld [vmem:[%s0 + $0x138] sm:$0xff]
  %v57 = vld [vmem:[%s0 + $0x140] sm:$0xff]
  %v58 = vld [vmem:[%s0 + $0x148] sm:$0xff]
  %v59 = vld [vmem:[%s0 + $0x150] sm:$0xff]
  %v60 = vld [vmem:[%s0 + $0x158] sm:$0xff]
  %v61 = vld [vmem:[%s0 + $0x160] sm:$0xff]
  %v62 = vld [vmem:[%s0 + $0x168] sm:$0xff]
  %v63 = vld [vmem:[%s0 + $0x170] sm:$0xff]
  %v64 = vld [vmem:[%s0 + $0x178] sm:$0xff]
  %v65 = vld [vmem:[%s0 + $0x180] sm:$0xff]
  %v66 = vld [vmem:[%s1] sm:$0xff]
  %v67 = vld [vmem:[%s1 + $0x8] sm:$0xff]
  %v68 = vld [vmem:[%s1 + $0x10] sm:$0xff]
  %v69 = vld [vmem:[%s1 + $0x18] sm:$0xff]
  %v70 = vld [vmem:[%s2] sm:$0x1]
  %v72 = vlaneseq
  %v73 = vshrl.u32 %v72, 7
  %v74 = vsub.s32 0, %v73
  %v75 = vrot.slane %v70, %v74
  %vm77 = vcmask 261120
  %v79 = vsel %vm77, %v17, 0
  %v82 = vsel %vm77, %v18, 0
  %v85 = vsel %vm77, %v19, 0
  %v88 = vsel %vm77, %v20, 0
  %v91 = vsel %vm77, %v21, 0
  %v94 = vsel %vm77, %v22, 0
  %v97 = vsel %vm77, %v23, 0
  %v100 = vsel %vm77, %v24, 0
  %v103 = vsel %vm77, %v25, 0
  %v106 = vsel %vm77, %v26, 0
  %v109 = vsel %vm77, %v27, 0
  %v112 = vsel %vm77, %v28, 0
  %v115 = vsel %vm77, %v29, 0
  %v118 = vsel %vm77, %v30, 0
  %v121 = vsel %vm77, %v31, 0
  %v124 = vsel %vm77, %v32, 0
  %v127 = vsel %vm77, %v33, 0
  %v130 = vsel %vm77, %v34, 0
  %v133 = vsel %vm77, %v35, 0
  %v136 = vsel %vm77, %v36, 0
  %v139 = vsel %vm77, %v37, 0
  %v142 = vsel %vm77, %v38, 0
  %v145 = vsel %vm77, %v39, 0
  %v148 = vsel %vm77, %v40, 0
  %v151 = vsel %vm77, %v41, 0
  %v154 = vsel %vm77, %v42, 0
  %v157 = vsel %vm77, %v43, 0
  %v160 = vsel %vm77, %v44, 0
  %v163 = vsel %vm77, %v45, 0
  %v166 = vsel %vm77, %v46, 0
  %v169 = vsel %vm77, %v47, 0
  %v172 = vsel %vm77, %v48, 0
  %v175 = vsel %vm77, %v49, 0
  %v178 = vsel %vm77, %v50, 0
  %v181 = vsel %vm77, %v51, 0
  %v184 = vsel %vm77, %v52, 0
  %v187 = vsel %vm77, %v53, 0
  %v190 = vsel %vm77, %v54, 0
  %v193 = vsel %vm77, %v55, 0
  %v196 = vsel %vm77, %v56, 0
  %v199 = vsel %vm77, %v57, 0
  %v202 = vsel %vm77, %v58, 0
  %v205 = vsel %vm77, %v59, 0
  %v208 = vsel %vm77, %v60, 0
  %v211 = vsel %vm77, %v61, 0
  %v214 = vsel %vm77, %v62, 0
  %v217 = vsel %vm77, %v63, 0
  %v220 = vsel %vm77, %v64, 0
  %v223 = vsel %vm77, %v65, 0
  %225 = vmatprep.subr.mxu0 0.0
  %226 = vmatpush1.msra.mxu0 %v66
  %227 = vmatprep.subr.mxu0 0.0
  %228 = vmatpush1.msra.mxu0 %v67
  %229 = vmatprep.subr.mxu0 0.0
  %230 = vmatpush1.msra.mxu0 %v68
  %231 = vmatprep.subr.mxu0 0.0
  %232 = vmatpush1.msra.mxu0 %v69
  %233 = vmatprep.subr.mxu0 0.0
  %234 = vmatpush1.msra.mxu0 0.0
  %235 = vmatprep.subr.mxu0 0.0
  %236 = vmatpush1.msra.mxu0 0.0
  %237 = vmatprep.subr.mxu0 0.0
  %238 = vmatpush1.msra.mxu0 0.0
  %239 = vmatprep.subr.mxu0 0.0
  %240 = vmatpush1.msra.mxu0 0.0
  %241 = vmatprep.subr.mxu0 0.0
  %242 = vmatpush1.msra.mxu0 0.0
  %243 = vmatprep.subr.mxu0 0.0
  %244 = vmatpush1.msra.mxu0 0.0
  %245 = vmatprep.subr.mxu0 0.0
  %246 = vmatpush1.msra.mxu0 0.0
  %247 = vmatprep.subr.mxu0 0.0
  %248 = vmatpush1.msra.mxu0 0.0
  %249 = vmatprep.subr.mxu0 0.0
  %250 = vmatpush1.msra.mxu0 0.0
  %251 = vmatprep.subr.mxu0 0.0
  %252 = vmatpush1.msra.mxu0 0.0
  %253 = vmatprep.subr.mxu0 0.0
  %254 = vmatpush1.msra.mxu0 0.0
  %255 = vmatprep.subr.mxu0 0.0
  %256 = vmatpush1.msra.mxu0 0.0
  %257 = vmatprep.subr.mxu0 0.0
  %258 = vmatpush1.msra.mxu0 0.0
  %259 = vmatprep.subr.mxu0 0.0
  %260 = vmatpush1.msra.mxu0 0.0
  %261 = vmatprep.subr.mxu0 0.0
  %262 = vmatpush1.msra.mxu0 0.0
  %263 = vmatprep.subr.mxu0 0.0
  %264 = vmatpush1.msra.mxu0 0.0
  %265 = vmatprep.subr.mxu0 0.0
  %266 = vmatpush1.msra.mxu0 0.0
  %267 = vmatprep.subr.mxu0 0.0
  %268 = vmatpush1.msra.mxu0 0.0
  %269 = vmatprep.subr.mxu0 0.0
  %270 = vmatpush1.msra.mxu0 0.0
  %271 = vmatprep.subr.mxu0 0.0
  %272 = vmatpush1.msra.mxu0 0.0
  %273 = vmatprep.subr.mxu0 0.0
  %274 = vmatpush1.msra.mxu0 0.0
  %275 = vmatprep.subr.mxu0 0.0
  %276 = vmatpush1.msra.mxu0 0.0
  %277 = vmatprep.subr.mxu0 0.0
  %278 = vmatpush1.msra.mxu0 0.0
  %279 = vmatprep.subr.mxu0 0.0
  %280 = vmatpush1.msra.mxu0 0.0
  %281 = vmatprep.subr.mxu0 0.0
  %282 = vmatpush1.msra.mxu0 0.0
  %283 = vmatprep.subr.mxu0 0.0
  %284 = vmatpush1.msra.mxu0 0.0
  %285 = vmatprep.subr.mxu0 0.0
  %286 = vmatpush1.msra.mxu0 0.0
  %287 = vmatprep.subr.mxu0 0.0
  %288 = vmatpush1.msra.mxu0 0.0
  %289 = vmatprep.mubr.f32.mxu0 0.0
  %290 = vmatmul.mubr.f32.gmra.mrb[0].mxu0 %v79
  %v291 = vpop.f32.mrb[0].mxu0
  %v292 = vadd.f32 %v75, %v291
  %v293 = vpop.f32.mrb[0].mxu0
  %294 = vmatprep.mubr.f32.mxu0 0.0
  %295 = vmatmul.mubr.f32.gmra.mrb[0].mxu0 %v82
  %v296 = vpop.f32.mrb[0].mxu0
  %v297 = vadd.f32 %v75, %v296
  %v298 = vpop.f32.mrb[0].mxu0
  %299 = vmatprep.mubr.f32.mxu0 0.0
  %300 = vmatmul.mubr.f32.gmra.mrb[0].mxu0 %v85
  %v301 = vpop.f32.mrb[0].mxu0
  %v302 = vadd.f32 %v75, %v301
  %v303 = vpop.f32.mrb[0].mxu0
  %304 = vmatprep.mubr.f32.mxu0 0.0
  %305 = vmatmul.mubr.f32.gmra.mrb[0].mxu0 %v88
  %v306 = vpop.f32.mrb[0].mxu0
  %v307 = vadd.f32 %v75, %v306
  %v308 = vpop.f32.mrb[0].mxu0
  %309 = vmatprep.mubr.f32.mxu0 0.0
  %310 = vmatmul.mubr.f32.gmra.mrb[0].mxu0 %v91
  %v311 = vpop.f32.mrb[0].mxu0
  %v312 = vadd.f32 %v75, %v311
  %v313 = vpop.f32.mrb[0].mxu0
  %314 = vmatprep.mubr.f32.mxu0 0.0
  %315 = vmatmul.mubr.f32.gmra.mrb[0].mxu0 %v94
  %v316 = vpop.f32.mrb[0].mxu0
  %v317 = vadd.f32 %v75, %v316
  %v318 = vpop.f32.mrb[0].mxu0
  %319 = vmatprep.mubr.f32.mxu0 0.0
  %320 = vmatmul.mubr.f32.gmra.mrb[0].mxu0 %v97
  %v321 = vpop.f32.mrb[0].mxu0
  %v322 = vadd.f32 %v75, %v321
  %v323 = vpop.f32.mrb[0].mxu0
  %324 = vmatprep.mubr.f32.mxu0 0.0
  %325 = vmatmul.mubr.f32.gmra.mrb[0].mxu0 %v100
  %v326 = vpop.f32.mrb[0].mxu0
  %v327 = vadd.f32 %v75, %v326
  %v328 = vpop.f32.mrb[0].mxu0
  %329 = vmatprep.mubr.f32.mxu0 0.0
  %330 = vmatmul.mubr.f32.gmra.mrb[0].mxu0 %v103
  %v331 = vpop.f32.mrb[0].mxu0
  %v332 = vadd.f32 %v75, %v331
  %v333 = vpop.f32.mrb[0].mxu0
  %334 = vmatprep.mubr.f32.mxu0 0.0
  %335 = vmatmul.mubr.f32.gmra.mrb[0].mxu0 %v106
  %v336 = vpop.f32.mrb[0].mxu0
  %v337 = vadd.f32 %v75, %v336
  %v338 = vpop.f32.mrb[0].mxu0
  %339 = vmatprep.mubr.f32.mxu0 0.0
  %340 = vmatmul.mubr.f32.gmra.mrb[0].mxu0 %v109
  %v341 = vpop.f32.mrb[0].mxu0
  %v342 = vadd.f32 %v75, %v341
  %v343 = vpop.f32.mrb[0].mxu0
  %344 = vmatprep.mubr.f32.mxu0 0.0
  %345 = vmatmul.mubr.f32.gmra.mrb[0].mxu0 %v112
  %v346 = vpop.f32.mrb[0].mxu0
  %v347 = vadd.f32 %v75, %v346
  %v348 = vpop.f32.mrb[0].mxu0
  %349 = vmatprep.mubr.f32.mxu0 0.0
  %350 = vmatmul.mubr.f32.gmra.mrb[0].mxu0 %v115
  %v351 = vpop.f32.mrb[0].mxu0
  %v352 = vadd.f32 %v75, %v351
  %v353 = vpop.f32.mrb[0].mxu0
  %354 = vmatprep.mubr.f32.mxu0 0.0
  %355 = vmatmul.mubr.f32.gmra.mrb[0].mxu0 %v118
  %v356 = vpop.f32.mrb[0].mxu0
  %v357 = vadd.f32 %v75, %v356
  %v358 = vpop.f32.mrb[0].mxu0
  %359 = vmatprep.mubr.f32.mxu0 0.0
  %360 = vmatmul.mubr.f32.gmra.mrb[0].mxu0 %v121
  %v361 = vpop.f32.mrb[0].mxu0
  %v362 = vadd.f32 %v75, %v361
  %v363 = vpop.f32.mrb[0].mxu0
  %364 = vmatprep.mubr.f32.mxu0 0.0
  %365 = vmatmul.mubr.f32.gmra.mrb[0].mxu0 %v124
  %v366 = vpop.f32.mrb[0].mxu0
  %v367 = vadd.f32 %v75, %v366
  %v368 = vpop.f32.mrb[0].mxu0
  %369 = vmatprep.mubr.f32.mxu0 0.0
  %370 = vmatmul.mubr.f32.gmra.mrb[0].mxu0 %v127
  %v371 = vpop.f32.mrb[0].mxu0
  %v372 = vadd.f32 %v75, %v371
  %v373 = vpop.f32.mrb[0].mxu0
  %374 = vmatprep.mubr.f32.mxu0 0.0
  %375 = vmatmul.mubr.f32.gmra.mrb[0].mxu0 %v130
  %v376 = vpop.f32.mrb[0].mxu0
  %v377 = vadd.f32 %v75, %v376
  %v378 = vpop.f32.mrb[0].mxu0
  %379 = vmatprep.mubr.f32.mxu0 0.0
  %380 = vmatmul.mubr.f32.gmra.mrb[0].mxu0 %v133
  %v381 = vpop.f32.mrb[0].mxu0
  %v382 = vadd.f32 %v75, %v381
  %v383 = vpop.f32.mrb[0].mxu0
  %384 = vmatprep.mubr.f32.mxu0 0.0
  %385 = vmatmul.mubr.f32.gmra.mrb[0].mxu0 %v136
  %v386 = vpop.f32.mrb[0].mxu0
  %v387 = vadd.f32 %v75, %v386
  %v388 = vpop.f32.mrb[0].mxu0
  %389 = vmatprep.mubr.f32.mxu0 0.0
  %390 = vmatmul.mubr.f32.gmra.mrb[0].mxu0 %v139
  %v391 = vpop.f32.mrb[0].mxu0
  %v392 = vadd.f32 %v75, %v391
  %v393 = vpop.f32.mrb[0].mxu0
  %394 = vmatprep.mubr.f32.mxu0 0.0
  %395 = vmatmul.mubr.f32.gmra.mrb[0].mxu0 %v142
  %v396 = vpop.f32.mrb[0].mxu0
  %v397 = vadd.f32 %v75, %v396
  %v398 = vpop.f32.mrb[0].mxu0
  %399 = vmatprep.mubr.f32.mxu0 0.0
  %400 = vmatmul.mubr.f32.gmra.mrb[0].mxu0 %v145
  %v401 = vpop.f32.mrb[0].mxu0
  %v402 = vadd.f32 %v75, %v401
  %v403 = vpop.f32.mrb[0].mxu0
  %404 = vmatprep.mubr.f32.mxu0 0.0
  %405 = vmatmul.mubr.f32.gmra.mrb[0].mxu0 %v148
  %v406 = vpop.f32.mrb[0].mxu0
  %v407 = vadd.f32 %v75, %v406
  %v408 = vpop.f32.mrb[0].mxu0
  %409 = vmatprep.mubr.f32.mxu0 0.0
  %410 = vmatmul.mubr.f32.gmra.mrb[0].mxu0 %v151
  %v411 = vpop.f32.mrb[0].mxu0
  %v412 = vadd.f32 %v75, %v411
  %v413 = vpop.f32.mrb[0].mxu0
  %414 = vmatprep.mubr.f32.mxu0 0.0
  %415 = vmatmul.mubr.f32.gmra.mrb[0].mxu0 %v154
  %v416 = vpop.f32.mrb[0].mxu0
  %v417 = vadd.f32 %v75, %v416
  %v418 = vpop.f32.mrb[0].mxu0
  %419 = vmatprep.mubr.f32.mxu0 0.0
  %420 = vmatmul.mubr.f32.gmra.mrb[0].mxu0 %v157
  %v421 = vpop.f32.mrb[0].mxu0
  %v422 = vadd.f32 %v75, %v421
  %v423 = vpop.f32.mrb[0].mxu0
  %424 = vmatprep.mubr.f32.mxu0 0.0
  %425 = vmatmul.mubr.f32.gmra.mrb[0].mxu0 %v160
  %v426 = vpop.f32.mrb[0].mxu0
  %v427 = vadd.f32 %v75, %v426
  %v428 = vpop.f32.mrb[0].mxu0
  %429 = vmatprep.mubr.f32.mxu0 0.0
  %430 = vmatmul.mubr.f32.gmra.mrb[0].mxu0 %v163
  %v431 = vpop.f32.mrb[0].mxu0
  %v432 = vadd.f32 %v75, %v431
  %v433 = vpop.f32.mrb[0].mxu0
  %434 = vmatprep.mubr.f32.mxu0 0.0
  %435 = vmatmul.mubr.f32.gmra.mrb[0].mxu0 %v166
  %v436 = vpop.f32.mrb[0].mxu0
  %v437 = vadd.f32 %v75, %v436
  %v438 = vpop.f32.mrb[0].mxu0
  %439 = vmatprep.mubr.f32.mxu0 0.0
  %440 = vmatmul.mubr.f32.gmra.mrb[0].mxu0 %v169
  %v441 = vpop.f32.mrb[0].mxu0
  %v442 = vadd.f32 %v75, %v441
  %v443 = vpop.f32.mrb[0].mxu0
  %444 = vmatprep.mubr.f32.mxu0 0.0
  %445 = vmatmul.mubr.f32.gmra.mrb[0].mxu0 %v172
  %v446 = vpop.f32.mrb[0].mxu0
  %v447 = vadd.f32 %v75, %v446
  %v448 = vpop.f32.mrb[0].mxu0
  %449 = vmatprep.mubr.f32.mxu0 0.0
  %450 = vmatmul.mubr.f32.gmra.mrb[0].mxu0 %v175
  %v451 = vpop.f32.mrb[0].mxu0
  %v452 = vadd.f32 %v75, %v451
  %v453 = vpop.f32.mrb[0].mxu0
  %454 = vmatprep.mubr.f32.mxu0 0.0
  %455 = vmatmul.mubr.f32.gmra.mrb[0].mxu0 %v178
  %v456 = vpop.f32.mrb[0].mxu0
  %v457 = vadd.f32 %v75, %v456
  %v458 = vpop.f32.mrb[0].mxu0
  %459 = vmatprep.mubr.f32.mxu0 0.0
  %460 = vmatmul.mubr.f32.gmra.mrb[0].mxu0 %v181
  %v461 = vpop.f32.mrb[0].mxu0
  %v462 = vadd.f32 %v75, %v461
  %v463 = vpop.f32.mrb[0].mxu0
  %464 = vmatprep.mubr.f32.mxu0 0.0
  %465 = vmatmul.mubr.f32.gmra.mrb[0].mxu0 %v184
  %v466 = vpop.f32.mrb[0].mxu0
  %v467 = vadd.f32 %v75, %v466
  %v468 = vpop.f32.mrb[0].mxu0
  %469 = vmatprep.mubr.f32.mxu0 0.0
  %470 = vmatmul.mubr.f32.gmra.mrb[0].mxu0 %v187
  %v471 = vpop.f32.mrb[0].mxu0
  %v472 = vadd.f32 %v75, %v471
  %v473 = vpop.f32.mrb[0].mxu0
  %474 = vmatprep.mubr.f32.mxu0 0.0
  %475 = vmatmul.mubr.f32.gmra.mrb[0].mxu0 %v190
  %v476 = vpop.f32.mrb[0].mxu0
  %v477 = vadd.f32 %v75, %v476
  %v478 = vpop.f32.mrb[0].mxu0
  %479 = vmatprep.mubr.f32.mxu0 0.0
  %480 = vmatmul.mubr.f32.gmra.mrb[0].mxu0 %v193
  %v481 = vpop.f32.mrb[0].mxu0
  %v482 = vadd.f32 %v75, %v481
  %v483 = vpop.f32.mrb[0].mxu0
  %484 = vmatprep.mubr.f32.mxu0 0.0
  %485 = vmatmul.mubr.f32.gmra.mrb[0].mxu0 %v196
  %v486 = vpop.f32.mrb[0].mxu0
  %v487 = vadd.f32 %v75, %v486
  %v488 = vpop.f32.mrb[0].mxu0
  %489 = vmatprep.mubr.f32.mxu0 0.0
  %490 = vmatmul.mubr.f32.gmra.mrb[0].mxu0 %v199
  %v491 = vpop.f32.mrb[0].mxu0
  %v492 = vadd.f32 %v75, %v491
  %v493 = vpop.f32.mrb[0].mxu0
  %494 = vmatprep.mubr.f32.mxu0 0.0
  %495 = vmatmul.mubr.f32.gmra.mrb[0].mxu0 %v202
  %v496 = vpop.f32.mrb[0].mxu0
  %v497 = vadd.f32 %v75, %v496
  %v498 = vpop.f32.mrb[0].mxu0
  %499 = vmatprep.mubr.f32.mxu0 0.0
  %500 = vmatmul.mubr.f32.gmra.mrb[0].mxu0 %v205
  %v501 = vpop.f32.mrb[0].mxu0
  %v502 = vadd.f32 %v75, %v501
  %v503 = vpop.f32.mrb[0].mxu0
  %504 = vmatprep.mubr.f32.mxu0 0.0
  %505 = vmatmul.mubr.f32.gmra.mrb[0].mxu0 %v208
  %v506 = vpop.f32.mrb[0].mxu0
  %v507 = vadd.f32 %v75, %v506
  %v508 = vpop.f32.mrb[0].mxu0
  %509 = vmatprep.mubr.f32.mxu0 0.0
  %510 = vmatmul.mubr.f32.gmra.mrb[0].mxu0 %v211
  %v511 = vpop.f32.mrb[0].mxu0
  %v512 = vadd.f32 %v75, %v511
  %v513 = vpop.f32.mrb[0].mxu0
  %514 = vmatprep.mubr.f32.mxu0 0.0
  %515 = vmatmul.mubr.f32.gmra.mrb[0].mxu0 %v214
  %v516 = vpop.f32.mrb[0].mxu0
  %v517 = vadd.f32 %v75, %v516
  %v518 = vpop.f32.mrb[0].mxu0
  %519 = vmatprep.mubr.f32.mxu0 0.0
  %520 = vmatmul.mubr.f32.gmra.mrb[0].mxu0 %v217
  %v521 = vpop.f32.mrb[0].mxu0
  %v522 = vadd.f32 %v75, %v521
  %v523 = vpop.f32.mrb[0].mxu0
  %524 = vmatprep.mubr.f32.mxu0 0.0
  %525 = vmatmul.mubr.f32.gmra.mrb[0].mxu0 %v220
  %v526 = vpop.f32.mrb[0].mxu0
  %v527 = vadd.f32 %v75, %v526
  %v528 = vpop.f32.mrb[0].mxu0
  %529 = vmatprep.mubr.f32.mxu0 0.0
  %530 = vmatmul.mubr.f32.gmra.mrb[0].mxu0 %v223
  %v531 = vpop.f32.mrb[0].mxu0
  %v532 = vadd.f32 %v75, %v531
  %v533 = vpop.f32.mrb[0].mxu0
  %534 = vdwg.mxu0
  %v535 = vld [vmem:[%s3] sm:$0xff]
  %v536 = vld [vmem:[%s3 + $0x8] sm:$0xff]
  %v537 = vld [vmem:[%s3 + $0x10] sm:$0xff]
  %v538 = vld [vmem:[%s3 + $0x18] sm:$0xff]
  %v539 = vld [vmem:[%s3 + $0x20] sm:$0xff]
  %v540 = vld [vmem:[%s3 + $0x28] sm:$0xff]
  %v541 = vld [vmem:[%s3 + $0x30] sm:$0xff]
  %v542 = vld [vmem:[%s3 + $0x38] sm:$0xff]
  %v543 = vld [vmem:[%s3 + $0x40] sm:$0xff]
  %v544 = vld [vmem:[%s3 + $0x48] sm:$0xff]
  %v545 = vld [vmem:[%s3 + $0x50] sm:$0xff]
  %v546 = vld [vmem:[%s3 + $0x58] sm:$0xff]
  %v547 = vld [vmem:[%s3 + $0x60] sm:$0xff]
  %v548 = vld [vmem:[%s3 + $0x68] sm:$0xff]
  %v549 = vld [vmem:[%s3 + $0x70] sm:$0xff]
  %v550 = vld [vmem:[%s3 + $0x78] sm:$0xff]
  %v551 = vld [vmem:[%s3 + $0x80] sm:$0xff]
  %v552 = vld [vmem:[%s3 + $0x88] sm:$0xff]
  %v553 = vld [vmem:[%s3 + $0x90] sm:$0xff]
  %v554 = vld [vmem:[%s3 + $0x98] sm:$0xff]
  %v555 = vld [vmem:[%s3 + $0xa0] sm:$0xff]
  %v556 = vld [vmem:[%s3 + $0xa8] sm:$0xff]
  %v557 = vld [vmem:[%s3 + $0xb0] sm:$0xff]
  %v558 = vld [vmem:[%s3 + $0xb8] sm:$0xff]
  %v559 = vld [vmem:[%s3 + $0xc0] sm:$0xff]
  %v560 = vld [vmem:[%s3 + $0xc8] sm:$0xff]
  %v561 = vld [vmem:[%s3 + $0xd0] sm:$0xff]
  %v562 = vld [vmem:[%s3 + $0xd8] sm:$0xff]
  %v563 = vld [vmem:[%s3 + $0xe0] sm:$0xff]
  %v564 = vld [vmem:[%s3 + $0xe8] sm:$0xff]
  %v565 = vld [vmem:[%s3 + $0xf0] sm:$0xff]
  %v566 = vld [vmem:[%s3 + $0xf8] sm:$0xff]
  %v567 = vld [vmem:[%s3 + $0x100] sm:$0xff]
  %v568 = vld [vmem:[%s3 + $0x108] sm:$0xff]
  %v569 = vld [vmem:[%s3 + $0x110] sm:$0xff]
  %v570 = vld [vmem:[%s3 + $0x118] sm:$0xff]
  %v571 = vld [vmem:[%s3 + $0x120] sm:$0xff]
  %v572 = vld [vmem:[%s3 + $0x128] sm:$0xff]
  %v573 = vld [vmem:[%s3 + $0x130] sm:$0xff]
  %v574 = vld [vmem:[%s3 + $0x138] sm:$0xff]
  %v575 = vld [vmem:[%s3 + $0x140] sm:$0xff]
  %v576 = vld [vmem:[%s3 + $0x148] sm:$0xff]
  %v577 = vld [vmem:[%s3 + $0x150] sm:$0xff]
  %v578 = vld [vmem:[%s3 + $0x158] sm:$0xff]
  %v579 = vld [vmem:[%s3 + $0x160] sm:$0xff]
  %v580 = vld [vmem:[%s3 + $0x168] sm:$0xff]
  %v581 = vld [vmem:[%s3 + $0x170] sm:$0xff]
  %v582 = vld [vmem:[%s3 + $0x178] sm:$0xff]
  %v583 = vld [vmem:[%s3 + $0x180] sm:$0xff]
  %v584 = vadd.f32 %v292, %v535
  %v585 = vadd.f32 %v297, %v536
  %v586 = vadd.f32 %v302, %v537
  %v587 = vadd.f32 %v307, %v538
  %v588 = vadd.f32 %v312, %v539
  %v589 = vadd.f32 %v317, %v540
  %v590 = vadd.f32 %v322, %v541
  %v591 = vadd.f32 %v327, %v542
  %v592 = vadd.f32 %v332, %v543
  %v593 = vadd.f32 %v337, %v544
  %v594 = vadd.f32 %v342, %v545
  %v595 = vadd.f32 %v347, %v546
  %v596 = vadd.f32 %v352, %v547
  %v597 = vadd.f32 %v357, %v548
  %v598 = vadd.f32 %v362, %v549
  %v599 = vadd.f32 %v367, %v550
  %v600 = vadd.f32 %v372, %v551
  %v601 = vadd.f32 %v377, %v552
  %v602 = vadd.f32 %v382, %v553
  %v603 = vadd.f32 %v387, %v554
  %v604 = vadd.f32 %v392, %v555
  %v605 = vadd.f32 %v397, %v556
  %v606 = vadd.f32 %v402, %v557
  %v607 = vadd.f32 %v407, %v558
  %v608 = vadd.f32 %v412, %v559
  %v609 = vadd.f32 %v417, %v560
  %v610 = vadd.f32 %v422, %v561
  %v611 = vadd.f32 %v427, %v562
  %v612 = vadd.f32 %v432, %v563
  %v613 = vadd.f32 %v437, %v564
  %v614 = vadd.f32 %v442, %v565
  %v615 = vadd.f32 %v447, %v566
  %v616 = vadd.f32 %v452, %v567
  %v617 = vadd.f32 %v457, %v568
  %v618 = vadd.f32 %v462, %v569
  %v619 = vadd.f32 %v467, %v570
  %v620 = vadd.f32 %v472, %v571
  %v621 = vadd.f32 %v477, %v572
  %v622 = vadd.f32 %v482, %v573
  %v623 = vadd.f32 %v487, %v574
  %v624 = vadd.f32 %v492, %v575
  %v625 = vadd.f32 %v497, %v576
  %v626 = vadd.f32 %v502, %v577
  %v627 = vadd.f32 %v507, %v578
  %v628 = vadd.f32 %v512, %v579
  %v629 = vadd.f32 %v517, %v580
  %v630 = vadd.f32 %v522, %v581
  %v631 = vadd.f32 %v527, %v582
  %v632 = vadd.f32 %v532, %v583
  %633 = vst.msk [vmem:[%s4] sm:$0xff] %vm77, %v584
  %634 = vst.msk [vmem:[%s4 + $0x8] sm:$0xff] %vm77, %v585
  %635 = vst.msk [vmem:[%s4 + $0x10] sm:$0xff] %vm77, %v586
  %636 = vst.msk [vmem:[%s4 + $0x18] sm:$0xff] %vm77, %v587
  %637 = vst.msk [vmem:[%s4 + $0x20] sm:$0xff] %vm77, %v588
  %638 = vst.msk [vmem:[%s4 + $0x28] sm:$0xff] %vm77, %v589
  %639 = vst.msk [vmem:[%s4 + $0x30] sm:$0xff] %vm77, %v590
  %640 = vst.msk [vmem:[%s4 + $0x38] sm:$0xff] %vm77, %v591
  %641 = vst.msk [vmem:[%s4 + $0x40] sm:$0xff] %vm77, %v592
  %642 = vst.msk [vmem:[%s4 + $0x48] sm:$0xff] %vm77, %v593
  %643 = vst.msk [vmem:[%s4 + $0x50] sm:$0xff] %vm77, %v594
  %644 = vst.msk [vmem:[%s4 + $0x58] sm:$0xff] %vm77, %v595
  %645 = vst.msk [vmem:[%s4 + $0x60] sm:$0xff] %vm77, %v596
  %646 = vst.msk [vmem:[%s4 + $0x68] sm:$0xff] %vm77, %v597
  %647 = vst.msk [vmem:[%s4 + $0x70] sm:$0xff] %vm77, %v598
  %648 = vst.msk [vmem:[%s4 + $0x78] sm:$0xff] %vm77, %v599
  %649 = vst.msk [vmem:[%s4 + $0x80] sm:$0xff] %vm77, %v600
  %650 = vst.msk [vmem:[%s4 + $0x88] sm:$0xff] %vm77, %v601
  %651 = vst.msk [vmem:[%s4 + $0x90] sm:$0xff] %vm77, %v602
  %652 = vst.msk [vmem:[%s4 + $0x98] sm:$0xff] %vm77, %v603
  %653 = vst.msk [vmem:[%s4 + $0xa0] sm:$0xff] %vm77, %v604
  %654 = vst.msk [vmem:[%s4 + $0xa8] sm:$0xff] %vm77, %v605
  %655 = vst.msk [vmem:[%s4 + $0xb0] sm:$0xff] %vm77, %v606
  %656 = vst.msk [vmem:[%s4 + $0xb8] sm:$0xff] %vm77, %v607
  %657 = vst.msk [vmem:[%s4 + $0xc0] sm:$0xff] %vm77, %v608
  %658 = vst.msk [vmem:[%s4 + $0xc8] sm:$0xff] %vm77, %v609
  %659 = vst.msk [vmem:[%s4 + $0xd0] sm:$0xff] %vm77, %v610
  %660 = vst.msk [vmem:[%s4 + $0xd8] sm:$0xff] %vm77, %v611
  %661 = vst.msk [vmem:[%s4 + $0xe0] sm:$0xff] %vm77, %v612
  %662 = vst.msk [vmem:[%s4 + $0xe8] sm:$0xff] %vm77, %v613
  %663 = vst.msk [vmem:[%s4 + $0xf0] sm:$0xff] %vm77, %v614
  %664 = vst.msk [vmem:[%s4 + $0xf8] sm:$0xff] %vm77, %v615
  %665 = vst.msk [vmem:[%s4 + $0x100] sm:$0xff] %vm77, %v616
  %666 = vst.msk [vmem:[%s4 + $0x108] sm:$0xff] %vm77, %v617
  %667 = vst.msk [vmem:[%s4 + $0x110] sm:$0xff] %vm77, %v618
  %668 = vst.msk [vmem:[%s4 + $0x118] sm:$0xff] %vm77, %v619
  %669 = vst.msk [vmem:[%s4 + $0x120] sm:$0xff] %vm77, %v620
  %670 = vst.msk [vmem:[%s4 + $0x128] sm:$0xff] %vm77, %v621
  %671 = vst.msk [vmem:[%s4 + $0x130] sm:$0xff] %vm77, %v622
  %672 = vst.msk [vmem:[%s4 + $0x138] sm:$0xff] %vm77, %v623
  %673 = vst.msk [vmem:[%s4 + $0x140] sm:$0xff] %vm77, %v624
  %674 = vst.msk [vmem:[%s4 + $0x148] sm:$0xff] %vm77, %v625
  %675 = vst.msk [vmem:[%s4 + $0x150] sm:$0xff] %vm77, %v626
  %676 = vst.msk [vmem:[%s4 + $0x158] sm:$0xff] %vm77, %v627
  %677 = vst.msk [vmem:[%s4 + $0x160] sm:$0xff] %vm77, %v628
  %678 = vst.msk [vmem:[%s4 + $0x168] sm:$0xff] %vm77, %v629
  %679 = vst.msk [vmem:[%s4 + $0x170] sm:$0xff] %vm77, %v630
  %680 = vst.msk [vmem:[%s4 + $0x178] sm:$0xff] %vm77, %v631
  %681 = vst.msk [vmem:[%s4 + $0x180] sm:$0xff] %vm77, %v632
  // Predicated region
  $region18: #{swin_encoder_block_forward.7} parent=0 // pred_check
    _
  $region19: #{swin_encoder_block_forward.7} parent=0 // pred_check_branch
    %683 = sbr.rel (0) target = $region21
  $region20: #{swin_encoder_block_forward.7} parent=0 // pred_region
    _
  $region21: #{swin_encoder_block_forward.7} parent=0 // pred_fallthru
    _
  // Predicated region
  $region22: #{swin_encoder_block_forward.7} parent=0 // pred_check
    _
  $region23: #{swin_encoder_block_forward.7} parent=0 // pred_check_branch
    %685 = sbr.rel (0) target = $region25
  $region24: #{swin_encoder_block_forward.7} parent=0 // pred_region
    _
  $region25: #{swin_encoder_block_forward.7} parent=0 // pred_fallthru
    _

// kernel: swin_encoder_block_forward.8
$region0: #{swin_encoder_block_forward.8}
  #allocation0 [shape = 'u32[]', space=smem, size = 0x4, offset = 0x4, fixed_abs, tag = 'smem constant byte address 0x4 - core index']
  #allocation1 [shape = 'u32[144,128]{1,0:T(1,128)}', space=vmem, size = 0x12000, scoped, tag = 'internal scratch']
  %s0 = inlined_call_operand.vmem [shape: f32[392,32], index: 0, kind: input, shape index: {}]
  %s1 = inlined_call_operand.vmem [shape: f32[1,32], index: 1, kind: input, shape index: {}]
  %s2 = inlined_call_operand.vmem [shape: f32[1,32], index: 2, kind: input, shape index: {}]
  %s3 = inlined_call_operand.vmem [shape: f32[32,128], index: 3, kind: input, shape index: {}]
  %s4 = inlined_call_operand.vmem [shape: f32[1,128], index: 4, kind: input, shape index: {}]
  %s5 = inlined_call_operand.vmem [shape: f32[392,128], index: 5, kind: output, shape index: {}]
  %s6 = sld [smem:[#allocation0]]
  $region30: #{swin_encoder_block_forward.8} parent=0
    _
  %s8 = ssub.s32 1, %s6
  %s9 = scalar_select 0, %s8, %s6
  // Predicated region
  $region2: #{swin_encoder_block_forward.8} parent=0 // pred_check
    _
  $region3: #{swin_encoder_block_forward.8} parent=0 // pred_check_branch
    %11 = sbr.rel (0) target = $region5
  $region4: #{swin_encoder_block_forward.8} parent=0 // pred_region
    _
  $region5: #{swin_encoder_block_forward.8} parent=0 // pred_fallthru
    _
  // Predicated region
  $region6: #{swin_encoder_block_forward.8} parent=0 // pred_check
    _
  $region7: #{swin_encoder_block_forward.8} parent=0 // pred_check_branch
    %13 = sbr.rel (0) target = $region9
  $region8: #{swin_encoder_block_forward.8} parent=0 // pred_region
    _
  $region9: #{swin_encoder_block_forward.8} parent=0 // pred_fallthru
    _
  // Predicated region
  $region10: #{swin_encoder_block_forward.8} parent=0 // pred_check
    _
  $region11: #{swin_encoder_block_forward.8} parent=0 // pred_check_branch
    %15 = sbr.rel (0) target = $region13
  $region12: #{swin_encoder_block_forward.8} parent=0 // pred_region
    _
  $region13: #{swin_encoder_block_forward.8} parent=0 // pred_fallthru
    _
  // Predicated region
  $region14: #{swin_encoder_block_forward.8} parent=0 // pred_check
    _
  $region15: #{swin_encoder_block_forward.8} parent=0 // pred_check_branch
    %17 = sbr.rel (0) target = $region17
  $region16: #{swin_encoder_block_forward.8} parent=0 // pred_region
    _
  $region17: #{swin_encoder_block_forward.8} parent=0 // pred_fallthru
    _
  // Predicated region
  $region18: #{swin_encoder_block_forward.8} parent=0 // pred_check
    _
  $region19: #{swin_encoder_block_forward.8} parent=0 // pred_check_branch
    %19 = sbr.rel (0) target = $region21
  $region20: #{swin_encoder_block_forward.8} parent=0 // pred_region
    _
  $region21: #{swin_encoder_block_forward.8} parent=0 // pred_fallthru
    _
  %v20 = vld [vmem:[%s0] sm:$0xff]
  %v21 = vld [vmem:[%s0 + $0x8] sm:$0xff]
  %v22 = vld [vmem:[%s0 + $0x10] sm:$0xff]
  %v23 = vld [vmem:[%s0 + $0x18] sm:$0xff]
  %v24 = vld [vmem:[%s0 + $0x20] sm:$0xff]
  %v25 = vld [vmem:[%s0 + $0x28] sm:$0xff]
  %v26 = vld [vmem:[%s0 + $0x30] sm:$0xff]
  %v27 = vld [vmem:[%s0 + $0x38] sm:$0xff]
  %v28 = vld [vmem:[%s0 + $0x40] sm:$0xff]
  %v29 = vld [vmem:[%s0 + $0x48] sm:$0xff]
  %v30 = vld [vmem:[%s0 + $0x50] sm:$0xff]
  %v31 = vld [vmem:[%s0 + $0x58] sm:$0xff]
  %v32 = vld [vmem:[%s0 + $0x60] sm:$0xff]
  %v33 = vld [vmem:[%s0 + $0x68] sm:$0xff]
  %v34 = vld [vmem:[%s0 + $0x70] sm:$0xff]
  %v35 = vld [vmem:[%s0 + $0x78] sm:$0xff]
  %v36 = vld [vmem:[%s0 + $0x80] sm:$0xff]
  %v37 = vld [vmem:[%s0 + $0x88] sm:$0xff]
  %v38 = vld [vmem:[%s0 + $0x90] sm:$0xff]
  %v39 = vld [vmem:[%s0 + $0x98] sm:$0xff]
  %v40 = vld [vmem:[%s0 + $0xa0] sm:$0xff]
  %v41 = vld [vmem:[%s0 + $0xa8] sm:$0xff]
  %v42 = vld [vmem:[%s0 + $0xb0] sm:$0xff]
  %v43 = vld [vmem:[%s0 + $0xb8] sm:$0xff]
  %v44 = vld [vmem:[%s0 + $0xc0] sm:$0xff]
  %v45 = vld [vmem:[%s0 + $0xc8] sm:$0xff]
  %v46 = vld [vmem:[%s0 + $0xd0] sm:$0xff]
  %v47 = vld [vmem:[%s0 + $0xd8] sm:$0xff]
  %v48 = vld [vmem:[%s0 + $0xe0] sm:$0xff]
  %v49 = vld [vmem:[%s0 + $0xe8] sm:$0xff]
  %v50 = vld [vmem:[%s0 + $0xf0] sm:$0xff]
  %v51 = vld [vmem:[%s0 + $0xf8] sm:$0xff]
  %v52 = vld [vmem:[%s0 + $0x100] sm:$0xff]
  %v53 = vld [vmem:[%s0 + $0x108] sm:$0xff]
  %v54 = vld [vmem:[%s0 + $0x110] sm:$0xff]
  %v55 = vld [vmem:[%s0 + $0x118] sm:$0xff]
  %v56 = vld [vmem:[%s0 + $0x120] sm:$0xff]
  %v57 = vld [vmem:[%s0 + $0x128] sm:$0xff]
  %v58 = vld [vmem:[%s0 + $0x130] sm:$0xff]
  %v59 = vld [vmem:[%s0 + $0x138] sm:$0xff]
  %v60 = vld [vmem:[%s0 + $0x140] sm:$0xff]
  %v61 = vld [vmem:[%s0 + $0x148] sm:$0xff]
  %v62 = vld [vmem:[%s0 + $0x150] sm:$0xff]
  %v63 = vld [vmem:[%s0 + $0x158] sm:$0xff]
  %v64 = vld [vmem:[%s0 + $0x160] sm:$0xff]
  %v65 = vld [vmem:[%s0 + $0x168] sm:$0xff]
  %v66 = vld [vmem:[%s0 + $0x170] sm:$0xff]
  %v67 = vld [vmem:[%s0 + $0x178] sm:$0xff]
  %v68 = vld [vmem:[%s0 + $0x180] sm:$0xff]
  %vm69 = vcmask 261120
  %v70 = vsel %vm69, %v20, 0.0
  %71 = vadd.xlane.f32.xlu0 %v70
  %v72 = vpop.xlane.xlu0 %71
  %v73 = vsel %vm69, %v21, 0.0
  %74 = vadd.xlane.f32.xlu0 %v73
  %v75 = vpop.xlane.xlu0 %74
  %v76 = vsel %vm69, %v22, 0.0
  %77 = vadd.xlane.f32.xlu0 %v76
  %v78 = vpop.xlane.xlu0 %77
  %v79 = vsel %vm69, %v23, 0.0
  %80 = vadd.xlane.f32.xlu0 %v79
  %v81 = vpop.xlane.xlu0 %80
  %v82 = vsel %vm69, %v24, 0.0
  %83 = vadd.xlane.f32.xlu0 %v82
  %v84 = vpop.xlane.xlu0 %83
  %v85 = vsel %vm69, %v25, 0.0
  %86 = vadd.xlane.f32.xlu0 %v85
  %v87 = vpop.xlane.xlu0 %86
  %v88 = vsel %vm69, %v26, 0.0
  %89 = vadd.xlane.f32.xlu0 %v88
  %v90 = vpop.xlane.xlu0 %89
  %v91 = vsel %vm69, %v27, 0.0
  %92 = vadd.xlane.f32.xlu0 %v91
  %v93 = vpop.xlane.xlu0 %92
  %v94 = vsel %vm69, %v28, 0.0
  %95 = vadd.xlane.f32.xlu0 %v94
  %v96 = vpop.xlane.xlu0 %95
  %v97 = vsel %vm69, %v29, 0.0
  %98 = vadd.xlane.f32.xlu0 %v97
  %v99 = vpop.xlane.xlu0 %98
  %v100 = vsel %vm69, %v30, 0.0
  %101 = vadd.xlane.f32.xlu0 %v100
  %v102 = vpop.xlane.xlu0 %101
  %v103 = vsel %vm69, %v31, 0.0
  %104 = vadd.xlane.f32.xlu0 %v103
  %v105 = vpop.xlane.xlu0 %104
  %v106 = vsel %vm69, %v32, 0.0
  %107 = vadd.xlane.f32.xlu0 %v106
  %v108 = vpop.xlane.xlu0 %107
  %v109 = vsel %vm69, %v33, 0.0
  %110 = vadd.xlane.f32.xlu0 %v109
  %v111 = vpop.xlane.xlu0 %110
  %v112 = vsel %vm69, %v34, 0.0
  %113 = vadd.xlane.f32.xlu0 %v112
  %v114 = vpop.xlane.xlu0 %113
  %v115 = vsel %vm69, %v35, 0.0
  %116 = vadd.xlane.f32.xlu0 %v115
  %v117 = vpop.xlane.xlu0 %116
  %v118 = vsel %vm69, %v36, 0.0
  %119 = vadd.xlane.f32.xlu0 %v118
  %v120 = vpop.xlane.xlu0 %119
  %v121 = vsel %vm69, %v37, 0.0
  %122 = vadd.xlane.f32.xlu0 %v121
  %v123 = vpop.xlane.xlu0 %122
  %v124 = vsel %vm69, %v38, 0.0
  %125 = vadd.xlane.f32.xlu0 %v124
  %v126 = vpop.xlane.xlu0 %125
  %v127 = vsel %vm69, %v39, 0.0
  %128 = vadd.xlane.f32.xlu0 %v127
  %v129 = vpop.xlane.xlu0 %128
  %v130 = vsel %vm69, %v40, 0.0
  %131 = vadd.xlane.f32.xlu0 %v130
  %v132 = vpop.xlane.xlu0 %131
  %v133 = vsel %vm69, %v41, 0.0
  %134 = vadd.xlane.f32.xlu0 %v133
  %v135 = vpop.xlane.xlu0 %134
  %v136 = vsel %vm69, %v42, 0.0
  %137 = vadd.xlane.f32.xlu0 %v136
  %v138 = vpop.xlane.xlu0 %137
  %v139 = vsel %vm69, %v43, 0.0
  %140 = vadd.xlane.f32.xlu0 %v139
  %v141 = vpop.xlane.xlu0 %140
  %v142 = vsel %vm69, %v44, 0.0
  %143 = vadd.xlane.f32.xlu0 %v142
  %v144 = vpop.xlane.xlu0 %143
  %v145 = vsel %vm69, %v45, 0.0
  %146 = vadd.xlane.f32.xlu0 %v145
  %v147 = vpop.xlane.xlu0 %146
  %v148 = vsel %vm69, %v46, 0.0
  %149 = vadd.xlane.f32.xlu0 %v148
  %v150 = vpop.xlane.xlu0 %149
  %v151 = vsel %vm69, %v47, 0.0
  %152 = vadd.xlane.f32.xlu0 %v151
  %v153 = vpop.xlane.xlu0 %152
  %v154 = vsel %vm69, %v48, 0.0
  %155 = vadd.xlane.f32.xlu0 %v154
  %v156 = vpop.xlane.xlu0 %155
  %v157 = vsel %vm69, %v49, 0.0
  %158 = vadd.xlane.f32.xlu0 %v157
  %v159 = vpop.xlane.xlu0 %158
  %v160 = vsel %vm69, %v50, 0.0
  %161 = vadd.xlane.f32.xlu0 %v160
  %v162 = vpop.xlane.xlu0 %161
  %v163 = vsel %vm69, %v51, 0.0
  %164 = vadd.xlane.f32.xlu0 %v163
  %v165 = vpop.xlane.xlu0 %164
  %v166 = vsel %vm69, %v52, 0.0
  %167 = vadd.xlane.f32.xlu0 %v166
  %v168 = vpop.xlane.xlu0 %167
  %v169 = vsel %vm69, %v53, 0.0
  %170 = vadd.xlane.f32.xlu0 %v169
  %v171 = vpop.xlane.xlu0 %170
  %v172 = vsel %vm69, %v54, 0.0
  %173 = vadd.xlane.f32.xlu0 %v172
  %v174 = vpop.xlane.xlu0 %173
  %v175 = vsel %vm69, %v55, 0.0
  %176 = vadd.xlane.f32.xlu0 %v175
  %v177 = vpop.xlane.xlu0 %176
  %v178 = vsel %vm69, %v56, 0.0
  %179 = vadd.xlane.f32.xlu0 %v178
  %v180 = vpop.xlane.xlu0 %179
  %v181 = vsel %vm69, %v57, 0.0
  %182 = vadd.xlane.f32.xlu0 %v181
  %v183 = vpop.xlane.xlu0 %182
  %v184 = vsel %vm69, %v58, 0.0
  %185 = vadd.xlane.f32.xlu0 %v184
  %v186 = vpop.xlane.xlu0 %185
  %v187 = vsel %vm69, %v59, 0.0
  %188 = vadd.xlane.f32.xlu0 %v187
  %v189 = vpop.xlane.xlu0 %188
  %v190 = vsel %vm69, %v60, 0.0
  %191 = vadd.xlane.f32.xlu0 %v190
  %v192 = vpop.xlane.xlu0 %191
  %v193 = vsel %vm69, %v61, 0.0
  %194 = vadd.xlane.f32.xlu0 %v193
  %v195 = vpop.xlane.xlu0 %194
  %v196 = vsel %vm69, %v62, 0.0
  %197 = vadd.xlane.f32.xlu0 %v196
  %v198 = vpop.xlane.xlu0 %197
  %v199 = vsel %vm69, %v63, 0.0
  %200 = vadd.xlane.f32.xlu0 %v199
  %v201 = vpop.xlane.xlu0 %200
  %v202 = vsel %vm69, %v64, 0.0
  %203 = vadd.xlane.f32.xlu0 %v202
  %v204 = vpop.xlane.xlu0 %203
  %v205 = vsel %vm69, %v65, 0.0
  %206 = vadd.xlane.f32.xlu0 %v205
  %v207 = vpop.xlane.xlu0 %206
  %v208 = vsel %vm69, %v66, 0.0
  %209 = vadd.xlane.f32.xlu0 %v208
  %v210 = vpop.xlane.xlu0 %209
  %v211 = vsel %vm69, %v67, 0.0
  %212 = vadd.xlane.f32.xlu0 %v211
  %v213 = vpop.xlane.xlu0 %212
  %v214 = vsel %vm69, %v68, 0.0
  %215 = vadd.xlane.f32.xlu0 %v214
  %v216 = vpop.xlane.xlu0 %215
  %v217 = vrcp.pop 32.0
  %v218 = vmul.f32 %v72, %v217
  %v219 = vmul.f32 %v75, %v217
  %v220 = vmul.f32 %v78, %v217
  %v221 = vmul.f32 %v81, %v217
  %v222 = vmul.f32 %v84, %v217
  %v223 = vmul.f32 %v87, %v217
  %v224 = vmul.f32 %v90, %v217
  %v225 = vmul.f32 %v93, %v217
  %v226 = vmul.f32 %v96, %v217
  %v227 = vmul.f32 %v99, %v217
  %v228 = vmul.f32 %v102, %v217
  %v229 = vmul.f32 %v105, %v217
  %v230 = vmul.f32 %v108, %v217
  %v231 = vmul.f32 %v111, %v217
  %v232 = vmul.f32 %v114, %v217
  %v233 = vmul.f32 %v117, %v217
  %v234 = vmul.f32 %v120, %v217
  %v235 = vmul.f32 %v123, %v217
  %v236 = vmul.f32 %v126, %v217
  %v237 = vmul.f32 %v129, %v217
  %v238 = vmul.f32 %v132, %v217
  %v239 = vmul.f32 %v135, %v217
  %v240 = vmul.f32 %v138, %v217
  %v241 = vmul.f32 %v141, %v217
  %v242 = vmul.f32 %v144, %v217
  %v243 = vmul.f32 %v147, %v217
  %v244 = vmul.f32 %v150, %v217
  %v245 = vmul.f32 %v153, %v217
  %v246 = vmul.f32 %v156, %v217
  %v247 = vmul.f32 %v159, %v217
  %v248 = vmul.f32 %v162, %v217
  %v249 = vmul.f32 %v165, %v217
  %v250 = vmul.f32 %v168, %v217
  %v251 = vmul.f32 %v171, %v217
  %v252 = vmul.f32 %v174, %v217
  %v253 = vmul.f32 %v177, %v217
  %v254 = vmul.f32 %v180, %v217
  %v255 = vmul.f32 %v183, %v217
  %v256 = vmul.f32 %v186, %v217
  %v257 = vmul.f32 %v189, %v217
  %v258 = vmul.f32 %v192, %v217
  %v259 = vmul.f32 %v195, %v217
  %v260 = vmul.f32 %v198, %v217
  %v261 = vmul.f32 %v201, %v217
  %v262 = vmul.f32 %v204, %v217
  %v263 = vmul.f32 %v207, %v217
  %v264 = vmul.f32 %v210, %v217
  %v265 = vmul.f32 %v213, %v217
  %v266 = vmul.f32 %v216, %v217
  %v267 = vsub.f32 %v20, %v218
  %v268 = vsub.f32 %v21, %v219
  %v269 = vsub.f32 %v22, %v220
  %v270 = vsub.f32 %v23, %v221
  %v271 = vsub.f32 %v24, %v222
  %v272 = vsub.f32 %v25, %v223
  %v273 = vsub.f32 %v26, %v224
  %v274 = vsub.f32 %v27, %v225
  %v275 = vsub.f32 %v28, %v226
  %v276 = vsub.f32 %v29, %v227
  %v277 = vsub.f32 %v30, %v228
  %v278 = vsub.f32 %v31, %v229
  %v279 = vsub.f32 %v32, %v230
  %v280 = vsub.f32 %v33, %v231
  %v281 = vsub.f32 %v34, %v232
  %v282 = vsub.f32 %v35, %v233
  %v283 = vsub.f32 %v36, %v234
  %v284 = vsub.f32 %v37, %v235
  %v285 = vsub.f32 %v38, %v236
  %v286 = vsub.f32 %v39, %v237
  %v287 = vsub.f32 %v40, %v238
  %v288 = vsub.f32 %v41, %v239
  %v289 = vsub.f32 %v42, %v240
  %v290 = vsub.f32 %v43, %v241
  %v291 = vsub.f32 %v44, %v242
  %v292 = vsub.f32 %v45, %v243
  %v293 = vsub.f32 %v46, %v244
  %v294 = vsub.f32 %v47, %v245
  %v295 = vsub.f32 %v48, %v246
  %v296 = vsub.f32 %v49, %v247
  %v297 = vsub.f32 %v50, %v248
  %v298 = vsub.f32 %v51, %v249
  %v299 = vsub.f32 %v52, %v250
  %v300 = vsub.f32 %v53, %v251
  %v301 = vsub.f32 %v54, %v252
  %v302 = vsub.f32 %v55, %v253
  %v303 = vsub.f32 %v56, %v254
  %v304 = vsub.f32 %v57, %v255
  %v305 = vsub.f32 %v58, %v256
  %v306 = vsub.f32 %v59, %v257
  %v307 = vsub.f32 %v60, %v258
  %v308 = vsub.f32 %v61, %v259
  %v309 = vsub.f32 %v62, %v260
  %v310 = vsub.f32 %v63, %v261
  %v311 = vsub.f32 %v64, %v262
  %v312 = vsub.f32 %v65, %v263
  %v313 = vsub.f32 %v66, %v264
  %v314 = vsub.f32 %v67, %v265
  %v315 = vsub.f32 %v68, %v266
  %v316 = vmul.f32 %v267, %v267
  %v317 = vmul.f32 %v268, %v268
  %v318 = vmul.f32 %v269, %v269
  %v319 = vmul.f32 %v270, %v270
  %v320 = vmul.f32 %v271, %v271
  %v321 = vmul.f32 %v272, %v272
  %v322 = vmul.f32 %v273, %v273
  %v323 = vmul.f32 %v274, %v274
  %v324 = vmul.f32 %v275, %v275
  %v325 = vmul.f32 %v276, %v276
  %v326 = vmul.f32 %v277, %v277
  %v327 = vmul.f32 %v278, %v278
  %v328 = vmul.f32 %v279, %v279
  %v329 = vmul.f32 %v280, %v280
  %v330 = vmul.f32 %v281, %v281
  %v331 = vmul.f32 %v282, %v282
  %v332 = vmul.f32 %v283, %v283
  %v333 = vmul.f32 %v284, %v284
  %v334 = vmul.f32 %v285, %v285
  %v335 = vmul.f32 %v286, %v286
  %v336 = vmul.f32 %v287, %v287
  %v337 = vmul.f32 %v288, %v288
  %v338 = vmul.f32 %v289, %v289
  %v339 = vmul.f32 %v290, %v290
  %v340 = vmul.f32 %v291, %v291
  %v341 = vmul.f32 %v292, %v292
  %v342 = vmul.f32 %v293, %v293
  %v343 = vmul.f32 %v294, %v294
  %v344 = vmul.f32 %v295, %v295
  %v345 = vmul.f32 %v296, %v296
  %v346 = vmul.f32 %v297, %v297
  %v347 = vmul.f32 %v298, %v298
  %v348 = vmul.f32 %v299, %v299
  %v349 = vmul.f32 %v300, %v300
  %v350 = vmul.f32 %v301, %v301
  %v351 = vmul.f32 %v302, %v302
  %v352 = vmul.f32 %v303, %v303
  %v353 = vmul.f32 %v304, %v304
  %v354 = vmul.f32 %v305, %v305
  %v355 = vmul.f32 %v306, %v306
  %v356 = vmul.f32 %v307, %v307
  %v357 = vmul.f32 %v308, %v308
  %v358 = vmul.f32 %v309, %v309
  %v359 = vmul.f32 %v310, %v310
  %v360 = vmul.f32 %v311, %v311
  %v361 = vmul.f32 %v312, %v312
  %v362 = vmul.f32 %v313, %v313
  %v363 = vmul.f32 %v314, %v314
  %v364 = vmul.f32 %v315, %v315
  %v365 = vsel %vm69, %v316, 0.0
  %366 = vadd.xlane.f32.xlu0 %v365
  %v367 = vpop.xlane.xlu0 %366
  %v368 = vsel %vm69, %v317, 0.0
  %369 = vadd.xlane.f32.xlu0 %v368
  %v370 = vpop.xlane.xlu0 %369
  %v371 = vsel %vm69, %v318, 0.0
  %372 = vadd.xlane.f32.xlu0 %v371
  %v373 = vpop.xlane.xlu0 %372
  %v374 = vsel %vm69, %v319, 0.0
  %375 = vadd.xlane.f32.xlu0 %v374
  %v376 = vpop.xlane.xlu0 %375
  %v377 = vsel %vm69, %v320, 0.0
  %378 = vadd.xlane.f32.xlu0 %v377
  %v379 = vpop.xlane.xlu0 %378
  %v380 = vsel %vm69, %v321, 0.0
  %381 = vadd.xlane.f32.xlu0 %v380
  %v382 = vpop.xlane.xlu0 %381
  %v383 = vsel %vm69, %v322, 0.0
  %384 = vadd.xlane.f32.xlu0 %v383
  %v385 = vpop.xlane.xlu0 %384
  %v386 = vsel %vm69, %v323, 0.0
  %387 = vadd.xlane.f32.xlu0 %v386
  %v388 = vpop.xlane.xlu0 %387
  %v389 = vsel %vm69, %v324, 0.0
  %390 = vadd.xlane.f32.xlu0 %v389
  %v391 = vpop.xlane.xlu0 %390
  %v392 = vsel %vm69, %v325, 0.0
  %393 = vadd.xlane.f32.xlu0 %v392
  %v394 = vpop.xlane.xlu0 %393
  %v395 = vsel %vm69, %v326, 0.0
  %396 = vadd.xlane.f32.xlu0 %v395
  %v397 = vpop.xlane.xlu0 %396
  %v398 = vsel %vm69, %v327, 0.0
  %399 = vadd.xlane.f32.xlu0 %v398
  %v400 = vpop.xlane.xlu0 %399
  %v401 = vsel %vm69, %v328, 0.0
  %402 = vadd.xlane.f32.xlu0 %v401
  %v403 = vpop.xlane.xlu0 %402
  %v404 = vsel %vm69, %v329, 0.0
  %405 = vadd.xlane.f32.xlu0 %v404
  %v406 = vpop.xlane.xlu0 %405
  %v407 = vsel %vm69, %v330, 0.0
  %408 = vadd.xlane.f32.xlu0 %v407
  %v409 = vpop.xlane.xlu0 %408
  %v410 = vsel %vm69, %v331, 0.0
  %411 = vadd.xlane.f32.xlu0 %v410
  %v412 = vpop.xlane.xlu0 %411
  %v413 = vsel %vm69, %v332, 0.0
  %414 = vadd.xlane.f32.xlu0 %v413
  %v415 = vpop.xlane.xlu0 %414
  %v416 = vsel %vm69, %v333, 0.0
  %417 = vadd.xlane.f32.xlu0 %v416
  %v418 = vpop.xlane.xlu0 %417
  %v419 = vsel %vm69, %v334, 0.0
  %420 = vadd.xlane.f32.xlu0 %v419
  %v421 = vpop.xlane.xlu0 %420
  %v422 = vsel %vm69, %v335, 0.0
  %423 = vadd.xlane.f32.xlu0 %v422
  %v424 = vpop.xlane.xlu0 %423
  %v425 = vsel %vm69, %v336, 0.0
  %426 = vadd.xlane.f32.xlu0 %v425
  %v427 = vpop.xlane.xlu0 %426
  %v428 = vsel %vm69, %v337, 0.0
  %429 = vadd.xlane.f32.xlu0 %v428
  %v430 = vpop.xlane.xlu0 %429
  %v431 = vsel %vm69, %v338, 0.0
  %432 = vadd.xlane.f32.xlu0 %v431
  %v433 = vpop.xlane.xlu0 %432
  %v434 = vsel %vm69, %v339, 0.0
  %435 = vadd.xlane.f32.xlu0 %v434
  %v436 = vpop.xlane.xlu0 %435
  %v437 = vsel %vm69, %v340, 0.0
  %438 = vadd.xlane.f32.xlu0 %v437
  %v439 = vpop.xlane.xlu0 %438
  %v440 = vsel %vm69, %v341, 0.0
  %441 = vadd.xlane.f32.xlu0 %v440
  %v442 = vpop.xlane.xlu0 %441
  %v443 = vsel %vm69, %v342, 0.0
  %444 = vadd.xlane.f32.xlu0 %v443
  %v445 = vpop.xlane.xlu0 %444
  %v446 = vsel %vm69, %v343, 0.0
  %447 = vadd.xlane.f32.xlu0 %v446
  %v448 = vpop.xlane.xlu0 %447
  %v449 = vsel %vm69, %v344, 0.0
  %450 = vadd.xlane.f32.xlu0 %v449
  %v451 = vpop.xlane.xlu0 %450
  %v452 = vsel %vm69, %v345, 0.0
  %453 = vadd.xlane.f32.xlu0 %v452
  %v454 = vpop.xlane.xlu0 %453
  %v455 = vsel %vm69, %v346, 0.0
  %456 = vadd.xlane.f32.xlu0 %v455
  %v457 = vpop.xlane.xlu0 %456
  %v458 = vsel %vm69, %v347, 0.0
  %459 = vadd.xlane.f32.xlu0 %v458
  %v460 = vpop.xlane.xlu0 %459
  %v461 = vsel %vm69, %v348, 0.0
  %462 = vadd.xlane.f32.xlu0 %v461
  %v463 = vpop.xlane.xlu0 %462
  %v464 = vsel %vm69, %v349, 0.0
  %465 = vadd.xlane.f32.xlu0 %v464
  %v466 = vpop.xlane.xlu0 %465
  %v467 = vsel %vm69, %v350, 0.0
  %468 = vadd.xlane.f32.xlu0 %v467
  %v469 = vpop.xlane.xlu0 %468
  %v470 = vsel %vm69, %v351, 0.0
  %471 = vadd.xlane.f32.xlu0 %v470
  %v472 = vpop.xlane.xlu0 %471
  %v473 = vsel %vm69, %v352, 0.0
  %474 = vadd.xlane.f32.xlu0 %v473
  %v475 = vpop.xlane.xlu0 %474
  %v476 = vsel %vm69, %v353, 0.0
  %477 = vadd.xlane.f32.xlu0 %v476
  %v478 = vpop.xlane.xlu0 %477
  %v479 = vsel %vm69, %v354, 0.0
  %480 = vadd.xlane.f32.xlu0 %v479
  %v481 = vpop.xlane.xlu0 %480
  %v482 = vsel %vm69, %v355, 0.0
  %483 = vadd.xlane.f32.xlu0 %v482
  %v484 = vpop.xlane.xlu0 %483
  %v485 = vsel %vm69, %v356, 0.0
  %486 = vadd.xlane.f32.xlu0 %v485
  %v487 = vpop.xlane.xlu0 %486
  %v488 = vsel %vm69, %v357, 0.0
  %489 = vadd.xlane.f32.xlu0 %v488
  %v490 = vpop.xlane.xlu0 %489
  %v491 = vsel %vm69, %v358, 0.0
  %492 = vadd.xlane.f32.xlu0 %v491
  %v493 = vpop.xlane.xlu0 %492
  %v494 = vsel %vm69, %v359, 0.0
  %495 = vadd.xlane.f32.xlu0 %v494
  %v496 = vpop.xlane.xlu0 %495
  %v497 = vsel %vm69, %v360, 0.0
  %498 = vadd.xlane.f32.xlu0 %v497
  %v499 = vpop.xlane.xlu0 %498
  %v500 = vsel %vm69, %v361, 0.0
  %501 = vadd.xlane.f32.xlu0 %v500
  %v502 = vpop.xlane.xlu0 %501
  %v503 = vsel %vm69, %v362, 0.0
  %504 = vadd.xlane.f32.xlu0 %v503
  %v505 = vpop.xlane.xlu0 %504
  %v506 = vsel %vm69, %v363, 0.0
  %507 = vadd.xlane.f32.xlu0 %v506
  %v508 = vpop.xlane.xlu0 %507
  %v509 = vsel %vm69, %v364, 0.0
  %510 = vadd.xlane.f32.xlu0 %v509
  %v511 = vpop.xlane.xlu0 %510
  %v512 = vmul.f32 %v367, %v217
  %v513 = vmul.f32 %v370, %v217
  %v514 = vmul.f32 %v373, %v217
  %v515 = vmul.f32 %v376, %v217
  %v516 = vmul.f32 %v379, %v217
  %v517 = vmul.f32 %v382, %v217
  %v518 = vmul.f32 %v385, %v217
  %v519 = vmul.f32 %v388, %v217
  %v520 = vmul.f32 %v391, %v217
  %v521 = vmul.f32 %v394, %v217
  %v522 = vmul.f32 %v397, %v217
  %v523 = vmul.f32 %v400, %v217
  %v524 = vmul.f32 %v403, %v217
  %v525 = vmul.f32 %v406, %v217
  %v526 = vmul.f32 %v409, %v217
  %v527 = vmul.f32 %v412, %v217
  %v528 = vmul.f32 %v415, %v217
  %v529 = vmul.f32 %v418, %v217
  %v530 = vmul.f32 %v421, %v217
  %v531 = vmul.f32 %v424, %v217
  %v532 = vmul.f32 %v427, %v217
  %v533 = vmul.f32 %v430, %v217
  %v534 = vmul.f32 %v433, %v217
  %v535 = vmul.f32 %v436, %v217
  %v536 = vmul.f32 %v439, %v217
  %v537 = vmul.f32 %v442, %v217
  %v538 = vmul.f32 %v445, %v217
  %v539 = vmul.f32 %v448, %v217
  %v540 = vmul.f32 %v451, %v217
  %v541 = vmul.f32 %v454, %v217
  %v542 = vmul.f32 %v457, %v217
  %v543 = vmul.f32 %v460, %v217
  %v544 = vmul.f32 %v463, %v217
  %v545 = vmul.f32 %v466, %v217
  %v546 = vmul.f32 %v469, %v217
  %v547 = vmul.f32 %v472, %v217
  %v548 = vmul.f32 %v475, %v217
  %v549 = vmul.f32 %v478, %v217
  %v550 = vmul.f32 %v481, %v217
  %v551 = vmul.f32 %v484, %v217
  %v552 = vmul.f32 %v487, %v217
  %v553 = vmul.f32 %v490, %v217
  %v554 = vmul.f32 %v493, %v217
  %v555 = vmul.f32 %v496, %v217
  %v556 = vmul.f32 %v499, %v217
  %v557 = vmul.f32 %v502, %v217
  %v558 = vmul.f32 %v505, %v217
  %v559 = vmul.f32 %v508, %v217
  %v560 = vmul.f32 %v511, %v217
  %v561 = vadd.f32 %v512, 1e-05
  %v562 = vadd.f32 %v513, 1e-05
  %v563 = vadd.f32 %v514, 1e-05
  %v564 = vadd.f32 %v515, 1e-05
  %v565 = vadd.f32 %v516, 1e-05
  %v566 = vadd.f32 %v517, 1e-05
  %v567 = vadd.f32 %v518, 1e-05
  %v568 = vadd.f32 %v519, 1e-05
  %v569 = vadd.f32 %v520, 1e-05
  %v570 = vadd.f32 %v521, 1e-05
  %v571 = vadd.f32 %v522, 1e-05
  %v572 = vadd.f32 %v523, 1e-05
  %v573 = vadd.f32 %v524, 1e-05
  %v574 = vadd.f32 %v525, 1e-05
  %v575 = vadd.f32 %v526, 1e-05
  %v576 = vadd.f32 %v527, 1e-05
  %v577 = vadd.f32 %v528, 1e-05
  %v578 = vadd.f32 %v529, 1e-05
  %v579 = vadd.f32 %v530, 1e-05
  %v580 = vadd.f32 %v531, 1e-05
  %v581 = vadd.f32 %v532, 1e-05
  %v582 = vadd.f32 %v533, 1e-05
  %v583 = vadd.f32 %v534, 1e-05
  %v584 = vadd.f32 %v535, 1e-05
  %v585 = vadd.f32 %v536, 1e-05
  %v586 = vadd.f32 %v537, 1e-05
  %v587 = vadd.f32 %v538, 1e-05
  %v588 = vadd.f32 %v539, 1e-05
  %v589 = vadd.f32 %v540, 1e-05
  %v590 = vadd.f32 %v541, 1e-05
  %v591 = vadd.f32 %v542, 1e-05
  %v592 = vadd.f32 %v543, 1e-05
  %v593 = vadd.f32 %v544, 1e-05
  %v594 = vadd.f32 %v545, 1e-05
  %v595 = vadd.f32 %v546, 1e-05
  %v596 = vadd.f32 %v547, 1e-05
  %v597 = vadd.f32 %v548, 1e-05
  %v598 = vadd.f32 %v549, 1e-05
  %v599 = vadd.f32 %v550, 1e-05
  %v600 = vadd.f32 %v551, 1e-05
  %v601 = vadd.f32 %v552, 1e-05
  %v602 = vadd.f32 %v553, 1e-05
  %v603 = vadd.f32 %v554, 1e-05
  %v604 = vadd.f32 %v555, 1e-05
  %v605 = vadd.f32 %v556, 1e-05
  %v606 = vadd.f32 %v557, 1e-05
  %v607 = vadd.f32 %v558, 1e-05
  %v608 = vadd.f32 %v559, 1e-05
  %v609 = vadd.f32 %v560, 1e-05
  %v610 = vrsqrt.pop %v561
  %v611 = vrsqrt.pop %v562
  %v612 = vrsqrt.pop %v563
  %v613 = vrsqrt.pop %v564
  %v614 = vrsqrt.pop %v565
  %v615 = vrsqrt.pop %v566
  %v616 = vrsqrt.pop %v567
  %v617 = vrsqrt.pop %v568
  %v618 = vrsqrt.pop %v569
  %v619 = vrsqrt.pop %v570
  %v620 = vrsqrt.pop %v571
  %v621 = vrsqrt.pop %v572
  %v622 = vrsqrt.pop %v573
  %v623 = vrsqrt.pop %v574
  %v624 = vrsqrt.pop %v575
  %v625 = vrsqrt.pop %v576
  %v626 = vrsqrt.pop %v577
  %v627 = vrsqrt.pop %v578
  %v628 = vrsqrt.pop %v579
  %v629 = vrsqrt.pop %v580
  %v630 = vrsqrt.pop %v581
  %v631 = vrsqrt.pop %v582
  %v632 = vrsqrt.pop %v583
  %v633 = vrsqrt.pop %v584
  %v634 = vrsqrt.pop %v585
  %v635 = vrsqrt.pop %v586
  %v636 = vrsqrt.pop %v587
  %v637 = vrsqrt.pop %v588
  %v638 = vrsqrt.pop %v589
  %v639 = vrsqrt.pop %v590
  %v640 = vrsqrt.pop %v591
  %v641 = vrsqrt.pop %v592
  %v642 = vrsqrt.pop %v593
  %v643 = vrsqrt.pop %v594
  %v644 = vrsqrt.pop %v595
  %v645 = vrsqrt.pop %v596
  %v646 = vrsqrt.pop %v597
  %v647 = vrsqrt.pop %v598
  %v648 = vrsqrt.pop %v599
  %v649 = vrsqrt.pop %v600
  %v650 = vrsqrt.pop %v601
  %v651 = vrsqrt.pop %v602
  %v652 = vrsqrt.pop %v603
  %v653 = vrsqrt.pop %v604
  %v654 = vrsqrt.pop %v605
  %v655 = vrsqrt.pop %v606
  %v656 = vrsqrt.pop %v607
  %v657 = vrsqrt.pop %v608
  %v658 = vrsqrt.pop %v609
  %v659 = vmul.f32 %v267, %v610
  %v660 = vmul.f32 %v268, %v611
  %v661 = vmul.f32 %v269, %v612
  %v662 = vmul.f32 %v270, %v613
  %v663 = vmul.f32 %v271, %v614
  %v664 = vmul.f32 %v272, %v615
  %v665 = vmul.f32 %v273, %v616
  %v666 = vmul.f32 %v274, %v617
  %v667 = vmul.f32 %v275, %v618
  %v668 = vmul.f32 %v276, %v619
  %v669 = vmul.f32 %v277, %v620
  %v670 = vmul.f32 %v278, %v621
  %v671 = vmul.f32 %v279, %v622
  %v672 = vmul.f32 %v280, %v623
  %v673 = vmul.f32 %v281, %v624
  %v674 = vmul.f32 %v282, %v625
  %v675 = vmul.f32 %v283, %v626
  %v676 = vmul.f32 %v284, %v627
  %v677 = vmul.f32 %v285, %v628
  %v678 = vmul.f32 %v286, %v629
  %v679 = vmul.f32 %v287, %v630
  %v680 = vmul.f32 %v288, %v631
  %v681 = vmul.f32 %v289, %v632
  %v682 = vmul.f32 %v290, %v633
  %v683 = vmul.f32 %v291, %v634
  %v684 = vmul.f32 %v292, %v635
  %v685 = vmul.f32 %v293, %v636
  %v686 = vmul.f32 %v294, %v637
  %v687 = vmul.f32 %v295, %v638
  %v688 = vmul.f32 %v296, %v639
  %v689 = vmul.f32 %v297, %v640
  %v690 = vmul.f32 %v298, %v641
  %v691 = vmul.f32 %v299, %v642
  %v692 = vmul.f32 %v300, %v643
  %v693 = vmul.f32 %v301, %v644
  %v694 = vmul.f32 %v302, %v645
  %v695 = vmul.f32 %v303, %v646
  %v696 = vmul.f32 %v304, %v647
  %v697 = vmul.f32 %v305, %v648
  %v698 = vmul.f32 %v306, %v649
  %v699 = vmul.f32 %v307, %v650
  %v700 = vmul.f32 %v308, %v651
  %v701 = vmul.f32 %v309, %v652
  %v702 = vmul.f32 %v310, %v653
  %v703 = vmul.f32 %v311, %v654
  %v704 = vmul.f32 %v312, %v655
  %v705 = vmul.f32 %v313, %v656
  %v706 = vmul.f32 %v314, %v657
  %v707 = vmul.f32 %v315, %v658
  %v708 = vld [vmem:[%s1] sm:$0x1]
  %v710 = vlaneseq
  %v711 = vshrl.u32 %v710, 7
  %v712 = vsub.s32 0, %v711
  %v713 = vrot.slane %v708, %v712
  %v715 = vmul.f32 %v659, %v713
  %v716 = vmul.f32 %v660, %v713
  %v717 = vmul.f32 %v661, %v713
  %v718 = vmul.f32 %v662, %v713
  %v719 = vmul.f32 %v663, %v713
  %v720 = vmul.f32 %v664, %v713
  %v721 = vmul.f32 %v665, %v713
  %v722 = vmul.f32 %v666, %v713
  %v723 = vmul.f32 %v667, %v713
  %v724 = vmul.f32 %v668, %v713
  %v725 = vmul.f32 %v669, %v713
  %v726 = vmul.f32 %v670, %v713
  %v727 = vmul.f32 %v671, %v713
  %v728 = vmul.f32 %v672, %v713
  %v729 = vmul.f32 %v673, %v713
  %v730 = vmul.f32 %v674, %v713
  %v731 = vmul.f32 %v675, %v713
  %v732 = vmul.f32 %v676, %v713
  %v733 = vmul.f32 %v677, %v713
  %v734 = vmul.f32 %v678, %v713
  %v735 = vmul.f32 %v679, %v713
  %v736 = vmul.f32 %v680, %v713
  %v737 = vmul.f32 %v681, %v713
  %v738 = vmul.f32 %v682, %v713
  %v739 = vmul.f32 %v683, %v713
  %v740 = vmul.f32 %v684, %v713
  %v741 = vmul.f32 %v685, %v713
  %v742 = vmul.f32 %v686, %v713
  %v743 = vmul.f32 %v687, %v713
  %v744 = vmul.f32 %v688, %v713
  %v745 = vmul.f32 %v689, %v713
  %v746 = vmul.f32 %v690, %v713
  %v747 = vmul.f32 %v691, %v713
  %v748 = vmul.f32 %v692, %v713
  %v749 = vmul.f32 %v693, %v713
  %v750 = vmul.f32 %v694, %v713
  %v751 = vmul.f32 %v695, %v713
  %v752 = vmul.f32 %v696, %v713
  %v753 = vmul.f32 %v697, %v713
  %v754 = vmul.f32 %v698, %v713
  %v755 = vmul.f32 %v699, %v713
  %v756 = vmul.f32 %v700, %v713
  %v757 = vmul.f32 %v701, %v713
  %v758 = vmul.f32 %v702, %v713
  %v759 = vmul.f32 %v703, %v713
  %v760 = vmul.f32 %v704, %v713
  %v761 = vmul.f32 %v705, %v713
  %v762 = vmul.f32 %v706, %v713
  %v763 = vmul.f32 %v707, %v713
  %v764 = vld [vmem:[%s2] sm:$0x1]
  %v766 = vlaneseq
  %v767 = vshrl.u32 %v766, 7
  %v768 = vsub.s32 0, %v767
  %v769 = vrot.slane %v764, %v768
  %v771 = vadd.f32 %v715, %v769
  %v772 = vadd.f32 %v716, %v769
  %v773 = vadd.f32 %v717, %v769
  %v774 = vadd.f32 %v718, %v769
  %v775 = vadd.f32 %v719, %v769
  %v776 = vadd.f32 %v720, %v769
  %v777 = vadd.f32 %v721, %v769
  %v778 = vadd.f32 %v722, %v769
  %v779 = vadd.f32 %v723, %v769
  %v780 = vadd.f32 %v724, %v769
  %v781 = vadd.f32 %v725, %v769
  %v782 = vadd.f32 %v726, %v769
  %v783 = vadd.f32 %v727, %v769
  %v784 = vadd.f32 %v728, %v769
  %v785 = vadd.f32 %v729, %v769
  %v786 = vadd.f32 %v730, %v769
  %v787 = vadd.f32 %v731, %v769
  %v788 = vadd.f32 %v732, %v769
  %v789 = vadd.f32 %v733, %v769
  %v790 = vadd.f32 %v734, %v769
  %v791 = vadd.f32 %v735, %v769
  %v792 = vadd.f32 %v736, %v769
  %v793 = vadd.f32 %v737, %v769
  %v794 = vadd.f32 %v738, %v769
  %v795 = vadd.f32 %v739, %v769
  %v796 = vadd.f32 %v740, %v769
  %v797 = vadd.f32 %v741, %v769
  %v798 = vadd.f32 %v742, %v769
  %v799 = vadd.f32 %v743, %v769
  %v800 = vadd.f32 %v744, %v769
  %v801 = vadd.f32 %v745, %v769
  %v802 = vadd.f32 %v746, %v769
  %v803 = vadd.f32 %v747, %v769
  %v804 = vadd.f32 %v748, %v769
  %v805 = vadd.f32 %v749, %v769
  %v806 = vadd.f32 %v750, %v769
  %v807 = vadd.f32 %v751, %v769
  %v808 = vadd.f32 %v752, %v769
  %v809 = vadd.f32 %v753, %v769
  %v810 = vadd.f32 %v754, %v769
  %v811 = vadd.f32 %v755, %v769
  %v812 = vadd.f32 %v756, %v769
  %v813 = vadd.f32 %v757, %v769
  %v814 = vadd.f32 %v758, %v769
  %v815 = vadd.f32 %v759, %v769
  %v816 = vadd.f32 %v760, %v769
  %v817 = vadd.f32 %v761, %v769
  %v818 = vadd.f32 %v762, %v769
  %v819 = vadd.f32 %v763, %v769
  %v820 = vld [vmem:[%s3] sm:$0xff]
  %v821 = vld [vmem:[%s3 + $0x8] sm:$0xff]
  %v822 = vld [vmem:[%s3 + $0x10] sm:$0xff]
  %v823 = vld [vmem:[%s3 + $0x18] sm:$0xff]
  %v824 = vld [vmem:[%s4] sm:$0x1]
  %v826 = vlaneseq
  %v827 = vshrl.u32 %v826, 7
  %v828 = vsub.s32 0, %v827
  %v829 = vrot.slane %v824, %v828
  %v832 = vsel %vm69, %v771, 0
  %v835 = vsel %vm69, %v772, 0
  %v838 = vsel %vm69, %v773, 0
  %v841 = vsel %vm69, %v774, 0
  %v844 = vsel %vm69, %v775, 0
  %v847 = vsel %vm69, %v776, 0
  %v850 = vsel %vm69, %v777, 0
  %v853 = vsel %vm69, %v778, 0
  %v856 = vsel %vm69, %v779, 0
  %v859 = vsel %vm69, %v780, 0
  %v862 = vsel %vm69, %v781, 0
  %v865 = vsel %vm69, %v782, 0
  %v868 = vsel %vm69, %v783, 0
  %v871 = vsel %vm69, %v784, 0
  %v874 = vsel %vm69, %v785, 0
  %v877 = vsel %vm69, %v786, 0
  %v880 = vsel %vm69, %v787, 0
  %v883 = vsel %vm69, %v788, 0
  %v886 = vsel %vm69, %v789, 0
  %v889 = vsel %vm69, %v790, 0
  %v892 = vsel %vm69, %v791, 0
  %v895 = vsel %vm69, %v792, 0
  %v898 = vsel %vm69, %v793, 0
  %v901 = vsel %vm69, %v794, 0
  %v904 = vsel %vm69, %v795, 0
  %v907 = vsel %vm69, %v796, 0
  %v910 = vsel %vm69, %v797, 0
  %v913 = vsel %vm69, %v798, 0
  %v916 = vsel %vm69, %v799, 0
  %v919 = vsel %vm69, %v800, 0
  %v922 = vsel %vm69, %v801, 0
  %v925 = vsel %vm69, %v802, 0
  %v928 = vsel %vm69, %v803, 0
  %v931 = vsel %vm69, %v804, 0
  %v934 = vsel %vm69, %v805, 0
  %v937 = vsel %vm69, %v806, 0
  %v940 = vsel %vm69, %v807, 0
  %v943 = vsel %vm69, %v808, 0
  %v946 = vsel %vm69, %v809, 0
  %v949 = vsel %vm69, %v810, 0
  %v952 = vsel %vm69, %v811, 0
  %v955 = vsel %vm69, %v812, 0
  %v958 = vsel %vm69, %v813, 0
  %v961 = vsel %vm69, %v814, 0
  %v964 = vsel %vm69, %v815, 0
  %v967 = vsel %vm69, %v816, 0
  %v970 = vsel %vm69, %v817, 0
  %v973 = vsel %vm69, %v818, 0
  %v976 = vsel %vm69, %v819, 0
  %978 = vmatprep.subr.mxu0 0.0
  %979 = vmatpush1.msra.mxu0 %v820
  %980 = vmatprep.subr.mxu0 0.0
  %981 = vmatpush1.msra.mxu0 %v821
  %982 = vmatprep.subr.mxu0 0.0
  %983 = vmatpush1.msra.mxu0 %v822
  %984 = vmatprep.subr.mxu0 0.0
  %985 = vmatpush1.msra.mxu0 %v823
  %986 = vmatprep.subr.mxu0 0.0
  %987 = vmatpush1.msra.mxu0 0.0
  %988 = vmatprep.subr.mxu0 0.0
  %989 = vmatpush1.msra.mxu0 0.0
  %990 = vmatprep.subr.mxu0 0.0
  %991 = vmatpush1.msra.mxu0 0.0
  %992 = vmatprep.subr.mxu0 0.0
  %993 = vmatpush1.msra.mxu0 0.0
  %994 = vmatprep.subr.mxu0 0.0
  %995 = vmatpush1.msra.mxu0 0.0
  %996 = vmatprep.subr.mxu0 0.0
  %997 = vmatpush1.msra.mxu0 0.0
  %998 = vmatprep.subr.mxu0 0.0
  %999 = vmatpush1.msra.mxu0 0.0
  %1000 = vmatprep.subr.mxu0 0.0
  %1001 = vmatpush1.msra.mxu0 0.0
  %1002 = vmatprep.subr.mxu0 0.0
  %1003 = vmatpush1.msra.mxu0 0.0
  %1004 = vmatprep.subr.mxu0 0.0
  %1005 = vmatpush1.msra.mxu0 0.0
  %1006 = vmatprep.subr.mxu0 0.0
  %1007 = vmatpush1.msra.mxu0 0.0
  %1008 = vmatprep.subr.mxu0 0.0
  %1009 = vmatpush1.msra.mxu0 0.0
  %1010 = vmatprep.subr.mxu0 0.0
  %1011 = vmatpush1.msra.mxu0 0.0
  %1012 = vmatprep.subr.mxu0 0.0
  %1013 = vmatpush1.msra.mxu0 0.0
  %1014 = vmatprep.subr.mxu0 0.0
  %1015 = vmatpush1.msra.mxu0 0.0
  %1016 = vmatprep.subr.mxu0 0.0
  %1017 = vmatpush1.msra.mxu0 0.0
  %1018 = vmatprep.subr.mxu0 0.0
  %1019 = vmatpush1.msra.mxu0 0.0
  %1020 = vmatprep.subr.mxu0 0.0
  %1021 = vmatpush1.msra.mxu0 0.0
  %1022 = vmatprep.subr.mxu0 0.0
  %1023 = vmatpush1.msra.mxu0 0.0
  %1024 = vmatprep.subr.mxu0 0.0
  %1025 = vmatpush1.msra.mxu0 0.0
  %1026 = vmatprep.subr.mxu0 0.0
  %1027 = vmatpush1.msra.mxu0 0.0
  %1028 = vmatprep.subr.mxu0 0.0
  %1029 = vmatpush1.msra.mxu0 0.0
  %1030 = vmatprep.subr.mxu0 0.0
  %1031 = vmatpush1.msra.mxu0 0.0
  %1032 = vmatprep.subr.mxu0 0.0
  %1033 = vmatpush1.msra.mxu0 0.0
  %1034 = vmatprep.subr.mxu0 0.0
  %1035 = vmatpush1.msra.mxu0 0.0
  %1036 = vmatprep.subr.mxu0 0.0
  %1037 = vmatpush1.msra.mxu0 0.0
  %1038 = vmatprep.subr.mxu0 0.0
  %1039 = vmatpush1.msra.mxu0 0.0
  %1040 = vmatprep.subr.mxu0 0.0
  %1041 = vmatpush1.msra.mxu0 0.0
  %1042 = vmatprep.mubr.f32.mxu0 0.0
  %1043 = vmatmul.mubr.f32.gmra.mrb[0].mxu0 %v832
  %v1044 = vpop.f32.mrb[0].mxu0
  %v1045 = vadd.f32 %v829, %v1044
  %v1046 = vpop.f32.mrb[0].mxu0
  %1047 = vmatprep.mubr.f32.mxu0 0.0
  %1048 = vmatmul.mubr.f32.gmra.mrb[0].mxu0 %v835
  %v1049 = vpop.f32.mrb[0].mxu0
  %v1050 = vadd.f32 %v829, %v1049
  %v1051 = vpop.f32.mrb[0].mxu0
  %1052 = vmatprep.mubr.f32.mxu0 0.0
  %1053 = vmatmul.mubr.f32.gmra.mrb[0].mxu0 %v838
  %v1054 = vpop.f32.mrb[0].mxu0
  %v1055 = vadd.f32 %v829, %v1054
  %v1056 = vpop.f32.mrb[0].mxu0
  %1057 = vmatprep.mubr.f32.mxu0 0.0
  %1058 = vmatmul.mubr.f32.gmra.mrb[0].mxu0 %v841
  %v1059 = vpop.f32.mrb[0].mxu0
  %v1060 = vadd.f32 %v829, %v1059
  %v1061 = vpop.f32.mrb[0].mxu0
  %1062 = vmatprep.mubr.f32.mxu0 0.0
  %1063 = vmatmul.mubr.f32.gmra.mrb[0].mxu0 %v844
  %v1064 = vpop.f32.mrb[0].mxu0
  %v1065 = vadd.f32 %v829, %v1064
  %v1066 = vpop.f32.mrb[0].mxu0
  %1067 = vmatprep.mubr.f32.mxu0 0.0
  %1068 = vmatmul.mubr.f32.gmra.mrb[0].mxu0 %v847
  %v1069 = vpop.f32.mrb[0].mxu0
  %v1070 = vadd.f32 %v829, %v1069
  %v1071 = vpop.f32.mrb[0].mxu0
  %1072 = vmatprep.mubr.f32.mxu0 0.0
  %1073 = vmatmul.mubr.f32.gmra.mrb[0].mxu0 %v850
  %v1074 = vpop.f32.mrb[0].mxu0
  %v1075 = vadd.f32 %v829, %v1074
  %v1076 = vpop.f32.mrb[0].mxu0
  %1077 = vmatprep.mubr.f32.mxu0 0.0
  %1078 = vmatmul.mubr.f32.gmra.mrb[0].mxu0 %v853
  %v1079 = vpop.f32.mrb[0].mxu0
  %v1080 = vadd.f32 %v829, %v1079
  %v1081 = vpop.f32.mrb[0].mxu0
  %1082 = vmatprep.mubr.f32.mxu0 0.0
  %1083 = vmatmul.mubr.f32.gmra.mrb[0].mxu0 %v856
  %v1084 = vpop.f32.mrb[0].mxu0
  %v1085 = vadd.f32 %v829, %v1084
  %v1086 = vpop.f32.mrb[0].mxu0
  %1087 = vmatprep.mubr.f32.mxu0 0.0
  %1088 = vmatmul.mubr.f32.gmra.mrb[0].mxu0 %v859
  %v1089 = vpop.f32.mrb[0].mxu0
  %v1090 = vadd.f32 %v829, %v1089
  %v1091 = vpop.f32.mrb[0].mxu0
  %1092 = vmatprep.mubr.f32.mxu0 0.0
  %1093 = vmatmul.mubr.f32.gmra.mrb[0].mxu0 %v862
  %v1094 = vpop.f32.mrb[0].mxu0
  %v1095 = vadd.f32 %v829, %v1094
  %v1096 = vpop.f32.mrb[0].mxu0
  %1097 = vmatprep.mubr.f32.mxu0 0.0
  %1098 = vmatmul.mubr.f32.gmra.mrb[0].mxu0 %v865
  %v1099 = vpop.f32.mrb[0].mxu0
  %v1100 = vadd.f32 %v829, %v1099
  %v1101 = vpop.f32.mrb[0].mxu0
  %1102 = vmatprep.mubr.f32.mxu0 0.0
  %1103 = vmatmul.mubr.f32.gmra.mrb[0].mxu0 %v868
  %v1104 = vpop.f32.mrb[0].mxu0
  %v1105 = vadd.f32 %v829, %v1104
  %v1106 = vpop.f32.mrb[0].mxu0
  %1107 = vmatprep.mubr.f32.mxu0 0.0
  %1108 = vmatmul.mubr.f32.gmra.mrb[0].mxu0 %v871
  %v1109 = vpop.f32.mrb[0].mxu0
  %v1110 = vadd.f32 %v829, %v1109
  %v1111 = vpop.f32.mrb[0].mxu0
  %1112 = vmatprep.mubr.f32.mxu0 0.0
  %1113 = vmatmul.mubr.f32.gmra.mrb[0].mxu0 %v874
  %v1114 = vpop.f32.mrb[0].mxu0
  %v1115 = vadd.f32 %v829, %v1114
  %v1116 = vpop.f32.mrb[0].mxu0
  %1117 = vmatprep.mubr.f32.mxu0 0.0
  %1118 = vmatmul.mubr.f32.gmra.mrb[0].mxu0 %v877
  %v1119 = vpop.f32.mrb[0].mxu0
  %v1120 = vadd.f32 %v829, %v1119
  %v1121 = vpop.f32.mrb[0].mxu0
  %1122 = vmatprep.mubr.f32.mxu0 0.0
  %1123 = vmatmul.mubr.f32.gmra.mrb[0].mxu0 %v880
  %v1124 = vpop.f32.mrb[0].mxu0
  %v1125 = vadd.f32 %v829, %v1124
  %v1126 = vpop.f32.mrb[0].mxu0
  %1127 = vmatprep.mubr.f32.mxu0 0.0
  %1128 = vmatmul.mubr.f32.gmra.mrb[0].mxu0 %v883
  %v1129 = vpop.f32.mrb[0].mxu0
  %v1130 = vadd.f32 %v829, %v1129
  %v1131 = vpop.f32.mrb[0].mxu0
  %1132 = vmatprep.mubr.f32.mxu0 0.0
  %1133 = vmatmul.mubr.f32.gmra.mrb[0].mxu0 %v886
  %v1134 = vpop.f32.mrb[0].mxu0
  %v1135 = vadd.f32 %v829, %v1134
  %v1136 = vpop.f32.mrb[0].mxu0
  %1137 = vmatprep.mubr.f32.mxu0 0.0
  %1138 = vmatmul.mubr.f32.gmra.mrb[0].mxu0 %v889
  %v1139 = vpop.f32.mrb[0].mxu0
  %v1140 = vadd.f32 %v829, %v1139
  %v1141 = vpop.f32.mrb[0].mxu0
  %1142 = vmatprep.mubr.f32.mxu0 0.0
  %1143 = vmatmul.mubr.f32.gmra.mrb[0].mxu0 %v892
  %v1144 = vpop.f32.mrb[0].mxu0
  %v1145 = vadd.f32 %v829, %v1144
  %v1146 = vpop.f32.mrb[0].mxu0
  %1147 = vmatprep.mubr.f32.mxu0 0.0
  %1148 = vmatmul.mubr.f32.gmra.mrb[0].mxu0 %v895
  %v1149 = vpop.f32.mrb[0].mxu0
  %v1150 = vadd.f32 %v829, %v1149
  %v1151 = vpop.f32.mrb[0].mxu0
  %1152 = vmatprep.mubr.f32.mxu0 0.0
  %1153 = vmatmul.mubr.f32.gmra.mrb[0].mxu0 %v898
  %v1154 = vpop.f32.mrb[0].mxu0
  %v1155 = vadd.f32 %v829, %v1154
  %v1156 = vpop.f32.mrb[0].mxu0
  %1157 = vmatprep.mubr.f32.mxu0 0.0
  %1158 = vmatmul.mubr.f32.gmra.mrb[0].mxu0 %v901
  %v1159 = vpop.f32.mrb[0].mxu0
  %v1160 = vadd.f32 %v829, %v1159
  %v1161 = vpop.f32.mrb[0].mxu0
  %1162 = vmatprep.mubr.f32.mxu0 0.0
  %1163 = vmatmul.mubr.f32.gmra.mrb[0].mxu0 %v904
  %v1164 = vpop.f32.mrb[0].mxu0
  %v1165 = vadd.f32 %v829, %v1164
  %v1166 = vpop.f32.mrb[0].mxu0
  %1167 = vmatprep.mubr.f32.mxu0 0.0
  %1168 = vmatmul.mubr.f32.gmra.mrb[0].mxu0 %v907
  %v1169 = vpop.f32.mrb[0].mxu0
  %v1170 = vadd.f32 %v829, %v1169
  %v1171 = vpop.f32.mrb[0].mxu0
  %1172 = vmatprep.mubr.f32.mxu0 0.0
  %1173 = vmatmul.mubr.f32.gmra.mrb[0].mxu0 %v910
  %v1174 = vpop.f32.mrb[0].mxu0
  %v1175 = vadd.f32 %v829, %v1174
  %v1176 = vpop.f32.mrb[0].mxu0
  %1177 = vmatprep.mubr.f32.mxu0 0.0
  %1178 = vmatmul.mubr.f32.gmra.mrb[0].mxu0 %v913
  %v1179 = vpop.f32.mrb[0].mxu0
  %v1180 = vadd.f32 %v829, %v1179
  %v1181 = vpop.f32.mrb[0].mxu0
  %1182 = vmatprep.mubr.f32.mxu0 0.0
  %1183 = vmatmul.mubr.f32.gmra.mrb[0].mxu0 %v916
  %v1184 = vpop.f32.mrb[0].mxu0
  %v1185 = vadd.f32 %v829, %v1184
  %v1186 = vpop.f32.mrb[0].mxu0
  %1187 = vmatprep.mubr.f32.mxu0 0.0
  %1188 = vmatmul.mubr.f32.gmra.mrb[0].mxu0 %v919
  %v1189 = vpop.f32.mrb[0].mxu0
  %v1190 = vadd.f32 %v829, %v1189
  %v1191 = vpop.f32.mrb[0].mxu0
  %1192 = vmatprep.mubr.f32.mxu0 0.0
  %1193 = vmatmul.mubr.f32.gmra.mrb[0].mxu0 %v922
  %v1194 = vpop.f32.mrb[0].mxu0
  %v1195 = vadd.f32 %v829, %v1194
  %v1196 = vpop.f32.mrb[0].mxu0
  %1197 = vmatprep.mubr.f32.mxu0 0.0
  %1198 = vmatmul.mubr.f32.gmra.mrb[0].mxu0 %v925
  %v1199 = vpop.f32.mrb[0].mxu0
  %v1200 = vadd.f32 %v829, %v1199
  %v1201 = vpop.f32.mrb[0].mxu0
  %1202 = vmatprep.mubr.f32.mxu0 0.0
  %1203 = vmatmul.mubr.f32.gmra.mrb[0].mxu0 %v928
  %v1204 = vpop.f32.mrb[0].mxu0
  %v1205 = vadd.f32 %v829, %v1204
  %v1206 = vpop.f32.mrb[0].mxu0
  %1207 = vmatprep.mubr.f32.mxu0 0.0
  %1208 = vmatmul.mubr.f32.gmra.mrb[0].mxu0 %v931
  %v1209 = vpop.f32.mrb[0].mxu0
  %v1210 = vadd.f32 %v829, %v1209
  %v1211 = vpop.f32.mrb[0].mxu0
  %1212 = vmatprep.mubr.f32.mxu0 0.0
  %1213 = vmatmul.mubr.f32.gmra.mrb[0].mxu0 %v934
  %v1214 = vpop.f32.mrb[0].mxu0
  %v1215 = vadd.f32 %v829, %v1214
  %v1216 = vpop.f32.mrb[0].mxu0
  %1217 = vmatprep.mubr.f32.mxu0 0.0
  %1218 = vmatmul.mubr.f32.gmra.mrb[0].mxu0 %v937
  %v1219 = vpop.f32.mrb[0].mxu0
  %v1220 = vadd.f32 %v829, %v1219
  %v1221 = vpop.f32.mrb[0].mxu0
  %1222 = vmatprep.mubr.f32.mxu0 0.0
  %1223 = vmatmul.mubr.f32.gmra.mrb[0].mxu0 %v940
  %v1224 = vpop.f32.mrb[0].mxu0
  %v1225 = vadd.f32 %v829, %v1224
  %v1226 = vpop.f32.mrb[0].mxu0
  %1227 = vmatprep.mubr.f32.mxu0 0.0
  %1228 = vmatmul.mubr.f32.gmra.mrb[0].mxu0 %v943
  %v1229 = vpop.f32.mrb[0].mxu0
  %v1230 = vadd.f32 %v829, %v1229
  %v1231 = vpop.f32.mrb[0].mxu0
  %1232 = vmatprep.mubr.f32.mxu0 0.0
  %1233 = vmatmul.mubr.f32.gmra.mrb[0].mxu0 %v946
  %v1234 = vpop.f32.mrb[0].mxu0
  %v1235 = vadd.f32 %v829, %v1234
  %v1236 = vpop.f32.mrb[0].mxu0
  %1237 = vmatprep.mubr.f32.mxu0 0.0
  %1238 = vmatmul.mubr.f32.gmra.mrb[0].mxu0 %v949
  %v1239 = vpop.f32.mrb[0].mxu0
  %v1240 = vadd.f32 %v829, %v1239
  %v1241 = vpop.f32.mrb[0].mxu0
  %1242 = vmatprep.mubr.f32.mxu0 0.0
  %1243 = vmatmul.mubr.f32.gmra.mrb[0].mxu0 %v952
  %v1244 = vpop.f32.mrb[0].mxu0
  %v1245 = vadd.f32 %v829, %v1244
  %v1246 = vpop.f32.mrb[0].mxu0
  %1247 = vmatprep.mubr.f32.mxu0 0.0
  %1248 = vmatmul.mubr.f32.gmra.mrb[0].mxu0 %v955
  %v1249 = vpop.f32.mrb[0].mxu0
  %v1250 = vadd.f32 %v829, %v1249
  %v1251 = vpop.f32.mrb[0].mxu0
  %1252 = vmatprep.mubr.f32.mxu0 0.0
  %1253 = vmatmul.mubr.f32.gmra.mrb[0].mxu0 %v958
  %v1254 = vpop.f32.mrb[0].mxu0
  %v1255 = vadd.f32 %v829, %v1254
  %v1256 = vpop.f32.mrb[0].mxu0
  %1257 = vmatprep.mubr.f32.mxu0 0.0
  %1258 = vmatmul.mubr.f32.gmra.mrb[0].mxu0 %v961
  %v1259 = vpop.f32.mrb[0].mxu0
  %v1260 = vadd.f32 %v829, %v1259
  %v1261 = vpop.f32.mrb[0].mxu0
  %1262 = vmatprep.mubr.f32.mxu0 0.0
  %1263 = vmatmul.mubr.f32.gmra.mrb[0].mxu0 %v964
  %v1264 = vpop.f32.mrb[0].mxu0
  %v1265 = vadd.f32 %v829, %v1264
  %v1266 = vpop.f32.mrb[0].mxu0
  %1267 = vmatprep.mubr.f32.mxu0 0.0
  %1268 = vmatmul.mubr.f32.gmra.mrb[0].mxu0 %v967
  %v1269 = vpop.f32.mrb[0].mxu0
  %v1270 = vadd.f32 %v829, %v1269
  %v1271 = vpop.f32.mrb[0].mxu0
  %1272 = vmatprep.mubr.f32.mxu0 0.0
  %1273 = vmatmul.mubr.f32.gmra.mrb[0].mxu0 %v970
  %v1274 = vpop.f32.mrb[0].mxu0
  %v1275 = vadd.f32 %v829, %v1274
  %v1276 = vpop.f32.mrb[0].mxu0
  %1277 = vmatprep.mubr.f32.mxu0 0.0
  %1278 = vmatmul.mubr.f32.gmra.mrb[0].mxu0 %v973
  %v1279 = vpop.f32.mrb[0].mxu0
  %v1280 = vadd.f32 %v829, %v1279
  %v1281 = vpop.f32.mrb[0].mxu0
  %1282 = vmatprep.mubr.f32.mxu0 0.0
  %1283 = vmatmul.mubr.f32.gmra.mrb[0].mxu0 %v976
  %v1284 = vpop.f32.mrb[0].mxu0
  %v1285 = vadd.f32 %v829, %v1284
  %v1286 = vpop.f32.mrb[0].mxu0
  %1287 = vdwg.mxu0
  %v1288 = vmul.f32 %v1045, 0.5
  %v1289 = vmul.f32 %v1050, 0.5
  %v1290 = vmul.f32 %v1055, 0.5
  %v1291 = vmul.f32 %v1060, 0.5
  %v1292 = vmul.f32 %v1065, 0.5
  %v1293 = vmul.f32 %v1070, 0.5
  %v1294 = vmul.f32 %v1075, 0.5
  %v1295 = vmul.f32 %v1080, 0.5
  %v1296 = vmul.f32 %v1085, 0.5
  %v1297 = vmul.f32 %v1090, 0.5
  %v1298 = vmul.f32 %v1095, 0.5
  %v1299 = vmul.f32 %v1100, 0.5
  %v1300 = vmul.f32 %v1105, 0.5
  %v1301 = vmul.f32 %v1110, 0.5
  %v1302 = vmul.f32 %v1115, 0.5
  %v1303 = vmul.f32 %v1120, 0.5
  %v1304 = vmul.f32 %v1125, 0.5
  %v1305 = vmul.f32 %v1130, 0.5
  %v1306 = vmul.f32 %v1135, 0.5
  %v1307 = vmul.f32 %v1140, 0.5
  %v1308 = vmul.f32 %v1145, 0.5
  %v1309 = vmul.f32 %v1150, 0.5
  %v1310 = vmul.f32 %v1155, 0.5
  %v1311 = vmul.f32 %v1160, 0.5
  %v1312 = vmul.f32 %v1165, 0.5
  %v1313 = vmul.f32 %v1170, 0.5
  %v1314 = vmul.f32 %v1175, 0.5
  %v1315 = vmul.f32 %v1180, 0.5
  %v1316 = vmul.f32 %v1185, 0.5
  %v1317 = vmul.f32 %v1190, 0.5
  %v1318 = vmul.f32 %v1195, 0.5
  %v1319 = vmul.f32 %v1200, 0.5
  %v1320 = vmul.f32 %v1205, 0.5
  %v1321 = vmul.f32 %v1210, 0.5
  %v1322 = vmul.f32 %v1215, 0.5
  %v1323 = vmul.f32 %v1220, 0.5
  %v1324 = vmul.f32 %v1225, 0.5
  %v1325 = vmul.f32 %v1230, 0.5
  %v1326 = vmul.f32 %v1235, 0.5
  %v1327 = vmul.f32 %v1240, 0.5
  %v1328 = vmul.f32 %v1245, 0.5
  %v1329 = vmul.f32 %v1250, 0.5
  %v1330 = vmul.f32 %v1255, 0.5
  %v1331 = vmul.f32 %v1260, 0.5
  %v1332 = vmul.f32 %v1265, 0.5
  %v1333 = vmul.f32 %v1270, 0.5
  %v1334 = vmul.f32 %v1275, 0.5
  %v1335 = vmul.f32 %v1280, 0.5
  %v1336 = vmul.f32 %v1285, 0.5
  %v1337 = vmul.f32 %v1045, 0.044715
  %v1338 = vmul.f32 %v1050, 0.044715
  %v1339 = vmul.f32 %v1055, 0.044715
  %v1340 = vmul.f32 %v1060, 0.044715
  %v1341 = vmul.f32 %v1065, 0.044715
  %v1342 = vmul.f32 %v1070, 0.044715
  %v1343 = vmul.f32 %v1075, 0.044715
  %v1344 = vmul.f32 %v1080, 0.044715
  %v1345 = vmul.f32 %v1085, 0.044715
  %v1346 = vmul.f32 %v1090, 0.044715
  %v1347 = vmul.f32 %v1095, 0.044715
  %v1348 = vmul.f32 %v1100, 0.044715
  %v1349 = vmul.f32 %v1105, 0.044715
  %v1350 = vmul.f32 %v1110, 0.044715
  %v1351 = vmul.f32 %v1115, 0.044715
  %v1352 = vmul.f32 %v1120, 0.044715
  %v1353 = vmul.f32 %v1125, 0.044715
  %v1354 = vmul.f32 %v1130, 0.044715
  %v1355 = vmul.f32 %v1135, 0.044715
  %v1356 = vmul.f32 %v1140, 0.044715
  %v1357 = vmul.f32 %v1145, 0.044715
  %v1358 = vmul.f32 %v1150, 0.044715
  %v1359 = vmul.f32 %v1155, 0.044715
  %v1360 = vmul.f32 %v1160, 0.044715
  %v1361 = vmul.f32 %v1165, 0.044715
  %v1362 = vmul.f32 %v1170, 0.044715
  %v1363 = vmul.f32 %v1175, 0.044715
  %v1364 = vmul.f32 %v1180, 0.044715
  %v1365 = vmul.f32 %v1185, 0.044715
  %v1366 = vmul.f32 %v1190, 0.044715
  %v1367 = vmul.f32 %v1195, 0.044715
  %v1368 = vmul.f32 %v1200, 0.044715
  %v1369 = vmul.f32 %v1205, 0.044715
  %v1370 = vmul.f32 %v1210, 0.044715
  %v1371 = vmul.f32 %v1215, 0.044715
  %v1372 = vmul.f32 %v1220, 0.044715
  %v1373 = vmul.f32 %v1225, 0.044715
  %v1374 = vmul.f32 %v1230, 0.044715
  %v1375 = vmul.f32 %v1235, 0.044715
  %v1376 = vmul.f32 %v1240, 0.044715
  %v1377 = vmul.f32 %v1245, 0.044715
  %v1378 = vmul.f32 %v1250, 0.044715
  %v1379 = vmul.f32 %v1255, 0.044715
  %v1380 = vmul.f32 %v1260, 0.044715
  %v1381 = vmul.f32 %v1265, 0.044715
  %v1382 = vmul.f32 %v1270, 0.044715
  %v1383 = vmul.f32 %v1275, 0.044715
  %v1384 = vmul.f32 %v1280, 0.044715
  %v1385 = vmul.f32 %v1285, 0.044715
  %v1386 = vmul.f32 %v1337, %v1045
  %v1387 = vmul.f32 %v1338, %v1050
  %v1388 = vmul.f32 %v1339, %v1055
  %v1389 = vmul.f32 %v1340, %v1060
  %v1390 = vmul.f32 %v1341, %v1065
  %v1391 = vmul.f32 %v1342, %v1070
  %v1392 = vmul.f32 %v1343, %v1075
  %v1393 = vmul.f32 %v1344, %v1080
  %v1394 = vmul.f32 %v1345, %v1085
  %v1395 = vmul.f32 %v1346, %v1090
  %v1396 = vmul.f32 %v1347, %v1095
  %v1397 = vmul.f32 %v1348, %v1100
  %v1398 = vmul.f32 %v1349, %v1105
  %v1399 = vmul.f32 %v1350, %v1110
  %v1400 = vmul.f32 %v1351, %v1115
  %v1401 = vmul.f32 %v1352, %v1120
  %v1402 = vmul.f32 %v1353, %v1125
  %v1403 = vmul.f32 %v1354, %v1130
  %v1404 = vmul.f32 %v1355, %v1135
  %v1405 = vmul.f32 %v1356, %v1140
  %v1406 = vmul.f32 %v1357, %v1145
  %v1407 = vmul.f32 %v1358, %v1150
  %v1408 = vmul.f32 %v1359, %v1155
  %v1409 = vmul.f32 %v1360, %v1160
  %v1410 = vmul.f32 %v1361, %v1165
  %v1411 = vmul.f32 %v1362, %v1170
  %v1412 = vmul.f32 %v1363, %v1175
  %v1413 = vmul.f32 %v1364, %v1180
  %v1414 = vmul.f32 %v1365, %v1185
  %v1415 = vmul.f32 %v1366, %v1190
  %v1416 = vmul.f32 %v1367, %v1195
  %v1417 = vmul.f32 %v1368, %v1200
  %v1418 = vmul.f32 %v1369, %v1205
  %v1419 = vmul.f32 %v1370, %v1210
  %v1420 = vmul.f32 %v1371, %v1215
  %v1421 = vmul.f32 %v1372, %v1220
  %v1422 = vmul.f32 %v1373, %v1225
  %v1423 = vmul.f32 %v1374, %v1230
  %v1424 = vmul.f32 %v1375, %v1235
  %v1425 = vmul.f32 %v1376, %v1240
  %v1426 = vmul.f32 %v1377, %v1245
  %v1427 = vmul.f32 %v1378, %v1250
  %v1428 = vmul.f32 %v1379, %v1255
  %v1429 = vmul.f32 %v1380, %v1260
  %v1430 = vmul.f32 %v1381, %v1265
  %v1431 = vmul.f32 %v1382, %v1270
  %v1432 = vmul.f32 %v1383, %v1275
  %v1433 = vmul.f32 %v1384, %v1280
  %v1434 = vmul.f32 %v1385, %v1285
  %v1435 = vmul.f32 %v1386, %v1045
  %v1436 = vmul.f32 %v1387, %v1050
  %v1437 = vmul.f32 %v1388, %v1055
  %v1438 = vmul.f32 %v1389, %v1060
  %v1439 = vmul.f32 %v1390, %v1065
  %v1440 = vmul.f32 %v1391, %v1070
  %v1441 = vmul.f32 %v1392, %v1075
  %v1442 = vmul.f32 %v1393, %v1080
  %v1443 = vmul.f32 %v1394, %v1085
  %v1444 = vmul.f32 %v1395, %v1090
  %v1445 = vmul.f32 %v1396, %v1095
  %v1446 = vmul.f32 %v1397, %v1100
  %v1447 = vmul.f32 %v1398, %v1105
  %v1448 = vmul.f32 %v1399, %v1110
  %v1449 = vmul.f32 %v1400, %v1115
  %v1450 = vmul.f32 %v1401, %v1120
  %v1451 = vmul.f32 %v1402, %v1125
  %v1452 = vmul.f32 %v1403, %v1130
  %v1453 = vmul.f32 %v1404, %v1135
  %v1454 = vmul.f32 %v1405, %v1140
  %v1455 = vmul.f32 %v1406, %v1145
  %v1456 = vmul.f32 %v1407, %v1150
  %v1457 = vmul.f32 %v1408, %v1155
  %v1458 = vmul.f32 %v1409, %v1160
  %v1459 = vmul.f32 %v1410, %v1165
  %v1460 = vmul.f32 %v1411, %v1170
  %v1461 = vmul.f32 %v1412, %v1175
  %v1462 = vmul.f32 %v1413, %v1180
  %v1463 = vmul.f32 %v1414, %v1185
  %v1464 = vmul.f32 %v1415, %v1190
  %v1465 = vmul.f32 %v1416, %v1195
  %v1466 = vmul.f32 %v1417, %v1200
  %v1467 = vmul.f32 %v1418, %v1205
  %v1468 = vmul.f32 %v1419, %v1210
  %v1469 = vmul.f32 %v1420, %v1215
  %v1470 = vmul.f32 %v1421, %v1220
  %v1471 = vmul.f32 %v1422, %v1225
  %v1472 = vmul.f32 %v1423, %v1230
  %v1473 = vmul.f32 %v1424, %v1235
  %v1474 = vmul.f32 %v1425, %v1240
  %v1475 = vmul.f32 %v1426, %v1245
  %v1476 = vmul.f32 %v1427, %v1250
  %v1477 = vmul.f32 %v1428, %v1255
  %v1478 = vmul.f32 %v1429, %v1260
  %v1479 = vmul.f32 %v1430, %v1265
  %v1480 = vmul.f32 %v1431, %v1270
  %v1481 = vmul.f32 %v1432, %v1275
  %v1482 = vmul.f32 %v1433, %v1280
  %v1483 = vmul.f32 %v1434, %v1285
  %v1484 = vadd.f32 %v1045, %v1435
  %v1485 = vadd.f32 %v1050, %v1436
  %v1486 = vadd.f32 %v1055, %v1437
  %v1487 = vadd.f32 %v1060, %v1438
  %v1488 = vadd.f32 %v1065, %v1439
  %v1489 = vadd.f32 %v1070, %v1440
  %v1490 = vadd.f32 %v1075, %v1441
  %v1491 = vadd.f32 %v1080, %v1442
  %v1492 = vadd.f32 %v1085, %v1443
  %v1493 = vadd.f32 %v1090, %v1444
  %v1494 = vadd.f32 %v1095, %v1445
  %v1495 = vadd.f32 %v1100, %v1446
  %v1496 = vadd.f32 %v1105, %v1447
  %v1497 = vadd.f32 %v1110, %v1448
  %v1498 = vadd.f32 %v1115, %v1449
  %v1499 = vadd.f32 %v1120, %v1450
  %v1500 = vadd.f32 %v1125, %v1451
  %v1501 = vadd.f32 %v1130, %v1452
  %v1502 = vadd.f32 %v1135, %v1453
  %v1503 = vadd.f32 %v1140, %v1454
  %v1504 = vadd.f32 %v1145, %v1455
  %v1505 = vadd.f32 %v1150, %v1456
  %v1506 = vadd.f32 %v1155, %v1457
  %v1507 = vadd.f32 %v1160, %v1458
  %v1508 = vadd.f32 %v1165, %v1459
  %v1509 = vadd.f32 %v1170, %v1460
  %v1510 = vadd.f32 %v1175, %v1461
  %v1511 = vadd.f32 %v1180, %v1462
  %v1512 = vadd.f32 %v1185, %v1463
  %v1513 = vadd.f32 %v1190, %v1464
  %v1514 = vadd.f32 %v1195, %v1465
  %v1515 = vadd.f32 %v1200, %v1466
  %v1516 = vadd.f32 %v1205, %v1467
  %v1517 = vadd.f32 %v1210, %v1468
  %v1518 = vadd.f32 %v1215, %v1469
  %v1519 = vadd.f32 %v1220, %v1470
  %v1520 = vadd.f32 %v1225, %v1471
  %v1521 = vadd.f32 %v1230, %v1472
  %v1522 = vadd.f32 %v1235, %v1473
  %v1523 = vadd.f32 %v1240, %v1474
  %v1524 = vadd.f32 %v1245, %v1475
  %v1525 = vadd.f32 %v1250, %v1476
  %v1526 = vadd.f32 %v1255, %v1477
  %v1527 = vadd.f32 %v1260, %v1478
  %v1528 = vadd.f32 %v1265, %v1479
  %v1529 = vadd.f32 %v1270, %v1480
  %v1530 = vadd.f32 %v1275, %v1481
  %v1531 = vadd.f32 %v1280, %v1482
  %v1532 = vadd.f32 %v1285, %v1483
  %v1533 = vmul.f32 %v1484, 0.7978846
  %v1534 = vmul.f32 %v1485, 0.7978846
  %v1535 = vmul.f32 %v1486, 0.7978846
  %v1536 = vmul.f32 %v1487, 0.7978846
  %v1537 = vmul.f32 %v1488, 0.7978846
  %v1538 = vmul.f32 %v1489, 0.7978846
  %v1539 = vmul.f32 %v1490, 0.7978846
  %v1540 = vmul.f32 %v1491, 0.7978846
  %v1541 = vmul.f32 %v1492, 0.7978846
  %v1542 = vmul.f32 %v1493, 0.7978846
  %v1543 = vmul.f32 %v1494, 0.7978846
  %v1544 = vmul.f32 %v1495, 0.7978846
  %v1545 = vmul.f32 %v1496, 0.7978846
  %v1546 = vmul.f32 %v1497, 0.7978846
  %v1547 = vmul.f32 %v1498, 0.7978846
  %v1548 = vmul.f32 %v1499, 0.7978846
  %v1549 = vmul.f32 %v1500, 0.7978846
  %v1550 = vmul.f32 %v1501, 0.7978846
  %v1551 = vmul.f32 %v1502, 0.7978846
  %v1552 = vmul.f32 %v1503, 0.7978846
  %v1553 = vmul.f32 %v1504, 0.7978846
  %v1554 = vmul.f32 %v1505, 0.7978846
  %v1555 = vmul.f32 %v1506, 0.7978846
  %v1556 = vmul.f32 %v1507, 0.7978846
  %v1557 = vmul.f32 %v1508, 0.7978846
  %v1558 = vmul.f32 %v1509, 0.7978846
  %v1559 = vmul.f32 %v1510, 0.7978846
  %v1560 = vmul.f32 %v1511, 0.7978846
  %v1561 = vmul.f32 %v1512, 0.7978846
  %v1562 = vmul.f32 %v1513, 0.7978846
  %v1563 = vmul.f32 %v1514, 0.7978846
  %v1564 = vmul.f32 %v1515, 0.7978846
  %v1565 = vmul.f32 %v1516, 0.7978846
  %v1566 = vmul.f32 %v1517, 0.7978846
  %v1567 = vmul.f32 %v1518, 0.7978846
  %v1568 = vmul.f32 %v1519, 0.7978846
  %v1569 = vmul.f32 %v1520, 0.7978846
  %v1570 = vmul.f32 %v1521, 0.7978846
  %v1571 = vmul.f32 %v1522, 0.7978846
  %v1572 = vmul.f32 %v1523, 0.7978846
  %v1573 = vmul.f32 %v1524, 0.7978846
  %v1574 = vmul.f32 %v1525, 0.7978846
  %v1575 = vmul.f32 %v1526, 0.7978846
  %v1576 = vmul.f32 %v1527, 0.7978846
  %v1577 = vmul.f32 %v1528, 0.7978846
  %v1578 = vmul.f32 %v1529, 0.7978846
  %v1579 = vmul.f32 %v1530, 0.7978846
  %v1580 = vmul.f32 %v1531, 0.7978846
  %v1581 = vmul.f32 %v1532, 0.7978846
  %v1582 = vtanh.pop %v1533
  %v1583 = vtanh.pop %v1534
  %v1584 = vtanh.pop %v1535
  %v1585 = vtanh.pop %v1536
  %v1586 = vtanh.pop %v1537
  %v1587 = vtanh.pop %v1538
  %v1588 = vtanh.pop %v1539
  %v1589 = vtanh.pop %v1540
  %v1590 = vtanh.pop %v1541
  %v1591 = vtanh.pop %v1542
  %v1592 = vtanh.pop %v1543
  %v1593 = vtanh.pop %v1544
  %v1594 = vtanh.pop %v1545
  %v1595 = vtanh.pop %v1546
  %v1596 = vtanh.pop %v1547
  %v1597 = vtanh.pop %v1548
  %v1598 = vtanh.pop %v1549
  %v1599 = vtanh.pop %v1550
  %v1600 = vtanh.pop %v1551
  %v1601 = vtanh.pop %v1552
  %v1602 = vtanh.pop %v1553
  %v1603 = vtanh.pop %v1554
  %v1604 = vtanh.pop %v1555
  %v1605 = vtanh.pop %v1556
  %v1606 = vtanh.pop %v1557
  %v1607 = vtanh.pop %v1558
  %v1608 = vtanh.pop %v1559
  %v1609 = vtanh.pop %v1560
  %v1610 = vtanh.pop %v1561
  %v1611 = vtanh.pop %v1562
  %v1612 = vtanh.pop %v1563
  %v1613 = vtanh.pop %v1564
  %v1614 = vtanh.pop %v1565
  %v1615 = vtanh.pop %v1566
  %v1616 = vtanh.pop %v1567
  %v1617 = vtanh.pop %v1568
  %v1618 = vtanh.pop %v1569
  %v1619 = vtanh.pop %v1570
  %v1620 = vtanh.pop %v1571
  %v1621 = vtanh.pop %v1572
  %v1622 = vtanh.pop %v1573
  %v1623 = vtanh.pop %v1574
  %v1624 = vtanh.pop %v1575
  %v1625 = vtanh.pop %v1576
  %v1626 = vtanh.pop %v1577
  %v1627 = vtanh.pop %v1578
  %v1628 = vtanh.pop %v1579
  %v1629 = vtanh.pop %v1580
  %v1630 = vtanh.pop %v1581
  %v1631 = vadd.f32 %v1582, 1.0
  %v1632 = vadd.f32 %v1583, 1.0
  %v1633 = vadd.f32 %v1584, 1.0
  %v1634 = vadd.f32 %v1585, 1.0
  %v1635 = vadd.f32 %v1586, 1.0
  %v1636 = vadd.f32 %v1587, 1.0
  %v1637 = vadd.f32 %v1588, 1.0
  %v1638 = vadd.f32 %v1589, 1.0
  %v1639 = vadd.f32 %v1590, 1.0
  %v1640 = vadd.f32 %v1591, 1.0
  %v1641 = vadd.f32 %v1592, 1.0
  %v1642 = vadd.f32 %v1593, 1.0
  %v1643 = vadd.f32 %v1594, 1.0
  %v1644 = vadd.f32 %v1595, 1.0
  %v1645 = vadd.f32 %v1596, 1.0
  %v1646 = vadd.f32 %v1597, 1.0
  %v1647 = vadd.f32 %v1598, 1.0
  %v1648 = vadd.f32 %v1599, 1.0
  %v1649 = vadd.f32 %v1600, 1.0
  %v1650 = vadd.f32 %v1601, 1.0
  %v1651 = vadd.f32 %v1602, 1.0
  %v1652 = vadd.f32 %v1603, 1.0
  %v1653 = vadd.f32 %v1604, 1.0
  %v1654 = vadd.f32 %v1605, 1.0
  %v1655 = vadd.f32 %v1606, 1.0
  %v1656 = vadd.f32 %v1607, 1.0
  %v1657 = vadd.f32 %v1608, 1.0
  %v1658 = vadd.f32 %v1609, 1.0
  %v1659 = vadd.f32 %v1610, 1.0
  %v1660 = vadd.f32 %v1611, 1.0
  %v1661 = vadd.f32 %v1612, 1.0
  %v1662 = vadd.f32 %v1613, 1.0
  %v1663 = vadd.f32 %v1614, 1.0
  %v1664 = vadd.f32 %v1615, 1.0
  %v1665 = vadd.f32 %v1616, 1.0
  %v1666 = vadd.f32 %v1617, 1.0
  %v1667 = vadd.f32 %v1618, 1.0
  %v1668 = vadd.f32 %v1619, 1.0
  %v1669 = vadd.f32 %v1620, 1.0
  %v1670 = vadd.f32 %v1621, 1.0
  %v1671 = vadd.f32 %v1622, 1.0
  %v1672 = vadd.f32 %v1623, 1.0
  %v1673 = vadd.f32 %v1624, 1.0
  %v1674 = vadd.f32 %v1625, 1.0
  %v1675 = vadd.f32 %v1626, 1.0
  %v1676 = vadd.f32 %v1627, 1.0
  %v1677 = vadd.f32 %v1628, 1.0
  %v1678 = vadd.f32 %v1629, 1.0
  %v1679 = vadd.f32 %v1630, 1.0
  %v1680 = vmul.f32 %v1288, %v1631
  %v1681 = vmul.f32 %v1289, %v1632
  %v1682 = vmul.f32 %v1290, %v1633
  %v1683 = vmul.f32 %v1291, %v1634
  %v1684 = vmul.f32 %v1292, %v1635
  %v1685 = vmul.f32 %v1293, %v1636
  %v1686 = vmul.f32 %v1294, %v1637
  %v1687 = vmul.f32 %v1295, %v1638
  %v1688 = vmul.f32 %v1296, %v1639
  %v1689 = vmul.f32 %v1297, %v1640
  %v1690 = vmul.f32 %v1298, %v1641
  %v1691 = vmul.f32 %v1299, %v1642
  %v1692 = vmul.f32 %v1300, %v1643
  %v1693 = vmul.f32 %v1301, %v1644
  %v1694 = vmul.f32 %v1302, %v1645
  %v1695 = vmul.f32 %v1303, %v1646
  %v1696 = vmul.f32 %v1304, %v1647
  %v1697 = vmul.f32 %v1305, %v1648
  %v1698 = vmul.f32 %v1306, %v1649
  %v1699 = vmul.f32 %v1307, %v1650
  %v1700 = vmul.f32 %v1308, %v1651
  %v1701 = vmul.f32 %v1309, %v1652
  %v1702 = vmul.f32 %v1310, %v1653
  %v1703 = vmul.f32 %v1311, %v1654
  %v1704 = vmul.f32 %v1312, %v1655
  %v1705 = vmul.f32 %v1313, %v1656
  %v1706 = vmul.f32 %v1314, %v1657
  %v1707 = vmul.f32 %v1315, %v1658
  %v1708 = vmul.f32 %v1316, %v1659
  %v1709 = vmul.f32 %v1317, %v1660
  %v1710 = vmul.f32 %v1318, %v1661
  %v1711 = vmul.f32 %v1319, %v1662
  %v1712 = vmul.f32 %v1320, %v1663
  %v1713 = vmul.f32 %v1321, %v1664
  %v1714 = vmul.f32 %v1322, %v1665
  %v1715 = vmul.f32 %v1323, %v1666
  %v1716 = vmul.f32 %v1324, %v1667
  %v1717 = vmul.f32 %v1325, %v1668
  %v1718 = vmul.f32 %v1326, %v1669
  %v1719 = vmul.f32 %v1327, %v1670
  %v1720 = vmul.f32 %v1328, %v1671
  %v1721 = vmul.f32 %v1329, %v1672
  %v1722 = vmul.f32 %v1330, %v1673
  %v1723 = vmul.f32 %v1331, %v1674
  %v1724 = vmul.f32 %v1332, %v1675
  %v1725 = vmul.f32 %v1333, %v1676
  %v1726 = vmul.f32 %v1334, %v1677
  %v1727 = vmul.f32 %v1335, %v1678
  %v1728 = vmul.f32 %v1336, %v1679
  %1729 = vst [vmem:[%s5] sm:$0xff] %v1680
  %1730 = vst [vmem:[%s5 + $0x8] sm:$0xff] %v1681
  %1731 = vst [vmem:[%s5 + $0x10] sm:$0xff] %v1682
  %1732 = vst [vmem:[%s5 + $0x18] sm:$0xff] %v1683
  %1733 = vst [vmem:[%s5 + $0x20] sm:$0xff] %v1684
  %1734 = vst [vmem:[%s5 + $0x28] sm:$0xff] %v1685
  %1735 = vst [vmem:[%s5 + $0x30] sm:$0xff] %v1686
  %1736 = vst [vmem:[%s5 + $0x38] sm:$0xff] %v1687
  %1737 = vst [vmem:[%s5 + $0x40] sm:$0xff] %v1688
  %1738 = vst [vmem:[%s5 + $0x48] sm:$0xff] %v1689
  %1739 = vst [vmem:[%s5 + $0x50] sm:$0xff] %v1690
  %1740 = vst [vmem:[%s5 + $0x58] sm:$0xff] %v1691
  %1741 = vst [vmem:[%s5 + $0x60] sm:$0xff] %v1692
  %1742 = vst [vmem:[%s5 + $0x68] sm:$0xff] %v1693
  %1743 = vst [vmem:[%s5 + $0x70] sm:$0xff] %v1694
  %1744 = vst [vmem:[%s5 + $0x78] sm:$0xff] %v1695
  %1745 = vst [vmem:[%s5 + $0x80] sm:$0xff] %v1696
  %1746 = vst [vmem:[%s5 + $0x88] sm:$0xff] %v1697
  %1747 = vst [vmem:[%s5 + $0x90] sm:$0xff] %v1698
  %1748 = vst [vmem:[%s5 + $0x98] sm:$0xff] %v1699
  %1749 = vst [vmem:[%s5 + $0xa0] sm:$0xff] %v1700
  %1750 = vst [vmem:[%s5 + $0xa8] sm:$0xff] %v1701
  %1751 = vst [vmem:[%s5 + $0xb0] sm:$0xff] %v1702
  %1752 = vst [vmem:[%s5 + $0xb8] sm:$0xff] %v1703
  %1753 = vst [vmem:[%s5 + $0xc0] sm:$0xff] %v1704
  %1754 = vst [vmem:[%s5 + $0xc8] sm:$0xff] %v1705
  %1755 = vst [vmem:[%s5 + $0xd0] sm:$0xff] %v1706
  %1756 = vst [vmem:[%s5 + $0xd8] sm:$0xff] %v1707
  %1757 = vst [vmem:[%s5 + $0xe0] sm:$0xff] %v1708
  %1758 = vst [vmem:[%s5 + $0xe8] sm:$0xff] %v1709
  %1759 = vst [vmem:[%s5 + $0xf0] sm:$0xff] %v1710
  %1760 = vst [vmem:[%s5 + $0xf8] sm:$0xff] %v1711
  %1761 = vst [vmem:[%s5 + $0x100] sm:$0xff] %v1712
  %1762 = vst [vmem:[%s5 + $0x108] sm:$0xff] %v1713
  %1763 = vst [vmem:[%s5 + $0x110] sm:$0xff] %v1714
  %1764 = vst [vmem:[%s5 + $0x118] sm:$0xff] %v1715
  %1765 = vst [vmem:[%s5 + $0x120] sm:$0xff] %v1716
  %1766 = vst [vmem:[%s5 + $0x128] sm:$0xff] %v1717
  %1767 = vst [vmem:[%s5 + $0x130] sm:$0xff] %v1718
  %1768 = vst [vmem:[%s5 + $0x138] sm:$0xff] %v1719
  %1769 = vst [vmem:[%s5 + $0x140] sm:$0xff] %v1720
  %1770 = vst [vmem:[%s5 + $0x148] sm:$0xff] %v1721
  %1771 = vst [vmem:[%s5 + $0x150] sm:$0xff] %v1722
  %1772 = vst [vmem:[%s5 + $0x158] sm:$0xff] %v1723
  %1773 = vst [vmem:[%s5 + $0x160] sm:$0xff] %v1724
  %1774 = vst [vmem:[%s5 + $0x168] sm:$0xff] %v1725
  %1775 = vst [vmem:[%s5 + $0x170] sm:$0xff] %v1726
  %1776 = vst [vmem:[%s5 + $0x178] sm:$0xff] %v1727
  %1777 = vst [vmem:[%s5 + $0x180] sm:$0xff] %v1728
  // Predicated region
  $region22: #{swin_encoder_block_forward.8} parent=0 // pred_check
    _
  $region23: #{swin_encoder_block_forward.8} parent=0 // pred_check_branch
    %1779 = sbr.rel (0) target = $region25
  $region24: #{swin_encoder_block_forward.8} parent=0 // pred_region
    _
  $region25: #{swin_encoder_block_forward.8} parent=0 // pred_fallthru
    _
  // Predicated region
  $region26: #{swin_encoder_block_forward.8} parent=0 // pred_check
    _
  $region27: #{swin_encoder_block_forward.8} parent=0 // pred_check_branch
    %1781 = sbr.rel (0) target = $region29
  $region28: #{swin_encoder_block_forward.8} parent=0 // pred_region
    _
  $region29: #{swin_encoder_block_forward.8} parent=0 // pred_fallthru
    _

// kernel: swin_encoder_block_forward.9
$region0: #{swin_encoder_block_forward.9}
  #allocation0 [shape = 'u32[]', space=smem, size = 0x4, offset = 0x4, fixed_abs, tag = 'smem constant byte address 0x4 - core index']
  #allocation1 [shape = 'u32[144,128]{1,0:T(1,128)}', space=vmem, size = 0x12000, scoped, tag = 'internal scratch']
  %s0 = inlined_call_operand.vmem [shape: f32[392,128], index: 0, kind: input, shape index: {}]
  %s1 = inlined_call_operand.vmem [shape: f32[128,32], index: 1, kind: input, shape index: {}]
  %s2 = inlined_call_operand.vmem [shape: f32[1,32], index: 2, kind: input, shape index: {}]
  %s3 = inlined_call_operand.vmem [shape: f32[392,32], index: 3, kind: input, shape index: {}]
  %s4 = inlined_call_operand.vmem [shape: f32[392,32], index: 4, kind: output, shape index: {}]
  %s5 = sld [smem:[#allocation0]]
  $region26: #{swin_encoder_block_forward.9} parent=0
    _
  %s7 = ssub.s32 1, %s5
  %s8 = scalar_select 0, %s7, %s5
  // Predicated region
  $region2: #{swin_encoder_block_forward.9} parent=0 // pred_check
    _
  $region3: #{swin_encoder_block_forward.9} parent=0 // pred_check_branch
    %10 = sbr.rel (0) target = $region5
  $region4: #{swin_encoder_block_forward.9} parent=0 // pred_region
    _
  $region5: #{swin_encoder_block_forward.9} parent=0 // pred_fallthru
    _
  // Predicated region
  $region6: #{swin_encoder_block_forward.9} parent=0 // pred_check
    _
  $region7: #{swin_encoder_block_forward.9} parent=0 // pred_check_branch
    %12 = sbr.rel (0) target = $region9
  $region8: #{swin_encoder_block_forward.9} parent=0 // pred_region
    _
  $region9: #{swin_encoder_block_forward.9} parent=0 // pred_fallthru
    _
  // Predicated region
  $region10: #{swin_encoder_block_forward.9} parent=0 // pred_check
    _
  $region11: #{swin_encoder_block_forward.9} parent=0 // pred_check_branch
    %14 = sbr.rel (0) target = $region13
  $region12: #{swin_encoder_block_forward.9} parent=0 // pred_region
    _
  $region13: #{swin_encoder_block_forward.9} parent=0 // pred_fallthru
    _
  // Predicated region
  $region14: #{swin_encoder_block_forward.9} parent=0 // pred_check
    _
  $region15: #{swin_encoder_block_forward.9} parent=0 // pred_check_branch
    %16 = sbr.rel (0) target = $region17
  $region16: #{swin_encoder_block_forward.9} parent=0 // pred_region
    _
  $region17: #{swin_encoder_block_forward.9} parent=0 // pred_fallthru
    _
  %v17 = vld [vmem:[%s0] sm:$0xff]
  %v18 = vld [vmem:[%s0 + $0x8] sm:$0xff]
  %v19 = vld [vmem:[%s0 + $0x10] sm:$0xff]
  %v20 = vld [vmem:[%s0 + $0x18] sm:$0xff]
  %v21 = vld [vmem:[%s0 + $0x20] sm:$0xff]
  %v22 = vld [vmem:[%s0 + $0x28] sm:$0xff]
  %v23 = vld [vmem:[%s0 + $0x30] sm:$0xff]
  %v24 = vld [vmem:[%s0 + $0x38] sm:$0xff]
  %v25 = vld [vmem:[%s0 + $0x40] sm:$0xff]
  %v26 = vld [vmem:[%s0 + $0x48] sm:$0xff]
  %v27 = vld [vmem:[%s0 + $0x50] sm:$0xff]
  %v28 = vld [vmem:[%s0 + $0x58] sm:$0xff]
  %v29 = vld [vmem:[%s0 + $0x60] sm:$0xff]
  %v30 = vld [vmem:[%s0 + $0x68] sm:$0xff]
  %v31 = vld [vmem:[%s0 + $0x70] sm:$0xff]
  %v32 = vld [vmem:[%s0 + $0x78] sm:$0xff]
  %v33 = vld [vmem:[%s0 + $0x80] sm:$0xff]
  %v34 = vld [vmem:[%s0 + $0x88] sm:$0xff]
  %v35 = vld [vmem:[%s0 + $0x90] sm:$0xff]
  %v36 = vld [vmem:[%s0 + $0x98] sm:$0xff]
  %v37 = vld [vmem:[%s0 + $0xa0] sm:$0xff]
  %v38 = vld [vmem:[%s0 + $0xa8] sm:$0xff]
  %v39 = vld [vmem:[%s0 + $0xb0] sm:$0xff]
  %v40 = vld [vmem:[%s0 + $0xb8] sm:$0xff]
  %v41 = vld [vmem:[%s0 + $0xc0] sm:$0xff]
  %v42 = vld [vmem:[%s0 + $0xc8] sm:$0xff]
  %v43 = vld [vmem:[%s0 + $0xd0] sm:$0xff]
  %v44 = vld [vmem:[%s0 + $0xd8] sm:$0xff]
  %v45 = vld [vmem:[%s0 + $0xe0] sm:$0xff]
  %v46 = vld [vmem:[%s0 + $0xe8] sm:$0xff]
  %v47 = vld [vmem:[%s0 + $0xf0] sm:$0xff]
  %v48 = vld [vmem:[%s0 + $0xf8] sm:$0xff]
  %v49 = vld [vmem:[%s0 + $0x100] sm:$0xff]
  %v50 = vld [vmem:[%s0 + $0x108] sm:$0xff]
  %v51 = vld [vmem:[%s0 + $0x110] sm:$0xff]
  %v52 = vld [vmem:[%s0 + $0x118] sm:$0xff]
  %v53 = vld [vmem:[%s0 + $0x120] sm:$0xff]
  %v54 = vld [vmem:[%s0 + $0x128] sm:$0xff]
  %v55 = vld [vmem:[%s0 + $0x130] sm:$0xff]
  %v56 = vld [vmem:[%s0 + $0x138] sm:$0xff]
  %v57 = vld [vmem:[%s0 + $0x140] sm:$0xff]
  %v58 = vld [vmem:[%s0 + $0x148] sm:$0xff]
  %v59 = vld [vmem:[%s0 + $0x150] sm:$0xff]
  %v60 = vld [vmem:[%s0 + $0x158] sm:$0xff]
  %v61 = vld [vmem:[%s0 + $0x160] sm:$0xff]
  %v62 = vld [vmem:[%s0 + $0x168] sm:$0xff]
  %v63 = vld [vmem:[%s0 + $0x170] sm:$0xff]
  %v64 = vld [vmem:[%s0 + $0x178] sm:$0xff]
  %v65 = vld [vmem:[%s0 + $0x180] sm:$0xff]
  %v66 = vld [vmem:[%s1] sm:$0xff]
  %v67 = vld [vmem:[%s1 + $0x8] sm:$0xff]
  %v68 = vld [vmem:[%s1 + $0x10] sm:$0xff]
  %v69 = vld [vmem:[%s1 + $0x18] sm:$0xff]
  %v70 = vld [vmem:[%s1 + $0x20] sm:$0xff]
  %v71 = vld [vmem:[%s1 + $0x28] sm:$0xff]
  %v72 = vld [vmem:[%s1 + $0x30] sm:$0xff]
  %v73 = vld [vmem:[%s1 + $0x38] sm:$0xff]
  %v74 = vld [vmem:[%s1 + $0x40] sm:$0xff]
  %v75 = vld [vmem:[%s1 + $0x48] sm:$0xff]
  %v76 = vld [vmem:[%s1 + $0x50] sm:$0xff]
  %v77 = vld [vmem:[%s1 + $0x58] sm:$0xff]
  %v78 = vld [vmem:[%s1 + $0x60] sm:$0xff]
  %v79 = vld [vmem:[%s1 + $0x68] sm:$0xff]
  %v80 = vld [vmem:[%s1 + $0x70] sm:$0xff]
  %v81 = vld [vmem:[%s1 + $0x78] sm:$0xff]
  %v82 = vld [vmem:[%s2] sm:$0x1]
  %v84 = vlaneseq
  %v85 = vshrl.u32 %v84, 7
  %v86 = vsub.s32 0, %v85
  %v87 = vrot.slane %v82, %v86
  %89 = vmatprep.subr.mxu0 0.0
  %90 = vmatpush1.msra.mxu0 %v66
  %91 = vmatprep.subr.mxu0 0.0
  %92 = vmatpush1.msra.mxu0 %v67
  %93 = vmatprep.subr.mxu0 0.0
  %94 = vmatpush1.msra.mxu0 %v68
  %95 = vmatprep.subr.mxu0 0.0
  %96 = vmatpush1.msra.mxu0 %v69
  %97 = vmatprep.subr.mxu0 0.0
  %98 = vmatpush1.msra.mxu0 %v70
  %99 = vmatprep.subr.mxu0 0.0
  %100 = vmatpush1.msra.mxu0 %v71
  %101 = vmatprep.subr.mxu0 0.0
  %102 = vmatpush1.msra.mxu0 %v72
  %103 = vmatprep.subr.mxu0 0.0
  %104 = vmatpush1.msra.mxu0 %v73
  %105 = vmatprep.subr.mxu0 0.0
  %106 = vmatpush1.msra.mxu0 %v74
  %107 = vmatprep.subr.mxu0 0.0
  %108 = vmatpush1.msra.mxu0 %v75
  %109 = vmatprep.subr.mxu0 0.0
  %110 = vmatpush1.msra.mxu0 %v76
  %111 = vmatprep.subr.mxu0 0.0
  %112 = vmatpush1.msra.mxu0 %v77
  %113 = vmatprep.subr.mxu0 0.0
  %114 = vmatpush1.msra.mxu0 %v78
  %115 = vmatprep.subr.mxu0 0.0
  %116 = vmatpush1.msra.mxu0 %v79
  %117 = vmatprep.subr.mxu0 0.0
  %118 = vmatpush1.msra.mxu0 %v80
  %119 = vmatprep.subr.mxu0 0.0
  %120 = vmatpush1.msra.mxu0 %v81
  %121 = vmatprep.subr.mxu0 0.0
  %122 = vmatpush1.msra.mxu0 0.0
  %123 = vmatprep.subr.mxu0 0.0
  %124 = vmatpush1.msra.mxu0 0.0
  %125 = vmatprep.subr.mxu0 0.0
  %126 = vmatpush1.msra.mxu0 0.0
  %127 = vmatprep.subr.mxu0 0.0
  %128 = vmatpush1.msra.mxu0 0.0
  %129 = vmatprep.subr.mxu0 0.0
  %130 = vmatpush1.msra.mxu0 0.0
  %131 = vmatprep.subr.mxu0 0.0
  %132 = vmatpush1.msra.mxu0 0.0
  %133 = vmatprep.subr.mxu0 0.0
  %134 = vmatpush1.msra.mxu0 0.0
  %135 = vmatprep.subr.mxu0 0.0
  %136 = vmatpush1.msra.mxu0 0.0
  %137 = vmatprep.subr.mxu0 0.0
  %138 = vmatpush1.msra.mxu0 0.0
  %139 = vmatprep.subr.mxu0 0.0
  %140 = vmatpush1.msra.mxu0 0.0
  %141 = vmatprep.subr.mxu0 0.0
  %142 = vmatpush1.msra.mxu0 0.0
  %143 = vmatprep.subr.mxu0 0.0
  %144 = vmatpush1.msra.mxu0 0.0
  %145 = vmatprep.subr.mxu0 0.0
  %146 = vmatpush1.msra.mxu0 0.0
  %147 = vmatprep.subr.mxu0 0.0
  %148 = vmatpush1.msra.mxu0 0.0
  %149 = vmatprep.subr.mxu0 0.0
  %150 = vmatpush1.msra.mxu0 0.0
  %151 = vmatprep.subr.mxu0 0.0
  %152 = vmatpush1.msra.mxu0 0.0
  %153 = vmatprep.mubr.f32.mxu0 0.0
  %154 = vmatmul.mubr.f32.gmra.mrb[0].mxu0 %v17
  %v155 = vpop.f32.mrb[0].mxu0
  %v156 = vadd.f32 %v87, %v155
  %v157 = vpop.f32.mrb[0].mxu0
  %158 = vmatprep.mubr.f32.mxu0 0.0
  %159 = vmatmul.mubr.f32.gmra.mrb[0].mxu0 %v18
  %v160 = vpop.f32.mrb[0].mxu0
  %v161 = vadd.f32 %v87, %v160
  %v162 = vpop.f32.mrb[0].mxu0
  %163 = vmatprep.mubr.f32.mxu0 0.0
  %164 = vmatmul.mubr.f32.gmra.mrb[0].mxu0 %v19
  %v165 = vpop.f32.mrb[0].mxu0
  %v166 = vadd.f32 %v87, %v165
  %v167 = vpop.f32.mrb[0].mxu0
  %168 = vmatprep.mubr.f32.mxu0 0.0
  %169 = vmatmul.mubr.f32.gmra.mrb[0].mxu0 %v20
  %v170 = vpop.f32.mrb[0].mxu0
  %v171 = vadd.f32 %v87, %v170
  %v172 = vpop.f32.mrb[0].mxu0
  %173 = vmatprep.mubr.f32.mxu0 0.0
  %174 = vmatmul.mubr.f32.gmra.mrb[0].mxu0 %v21
  %v175 = vpop.f32.mrb[0].mxu0
  %v176 = vadd.f32 %v87, %v175
  %v177 = vpop.f32.mrb[0].mxu0
  %178 = vmatprep.mubr.f32.mxu0 0.0
  %179 = vmatmul.mubr.f32.gmra.mrb[0].mxu0 %v22
  %v180 = vpop.f32.mrb[0].mxu0
  %v181 = vadd.f32 %v87, %v180
  %v182 = vpop.f32.mrb[0].mxu0
  %183 = vmatprep.mubr.f32.mxu0 0.0
  %184 = vmatmul.mubr.f32.gmra.mrb[0].mxu0 %v23
  %v185 = vpop.f32.mrb[0].mxu0
  %v186 = vadd.f32 %v87, %v185
  %v187 = vpop.f32.mrb[0].mxu0
  %188 = vmatprep.mubr.f32.mxu0 0.0
  %189 = vmatmul.mubr.f32.gmra.mrb[0].mxu0 %v24
  %v190 = vpop.f32.mrb[0].mxu0
  %v191 = vadd.f32 %v87, %v190
  %v192 = vpop.f32.mrb[0].mxu0
  %193 = vmatprep.mubr.f32.mxu0 0.0
  %194 = vmatmul.mubr.f32.gmra.mrb[0].mxu0 %v25
  %v195 = vpop.f32.mrb[0].mxu0
  %v196 = vadd.f32 %v87, %v195
  %v197 = vpop.f32.mrb[0].mxu0
  %198 = vmatprep.mubr.f32.mxu0 0.0
  %199 = vmatmul.mubr.f32.gmra.mrb[0].mxu0 %v26
  %v200 = vpop.f32.mrb[0].mxu0
  %v201 = vadd.f32 %v87, %v200
  %v202 = vpop.f32.mrb[0].mxu0
  %203 = vmatprep.mubr.f32.mxu0 0.0
  %204 = vmatmul.mubr.f32.gmra.mrb[0].mxu0 %v27
  %v205 = vpop.f32.mrb[0].mxu0
  %v206 = vadd.f32 %v87, %v205
  %v207 = vpop.f32.mrb[0].mxu0
  %208 = vmatprep.mubr.f32.mxu0 0.0
  %209 = vmatmul.mubr.f32.gmra.mrb[0].mxu0 %v28
  %v210 = vpop.f32.mrb[0].mxu0
  %v211 = vadd.f32 %v87, %v210
  %v212 = vpop.f32.mrb[0].mxu0
  %213 = vmatprep.mubr.f32.mxu0 0.0
  %214 = vmatmul.mubr.f32.gmra.mrb[0].mxu0 %v29
  %v215 = vpop.f32.mrb[0].mxu0
  %v216 = vadd.f32 %v87, %v215
  %v217 = vpop.f32.mrb[0].mxu0
  %218 = vmatprep.mubr.f32.mxu0 0.0
  %219 = vmatmul.mubr.f32.gmra.mrb[0].mxu0 %v30
  %v220 = vpop.f32.mrb[0].mxu0
  %v221 = vadd.f32 %v87, %v220
  %v222 = vpop.f32.mrb[0].mxu0
  %223 = vmatprep.mubr.f32.mxu0 0.0
  %224 = vmatmul.mubr.f32.gmra.mrb[0].mxu0 %v31
  %v225 = vpop.f32.mrb[0].mxu0
  %v226 = vadd.f32 %v87, %v225
  %v227 = vpop.f32.mrb[0].mxu0
  %228 = vmatprep.mubr.f32.mxu0 0.0
  %229 = vmatmul.mubr.f32.gmra.mrb[0].mxu0 %v32
  %v230 = vpop.f32.mrb[0].mxu0
  %v231 = vadd.f32 %v87, %v230
  %v232 = vpop.f32.mrb[0].mxu0
  %233 = vmatprep.mubr.f32.mxu0 0.0
  %234 = vmatmul.mubr.f32.gmra.mrb[0].mxu0 %v33
  %v235 = vpop.f32.mrb[0].mxu0
  %v236 = vadd.f32 %v87, %v235
  %v237 = vpop.f32.mrb[0].mxu0
  %238 = vmatprep.mubr.f32.mxu0 0.0
  %239 = vmatmul.mubr.f32.gmra.mrb[0].mxu0 %v34
  %v240 = vpop.f32.mrb[0].mxu0
  %v241 = vadd.f32 %v87, %v240
  %v242 = vpop.f32.mrb[0].mxu0
  %243 = vmatprep.mubr.f32.mxu0 0.0
  %244 = vmatmul.mubr.f32.gmra.mrb[0].mxu0 %v35
  %v245 = vpop.f32.mrb[0].mxu0
  %v246 = vadd.f32 %v87, %v245
  %v247 = vpop.f32.mrb[0].mxu0
  %248 = vmatprep.mubr.f32.mxu0 0.0
  %249 = vmatmul.mubr.f32.gmra.mrb[0].mxu0 %v36
  %v250 = vpop.f32.mrb[0].mxu0
  %v251 = vadd.f32 %v87, %v250
  %v252 = vpop.f32.mrb[0].mxu0
  %253 = vmatprep.mubr.f32.mxu0 0.0
  %254 = vmatmul.mubr.f32.gmra.mrb[0].mxu0 %v37
  %v255 = vpop.f32.mrb[0].mxu0
  %v256 = vadd.f32 %v87, %v255
  %v257 = vpop.f32.mrb[0].mxu0
  %258 = vmatprep.mubr.f32.mxu0 0.0
  %259 = vmatmul.mubr.f32.gmra.mrb[0].mxu0 %v38
  %v260 = vpop.f32.mrb[0].mxu0
  %v261 = vadd.f32 %v87, %v260
  %v262 = vpop.f32.mrb[0].mxu0
  %263 = vmatprep.mubr.f32.mxu0 0.0
  %264 = vmatmul.mubr.f32.gmra.mrb[0].mxu0 %v39
  %v265 = vpop.f32.mrb[0].mxu0
  %v266 = vadd.f32 %v87, %v265
  %v267 = vpop.f32.mrb[0].mxu0
  %268 = vmatprep.mubr.f32.mxu0 0.0
  %269 = vmatmul.mubr.f32.gmra.mrb[0].mxu0 %v40
  %v270 = vpop.f32.mrb[0].mxu0
  %v271 = vadd.f32 %v87, %v270
  %v272 = vpop.f32.mrb[0].mxu0
  %273 = vmatprep.mubr.f32.mxu0 0.0
  %274 = vmatmul.mubr.f32.gmra.mrb[0].mxu0 %v41
  %v275 = vpop.f32.mrb[0].mxu0
  %v276 = vadd.f32 %v87, %v275
  %v277 = vpop.f32.mrb[0].mxu0
  %278 = vmatprep.mubr.f32.mxu0 0.0
  %279 = vmatmul.mubr.f32.gmra.mrb[0].mxu0 %v42
  %v280 = vpop.f32.mrb[0].mxu0
  %v281 = vadd.f32 %v87, %v280
  %v282 = vpop.f32.mrb[0].mxu0
  %283 = vmatprep.mubr.f32.mxu0 0.0
  %284 = vmatmul.mubr.f32.gmra.mrb[0].mxu0 %v43
  %v285 = vpop.f32.mrb[0].mxu0
  %v286 = vadd.f32 %v87, %v285
  %v287 = vpop.f32.mrb[0].mxu0
  %288 = vmatprep.mubr.f32.mxu0 0.0
  %289 = vmatmul.mubr.f32.gmra.mrb[0].mxu0 %v44
  %v290 = vpop.f32.mrb[0].mxu0
  %v291 = vadd.f32 %v87, %v290
  %v292 = vpop.f32.mrb[0].mxu0
  %293 = vmatprep.mubr.f32.mxu0 0.0
  %294 = vmatmul.mubr.f32.gmra.mrb[0].mxu0 %v45
  %v295 = vpop.f32.mrb[0].mxu0
  %v296 = vadd.f32 %v87, %v295
  %v297 = vpop.f32.mrb[0].mxu0
  %298 = vmatprep.mubr.f32.mxu0 0.0
  %299 = vmatmul.mubr.f32.gmra.mrb[0].mxu0 %v46
  %v300 = vpop.f32.mrb[0].mxu0
  %v301 = vadd.f32 %v87, %v300
  %v302 = vpop.f32.mrb[0].mxu0
  %303 = vmatprep.mubr.f32.mxu0 0.0
  %304 = vmatmul.mubr.f32.gmra.mrb[0].mxu0 %v47
  %v305 = vpop.f32.mrb[0].mxu0
  %v306 = vadd.f32 %v87, %v305
  %v307 = vpop.f32.mrb[0].mxu0
  %308 = vmatprep.mubr.f32.mxu0 0.0
  %309 = vmatmul.mubr.f32.gmra.mrb[0].mxu0 %v48
  %v310 = vpop.f32.mrb[0].mxu0
  %v311 = vadd.f32 %v87, %v310
  %v312 = vpop.f32.mrb[0].mxu0
  %313 = vmatprep.mubr.f32.mxu0 0.0
  %314 = vmatmul.mubr.f32.gmra.mrb[0].mxu0 %v49
  %v315 = vpop.f32.mrb[0].mxu0
  %v316 = vadd.f32 %v87, %v315
  %v317 = vpop.f32.mrb[0].mxu0
  %318 = vmatprep.mubr.f32.mxu0 0.0
  %319 = vmatmul.mubr.f32.gmra.mrb[0].mxu0 %v50
  %v320 = vpop.f32.mrb[0].mxu0
  %v321 = vadd.f32 %v87, %v320
  %v322 = vpop.f32.mrb[0].mxu0
  %323 = vmatprep.mubr.f32.mxu0 0.0
  %324 = vmatmul.mubr.f32.gmra.mrb[0].mxu0 %v51
  %v325 = vpop.f32.mrb[0].mxu0
  %v326 = vadd.f32 %v87, %v325
  %v327 = vpop.f32.mrb[0].mxu0
  %328 = vmatprep.mubr.f32.mxu0 0.0
  %329 = vmatmul.mubr.f32.gmra.mrb[0].mxu0 %v52
  %v330 = vpop.f32.mrb[0].mxu0
  %v331 = vadd.f32 %v87, %v330
  %v332 = vpop.f32.mrb[0].mxu0
  %333 = vmatprep.mubr.f32.mxu0 0.0
  %334 = vmatmul.mubr.f32.gmra.mrb[0].mxu0 %v53
  %v335 = vpop.f32.mrb[0].mxu0
  %v336 = vadd.f32 %v87, %v335
  %v337 = vpop.f32.mrb[0].mxu0
  %338 = vmatprep.mubr.f32.mxu0 0.0
  %339 = vmatmul.mubr.f32.gmra.mrb[0].mxu0 %v54
  %v340 = vpop.f32.mrb[0].mxu0
  %v341 = vadd.f32 %v87, %v340
  %v342 = vpop.f32.mrb[0].mxu0
  %343 = vmatprep.mubr.f32.mxu0 0.0
  %344 = vmatmul.mubr.f32.gmra.mrb[0].mxu0 %v55
  %v345 = vpop.f32.mrb[0].mxu0
  %v346 = vadd.f32 %v87, %v345
  %v347 = vpop.f32.mrb[0].mxu0
  %348 = vmatprep.mubr.f32.mxu0 0.0
  %349 = vmatmul.mubr.f32.gmra.mrb[0].mxu0 %v56
  %v350 = vpop.f32.mrb[0].mxu0
  %v351 = vadd.f32 %v87, %v350
  %v352 = vpop.f32.mrb[0].mxu0
  %353 = vmatprep.mubr.f32.mxu0 0.0
  %354 = vmatmul.mubr.f32.gmra.mrb[0].mxu0 %v57
  %v355 = vpop.f32.mrb[0].mxu0
  %v356 = vadd.f32 %v87, %v355
  %v357 = vpop.f32.mrb[0].mxu0
  %358 = vmatprep.mubr.f32.mxu0 0.0
  %359 = vmatmul.mubr.f32.gmra.mrb[0].mxu0 %v58
  %v360 = vpop.f32.mrb[0].mxu0
  %v361 = vadd.f32 %v87, %v360
  %v362 = vpop.f32.mrb[0].mxu0
  %363 = vmatprep.mubr.f32.mxu0 0.0
  %364 = vmatmul.mubr.f32.gmra.mrb[0].mxu0 %v59
  %v365 = vpop.f32.mrb[0].mxu0
  %v366 = vadd.f32 %v87, %v365
  %v367 = vpop.f32.mrb[0].mxu0
  %368 = vmatprep.mubr.f32.mxu0 0.0
  %369 = vmatmul.mubr.f32.gmra.mrb[0].mxu0 %v60
  %v370 = vpop.f32.mrb[0].mxu0
  %v371 = vadd.f32 %v87, %v370
  %v372 = vpop.f32.mrb[0].mxu0
  %373 = vmatprep.mubr.f32.mxu0 0.0
  %374 = vmatmul.mubr.f32.gmra.mrb[0].mxu0 %v61
  %v375 = vpop.f32.mrb[0].mxu0
  %v376 = vadd.f32 %v87, %v375
  %v377 = vpop.f32.mrb[0].mxu0
  %378 = vmatprep.mubr.f32.mxu0 0.0
  %379 = vmatmul.mubr.f32.gmra.mrb[0].mxu0 %v62
  %v380 = vpop.f32.mrb[0].mxu0
  %v381 = vadd.f32 %v87, %v380
  %v382 = vpop.f32.mrb[0].mxu0
  %383 = vmatprep.mubr.f32.mxu0 0.0
  %384 = vmatmul.mubr.f32.gmra.mrb[0].mxu0 %v63
  %v385 = vpop.f32.mrb[0].mxu0
  %v386 = vadd.f32 %v87, %v385
  %v387 = vpop.f32.mrb[0].mxu0
  %388 = vmatprep.mubr.f32.mxu0 0.0
  %389 = vmatmul.mubr.f32.gmra.mrb[0].mxu0 %v64
  %v390 = vpop.f32.mrb[0].mxu0
  %v391 = vadd.f32 %v87, %v390
  %v392 = vpop.f32.mrb[0].mxu0
  %393 = vmatprep.mubr.f32.mxu0 0.0
  %394 = vmatmul.mubr.f32.gmra.mrb[0].mxu0 %v65
  %v395 = vpop.f32.mrb[0].mxu0
  %v396 = vadd.f32 %v87, %v395
  %v397 = vpop.f32.mrb[0].mxu0
  %398 = vdwg.mxu0
  %v399 = vld [vmem:[%s3] sm:$0xff]
  %v400 = vld [vmem:[%s3 + $0x8] sm:$0xff]
  %v401 = vld [vmem:[%s3 + $0x10] sm:$0xff]
  %v402 = vld [vmem:[%s3 + $0x18] sm:$0xff]
  %v403 = vld [vmem:[%s3 + $0x20] sm:$0xff]
  %v404 = vld [vmem:[%s3 + $0x28] sm:$0xff]
  %v405 = vld [vmem:[%s3 + $0x30] sm:$0xff]
  %v406 = vld [vmem:[%s3 + $0x38] sm:$0xff]
  %v407 = vld [vmem:[%s3 + $0x40] sm:$0xff]
  %v408 = vld [vmem:[%s3 + $0x48] sm:$0xff]
  %v409 = vld [vmem:[%s3 + $0x50] sm:$0xff]
  %v410 = vld [vmem:[%s3 + $0x58] sm:$0xff]
  %v411 = vld [vmem:[%s3 + $0x60] sm:$0xff]
  %v412 = vld [vmem:[%s3 + $0x68] sm:$0xff]
  %v413 = vld [vmem:[%s3 + $0x70] sm:$0xff]
  %v414 = vld [vmem:[%s3 + $0x78] sm:$0xff]
  %v415 = vld [vmem:[%s3 + $0x80] sm:$0xff]
  %v416 = vld [vmem:[%s3 + $0x88] sm:$0xff]
  %v417 = vld [vmem:[%s3 + $0x90] sm:$0xff]
  %v418 = vld [vmem:[%s3 + $0x98] sm:$0xff]
  %v419 = vld [vmem:[%s3 + $0xa0] sm:$0xff]
  %v420 = vld [vmem:[%s3 + $0xa8] sm:$0xff]
  %v421 = vld [vmem:[%s3 + $0xb0] sm:$0xff]
  %v422 = vld [vmem:[%s3 + $0xb8] sm:$0xff]
  %v423 = vld [vmem:[%s3 + $0xc0] sm:$0xff]
  %v424 = vld [vmem:[%s3 + $0xc8] sm:$0xff]
  %v425 = vld [vmem:[%s3 + $0xd0] sm:$0xff]
  %v426 = vld [vmem:[%s3 + $0xd8] sm:$0xff]
  %v427 = vld [vmem:[%s3 + $0xe0] sm:$0xff]
  %v428 = vld [vmem:[%s3 + $0xe8] sm:$0xff]
  %v429 = vld [vmem:[%s3 + $0xf0] sm:$0xff]
  %v430 = vld [vmem:[%s3 + $0xf8] sm:$0xff]
  %v431 = vld [vmem:[%s3 + $0x100] sm:$0xff]
  %v432 = vld [vmem:[%s3 + $0x108] sm:$0xff]
  %v433 = vld [vmem:[%s3 + $0x110] sm:$0xff]
  %v434 = vld [vmem:[%s3 + $0x118] sm:$0xff]
  %v435 = vld [vmem:[%s3 + $0x120] sm:$0xff]
  %v436 = vld [vmem:[%s3 + $0x128] sm:$0xff]
  %v437 = vld [vmem:[%s3 + $0x130] sm:$0xff]
  %v438 = vld [vmem:[%s3 + $0x138] sm:$0xff]
  %v439 = vld [vmem:[%s3 + $0x140] sm:$0xff]
  %v440 = vld [vmem:[%s3 + $0x148] sm:$0xff]
  %v441 = vld [vmem:[%s3 + $0x150] sm:$0xff]
  %v442 = vld [vmem:[%s3 + $0x158] sm:$0xff]
  %v443 = vld [vmem:[%s3 + $0x160] sm:$0xff]
  %v444 = vld [vmem:[%s3 + $0x168] sm:$0xff]
  %v445 = vld [vmem:[%s3 + $0x170] sm:$0xff]
  %v446 = vld [vmem:[%s3 + $0x178] sm:$0xff]
  %v447 = vld [vmem:[%s3 + $0x180] sm:$0xff]
  %v448 = vadd.f32 %v156, %v399
  %v449 = vadd.f32 %v161, %v400
  %v450 = vadd.f32 %v166, %v401
  %v451 = vadd.f32 %v171, %v402
  %v452 = vadd.f32 %v176, %v403
  %v453 = vadd.f32 %v181, %v404
  %v454 = vadd.f32 %v186, %v405
  %v455 = vadd.f32 %v191, %v406
  %v456 = vadd.f32 %v196, %v407
  %v457 = vadd.f32 %v201, %v408
  %v458 = vadd.f32 %v206, %v409
  %v459 = vadd.f32 %v211, %v410
  %v460 = vadd.f32 %v216, %v411
  %v461 = vadd.f32 %v221, %v412
  %v462 = vadd.f32 %v226, %v413
  %v463 = vadd.f32 %v231, %v414
  %v464 = vadd.f32 %v236, %v415
  %v465 = vadd.f32 %v241, %v416
  %v466 = vadd.f32 %v246, %v417
  %v467 = vadd.f32 %v251, %v418
  %v468 = vadd.f32 %v256, %v419
  %v469 = vadd.f32 %v261, %v420
  %v470 = vadd.f32 %v266, %v421
  %v471 = vadd.f32 %v271, %v422
  %v472 = vadd.f32 %v276, %v423
  %v473 = vadd.f32 %v281, %v424
  %v474 = vadd.f32 %v286, %v425
  %v475 = vadd.f32 %v291, %v426
  %v476 = vadd.f32 %v296, %v427
  %v477 = vadd.f32 %v301, %v428
  %v478 = vadd.f32 %v306, %v429
  %v479 = vadd.f32 %v311, %v430
  %v480 = vadd.f32 %v316, %v431
  %v481 = vadd.f32 %v321, %v432
  %v482 = vadd.f32 %v326, %v433
  %v483 = vadd.f32 %v331, %v434
  %v484 = vadd.f32 %v336, %v435
  %v485 = vadd.f32 %v341, %v436
  %v486 = vadd.f32 %v346, %v437
  %v487 = vadd.f32 %v351, %v438
  %v488 = vadd.f32 %v356, %v439
  %v489 = vadd.f32 %v361, %v440
  %v490 = vadd.f32 %v366, %v441
  %v491 = vadd.f32 %v371, %v442
  %v492 = vadd.f32 %v376, %v443
  %v493 = vadd.f32 %v381, %v444
  %v494 = vadd.f32 %v386, %v445
  %v495 = vadd.f32 %v391, %v446
  %v496 = vadd.f32 %v396, %v447
  %vm497 = vcmask 261120
  %498 = vst.msk [vmem:[%s4] sm:$0xff] %vm497, %v448
  %499 = vst.msk [vmem:[%s4 + $0x8] sm:$0xff] %vm497, %v449
  %500 = vst.msk [vmem:[%s4 + $0x10] sm:$0xff] %vm497, %v450
  %501 = vst.msk [vmem:[%s4 + $0x18] sm:$0xff] %vm497, %v451
  %502 = vst.msk [vmem:[%s4 + $0x20] sm:$0xff] %vm497, %v452
  %503 = vst.msk [vmem:[%s4 + $0x28] sm:$0xff] %vm497, %v453
  %504 = vst.msk [vmem:[%s4 + $0x30] sm:$0xff] %vm497, %v454
  %505 = vst.msk [vmem:[%s4 + $0x38] sm:$0xff] %vm497, %v455
  %506 = vst.msk [vmem:[%s4 + $0x40] sm:$0xff] %vm497, %v456
  %507 = vst.msk [vmem:[%s4 + $0x48] sm:$0xff] %vm497, %v457
  %508 = vst.msk [vmem:[%s4 + $0x50] sm:$0xff] %vm497, %v458
  %509 = vst.msk [vmem:[%s4 + $0x58] sm:$0xff] %vm497, %v459
  %510 = vst.msk [vmem:[%s4 + $0x60] sm:$0xff] %vm497, %v460
  %511 = vst.msk [vmem:[%s4 + $0x68] sm:$0xff] %vm497, %v461
  %512 = vst.msk [vmem:[%s4 + $0x70] sm:$0xff] %vm497, %v462
  %513 = vst.msk [vmem:[%s4 + $0x78] sm:$0xff] %vm497, %v463
  %514 = vst.msk [vmem:[%s4 + $0x80] sm:$0xff] %vm497, %v464
  %515 = vst.msk [vmem:[%s4 + $0x88] sm:$0xff] %vm497, %v465
  %516 = vst.msk [vmem:[%s4 + $0x90] sm:$0xff] %vm497, %v466
  %517 = vst.msk [vmem:[%s4 + $0x98] sm:$0xff] %vm497, %v467
  %518 = vst.msk [vmem:[%s4 + $0xa0] sm:$0xff] %vm497, %v468
  %519 = vst.msk [vmem:[%s4 + $0xa8] sm:$0xff] %vm497, %v469
  %520 = vst.msk [vmem:[%s4 + $0xb0] sm:$0xff] %vm497, %v470
  %521 = vst.msk [vmem:[%s4 + $0xb8] sm:$0xff] %vm497, %v471
  %522 = vst.msk [vmem:[%s4 + $0xc0] sm:$0xff] %vm497, %v472
  %523 = vst.msk [vmem:[%s4 + $0xc8] sm:$0xff] %vm497, %v473
  %524 = vst.msk [vmem:[%s4 + $0xd0] sm:$0xff] %vm497, %v474
  %525 = vst.msk [vmem:[%s4 + $0xd8] sm:$0xff] %vm497, %v475
  %526 = vst.msk [vmem:[%s4 + $0xe0] sm:$0xff] %vm497, %v476
  %527 = vst.msk [vmem:[%s4 + $0xe8] sm:$0xff] %vm497, %v477
  %528 = vst.msk [vmem:[%s4 + $0xf0] sm:$0xff] %vm497, %v478
  %529 = vst.msk [vmem:[%s4 + $0xf8] sm:$0xff] %vm497, %v479
  %530 = vst.msk [vmem:[%s4 + $0x100] sm:$0xff] %vm497, %v480
  %531 = vst.msk [vmem:[%s4 + $0x108] sm:$0xff] %vm497, %v481
  %532 = vst.msk [vmem:[%s4 + $0x110] sm:$0xff] %vm497, %v482
  %533 = vst.msk [vmem:[%s4 + $0x118] sm:$0xff] %vm497, %v483
  %534 = vst.msk [vmem:[%s4 + $0x120] sm:$0xff] %vm497, %v484
  %535 = vst.msk [vmem:[%s4 + $0x128] sm:$0xff] %vm497, %v485
  %536 = vst.msk [vmem:[%s4 + $0x130] sm:$0xff] %vm497, %v486
  %537 = vst.msk [vmem:[%s4 + $0x138] sm:$0xff] %vm497, %v487
  %538 = vst.msk [vmem:[%s4 + $0x140] sm:$0xff] %vm497, %v488
  %539 = vst.msk [vmem:[%s4 + $0x148] sm:$0xff] %vm497, %v489
  %540 = vst.msk [vmem:[%s4 + $0x150] sm:$0xff] %vm497, %v490
  %541 = vst.msk [vmem:[%s4 + $0x158] sm:$0xff] %vm497, %v491
  %542 = vst.msk [vmem:[%s4 + $0x160] sm:$0xff] %vm497, %v492
  %543 = vst.msk [vmem:[%s4 + $0x168] sm:$0xff] %vm497, %v493
  %544 = vst.msk [vmem:[%s4 + $0x170] sm:$0xff] %vm497, %v494
  %545 = vst.msk [vmem:[%s4 + $0x178] sm:$0xff] %vm497, %v495
  %546 = vst.msk [vmem:[%s4 + $0x180] sm:$0xff] %vm497, %v496
  // Predicated region
  $region18: #{swin_encoder_block_forward.9} parent=0 // pred_check
    _
  $region19: #{swin_encoder_block_forward.9} parent=0 // pred_check_branch
    %548 = sbr.rel (0) target = $region21
  $region20: #{swin_encoder_block_forward.9} parent=0 // pred_region
    _
  $region21: #{swin_encoder_block_forward.9} parent=0 // pred_fallthru
    _
  // Predicated region
  $region22: #{swin_encoder_block_forward.9} parent=0 // pred_check
    _
  $region23: #{swin_encoder_block_forward.9} parent=0 // pred_check_branch
    %550 = sbr.rel (0) target = $region25
  $region24: #{swin_encoder_block_forward.9} parent=0 // pred_region
    _
  $region25: #{swin_encoder_block_forward.9} parent=0 // pred_fallthru
    _

</llo_original>
